<compile_context>
chip_gen: v7x
topology: tpu7x:2x2x1
jax: 0.10.0
libtpu: 0.0.40
codegen_flags: <defaults>
</compile_context>

<pallas_src>
import functools

import numpy as np
import jax
import jax.numpy as jnp
from jax.experimental import pallas as pl
from jax.experimental.pallas import tpu as pltpu

# ------------------------- small synthetic model config -------------------------
IN_CHANS = 3
IMG_SIZE = 32          # DATA.TRAIN_CROP_SIZE
T_FRAMES = 2           # number of frames (== WIN_SIZE_T)
EMBED_DIMS = (16, 16, 32, 32)
LAYERS = (1, 1, 1, 1)
TRANSITIONS = (False, True, False, False)
WIN_SIZE = (4, 4, 4, 4)
WIN_SIZE_T = (2, 2, 2, 2)
GAMMA = (2, 2, 4, 4)   # POSGAMMA per stage (must divide the stage dim)
NUM_CLASSES = 10
LN_EPS = 1e-5
BN_EPS = 1e-5
_SQRT1_2 = 0.7071067811865476


# --------------------------- in-kernel math helpers ----------------------------
def _erf_approx(x):
    # Abramowitz & Stegun 7.1.26 (max abs err ~1.5e-7) -- keeps PyTorch's exact-erf
    # GELU semantics to ~float32 precision without relying on a lax.erf lowering.
    a1, a2, a3, a4, a5 = 0.254829592, -0.284496736, 1.421413741, -1.453152027, 1.061405429
    p = 0.3275911
    ax = jnp.abs(x)
    t = 1.0 / (1.0 + p * ax)
    poly = ((((a5 * t + a4) * t + a3) * t + a2) * t + a1) * t
    y = 1.0 - poly * jnp.exp(-ax * ax)
    return jnp.where(x >= 0, y, -y)


def _gelu(x):
    # TODO(synk): PyTorch nn.GELU() uses exact erf; this A&S polynomial is ~1.5e-7 off.
    return 0.5 * x * (1.0 + _erf_approx(x * _SQRT1_2))


def _layernorm(z, w, b):
    mu = jnp.mean(z, axis=-1, keepdims=True)
    var = jnp.mean((z - mu) ** 2, axis=-1, keepdims=True)
    return (z - mu) * jax.lax.rsqrt(var + LN_EPS) * w + b


def _fc_bf16(z, w_ref, b_ref):
    # bf16 MXU GEMM with f32 accumulation; bias add in f32.
    return jnp.dot(z.astype(jnp.bfloat16), w_ref[...],
                   preferred_element_type=jnp.float32) + b_ref[...]


# -------------------------------- Pallas kernels --------------------------------
def _conv_mm_kernel(apply_gelu, x_ref, w_ref, b_ref, o_ref):
    """o = gelu?(x @ w + b)   (im2col conv with BN pre-folded into w, b)."""
    y = _fc_bf16(x_ref[...], w_ref, b_ref)
    if apply_gelu:
        y = _gelu(y)
    o_ref[...] = y


def _conv_mm_ln_kernel(x_ref, w_ref, b_ref, lnw_ref, lnb_ref, o_ref):
    """Downsample: (x @ w + b) followed by LayerNorm over the output channels (fused)."""
    y = _fc_bf16(x_ref[...], w_ref, b_ref)
    o_ref[...] = _layernorm(y, lnw_ref[...], lnb_ref[...])


def _block_kernel(x_ref,
                  lnwt_ref, lnbt_ref, w1t_ref, b1t_ref, coef_ref, pbt_ref, w2t_ref, b2t_ref,
                  lnws_ref, lnbs_ref, w1s_ref, b1s_ref, a_ref, pbs_ref, w2s_ref, b2s_ref,
                  o_ref, mix_ref):
    """Fused PermutatorBlock over one batch element: out = x + fc(x) + t_fc(x).

    x:    (M, C) rows of one sample, ordered (t, h, w); M = T*H*W.
    coef: (T, M, C) temporal posmap coefficients, coef[dt][r,c] = pm_t[t(r), (t(r)+dt)%T, s(c)]
          -> temporal token mixing = sum_dt coef[dt] * roll(u, -dt*HW) (pure VPU/XLU, no kron).
    a:    (gamma, M, M) spatial mixing matrices, block-diagonal over frames & windows
          (encodes window_partition/window_reverse; applied directly to the plane).
    pbt/pbs: (M, C) token_proj_n biases pre-broadcast to rows/lanes.
    Channels of the u/v halves are pre-permuted (wrapper side) to gamma-major order so
    per-gamma channels are contiguous lane slices; w2 rows are permuted to match.
    """
    x = x_ref[...]                                                   # (M, C) f32
    M, C = x.shape
    gamma = a_ref.shape[0]
    T = coef_ref.shape[0]
    HW = M // T
    vd = C // gamma

    # ---------------- temporal branch (PosMLPLayerT) ----------------
    ht = _gelu(_fc_bf16(_layernorm(x, lnwt_ref[...], lnbt_ref[...]), w1t_ref, b1t_ref))
    ut, vt = ht[:, :C], ht[:, C:]
    mixed_t = coef_ref[0] * ut
    for dt in range(1, T):                                           # T == 2 (static)
        mixed_t = mixed_t + coef_ref[dt] * pltpu.roll(ut, shift=M - dt * HW, axis=0)
    gated_t = (mixed_t + pbt_ref[...]) * vt
    yt = _fc_bf16(gated_t, w2t_ref, b2t_ref)                         # fc2_t

    # ---------------- spatial branch (PosMLPLayer over windows) ----------------
    hs = _gelu(_fc_bf16(_layernorm(x, lnws_ref[...], lnbs_ref[...]), w1s_ref, b1s_ref))
    us, vs = hs[:, :C], hs[:, C:]
    # Per-gamma MXU mixing written into lane slices of one (M, C) buffer so fc2 is a
    # single K=C GEMM (no K=vd matmuls, no accumulator add-chain).
    for s in range(gamma):                                           # gamma <= 4 (static)
        mix_ref[:, s * vd:(s + 1) * vd] = jnp.dot(
            a_ref[s], us[:, s * vd:(s + 1) * vd].astype(jnp.bfloat16),
            preferred_element_type=jnp.float32)
    gated_s = (mix_ref[...] + pbs_ref[...]) * vs
    ys = _fc_bf16(gated_s, w2s_ref, b2s_ref)                         # fc2_s

    o_ref[...] = x + yt + ys                                         # PermutatorBlock residual


def _norm_pool_head_kernel(x_ref, lnw_ref, lnb_ref, hw_ref, hb_ref, o_ref):
    """Final LayerNorm + mean over tokens + classifier head, fused."""
    x = x_ref[...]                                                   # (B, ntok, C)
    xn = _layernorm(x, lnw_ref[...], lnb_ref[...])
    m = jnp.mean(xn, axis=1)                                         # (B, C)
    o_ref[...] = jnp.dot(m.astype(jnp.bfloat16), hw_ref[...],
                         preferred_element_type=jnp.float32) + hb_ref[...]


# ------------------------------ Pallas call wrappers -----------------------------
_VMEM = pl.BlockSpec(memory_space=pltpu.MemorySpace.VMEM)


def _run_conv_matmul(patches2d, w2d, b, apply_gelu, ln_params=None):
    M, K = patches2d.shape
    N = w2d.shape[1]
    if ln_params is None:
        kern = functools.partial(_conv_mm_kernel, apply_gelu)
        extra = []
    else:
        kern = _conv_mm_ln_kernel
        extra = [ln_params[0].reshape(1, N), ln_params[1].reshape(1, N)]
    # Working set is tiny (<100 KB) at these sizes -> single un-tiled step, no grid.
    # TODO(synk): tile over M (with pltpu.CompilerParams(vmem_limit_bytes=...)) for large M.
    return pl.pallas_call(
        kern,
        out_shape=jax.ShapeDtypeStruct((M, N), jnp.float32),
        in_specs=[_VMEM] * (3 + len(extra)),
        out_specs=_VMEM,
    )(patches2d, w2d, b.reshape(1, N), *extra)


def conv_1x3x3_s2(x, w2d, b, apply_gelu=False, ln=None):
    """Conv3d kernel (1,3,3), stride (1,2,2), pad (0,1,1) as im2col + Pallas matmul."""
    B, T, H, W, Cin = x.shape
    Ho = (H - 1) // 2 + 1
    Wo = (W - 1) // 2 + 1
    xp = jnp.pad(x, ((0, 0), (0, 0), (1, 1), (1, 1), (0, 0)))
    cols = []
    for kh in range(3):
        for kw in range(3):
            cols.append(xp[:, :, kh:kh + 2 * Ho - 1:2, kw:kw + 2 * Wo - 1:2, :])
    patches = jnp.concatenate(cols, axis=-1).reshape(-1, 9 * Cin)
    y = _run_conv_matmul(patches, w2d, b, apply_gelu, ln)
    return y.reshape(B, T, Ho, Wo, w2d.shape[1])


def permutator_block_apply(x2d, p):
    """x2d: (B*M, C) rows ordered (b, t, h, w); applies one fused PermutatorBlock."""
    A = p["s"]["A"]
    gamma, M, _ = A.shape
    T = p["t"]["coef"].shape[0]
    C = x2d.shape[1]
    B = x2d.shape[0] // M

    row = lambda b: (b, 0)
    const2 = lambda b: (0, 0)
    const3 = lambda b: (0, 0, 0)

    in_specs = [
        pl.BlockSpec((M, C), row),                                   # x (one sample per step)
        # temporal params (grid-invariant -> stay resident in VMEM)
        pl.BlockSpec((1, C), const2), pl.BlockSpec((1, C), const2),  # ln_t
        pl.BlockSpec((C, 2 * C), const2), pl.BlockSpec((1, 2 * C), const2),   # fc1_t
        pl.BlockSpec((T, M, C), const3),                             # temporal posmap coefs
        pl.BlockSpec((M, C), const2),                                # temporal token bias
        pl.BlockSpec((C, C), const2), pl.BlockSpec((1, C), const2),  # fc2_t
        # spatial params
        pl.BlockSpec((1, C), const2), pl.BlockSpec((1, C), const2),  # ln_s
        pl.BlockSpec((C, 2 * C), const2), pl.BlockSpec((1, 2 * C), const2),   # fc1_s
        pl.BlockSpec((gamma, M, M), const3),                         # block-diag mixing mats
        pl.BlockSpec((M, C), const2),                                # spatial token bias
        pl.BlockSpec((C, C), const2), pl.BlockSpec((1, C), const2),  # fc2_s
    ]
    args = [x2d,
            p["t"]["ln_w"], p["t"]["ln_b"], p["t"]["w1"], p["t"]["b1"],
            p["t"]["coef"], p["t"]["pbias"], p["t"]["w2"], p["t"]["b2"],
            p["s"]["ln_w"], p["s"]["ln_b"], p["s"]["w1"], p["s"]["b1"],
            p["s"]["A"], p["s"]["pbias"], p["s"]["w2"], p["s"]["b2"]]

    return pl.pallas_call(
        _block_kernel,
        out_shape=jax.ShapeDtypeStruct((B * M, C), jnp.float32),
        grid=(B,),
        in_specs=in_specs,
        out_specs=pl.BlockSpec((M, C), row),
        scratch_shapes=[pltpu.VMEM((M, C), jnp.float32)],
        compiler_params=pltpu.CompilerParams(dimension_semantics=("parallel",)),
    )(*args)


# ------------------------------ parameter creation -------------------------------
def _tn(key, shape, std=0.02):
    return jax.random.normal(key, shape, dtype=jnp.float32) * std


def spatial_rel_index(win):
    coords = np.stack(np.meshgrid(np.arange(win), np.arange(win), indexing="ij"), axis=0)
    flat = coords.reshape(2, -1)
    rel = flat[:, :, None] - flat[:, None, :]
    rel = np.transpose(rel, (1, 2, 0)).copy()
    rel[:, :, 0] += win - 1
    rel[:, :, 1] += win - 1
    rel[:, :, 0] *= 2 * win - 1
    return rel.sum(-1)                                               # (N, N)


def temporal_rel_index(t):
    i = np.arange(t)
    return (i[:, None] - i[None, :]) + (t - 1)                       # (T, T)


def make_conv_params(key, cin, cout, fold_bn=False):
    k1, k2 = jax.random.split(key)
    w = _tn(k1, (cout, cin, 1, 3, 3))                                # torch Conv3d layout
    w2d = jnp.transpose(w[:, :, 0, :, :], (2, 3, 1, 0)).reshape(9 * cin, cout)
    b = _tn(k2, (cout,))
    if fold_bn:
        # eval-mode BatchNorm3d with running_mean=0, running_var=1, gamma=1, beta=0
        scale = 1.0 / np.sqrt(1.0 + BN_EPS)
        w2d = w2d * scale
        b = b * scale
    return w2d.astype(jnp.bfloat16), b


def make_block_params(key, C, win, T, H, W, gamma):
    """Parameters for one fused PermutatorBlock at spatial size HxW, T frames."""
    assert C % gamma == 0 and H % win == 0 and W % win == 0
    N = win * win
    HW = H * W
    M = T * HW
    vd = C // gamma
    ks = jax.random.split(key, 8)
    # kernel channel c' = s*vd + j  <->  PyTorch channel c = j*gamma + s  (gamma-major)
    perm = np.arange(C).reshape(vd, gamma).T.reshape(-1)
    svec = np.repeat(np.arange(gamma), vd)                           # gamma index per permuted chan

    # ---------------- spatial (PosMLPLayer / PoSGU / LearnedPosMap) ----------------
    table_s = np.asarray(_tn(ks[0], ((2 * win - 1) ** 2, gamma)))
    pm_s = table_s[spatial_rel_index(win).reshape(-1)].reshape(N, N, gamma)   # pm[m, n, s]
    hh, ww = np.meshgrid(np.arange(H), np.arange(W), indexing="ij")
    widx = ((hh % win) * win + (ww % win)).reshape(-1)               # token-in-window index
    wid = ((hh // win) * (W // win) + (ww // win)).reshape(-1)       # window id
    same_win = (wid[:, None] == wid[None, :]).astype(np.float32)
    a_plane = pm_s[widx[:, None], widx[None, :], :] * same_win[:, :, None]    # (HW, HW, g)
    a_plane = np.transpose(a_plane, (2, 0, 1))                       # (gamma, HW, HW)
    A = np.zeros((gamma, M, M), np.float32)                          # block-diag over frames
    for t in range(T):
        A[:, t * HW:(t + 1) * HW, t * HW:(t + 1) * HW] = a_plane
    pbias_s = np.asarray(_tn(ks[1], (N,)))                           # token_proj_n_bias
    pbs = np.broadcast_to(np.tile(pbias_s[widx], T)[:, None], (M, C)).astype(np.float32)
    w1_s = np.asarray(_tn(ks[2], (C, 2 * C)))
    w2_s = np.asarray(_tn(ks[3], (C, C)))
    w1_sp = np.concatenate([w1_s[:, :C][:, perm], w1_s[:, C:][:, perm]], axis=1)
    w2_sp = w2_s[perm, :]

    # ---------------- temporal (PosMLPLayerT / PoSGUT / LearnedPosMapT) ----------------
    table_t = np.asarray(_tn(ks[4], (2 * T - 1, gamma)))
    pm_t = table_t[temporal_rel_index(T).reshape(-1)].reshape(T, T, gamma)    # pm[m, n, s]
    to_idx = np.arange(M) // HW                                      # output frame per row
    coef = np.zeros((T, M, C), np.float32)
    for dt in range(T):
        ti_idx = (to_idx + dt) % T
        coef[dt] = pm_t[to_idx[:, None], ti_idx[:, None], svec[None, :]]
    pbias_t = np.asarray(_tn(ks[5], (T,)))
    pbt = np.broadcast_to(np.repeat(pbias_t, HW)[:, None], (M, C)).astype(np.float32)
    w1_t = np.asarray(_tn(ks[6], (C, 2 * C)))
    w2_t = np.asarray(_tn(ks[7], (C, C)))
    w1_tp = np.concatenate([w1_t[:, :C][:, perm], w1_t[:, C:][:, perm]], axis=1)
    w2_tp = w2_t[perm, :]

    f32, bf16 = jnp.float32, jnp.bfloat16
    ones_c = jnp.ones((1, C), f32)
    zeros_c = jnp.zeros((1, C), f32)
    zeros_2c = jnp.zeros((1, 2 * C), f32)
    return dict(
        t=dict(ln_w=ones_c, ln_b=zeros_c,
               w1=jnp.asarray(w1_tp, bf16), b1=zeros_2c,
               coef=jnp.asarray(coef, f32), pbias=jnp.asarray(pbt, f32),
               w2=jnp.asarray(w2_tp, bf16), b2=zeros_c),
        s=dict(ln_w=ones_c, ln_b=zeros_c,
               w1=jnp.asarray(w1_sp, bf16), b1=zeros_2c,
               A=jnp.asarray(A, bf16), pbias=jnp.asarray(pbs, f32),
               w2=jnp.asarray(w2_sp, bf16), b2=zeros_c))


def init_params(key):
    nk = iter(jax.random.split(key, 64))
    params = {}
    # PatchEmbed: conv(3->C0/2)+BN+GELU + conv(C0/2->C0)+BN (eval-mode BN folded into w, b)
    c_half = EMBED_DIMS[0] // 2
    w1, b1 = make_conv_params(next(nk), IN_CHANS, c_half, fold_bn=True)
    w2, b2 = make_conv_params(next(nk), c_half, EMBED_DIMS[0], fold_bn=True)
    params["patch_embed1"] = dict(w1=w1, b1=b1, w2=w2, b2=b2)
    # spatial size after the two stride-2 patch-embed convs
    H = (IMG_SIZE - 1) // 2 + 1
    H = (H - 1) // 2 + 1
    T = T_FRAMES
    blocks, downs = [], []
    for s in range(4):
        C, win, wt, g = EMBED_DIMS[s], WIN_SIZE[s], WIN_SIZE_T[s], GAMMA[s]
        assert wt == T_FRAMES
        stage = [make_block_params(next(nk), C, win, T, H, H, g) for _ in range(LAYERS[s])]
        blocks.append(stage)
        if s < 3:
            if TRANSITIONS[s] or EMBED_DIMS[s] != EMBED_DIMS[s + 1]:
                wd, bd = make_conv_params(next(nk), EMBED_DIMS[s], EMBED_DIMS[s + 1])
                downs.append(dict(w=wd, b=bd,
                                  ln_w=jnp.ones((EMBED_DIMS[s + 1],), jnp.float32),
                                  ln_b=jnp.zeros((EMBED_DIMS[s + 1],), jnp.float32)))
                H = (H - 1) // 2 + 1
            else:
                downs.append(None)
    params["blocks"] = blocks
    params["downs"] = downs
    params["norm_w"] = jnp.ones((EMBED_DIMS[-1],), jnp.float32)
    params["norm_b"] = jnp.zeros((EMBED_DIMS[-1],), jnp.float32)
    params["head_w"] = _tn(next(nk), (EMBED_DIMS[-1], NUM_CLASSES)).astype(jnp.bfloat16)
    params["head_b"] = jnp.zeros((NUM_CLASSES,), jnp.float32)
    return params


# ----------------------------------- forward -------------------------------------
def forward(params, x_ncthw):
    # input is NCTHW; convert once to channels-last (B, T, H, W, C).
    x = jnp.transpose(x_ncthw, (0, 2, 3, 4, 1)).astype(jnp.float32)
    pe = params["patch_embed1"]
    x = conv_1x3x3_s2(x, pe["w1"], pe["b1"], apply_gelu=True)
    x = conv_1x3x3_s2(x, pe["w2"], pe["b2"], apply_gelu=False)
    for s in range(4):
        B, T, H, W, C = x.shape
        x2d = x.reshape(B * T * H * W, C)                            # rows ordered (b,t,h,w)
        for blk in params["blocks"][s]:
            x2d = permutator_block_apply(x2d, blk)                   # fused PermutatorBlock
        x = x2d.reshape(B, T, H, W, C)
        if s < 3 and params["downs"][s] is not None:                 # Downsample: conv s2 + LN
            dp = params["downs"][s]
            x = conv_1x3x3_s2(x, dp["w"], dp["b"], apply_gelu=False,
                              ln=(dp["ln_w"], dp["ln_b"]))
    B, T, H, W, C = x.shape
    xt = x.reshape(B, T * H * W, C)
    logits = pl.pallas_call(
        _norm_pool_head_kernel,
        out_shape=jax.ShapeDtypeStruct((B, NUM_CLASSES), jnp.float32),
        in_specs=[_VMEM] * 5,
        out_specs=_VMEM,
    )(xt, params["norm_w"].reshape(1, C), params["norm_b"].reshape(1, C),
      params["head_w"], params["head_b"].reshape(1, NUM_CLASSES))
    return logits


if __name__ == "__main__":
    key = jax.random.PRNGKey(0)
    pkey, xkey = jax.random.split(key)
    batch = 2
    params = init_params(pkey)
    x = jax.random.normal(xkey, (batch, IN_CHANS, T_FRAMES, IMG_SIZE, IMG_SIZE),
                          dtype=jnp.float32)
    fwd = jax.jit(forward)
    out = fwd(params, x)
    jax.block_until_ready(out)
    assert out.shape == (batch, NUM_CLASSES) and bool(jnp.all(jnp.isfinite(out)))
    print("KERNEL_OK")
</pallas_src>

<mosaic_0001>
module attributes {stable_mosaic.version = 11 : i64} {
  func.func @_conv_mm_kernel(%arg0: memref<1024x27xf32, #tpu.memory_space<vmem>>, %arg1: memref<27x8xbf16, #tpu.memory_space<vmem>>, %arg2: memref<1x8xf32, #tpu.memory_space<vmem>>, %arg3: memref<1024x8xf32, #tpu.memory_space<vmem>>) attributes {dimension_semantics = [], scalar_prefetch = 0 : i64, scratch_operands = 0 : i64, tpu.core_type = #tpu.core_type<tc>} {
    %c0 = arith.constant 0 : index
    %c0_0 = arith.constant 0 : index
    %0 = vector.load %arg0[%c0, %c0_0] : memref<1024x27xf32, #tpu.memory_space<vmem>>, vector<1024x27xf32>
    %1 = arith.truncf %0 : vector<1024x27xf32> to vector<1024x27xbf16>
    %c0_1 = arith.constant 0 : index
    %c0_2 = arith.constant 0 : index
    %2 = vector.load %arg1[%c0_1, %c0_2] : memref<27x8xbf16, #tpu.memory_space<vmem>>, vector<27x8xbf16>
    %cst = arith.constant dense<0.000000e+00> : vector<1024x8xf32>
    %3 = tpu.matmul %1, %2, %cst {dimension_numbers = #tpu.dot_dimension_numbers<[1], [0], [0], [1], [0, 0, 1, 1], [], []>} : vector<1024x27xbf16>, vector<27x8xbf16>, vector<1024x8xf32> -> vector<1024x8xf32>
    %c0_3 = arith.constant 0 : index
    %c0_4 = arith.constant 0 : index
    %4 = vector.load %arg2[%c0_3, %c0_4] : memref<1x8xf32, #tpu.memory_space<vmem>>, vector<1x8xf32>
    %5 = vector.broadcast %4 : vector<1x8xf32> to vector<1024x8xf32>
    %6 = arith.addf %3, %5 : vector<1024x8xf32>
    %cst_5 = arith.constant 5.000000e-01 : f32
    %7 = vector.broadcast %cst_5 : f32 to vector<1024x8xf32>
    %8 = arith.mulf %7, %6 : vector<1024x8xf32>
    %cst_6 = arith.constant 0.707106769 : f32
    %9 = vector.broadcast %cst_6 : f32 to vector<1024x8xf32>
    %10 = arith.mulf %6, %9 : vector<1024x8xf32>
    %11 = math.absf %10 : vector<1024x8xf32>
    %cst_7 = arith.constant 0.327591091 : f32
    %12 = vector.broadcast %cst_7 : f32 to vector<1024x8xf32>
    %13 = arith.mulf %12, %11 : vector<1024x8xf32>
    %cst_8 = arith.constant 1.000000e+00 : f32
    %14 = vector.broadcast %cst_8 : f32 to vector<1024x8xf32>
    %15 = arith.addf %14, %13 : vector<1024x8xf32>
    %cst_9 = arith.constant 1.000000e+00 : f32
    %16 = vector.broadcast %cst_9 : f32 to vector<1024x8xf32>
    %17 = arith.divf %16, %15 : vector<1024x8xf32>
    %cst_10 = arith.constant 1.06140542 : f32
    %18 = vector.broadcast %cst_10 : f32 to vector<1024x8xf32>
    %19 = arith.mulf %18, %17 : vector<1024x8xf32>
    %cst_11 = arith.constant -1.45315206 : f32
    %20 = vector.broadcast %cst_11 : f32 to vector<1024x8xf32>
    %21 = arith.addf %19, %20 : vector<1024x8xf32>
    %22 = arith.mulf %21, %17 : vector<1024x8xf32>
    %cst_12 = arith.constant 1.42141378 : f32
    %23 = vector.broadcast %cst_12 : f32 to vector<1024x8xf32>
    %24 = arith.addf %22, %23 : vector<1024x8xf32>
    %25 = arith.mulf %24, %17 : vector<1024x8xf32>
    %cst_13 = arith.constant -0.284496725 : f32
    %26 = vector.broadcast %cst_13 : f32 to vector<1024x8xf32>
    %27 = arith.addf %25, %26 : vector<1024x8xf32>
    %28 = arith.mulf %27, %17 : vector<1024x8xf32>
    %cst_14 = arith.constant 0.254829586 : f32
    %29 = vector.broadcast %cst_14 : f32 to vector<1024x8xf32>
    %30 = arith.addf %28, %29 : vector<1024x8xf32>
    %31 = arith.mulf %30, %17 : vector<1024x8xf32>
    %cst_15 = arith.constant 0.000000e+00 : f32
    %32 = vector.broadcast %cst_15 : f32 to vector<1024x8xf32>
    %33 = arith.subf %32, %11 : vector<1024x8xf32>
    %34 = arith.mulf %33, %11 : vector<1024x8xf32>
    %35 = math.exp %34 : vector<1024x8xf32>
    %36 = arith.mulf %31, %35 : vector<1024x8xf32>
    %cst_16 = arith.constant 1.000000e+00 : f32
    %37 = vector.broadcast %cst_16 : f32 to vector<1024x8xf32>
    %38 = arith.subf %37, %36 : vector<1024x8xf32>
    %cst_17 = arith.constant 0.000000e+00 : f32
    %39 = vector.broadcast %cst_17 : f32 to vector<1024x8xf32>
    %40 = arith.cmpf oge, %10, %39 : vector<1024x8xf32>
    %cst_18 = arith.constant 0.000000e+00 : f32
    %41 = vector.broadcast %cst_18 : f32 to vector<1024x8xf32>
    %42 = arith.subf %41, %38 : vector<1024x8xf32>
    %43 = arith.select %40, %38, %42 : vector<1024x8xi1>, vector<1024x8xf32>
    %cst_19 = arith.constant 1.000000e+00 : f32
    %44 = vector.broadcast %cst_19 : f32 to vector<1024x8xf32>
    %45 = arith.addf %44, %43 : vector<1024x8xf32>
    %46 = arith.mulf %8, %45 : vector<1024x8xf32>
    %c0_20 = arith.constant 0 : index
    %c0_21 = arith.constant 0 : index
    %47 = vector.load %arg3[%c0_20, %c0_21] : memref<1024x8xf32, #tpu.memory_space<vmem>>, vector<1024x8xf32>
    tpu.vector_store %arg3[%c0_20, %c0_21], %46 {strides = array<i32>} : memref<1024x8xf32, #tpu.memory_space<vmem>>, vector<1024x8xf32>,
    return
  }
}

module attributes {stable_mosaic.version = 11 : i64} {
  func.func @_conv_mm_kernel(%arg0: memref<256x72xf32, #tpu.memory_space<vmem>>, %arg1: memref<72x16xbf16, #tpu.memory_space<vmem>>, %arg2: memref<1x16xf32, #tpu.memory_space<vmem>>, %arg3: memref<256x16xf32, #tpu.memory_space<vmem>>) attributes {dimension_semantics = [], scalar_prefetch = 0 : i64, scratch_operands = 0 : i64, tpu.core_type = #tpu.core_type<tc>} {
    %c0 = arith.constant 0 : index
    %c0_0 = arith.constant 0 : index
    %0 = vector.load %arg0[%c0, %c0_0] : memref<256x72xf32, #tpu.memory_space<vmem>>, vector<256x72xf32>
    %1 = arith.truncf %0 : vector<256x72xf32> to vector<256x72xbf16>
    %c0_1 = arith.constant 0 : index
    %c0_2 = arith.constant 0 : index
    %2 = vector.load %arg1[%c0_1, %c0_2] : memref<72x16xbf16, #tpu.memory_space<vmem>>, vector<72x16xbf16>
    %cst = arith.constant dense<0.000000e+00> : vector<256x16xf32>
    %3 = tpu.matmul %1, %2, %cst {dimension_numbers = #tpu.dot_dimension_numbers<[1], [0], [0], [1], [0, 0, 1, 1], [], []>} : vector<256x72xbf16>, vector<72x16xbf16>, vector<256x16xf32> -> vector<256x16xf32>
    %c0_3 = arith.constant 0 : index
    %c0_4 = arith.constant 0 : index
    %4 = vector.load %arg2[%c0_3, %c0_4] : memref<1x16xf32, #tpu.memory_space<vmem>>, vector<1x16xf32>
    %5 = vector.broadcast %4 : vector<1x16xf32> to vector<256x16xf32>
    %6 = arith.addf %3, %5 : vector<256x16xf32>
    %c0_5 = arith.constant 0 : index
    %c0_6 = arith.constant 0 : index
    %7 = vector.load %arg3[%c0_5, %c0_6] : memref<256x16xf32, #tpu.memory_space<vmem>>, vector<256x16xf32>
    tpu.vector_store %arg3[%c0_5, %c0_6], %6 {strides = array<i32>} : memref<256x16xf32, #tpu.memory_space<vmem>>, vector<256x16xf32>,
    return
  }
}

module attributes {stable_mosaic.version = 11 : i64} {
  func.func @_block_kernel(%arg0: i32, %arg1: memref<128x16xf32, #tpu.memory_space<vmem>>, %arg2: memref<1x16xf32, #tpu.memory_space<vmem>>, %arg3: memref<1x16xf32, #tpu.memory_space<vmem>>, %arg4: memref<16x32xbf16, #tpu.memory_space<vmem>>, %arg5: memref<1x32xf32, #tpu.memory_space<vmem>>, %arg6: memref<2x128x16xf32, #tpu.memory_space<vmem>>, %arg7: memref<128x16xf32, #tpu.memory_space<vmem>>, %arg8: memref<16x16xbf16, #tpu.memory_space<vmem>>, %arg9: memref<1x16xf32, #tpu.memory_space<vmem>>, %arg10: memref<1x16xf32, #tpu.memory_space<vmem>>, %arg11: memref<1x16xf32, #tpu.memory_space<vmem>>, %arg12: memref<16x32xbf16, #tpu.memory_space<vmem>>, %arg13: memref<1x32xf32, #tpu.memory_space<vmem>>, %arg14: memref<2x128x128xbf16, #tpu.memory_space<vmem>>, %arg15: memref<128x16xf32, #tpu.memory_space<vmem>>, %arg16: memref<16x16xbf16, #tpu.memory_space<vmem>>, %arg17: memref<1x16xf32, #tpu.memory_space<vmem>>, %arg18: memref<128x16xf32, #tpu.memory_space<vmem>>, %arg19: memref<128x16xf32, #tpu.memory_space<vmem>>) attributes {dimension_semantics = [#tpu.dimension_semantics<parallel>], iteration_bounds = array<i64: 2>, scalar_prefetch = 0 : i64, scratch_operands = 1 : i64, tpu.core_type = #tpu.core_type<tc>, window_params = [{transform_indices = @transform_0, window_bounds = array<i64: 128, 16>}, {pipeline_mode = #tpu.pipeline_mode<synchronous>, transform_indices = @transform_1, window_bounds = array<i64: 1, 16>}, {pipeline_mode = #tpu.pipeline_mode<synchronous>, transform_indices = @transform_2, window_bounds = array<i64: 1, 16>}, {pipeline_mode = #tpu.pipeline_mode<synchronous>, transform_indices = @transform_3, window_bounds = array<i64: 16, 32>}, {pipeline_mode = #tpu.pipeline_mode<synchronous>, transform_indices = @transform_4, window_bounds = array<i64: 1, 32>}, {pipeline_mode = #tpu.pipeline_mode<synchronous>, transform_indices = @transform_5, window_bounds = array<i64: 2, 128, 16>}, {pipeline_mode = #tpu.pipeline_mode<synchronous>, transform_indices = @transform_6, window_bounds = array<i64: 128, 16>}, {pipeline_mode = #tpu.pipeline_mode<synchronous>, transform_indices = @transform_7, window_bounds = array<i64: 16, 16>}, {pipeline_mode = #tpu.pipeline_mode<synchronous>, transform_indices = @transform_8, window_bounds = array<i64: 1, 16>}, {pipeline_mode = #tpu.pipeline_mode<synchronous>, transform_indices = @transform_9, window_bounds = array<i64: 1, 16>}, {pipeline_mode = #tpu.pipeline_mode<synchronous>, transform_indices = @transform_10, window_bounds = array<i64: 1, 16>}, {pipeline_mode = #tpu.pipeline_mode<synchronous>, transform_indices = @transform_11, window_bounds = array<i64: 16, 32>}, {pipeline_mode = #tpu.pipeline_mode<synchronous>, transform_indices = @transform_12, window_bounds = array<i64: 1, 32>}, {pipeline_mode = #tpu.pipeline_mode<synchronous>, transform_indices = @transform_13, window_bounds = array<i64: 2, 128, 128>}, {pipeline_mode = #tpu.pipeline_mode<synchronous>, transform_indices = @transform_14, window_bounds = array<i64: 128, 16>}, {pipeline_mode = #tpu.pipeline_mode<synchronous>, transform_indices = @transform_15, window_bounds = array<i64: 16, 16>}, {pipeline_mode = #tpu.pipeline_mode<synchronous>, transform_indices = @transform_16, window_bounds = array<i64: 1, 16>}, {transform_indices = @transform_17, window_bounds = array<i64: 128, 16>}]} {
    %c0 = arith.constant 0 : index
    %c0_0 = arith.constant 0 : index
    %0 = vector.load %arg1[%c0, %c0_0] : memref<128x16xf32, #tpu.memory_space<vmem>>, vector<128x16xf32>
    %c0_1 = arith.constant 0 : index
    %c0_2 = arith.constant 0 : index
    %1 = vector.load %arg2[%c0_1, %c0_2] : memref<1x16xf32, #tpu.memory_space<vmem>>, vector<1x16xf32>
    %c0_3 = arith.constant 0 : index
    %c0_4 = arith.constant 0 : index
    %2 = vector.load %arg3[%c0_3, %c0_4] : memref<1x16xf32, #tpu.memory_space<vmem>>, vector<1x16xf32>
    %cst = arith.constant dense<0.000000e+00> : vector<128xf32>
    %3 = vector.multi_reduction <add>, %0, %cst [1] : vector<128x16xf32> to vector<128xf32>
    %4 = vector.shape_cast %3 : vector<128xf32> to vector<128x1xf32>
    %cst_5 = arith.constant 1.600000e+01 : f32
    %5 = vector.broadcast %cst_5 : f32 to vector<128x1xf32>
    %6 = arith.divf %4, %5 : vector<128x1xf32>
    %7 = vector.broadcast %6 : vector<128x1xf32> to vector<128x16xf32>
    %8 = arith.subf %0, %7 : vector<128x16xf32>
    %9 = arith.mulf %8, %8 : vector<128x16xf32>
    %cst_6 = arith.constant dense<0.000000e+00> : vector<128xf32>
    %10 = vector.multi_reduction <add>, %9, %cst_6 [1] : vector<128x16xf32> to vector<128xf32>
    %11 = vector.shape_cast %10 : vector<128xf32> to vector<128x1xf32>
    %cst_7 = arith.constant 1.600000e+01 : f32
    %12 = vector.broadcast %cst_7 : f32 to vector<128x1xf32>
    %13 = arith.divf %11, %12 : vector<128x1xf32>
    %14 = vector.broadcast %6 : vector<128x1xf32> to vector<128x16xf32>
    %15 = arith.subf %0, %14 : vector<128x16xf32>
    %cst_8 = arith.constant 9.99999974E-6 : f32
    %16 = vector.broadcast %cst_8 : f32 to vector<128x1xf32>
    %17 = arith.addf %13, %16 : vector<128x1xf32>
    %18 = math.rsqrt %17 : vector<128x1xf32>
    %19 = vector.broadcast %18 : vector<128x1xf32> to vector<128x16xf32>
    %20 = arith.mulf %15, %19 : vector<128x16xf32>
    %21 = vector.broadcast %1 : vector<1x16xf32> to vector<128x16xf32>
    %22 = arith.mulf %20, %21 : vector<128x16xf32>
    %23 = vector.broadcast %2 : vector<1x16xf32> to vector<128x16xf32>
    %24 = arith.addf %22, %23 : vector<128x16xf32>
    %25 = arith.truncf %24 : vector<128x16xf32> to vector<128x16xbf16>
    %c0_9 = arith.constant 0 : index
    %c0_10 = arith.constant 0 : index
    %26 = vector.load %arg4[%c0_9, %c0_10] : memref<16x32xbf16, #tpu.memory_space<vmem>>, vector<16x32xbf16>
    %cst_11 = arith.constant dense<0.000000e+00> : vector<128x32xf32>
    %27 = tpu.matmul %25, %26, %cst_11 {dimension_numbers = #tpu.dot_dimension_numbers<[1], [0], [0], [1], [0, 0, 1, 1], [], []>} : vector<128x16xbf16>, vector<16x32xbf16>, vector<128x32xf32> -> vector<128x32xf32>
    %c0_12 = arith.constant 0 : index
    %c0_13 = arith.constant 0 : index
    %28 = vector.load %arg5[%c0_12, %c0_13] : memref<1x32xf32, #tpu.memory_space<vmem>>, vector<1x32xf32>
    %29 = vector.broadcast %28 : vector<1x32xf32> to vector<128x32xf32>
    %30 = arith.addf %27, %29 : vector<128x32xf32>
    %cst_14 = arith.constant 5.000000e-01 : f32
    %31 = vector.broadcast %cst_14 : f32 to vector<128x32xf32>
    %32 = arith.mulf %31, %30 : vector<128x32xf32>
    %cst_15 = arith.constant 0.707106769 : f32
    %33 = vector.broadcast %cst_15 : f32 to vector<128x32xf32>
    %34 = arith.mulf %30, %33 : vector<128x32xf32>
    %35 = math.absf %34 : vector<128x32xf32>
    %cst_16 = arith.constant 0.327591091 : f32
    %36 = vector.broadcast %cst_16 : f32 to vector<128x32xf32>
    %37 = arith.mulf %36, %35 : vector<128x32xf32>
    %cst_17 = arith.constant 1.000000e+00 : f32
    %38 = vector.broadcast %cst_17 : f32 to vector<128x32xf32>
    %39 = arith.addf %38, %37 : vector<128x32xf32>
    %cst_18 = arith.constant 1.000000e+00 : f32
    %40 = vector.broadcast %cst_18 : f32 to vector<128x32xf32>
    %41 = arith.divf %40, %39 : vector<128x32xf32>
    %cst_19 = arith.constant 1.06140542 : f32
    %42 = vector.broadcast %cst_19 : f32 to vector<128x32xf32>
    %43 = arith.mulf %42, %41 : vector<128x32xf32>
    %cst_20 = arith.constant -1.45315206 : f32
    %44 = vector.broadcast %cst_20 : f32 to vector<128x32xf32>
    %45 = arith.addf %43, %44 : vector<128x32xf32>
    %46 = arith.mulf %45, %41 : vector<128x32xf32>
    %cst_21 = arith.constant 1.42141378 : f32
    %47 = vector.broadcast %cst_21 : f32 to vector<128x32xf32>
    %48 = arith.addf %46, %47 : vector<128x32xf32>
    %49 = arith.mulf %48, %41 : vector<128x32xf32>
    %cst_22 = arith.constant -0.284496725 : f32
    %50 = vector.broadcast %cst_22 : f32 to vector<128x32xf32>
    %51 = arith.addf %49, %50 : vector<128x32xf32>
    %52 = arith.mulf %51, %41 : vector<128x32xf32>
    %cst_23 = arith.constant 0.254829586 : f32
    %53 = vector.broadcast %cst_23 : f32 to vector<128x32xf32>
    %54 = arith.addf %52, %53 : vector<128x32xf32>
    %55 = arith.mulf %54, %41 : vector<128x32xf32>
    %cst_24 = arith.constant 0.000000e+00 : f32
    %56 = vector.broadcast %cst_24 : f32 to vector<128x32xf32>
    %57 = arith.subf %56, %35 : vector<128x32xf32>
    %58 = arith.mulf %57, %35 : vector<128x32xf32>
    %59 = math.exp %58 : vector<128x32xf32>
    %60 = arith.mulf %55, %59 : vector<128x32xf32>
    %cst_25 = arith.constant 1.000000e+00 : f32
    %61 = vector.broadcast %cst_25 : f32 to vector<128x32xf32>
    %62 = arith.subf %61, %60 : vector<128x32xf32>
    %cst_26 = arith.constant 0.000000e+00 : f32
    %63 = vector.broadcast %cst_26 : f32 to vector<128x32xf32>
    %64 = arith.cmpf oge, %34, %63 : vector<128x32xf32>
    %cst_27 = arith.constant 0.000000e+00 : f32
    %65 = vector.broadcast %cst_27 : f32 to vector<128x32xf32>
    %66 = arith.subf %65, %62 : vector<128x32xf32>
    %67 = arith.select %64, %62, %66 : vector<128x32xi1>, vector<128x32xf32>
    %cst_28 = arith.constant 1.000000e+00 : f32
    %68 = vector.broadcast %cst_28 : f32 to vector<128x32xf32>
    %69 = arith.addf %68, %67 : vector<128x32xf32>
    %70 = arith.mulf %32, %69 : vector<128x32xf32>
    %71 = vector.extract_strided_slice %70 {offsets = [0, 0], sizes = [128, 16], strides = [1, 1]} : vector<128x32xf32> to vector<128x16xf32>
    %72 = vector.extract_strided_slice %70 {offsets = [0, 16], sizes = [128, 16], strides = [1, 1]} : vector<128x32xf32> to vector<128x16xf32>
    %c0_29 = arith.constant 0 : index
    %c0_30 = arith.constant 0 : index
    %c0_31 = arith.constant 0 : index
    %73 = vector.load %arg6[%c0_29, %c0_30, %c0_31] : memref<2x128x16xf32, #tpu.memory_space<vmem>>, vector<1x128x16xf32>
    %74 = vector.shape_cast %73 : vector<1x128x16xf32> to vector<128x16xf32>
    %75 = arith.mulf %74, %71 : vector<128x16xf32>
    %c1 = arith.constant 1 : index
    %c0_32 = arith.constant 0 : index
    %c0_33 = arith.constant 0 : index
    %76 = vector.load %arg6[%c1, %c0_32, %c0_33] : memref<2x128x16xf32, #tpu.memory_space<vmem>>, vector<1x128x16xf32>
    %77 = vector.shape_cast %76 : vector<1x128x16xf32> to vector<128x16xf32>
    %c64_i32 = arith.constant 64 : i32
    %78 = tpu.dynamic_rotate %71 by %c64_i32 dim 0 : vector<128x16xf32>, i32 -> vector<128x16xf32>
    %79 = arith.mulf %77, %78 : vector<128x16xf32>
    %80 = arith.addf %75, %79 : vector<128x16xf32>
    %c0_34 = arith.constant 0 : index
    %c0_35 = arith.constant 0 : index
    %81 = vector.load %arg7[%c0_34, %c0_35] : memref<128x16xf32, #tpu.memory_space<vmem>>, vector<128x16xf32>
    %82 = arith.addf %80, %81 : vector<128x16xf32>
    %83 = arith.mulf %82, %72 : vector<128x16xf32>
    %84 = arith.truncf %83 : vector<128x16xf32> to vector<128x16xbf16>
    %c0_36 = arith.constant 0 : index
    %c0_37 = arith.constant 0 : index
    %85 = vector.load %arg8[%c0_36, %c0_37] : memref<16x16xbf16, #tpu.memory_space<vmem>>, vector<16x16xbf16>
    %cst_38 = arith.constant dense<0.000000e+00> : vector<128x16xf32>
    %86 = tpu.matmul %84, %85, %cst_38 {dimension_numbers = #tpu.dot_dimension_numbers<[1], [0], [0], [1], [0, 0, 1, 1], [], []>} : vector<128x16xbf16>, vector<16x16xbf16>, vector<128x16xf32> -> vector<128x16xf32>
    %c0_39 = arith.constant 0 : index
    %c0_40 = arith.constant 0 : index
    %87 = vector.load %arg9[%c0_39, %c0_40] : memref<1x16xf32, #tpu.memory_space<vmem>>, vector<1x16xf32>
    %88 = vector.broadcast %87 : vector<1x16xf32> to vector<128x16xf32>
    %89 = arith.addf %86, %88 : vector<128x16xf32>
    %c0_41 = arith.constant 0 : index
    %c0_42 = arith.constant 0 : index
    %90 = vector.load %arg10[%c0_41, %c0_42] : memref<1x16xf32, #tpu.memory_space<vmem>>, vector<1x16xf32>
    %c0_43 = arith.constant 0 : index
    %c0_44 = arith.constant 0 : index
    %91 = vector.load %arg11[%c0_43, %c0_44] : memref<1x16xf32, #tpu.memory_space<vmem>>, vector<1x16xf32>
    %cst_45 = arith.constant dense<0.000000e+00> : vector<128xf32>
    %92 = vector.multi_reduction <add>, %0, %cst_45 [1] : vector<128x16xf32> to vector<128xf32>
    %93 = vector.shape_cast %92 : vector<128xf32> to vector<128x1xf32>
    %cst_46 = arith.constant 1.600000e+01 : f32
    %94 = vector.broadcast %cst_46 : f32 to vector<128x1xf32>
    %95 = arith.divf %93, %94 : vector<128x1xf32>
    %96 = vector.broadcast %95 : vector<128x1xf32> to vector<128x16xf32>
    %97 = arith.subf %0, %96 : vector<128x16xf32>
    %98 = arith.mulf %97, %97 : vector<128x16xf32>
    %cst_47 = arith.constant dense<0.000000e+00> : vector<128xf32>
    %99 = vector.multi_reduction <add>, %98, %cst_47 [1] : vector<128x16xf32> to vector<128xf32>
    %100 = vector.shape_cast %99 : vector<128xf32> to vector<128x1xf32>
    %cst_48 = arith.constant 1.600000e+01 : f32
    %101 = vector.broadcast %cst_48 : f32 to vector<128x1xf32>
    %102 = arith.divf %100, %101 : vector<128x1xf32>
    %103 = vector.broadcast %95 : vector<128x1xf32> to vector<128x16xf32>
    %104 = arith.subf %0, %103 : vector<128x16xf32>
    %cst_49 = arith.constant 9.99999974E-6 : f32
    %105 = vector.broadcast %cst_49 : f32 to vector<128x1xf32>
    %106 = arith.addf %102, %105 : vector<128x1xf32>
    %107 = math.rsqrt %106 : vector<128x1xf32>
    %108 = vector.broadcast %107 : vector<128x1xf32> to vector<128x16xf32>
    %109 = arith.mulf %104, %108 : vector<128x16xf32>
    %110 = vector.broadcast %90 : vector<1x16xf32> to vector<128x16xf32>
    %111 = arith.mulf %109, %110 : vector<128x16xf32>
    %112 = vector.broadcast %91 : vector<1x16xf32> to vector<128x16xf32>
    %113 = arith.addf %111, %112 : vector<128x16xf32>
    %114 = arith.truncf %113 : vector<128x16xf32> to vector<128x16xbf16>
    %c0_50 = arith.constant 0 : index
    %c0_51 = arith.constant 0 : index
    %115 = vector.load %arg12[%c0_50, %c0_51] : memref<16x32xbf16, #tpu.memory_space<vmem>>, vector<16x32xbf16>
    %cst_52 = arith.constant dense<0.000000e+00> : vector<128x32xf32>
    %116 = tpu.matmul %114, %115, %cst_52 {dimension_numbers = #tpu.dot_dimension_numbers<[1], [0], [0], [1], [0, 0, 1, 1], [], []>} : vector<128x16xbf16>, vector<16x32xbf16>, vector<128x32xf32> -> vector<128x32xf32>
    %c0_53 = arith.constant 0 : index
    %c0_54 = arith.constant 0 : index
    %117 = vector.load %arg13[%c0_53, %c0_54] : memref<1x32xf32, #tpu.memory_space<vmem>>, vector<1x32xf32>
    %118 = vector.broadcast %117 : vector<1x32xf32> to vector<128x32xf32>
    %119 = arith.addf %116, %118 : vector<128x32xf32>
    %cst_55 = arith.constant 5.000000e-01 : f32
    %120 = vector.broadcast %cst_55 : f32 to vector<128x32xf32>
    %121 = arith.mulf %120, %119 : vector<128x32xf32>
    %cst_56 = arith.constant 0.707106769 : f32
    %122 = vector.broadcast %cst_56 : f32 to vector<128x32xf32>
    %123 = arith.mulf %119, %122 : vector<128x32xf32>
    %124 = math.absf %123 : vector<128x32xf32>
    %cst_57 = arith.constant 0.327591091 : f32
    %125 = vector.broadcast %cst_57 : f32 to vector<128x32xf32>
    %126 = arith.mulf %125, %124 : vector<128x32xf32>
    %cst_58 = arith.constant 1.000000e+00 : f32
    %127 = vector.broadcast %cst_58 : f32 to vector<128x32xf32>
    %128 = arith.addf %127, %126 : vector<128x32xf32>
    %cst_59 = arith.constant 1.000000e+00 : f32
    %129 = vector.broadcast %cst_59 : f32 to vector<128x32xf32>
    %130 = arith.divf %129, %128 : vector<128x32xf32>
    %cst_60 = arith.constant 1.06140542 : f32
    %131 = vector.broadcast %cst_60 : f32 to vector<128x32xf32>
    %132 = arith.mulf %131, %130 : vector<128x32xf32>
    %cst_61 = arith.constant -1.45315206 : f32
    %133 = vector.broadcast %cst_61 : f32 to vector<128x32xf32>
    %134 = arith.addf %132, %133 : vector<128x32xf32>
    %135 = arith.mulf %134, %130 : vector<128x32xf32>
    %cst_62 = arith.constant 1.42141378 : f32
    %136 = vector.broadcast %cst_62 : f32 to vector<128x32xf32>
    %137 = arith.addf %135, %136 : vector<128x32xf32>
    %138 = arith.mulf %137, %130 : vector<128x32xf32>
    %cst_63 = arith.constant -0.284496725 : f32
    %139 = vector.broadcast %cst_63 : f32 to vector<128x32xf32>
    %140 = arith.addf %138, %139 : vector<128x32xf32>
    %141 = arith.mulf %140, %130 : vector<128x32xf32>
    %cst_64 = arith.constant 0.254829586 : f32
    %142 = vector.broadcast %cst_64 : f32 to vector<128x32xf32>
    %143 = arith.addf %141, %142 : vector<128x32xf32>
    %144 = arith.mulf %143, %130 : vector<128x32xf32>
    %cst_65 = arith.constant 0.000000e+00 : f32
    %145 = vector.broadcast %cst_65 : f32 to vector<128x32xf32>
    %146 = arith.subf %145, %124 : vector<128x32xf32>
    %147 = arith.mulf %146, %124 : vector<128x32xf32>
    %148 = math.exp %147 : vector<128x32xf32>
    %149 = arith.mulf %144, %148 : vector<128x32xf32>
    %cst_66 = arith.constant 1.000000e+00 : f32
    %150 = vector.broadcast %cst_66 : f32 to vector<128x32xf32>
    %151 = arith.subf %150, %149 : vector<128x32xf32>
    %cst_67 = arith.constant 0.000000e+00 : f32
    %152 = vector.broadcast %cst_67 : f32 to vector<128x32xf32>
    %153 = arith.cmpf oge, %123, %152 : vector<128x32xf32>
    %cst_68 = arith.constant 0.000000e+00 : f32
    %154 = vector.broadcast %cst_68 : f32 to vector<128x32xf32>
    %155 = arith.subf %154, %151 : vector<128x32xf32>
    %156 = arith.select %153, %151, %155 : vector<128x32xi1>, vector<128x32xf32>
    %cst_69 = arith.constant 1.000000e+00 : f32
    %157 = vector.broadcast %cst_69 : f32 to vector<128x32xf32>
    %158 = arith.addf %157, %156 : vector<128x32xf32>
    %159 = arith.mulf %121, %158 : vector<128x32xf32>
    %160 = vector.extract_strided_slice %159 {offsets = [0, 0], sizes = [128, 16], strides = [1, 1]} : vector<128x32xf32> to vector<128x16xf32>
    %161 = vector.extract_strided_slice %159 {offsets = [0, 16], sizes = [128, 16], strides = [1, 1]} : vector<128x32xf32> to vector<128x16xf32>
    %c0_70 = arith.constant 0 : index
    %c0_71 = arith.constant 0 : index
    %c0_72 = arith.constant 0 : index
    %162 = vector.load %arg14[%c0_70, %c0_71, %c0_72] : memref<2x128x128xbf16, #tpu.memory_space<vmem>>, vector<1x128x128xbf16>
    %163 = vector.shape_cast %162 : vector<1x128x128xbf16> to vector<128x128xbf16>
    %164 = vector.extract_strided_slice %160 {offsets = [0, 0], sizes = [128, 8], strides = [1, 1]} : vector<128x16xf32> to vector<128x8xf32>
    %165 = arith.truncf %164 : vector<128x8xf32> to vector<128x8xbf16>
    %cst_73 = arith.constant dense<0.000000e+00> : vector<128x8xf32>
    %166 = tpu.matmul %163, %165, %cst_73 {dimension_numbers = #tpu.dot_dimension_numbers<[1], [0], [0], [1], [0, 0, 1, 1], [], []>} : vector<128x128xbf16>, vector<128x8xbf16>, vector<128x8xf32> -> vector<128x8xf32>
    %c0_74 = arith.constant 0 : index
    %c0_75 = arith.constant 0 : index
    %167 = vector.load %arg19[%c0_74, %c0_75] : memref<128x16xf32, #tpu.memory_space<vmem>>, vector<128x8xf32>
    tpu.vector_store %arg19[%c0_74, %c0_75], %166 {strides = array<i32>} : memref<128x16xf32, #tpu.memory_space<vmem>>, vector<128x8xf32>,
    %c1_76 = arith.constant 1 : index
    %c0_77 = arith.constant 0 : index
    %c0_78 = arith.constant 0 : index
    %168 = vector.load %arg14[%c1_76, %c0_77, %c0_78] : memref<2x128x128xbf16, #tpu.memory_space<vmem>>, vector<1x128x128xbf16>
    %169 = vector.shape_cast %168 : vector<1x128x128xbf16> to vector<128x128xbf16>
    %170 = vector.extract_strided_slice %160 {offsets = [0, 8], sizes = [128, 8], strides = [1, 1]} : vector<128x16xf32> to vector<128x8xf32>
    %171 = arith.truncf %170 : vector<128x8xf32> to vector<128x8xbf16>
    %cst_79 = arith.constant dense<0.000000e+00> : vector<128x8xf32>
    %172 = tpu.matmul %169, %171, %cst_79 {dimension_numbers = #tpu.dot_dimension_numbers<[1], [0], [0], [1], [0, 0, 1, 1], [], []>} : vector<128x128xbf16>, vector<128x8xbf16>, vector<128x8xf32> -> vector<128x8xf32>
    %c0_80 = arith.constant 0 : index
    %c8 = arith.constant 8 : index
    %173 = vector.load %arg19[%c0_80, %c8] : memref<128x16xf32, #tpu.memory_space<vmem>>, vector<128x8xf32>
    tpu.vector_store %arg19[%c0_80, %c8], %172 {strides = array<i32>} : memref<128x16xf32, #tpu.memory_space<vmem>>, vector<128x8xf32>,
    %c0_81 = arith.constant 0 : index
    %c0_82 = arith.constant 0 : index
    %174 = vector.load %arg19[%c0_81, %c0_82] : memref<128x16xf32, #tpu.memory_space<vmem>>, vector<128x16xf32>
    %c0_83 = arith.constant 0 : index
    %c0_84 = arith.constant 0 : index
    %175 = vector.load %arg15[%c0_83, %c0_84] : memref<128x16xf32, #tpu.memory_space<vmem>>, vector<128x16xf32>
    %176 = arith.addf %174, %175 : vector<128x16xf32>
    %177 = arith.mulf %176, %161 : vector<128x16xf32>
    %178 = arith.truncf %177 : vector<128x16xf32> to vector<128x16xbf16>
    %c0_85 = arith.constant 0 : index
    %c0_86 = arith.constant 0 : index
    %179 = vector.load %arg16[%c0_85, %c0_86] : memref<16x16xbf16, #tpu.memory_space<vmem>>, vector<16x16xbf16>
    %cst_87 = arith.constant dense<0.000000e+00> : vector<128x16xf32>
    %180 = tpu.matmul %178, %179, %cst_87 {dimension_numbers = #tpu.dot_dimension_numbers<[1], [0], [0], [1], [0, 0, 1, 1], [], []>} : vector<128x16xbf16>, vector<16x16xbf16>, vector<128x16xf32> -> vector<128x16xf32>
    %c0_88 = arith.constant 0 : index
    %c0_89 = arith.constant 0 : index
    %181 = vector.load %arg17[%c0_88, %c0_89] : memref<1x16xf32, #tpu.memory_space<vmem>>, vector<1x16xf32>
    %182 = vector.broadcast %181 : vector<1x16xf32> to vector<128x16xf32>
    %183 = arith.addf %180, %182 : vector<128x16xf32>
    %184 = arith.addf %0, %89 : vector<128x16xf32>
    %185 = arith.addf %184, %183 : vector<128x16xf32>
    %c0_90 = arith.constant 0 : index
    %c0_91 = arith.constant 0 : index
    %186 = vector.load %arg18[%c0_90, %c0_91] : memref<128x16xf32, #tpu.memory_space<vmem>>, vector<128x16xf32>
    tpu.vector_store %arg18[%c0_90, %c0_91], %185 {strides = array<i32>} : memref<128x16xf32, #tpu.memory_space<vmem>>, vector<128x16xf32>,
    return
  }
  func.func @transform_0(%arg0: i32) -> (i32, i32) {
    %c0_i32 = arith.constant 0 : i32
    %c0_i32_0 = arith.constant 0 : i32
    return %arg0, %c0_i32 : i32, i32
  }
  func.func @transform_1(%arg0: i32) -> (i32, i32) {
    %c0_i32 = arith.constant 0 : i32
    %c0_i32_0 = arith.constant 0 : i32
    %c0_i32_1 = arith.constant 0 : i32
    return %c0_i32, %c0_i32_0 : i32, i32
  }
  func.func @transform_2(%arg0: i32) -> (i32, i32) {
    %c0_i32 = arith.constant 0 : i32
    %c0_i32_0 = arith.constant 0 : i32
    %c0_i32_1 = arith.constant 0 : i32
    return %c0_i32, %c0_i32_0 : i32, i32
  }
  func.func @transform_3(%arg0: i32) -> (i32, i32) {
    %c0_i32 = arith.constant 0 : i32
    %c0_i32_0 = arith.constant 0 : i32
    %c0_i32_1 = arith.constant 0 : i32
    return %c0_i32, %c0_i32_0 : i32, i32
  }
  func.func @transform_4(%arg0: i32) -> (i32, i32) {
    %c0_i32 = arith.constant 0 : i32
    %c0_i32_0 = arith.constant 0 : i32
    %c0_i32_1 = arith.constant 0 : i32
    return %c0_i32, %c0_i32_0 : i32, i32
  }
  func.func @transform_5(%arg0: i32) -> (i32, i32, i32) {
    %c0_i32 = arith.constant 0 : i32
    %c0_i32_0 = arith.constant 0 : i32
    %c0_i32_1 = arith.constant 0 : i32
    %c0_i32_2 = arith.constant 0 : i32
    return %c0_i32, %c0_i32_0, %c0_i32_1 : i32, i32, i32
  }
  func.func @transform_6(%arg0: i32) -> (i32, i32) {
    %c0_i32 = arith.constant 0 : i32
    %c0_i32_0 = arith.constant 0 : i32
    %c0_i32_1 = arith.constant 0 : i32
    return %c0_i32, %c0_i32_0 : i32, i32
  }
  func.func @transform_7(%arg0: i32) -> (i32, i32) {
    %c0_i32 = arith.constant 0 : i32
    %c0_i32_0 = arith.constant 0 : i32
    %c0_i32_1 = arith.constant 0 : i32
    return %c0_i32, %c0_i32_0 : i32, i32
  }
  func.func @transform_8(%arg0: i32) -> (i32, i32) {
    %c0_i32 = arith.constant 0 : i32
    %c0_i32_0 = arith.constant 0 : i32
    %c0_i32_1 = arith.constant 0 : i32
    return %c0_i32, %c0_i32_0 : i32, i32
  }
  func.func @transform_9(%arg0: i32) -> (i32, i32) {
    %c0_i32 = arith.constant 0 : i32
    %c0_i32_0 = arith.constant 0 : i32
    %c0_i32_1 = arith.constant 0 : i32
    return %c0_i32, %c0_i32_0 : i32, i32
  }
  func.func @transform_10(%arg0: i32) -> (i32, i32) {
    %c0_i32 = arith.constant 0 : i32
    %c0_i32_0 = arith.constant 0 : i32
    %c0_i32_1 = arith.constant 0 : i32
    return %c0_i32, %c0_i32_0 : i32, i32
  }
  func.func @transform_11(%arg0: i32) -> (i32, i32) {
    %c0_i32 = arith.constant 0 : i32
    %c0_i32_0 = arith.constant 0 : i32
    %c0_i32_1 = arith.constant 0 : i32
    return %c0_i32, %c0_i32_0 : i32, i32
  }
  func.func @transform_12(%arg0: i32) -> (i32, i32) {
    %c0_i32 = arith.constant 0 : i32
    %c0_i32_0 = arith.constant 0 : i32
    %c0_i32_1 = arith.constant 0 : i32
    return %c0_i32, %c0_i32_0 : i32, i32
  }
  func.func @transform_13(%arg0: i32) -> (i32, i32, i32) {
    %c0_i32 = arith.constant 0 : i32
    %c0_i32_0 = arith.constant 0 : i32
    %c0_i32_1 = arith.constant 0 : i32
    %c0_i32_2 = arith.constant 0 : i32
    return %c0_i32, %c0_i32_0, %c0_i32_1 : i32, i32, i32
  }
  func.func @transform_14(%arg0: i32) -> (i32, i32) {
    %c0_i32 = arith.constant 0 : i32
    %c0_i32_0 = arith.constant 0 : i32
    %c0_i32_1 = arith.constant 0 : i32
    return %c0_i32, %c0_i32_0 : i32, i32
  }
  func.func @transform_15(%arg0: i32) -> (i32, i32) {
    %c0_i32 = arith.constant 0 : i32
    %c0_i32_0 = arith.constant 0 : i32
    %c0_i32_1 = arith.constant 0 : i32
    return %c0_i32, %c0_i32_0 : i32, i32
  }
  func.func @transform_16(%arg0: i32) -> (i32, i32) {
    %c0_i32 = arith.constant 0 : i32
    %c0_i32_0 = arith.constant 0 : i32
    %c0_i32_1 = arith.constant 0 : i32
    return %c0_i32, %c0_i32_0 : i32, i32
  }
  func.func @transform_17(%arg0: i32) -> (i32, i32) {
    %c0_i32 = arith.constant 0 : i32
    %c0_i32_0 = arith.constant 0 : i32
    return %arg0, %c0_i32 : i32, i32
  }
}

module attributes {stable_mosaic.version = 11 : i64} {
  func.func @_block_kernel(%arg0: i32, %arg1: memref<32x32xf32, #tpu.memory_space<vmem>>, %arg2: memref<1x32xf32, #tpu.memory_space<vmem>>, %arg3: memref<1x32xf32, #tpu.memory_space<vmem>>, %arg4: memref<32x64xbf16, #tpu.memory_space<vmem>>, %arg5: memref<1x64xf32, #tpu.memory_space<vmem>>, %arg6: memref<2x32x32xf32, #tpu.memory_space<vmem>>, %arg7: memref<32x32xf32, #tpu.memory_space<vmem>>, %arg8: memref<32x32xbf16, #tpu.memory_space<vmem>>, %arg9: memref<1x32xf32, #tpu.memory_space<vmem>>, %arg10: memref<1x32xf32, #tpu.memory_space<vmem>>, %arg11: memref<1x32xf32, #tpu.memory_space<vmem>>, %arg12: memref<32x64xbf16, #tpu.memory_space<vmem>>, %arg13: memref<1x64xf32, #tpu.memory_space<vmem>>, %arg14: memref<4x32x32xbf16, #tpu.memory_space<vmem>>, %arg15: memref<32x32xf32, #tpu.memory_space<vmem>>, %arg16: memref<32x32xbf16, #tpu.memory_space<vmem>>, %arg17: memref<1x32xf32, #tpu.memory_space<vmem>>, %arg18: memref<32x32xf32, #tpu.memory_space<vmem>>, %arg19: memref<32x32xf32, #tpu.memory_space<vmem>>) attributes {dimension_semantics = [#tpu.dimension_semantics<parallel>], iteration_bounds = array<i64: 2>, scalar_prefetch = 0 : i64, scratch_operands = 1 : i64, tpu.core_type = #tpu.core_type<tc>, window_params = [{transform_indices = @transform_0, window_bounds = array<i64: 32, 32>}, {pipeline_mode = #tpu.pipeline_mode<synchronous>, transform_indices = @transform_1, window_bounds = array<i64: 1, 32>}, {pipeline_mode = #tpu.pipeline_mode<synchronous>, transform_indices = @transform_2, window_bounds = array<i64: 1, 32>}, {pipeline_mode = #tpu.pipeline_mode<synchronous>, transform_indices = @transform_3, window_bounds = array<i64: 32, 64>}, {pipeline_mode = #tpu.pipeline_mode<synchronous>, transform_indices = @transform_4, window_bounds = array<i64: 1, 64>}, {pipeline_mode = #tpu.pipeline_mode<synchronous>, transform_indices = @transform_5, window_bounds = array<i64: 2, 32, 32>}, {pipeline_mode = #tpu.pipeline_mode<synchronous>, transform_indices = @transform_6, window_bounds = array<i64: 32, 32>}, {pipeline_mode = #tpu.pipeline_mode<synchronous>, transform_indices = @transform_7, window_bounds = array<i64: 32, 32>}, {pipeline_mode = #tpu.pipeline_mode<synchronous>, transform_indices = @transform_8, window_bounds = array<i64: 1, 32>}, {pipeline_mode = #tpu.pipeline_mode<synchronous>, transform_indices = @transform_9, window_bounds = array<i64: 1, 32>}, {pipeline_mode = #tpu.pipeline_mode<synchronous>, transform_indices = @transform_10, window_bounds = array<i64: 1, 32>}, {pipeline_mode = #tpu.pipeline_mode<synchronous>, transform_indices = @transform_11, window_bounds = array<i64: 32, 64>}, {pipeline_mode = #tpu.pipeline_mode<synchronous>, transform_indices = @transform_12, window_bounds = array<i64: 1, 64>}, {pipeline_mode = #tpu.pipeline_mode<synchronous>, transform_indices = @transform_13, window_bounds = array<i64: 4, 32, 32>}, {pipeline_mode = #tpu.pipeline_mode<synchronous>, transform_indices = @transform_14, window_bounds = array<i64: 32, 32>}, {pipeline_mode = #tpu.pipeline_mode<synchronous>, transform_indices = @transform_15, window_bounds = array<i64: 32, 32>}, {pipeline_mode = #tpu.pipeline_mode<synchronous>, transform_indices = @transform_16, window_bounds = array<i64: 1, 32>}, {transform_indices = @transform_17, window_bounds = array<i64: 32, 32>}]} {
    %c0 = arith.constant 0 : index
    %c0_0 = arith.constant 0 : index
    %0 = vector.load %arg1[%c0, %c0_0] : memref<32x32xf32, #tpu.memory_space<vmem>>, vector<32x32xf32>
    %c0_1 = arith.constant 0 : index
    %c0_2 = arith.constant 0 : index
    %1 = vector.load %arg2[%c0_1, %c0_2] : memref<1x32xf32, #tpu.memory_space<vmem>>, vector<1x32xf32>
    %c0_3 = arith.constant 0 : index
    %c0_4 = arith.constant 0 : index
    %2 = vector.load %arg3[%c0_3, %c0_4] : memref<1x32xf32, #tpu.memory_space<vmem>>, vector<1x32xf32>
    %cst = arith.constant dense<0.000000e+00> : vector<32xf32>
    %3 = vector.multi_reduction <add>, %0, %cst [1] : vector<32x32xf32> to vector<32xf32>
    %4 = vector.shape_cast %3 : vector<32xf32> to vector<32x1xf32>
    %cst_5 = arith.constant 3.200000e+01 : f32
    %5 = vector.broadcast %cst_5 : f32 to vector<32x1xf32>
    %6 = arith.divf %4, %5 : vector<32x1xf32>
    %7 = vector.broadcast %6 : vector<32x1xf32> to vector<32x32xf32>
    %8 = arith.subf %0, %7 : vector<32x32xf32>
    %9 = arith.mulf %8, %8 : vector<32x32xf32>
    %cst_6 = arith.constant dense<0.000000e+00> : vector<32xf32>
    %10 = vector.multi_reduction <add>, %9, %cst_6 [1] : vector<32x32xf32> to vector<32xf32>
    %11 = vector.shape_cast %10 : vector<32xf32> to vector<32x1xf32>
    %cst_7 = arith.constant 3.200000e+01 : f32
    %12 = vector.broadcast %cst_7 : f32 to vector<32x1xf32>
    %13 = arith.divf %11, %12 : vector<32x1xf32>
    %14 = vector.broadcast %6 : vector<32x1xf32> to vector<32x32xf32>
    %15 = arith.subf %0, %14 : vector<32x32xf32>
    %cst_8 = arith.constant 9.99999974E-6 : f32
    %16 = vector.broadcast %cst_8 : f32 to vector<32x1xf32>
    %17 = arith.addf %13, %16 : vector<32x1xf32>
    %18 = math.rsqrt %17 : vector<32x1xf32>
    %19 = vector.broadcast %18 : vector<32x1xf32> to vector<32x32xf32>
    %20 = arith.mulf %15, %19 : vector<32x32xf32>
    %21 = vector.broadcast %1 : vector<1x32xf32> to vector<32x32xf32>
    %22 = arith.mulf %20, %21 : vector<32x32xf32>
    %23 = vector.broadcast %2 : vector<1x32xf32> to vector<32x32xf32>
    %24 = arith.addf %22, %23 : vector<32x32xf32>
    %25 = arith.truncf %24 : vector<32x32xf32> to vector<32x32xbf16>
    %c0_9 = arith.constant 0 : index
    %c0_10 = arith.constant 0 : index
    %26 = vector.load %arg4[%c0_9, %c0_10] : memref<32x64xbf16, #tpu.memory_space<vmem>>, vector<32x64xbf16>
    %cst_11 = arith.constant dense<0.000000e+00> : vector<32x64xf32>
    %27 = tpu.matmul %25, %26, %cst_11 {dimension_numbers = #tpu.dot_dimension_numbers<[1], [0], [0], [1], [0, 0, 1, 1], [], []>} : vector<32x32xbf16>, vector<32x64xbf16>, vector<32x64xf32> -> vector<32x64xf32>
    %c0_12 = arith.constant 0 : index
    %c0_13 = arith.constant 0 : index
    %28 = vector.load %arg5[%c0_12, %c0_13] : memref<1x64xf32, #tpu.memory_space<vmem>>, vector<1x64xf32>
    %29 = vector.broadcast %28 : vector<1x64xf32> to vector<32x64xf32>
    %30 = arith.addf %27, %29 : vector<32x64xf32>
    %cst_14 = arith.constant 5.000000e-01 : f32
    %31 = vector.broadcast %cst_14 : f32 to vector<32x64xf32>
    %32 = arith.mulf %31, %30 : vector<32x64xf32>
    %cst_15 = arith.constant 0.707106769 : f32
    %33 = vector.broadcast %cst_15 : f32 to vector<32x64xf32>
    %34 = arith.mulf %30, %33 : vector<32x64xf32>
    %35 = math.absf %34 : vector<32x64xf32>
    %cst_16 = arith.constant 0.327591091 : f32
    %36 = vector.broadcast %cst_16 : f32 to vector<32x64xf32>
    %37 = arith.mulf %36, %35 : vector<32x64xf32>
    %cst_17 = arith.constant 1.000000e+00 : f32
    %38 = vector.broadcast %cst_17 : f32 to vector<32x64xf32>
    %39 = arith.addf %38, %37 : vector<32x64xf32>
    %cst_18 = arith.constant 1.000000e+00 : f32
    %40 = vector.broadcast %cst_18 : f32 to vector<32x64xf32>
    %41 = arith.divf %40, %39 : vector<32x64xf32>
    %cst_19 = arith.constant 1.06140542 : f32
    %42 = vector.broadcast %cst_19 : f32 to vector<32x64xf32>
    %43 = arith.mulf %42, %41 : vector<32x64xf32>
    %cst_20 = arith.constant -1.45315206 : f32
    %44 = vector.broadcast %cst_20 : f32 to vector<32x64xf32>
    %45 = arith.addf %43, %44 : vector<32x64xf32>
    %46 = arith.mulf %45, %41 : vector<32x64xf32>
    %cst_21 = arith.constant 1.42141378 : f32
    %47 = vector.broadcast %cst_21 : f32 to vector<32x64xf32>
    %48 = arith.addf %46, %47 : vector<32x64xf32>
    %49 = arith.mulf %48, %41 : vector<32x64xf32>
    %cst_22 = arith.constant -0.284496725 : f32
    %50 = vector.broadcast %cst_22 : f32 to vector<32x64xf32>
    %51 = arith.addf %49, %50 : vector<32x64xf32>
    %52 = arith.mulf %51, %41 : vector<32x64xf32>
    %cst_23 = arith.constant 0.254829586 : f32
    %53 = vector.broadcast %cst_23 : f32 to vector<32x64xf32>
    %54 = arith.addf %52, %53 : vector<32x64xf32>
    %55 = arith.mulf %54, %41 : vector<32x64xf32>
    %cst_24 = arith.constant 0.000000e+00 : f32
    %56 = vector.broadcast %cst_24 : f32 to vector<32x64xf32>
    %57 = arith.subf %56, %35 : vector<32x64xf32>
    %58 = arith.mulf %57, %35 : vector<32x64xf32>
    %59 = math.exp %58 : vector<32x64xf32>
    %60 = arith.mulf %55, %59 : vector<32x64xf32>
    %cst_25 = arith.constant 1.000000e+00 : f32
    %61 = vector.broadcast %cst_25 : f32 to vector<32x64xf32>
    %62 = arith.subf %61, %60 : vector<32x64xf32>
    %cst_26 = arith.constant 0.000000e+00 : f32
    %63 = vector.broadcast %cst_26 : f32 to vector<32x64xf32>
    %64 = arith.cmpf oge, %34, %63 : vector<32x64xf32>
    %cst_27 = arith.constant 0.000000e+00 : f32
    %65 = vector.broadcast %cst_27 : f32 to vector<32x64xf32>
    %66 = arith.subf %65, %62 : vector<32x64xf32>
    %67 = arith.select %64, %62, %66 : vector<32x64xi1>, vector<32x64xf32>
    %cst_28 = arith.constant 1.000000e+00 : f32
    %68 = vector.broadcast %cst_28 : f32 to vector<32x64xf32>
    %69 = arith.addf %68, %67 : vector<32x64xf32>
    %70 = arith.mulf %32, %69 : vector<32x64xf32>
    %71 = vector.extract_strided_slice %70 {offsets = [0, 0], sizes = [32, 32], strides = [1, 1]} : vector<32x64xf32> to vector<32x32xf32>
    %72 = vector.extract_strided_slice %70 {offsets = [0, 32], sizes = [32, 32], strides = [1, 1]} : vector<32x64xf32> to vector<32x32xf32>
    %c0_29 = arith.constant 0 : index
    %c0_30 = arith.constant 0 : index
    %c0_31 = arith.constant 0 : index
    %73 = vector.load %arg6[%c0_29, %c0_30, %c0_31] : memref<2x32x32xf32, #tpu.memory_space<vmem>>, vector<1x32x32xf32>
    %74 = vector.shape_cast %73 : vector<1x32x32xf32> to vector<32x32xf32>
    %75 = arith.mulf %74, %71 : vector<32x32xf32>
    %c1 = arith.constant 1 : index
    %c0_32 = arith.constant 0 : index
    %c0_33 = arith.constant 0 : index
    %76 = vector.load %arg6[%c1, %c0_32, %c0_33] : memref<2x32x32xf32, #tpu.memory_space<vmem>>, vector<1x32x32xf32>
    %77 = vector.shape_cast %76 : vector<1x32x32xf32> to vector<32x32xf32>
    %c16_i32 = arith.constant 16 : i32
    %78 = tpu.dynamic_rotate %71 by %c16_i32 dim 0 : vector<32x32xf32>, i32 -> vector<32x32xf32>
    %79 = arith.mulf %77, %78 : vector<32x32xf32>
    %80 = arith.addf %75, %79 : vector<32x32xf32>
    %c0_34 = arith.constant 0 : index
    %c0_35 = arith.constant 0 : index
    %81 = vector.load %arg7[%c0_34, %c0_35] : memref<32x32xf32, #tpu.memory_space<vmem>>, vector<32x32xf32>
    %82 = arith.addf %80, %81 : vector<32x32xf32>
    %83 = arith.mulf %82, %72 : vector<32x32xf32>
    %84 = arith.truncf %83 : vector<32x32xf32> to vector<32x32xbf16>
    %c0_36 = arith.constant 0 : index
    %c0_37 = arith.constant 0 : index
    %85 = vector.load %arg8[%c0_36, %c0_37] : memref<32x32xbf16, #tpu.memory_space<vmem>>, vector<32x32xbf16>
    %cst_38 = arith.constant dense<0.000000e+00> : vector<32x32xf32>
    %86 = tpu.matmul %84, %85, %cst_38 {dimension_numbers = #tpu.dot_dimension_numbers<[1], [0], [0], [1], [0, 0, 1, 1], [], []>} : vector<32x32xbf16>, vector<32x32xbf16>, vector<32x32xf32> -> vector<32x32xf32>
    %c0_39 = arith.constant 0 : index
    %c0_40 = arith.constant 0 : index
    %87 = vector.load %arg9[%c0_39, %c0_40] : memref<1x32xf32, #tpu.memory_space<vmem>>, vector<1x32xf32>
    %88 = vector.broadcast %87 : vector<1x32xf32> to vector<32x32xf32>
    %89 = arith.addf %86, %88 : vector<32x32xf32>
    %c0_41 = arith.constant 0 : index
    %c0_42 = arith.constant 0 : index
    %90 = vector.load %arg10[%c0_41, %c0_42] : memref<1x32xf32, #tpu.memory_space<vmem>>, vector<1x32xf32>
    %c0_43 = arith.constant 0 : index
    %c0_44 = arith.constant 0 : index
    %91 = vector.load %arg11[%c0_43, %c0_44] : memref<1x32xf32, #tpu.memory_space<vmem>>, vector<1x32xf32>
    %cst_45 = arith.constant dense<0.000000e+00> : vector<32xf32>
    %92 = vector.multi_reduction <add>, %0, %cst_45 [1] : vector<32x32xf32> to vector<32xf32>
    %93 = vector.shape_cast %92 : vector<32xf32> to vector<32x1xf32>
    %cst_46 = arith.constant 3.200000e+01 : f32
    %94 = vector.broadcast %cst_46 : f32 to vector<32x1xf32>
    %95 = arith.divf %93, %94 : vector<32x1xf32>
    %96 = vector.broadcast %95 : vector<32x1xf32> to vector<32x32xf32>
    %97 = arith.subf %0, %96 : vector<32x32xf32>
    %98 = arith.mulf %97, %97 : vector<32x32xf32>
    %cst_47 = arith.constant dense<0.000000e+00> : vector<32xf32>
    %99 = vector.multi_reduction <add>, %98, %cst_47 [1] : vector<32x32xf32> to vector<32xf32>
    %100 = vector.shape_cast %99 : vector<32xf32> to vector<32x1xf32>
    %cst_48 = arith.constant 3.200000e+01 : f32
    %101 = vector.broadcast %cst_48 : f32 to vector<32x1xf32>
    %102 = arith.divf %100, %101 : vector<32x1xf32>
    %103 = vector.broadcast %95 : vector<32x1xf32> to vector<32x32xf32>
    %104 = arith.subf %0, %103 : vector<32x32xf32>
    %cst_49 = arith.constant 9.99999974E-6 : f32
    %105 = vector.broadcast %cst_49 : f32 to vector<32x1xf32>
    %106 = arith.addf %102, %105 : vector<32x1xf32>
    %107 = math.rsqrt %106 : vector<32x1xf32>
    %108 = vector.broadcast %107 : vector<32x1xf32> to vector<32x32xf32>
    %109 = arith.mulf %104, %108 : vector<32x32xf32>
    %110 = vector.broadcast %90 : vector<1x32xf32> to vector<32x32xf32>
    %111 = arith.mulf %109, %110 : vector<32x32xf32>
    %112 = vector.broadcast %91 : vector<1x32xf32> to vector<32x32xf32>
    %113 = arith.addf %111, %112 : vector<32x32xf32>
    %114 = arith.truncf %113 : vector<32x32xf32> to vector<32x32xbf16>
    %c0_50 = arith.constant 0 : index
    %c0_51 = arith.constant 0 : index
    %115 = vector.load %arg12[%c0_50, %c0_51] : memref<32x64xbf16, #tpu.memory_space<vmem>>, vector<32x64xbf16>
    %cst_52 = arith.constant dense<0.000000e+00> : vector<32x64xf32>
    %116 = tpu.matmul %114, %115, %cst_52 {dimension_numbers = #tpu.dot_dimension_numbers<[1], [0], [0], [1], [0, 0, 1, 1], [], []>} : vector<32x32xbf16>, vector<32x64xbf16>, vector<32x64xf32> -> vector<32x64xf32>
    %c0_53 = arith.constant 0 : index
    %c0_54 = arith.constant 0 : index
    %117 = vector.load %arg13[%c0_53, %c0_54] : memref<1x64xf32, #tpu.memory_space<vmem>>, vector<1x64xf32>
    %118 = vector.broadcast %117 : vector<1x64xf32> to vector<32x64xf32>
    %119 = arith.addf %116, %118 : vector<32x64xf32>
    %cst_55 = arith.constant 5.000000e-01 : f32
    %120 = vector.broadcast %cst_55 : f32 to vector<32x64xf32>
    %121 = arith.mulf %120, %119 : vector<32x64xf32>
    %cst_56 = arith.constant 0.707106769 : f32
    %122 = vector.broadcast %cst_56 : f32 to vector<32x64xf32>
    %123 = arith.mulf %119, %122 : vector<32x64xf32>
    %124 = math.absf %123 : vector<32x64xf32>
    %cst_57 = arith.constant 0.327591091 : f32
    %125 = vector.broadcast %cst_57 : f32 to vector<32x64xf32>
    %126 = arith.mulf %125, %124 : vector<32x64xf32>
    %cst_58 = arith.constant 1.000000e+00 : f32
    %127 = vector.broadcast %cst_58 : f32 to vector<32x64xf32>
    %128 = arith.addf %127, %126 : vector<32x64xf32>
    %cst_59 = arith.constant 1.000000e+00 : f32
    %129 = vector.broadcast %cst_59 : f32 to vector<32x64xf32>
    %130 = arith.divf %129, %128 : vector<32x64xf32>
    %cst_60 = arith.constant 1.06140542 : f32
    %131 = vector.broadcast %cst_60 : f32 to vector<32x64xf32>
    %132 = arith.mulf %131, %130 : vector<32x64xf32>
    %cst_61 = arith.constant -1.45315206 : f32
    %133 = vector.broadcast %cst_61 : f32 to vector<32x64xf32>
    %134 = arith.addf %132, %133 : vector<32x64xf32>
    %135 = arith.mulf %134, %130 : vector<32x64xf32>
    %cst_62 = arith.constant 1.42141378 : f32
    %136 = vector.broadcast %cst_62 : f32 to vector<32x64xf32>
    %137 = arith.addf %135, %136 : vector<32x64xf32>
    %138 = arith.mulf %137, %130 : vector<32x64xf32>
    %cst_63 = arith.constant -0.284496725 : f32
    %139 = vector.broadcast %cst_63 : f32 to vector<32x64xf32>
    %140 = arith.addf %138, %139 : vector<32x64xf32>
    %141 = arith.mulf %140, %130 : vector<32x64xf32>
    %cst_64 = arith.constant 0.254829586 : f32
    %142 = vector.broadcast %cst_64 : f32 to vector<32x64xf32>
    %143 = arith.addf %141, %142 : vector<32x64xf32>
    %144 = arith.mulf %143, %130 : vector<32x64xf32>
    %cst_65 = arith.constant 0.000000e+00 : f32
    %145 = vector.broadcast %cst_65 : f32 to vector<32x64xf32>
    %146 = arith.subf %145, %124 : vector<32x64xf32>
    %147 = arith.mulf %146, %124 : vector<32x64xf32>
    %148 = math.exp %147 : vector<32x64xf32>
    %149 = arith.mulf %144, %148 : vector<32x64xf32>
    %cst_66 = arith.constant 1.000000e+00 : f32
    %150 = vector.broadcast %cst_66 : f32 to vector<32x64xf32>
    %151 = arith.subf %150, %149 : vector<32x64xf32>
    %cst_67 = arith.constant 0.000000e+00 : f32
    %152 = vector.broadcast %cst_67 : f32 to vector<32x64xf32>
    %153 = arith.cmpf oge, %123, %152 : vector<32x64xf32>
    %cst_68 = arith.constant 0.000000e+00 : f32
    %154 = vector.broadcast %cst_68 : f32 to vector<32x64xf32>
    %155 = arith.subf %154, %151 : vector<32x64xf32>
    %156 = arith.select %153, %151, %155 : vector<32x64xi1>, vector<32x64xf32>
    %cst_69 = arith.constant 1.000000e+00 : f32
    %157 = vector.broadcast %cst_69 : f32 to vector<32x64xf32>
    %158 = arith.addf %157, %156 : vector<32x64xf32>
    %159 = arith.mulf %121, %158 : vector<32x64xf32>
    %160 = vector.extract_strided_slice %159 {offsets = [0, 0], sizes = [32, 32], strides = [1, 1]} : vector<32x64xf32> to vector<32x32xf32>
    %161 = vector.extract_strided_slice %159 {offsets = [0, 32], sizes = [32, 32], strides = [1, 1]} : vector<32x64xf32> to vector<32x32xf32>
    %c0_70 = arith.constant 0 : index
    %c0_71 = arith.constant 0 : index
    %c0_72 = arith.constant 0 : index
    %162 = vector.load %arg14[%c0_70, %c0_71, %c0_72] : memref<4x32x32xbf16, #tpu.memory_space<vmem>>, vector<1x32x32xbf16>
    %163 = vector.shape_cast %162 : vector<1x32x32xbf16> to vector<32x32xbf16>
    %164 = vector.extract_strided_slice %160 {offsets = [0, 0], sizes = [32, 8], strides = [1, 1]} : vector<32x32xf32> to vector<32x8xf32>
    %165 = arith.truncf %164 : vector<32x8xf32> to vector<32x8xbf16>
    %cst_73 = arith.constant dense<0.000000e+00> : vector<32x8xf32>
    %166 = tpu.matmul %163, %165, %cst_73 {dimension_numbers = #tpu.dot_dimension_numbers<[1], [0], [0], [1], [0, 0, 1, 1], [], []>} : vector<32x32xbf16>, vector<32x8xbf16>, vector<32x8xf32> -> vector<32x8xf32>
    %c0_74 = arith.constant 0 : index
    %c0_75 = arith.constant 0 : index
    %167 = vector.load %arg19[%c0_74, %c0_75] : memref<32x32xf32, #tpu.memory_space<vmem>>, vector<32x8xf32>
    tpu.vector_store %arg19[%c0_74, %c0_75], %166 {strides = array<i32>} : memref<32x32xf32, #tpu.memory_space<vmem>>, vector<32x8xf32>,
    %c1_76 = arith.constant 1 : index
    %c0_77 = arith.constant 0 : index
    %c0_78 = arith.constant 0 : index
    %168 = vector.load %arg14[%c1_76, %c0_77, %c0_78] : memref<4x32x32xbf16, #tpu.memory_space<vmem>>, vector<1x32x32xbf16>
    %169 = vector.shape_cast %168 : vector<1x32x32xbf16> to vector<32x32xbf16>
    %170 = vector.extract_strided_slice %160 {offsets = [0, 8], sizes = [32, 8], strides = [1, 1]} : vector<32x32xf32> to vector<32x8xf32>
    %171 = arith.truncf %170 : vector<32x8xf32> to vector<32x8xbf16>
    %cst_79 = arith.constant dense<0.000000e+00> : vector<32x8xf32>
    %172 = tpu.matmul %169, %171, %cst_79 {dimension_numbers = #tpu.dot_dimension_numbers<[1], [0], [0], [1], [0, 0, 1, 1], [], []>} : vector<32x32xbf16>, vector<32x8xbf16>, vector<32x8xf32> -> vector<32x8xf32>
    %c0_80 = arith.constant 0 : index
    %c8 = arith.constant 8 : index
    %173 = vector.load %arg19[%c0_80, %c8] : memref<32x32xf32, #tpu.memory_space<vmem>>, vector<32x8xf32>
    tpu.vector_store %arg19[%c0_80, %c8], %172 {strides = array<i32>} : memref<32x32xf32, #tpu.memory_space<vmem>>, vector<32x8xf32>,
    %c2 = arith.constant 2 : index
    %c0_81 = arith.constant 0 : index
    %c0_82 = arith.constant 0 : index
    %174 = vector.load %arg14[%c2, %c0_81, %c0_82] : memref<4x32x32xbf16, #tpu.memory_space<vmem>>, vector<1x32x32xbf16>
    %175 = vector.shape_cast %174 : vector<1x32x32xbf16> to vector<32x32xbf16>
    %176 = vector.extract_strided_slice %160 {offsets = [0, 16], sizes = [32, 8], strides = [1, 1]} : vector<32x32xf32> to vector<32x8xf32>
    %177 = arith.truncf %176 : vector<32x8xf32> to vector<32x8xbf16>
    %cst_83 = arith.constant dense<0.000000e+00> : vector<32x8xf32>
    %178 = tpu.matmul %175, %177, %cst_83 {dimension_numbers = #tpu.dot_dimension_numbers<[1], [0], [0], [1], [0, 0, 1, 1], [], []>} : vector<32x32xbf16>, vector<32x8xbf16>, vector<32x8xf32> -> vector<32x8xf32>
    %c0_84 = arith.constant 0 : index
    %c16 = arith.constant 16 : index
    %179 = vector.load %arg19[%c0_84, %c16] : memref<32x32xf32, #tpu.memory_space<vmem>>, vector<32x8xf32>
    tpu.vector_store %arg19[%c0_84, %c16], %178 {strides = array<i32>} : memref<32x32xf32, #tpu.memory_space<vmem>>, vector<32x8xf32>,
    %c3 = arith.constant 3 : index
    %c0_85 = arith.constant 0 : index
    %c0_86 = arith.constant 0 : index
    %180 = vector.load %arg14[%c3, %c0_85, %c0_86] : memref<4x32x32xbf16, #tpu.memory_space<vmem>>, vector<1x32x32xbf16>
    %181 = vector.shape_cast %180 : vector<1x32x32xbf16> to vector<32x32xbf16>
    %182 = vector.extract_strided_slice %160 {offsets = [0, 24], sizes = [32, 8], strides = [1, 1]} : vector<32x32xf32> to vector<32x8xf32>
    %183 = arith.truncf %182 : vector<32x8xf32> to vector<32x8xbf16>
    %cst_87 = arith.constant dense<0.000000e+00> : vector<32x8xf32>
    %184 = tpu.matmul %181, %183, %cst_87 {dimension_numbers = #tpu.dot_dimension_numbers<[1], [0], [0], [1], [0, 0, 1, 1], [], []>} : vector<32x32xbf16>, vector<32x8xbf16>, vector<32x8xf32> -> vector<32x8xf32>
    %c0_88 = arith.constant 0 : index
    %c24 = arith.constant 24 : index
    %185 = vector.load %arg19[%c0_88, %c24] : memref<32x32xf32, #tpu.memory_space<vmem>>, vector<32x8xf32>
    tpu.vector_store %arg19[%c0_88, %c24], %184 {strides = array<i32>} : memref<32x32xf32, #tpu.memory_space<vmem>>, vector<32x8xf32>,
    %c0_89 = arith.constant 0 : index
    %c0_90 = arith.constant 0 : index
    %186 = vector.load %arg19[%c0_89, %c0_90] : memref<32x32xf32, #tpu.memory_space<vmem>>, vector<32x32xf32>
    %c0_91 = arith.constant 0 : index
    %c0_92 = arith.constant 0 : index
    %187 = vector.load %arg15[%c0_91, %c0_92] : memref<32x32xf32, #tpu.memory_space<vmem>>, vector<32x32xf32>
    %188 = arith.addf %186, %187 : vector<32x32xf32>
    %189 = arith.mulf %188, %161 : vector<32x32xf32>
    %190 = arith.truncf %189 : vector<32x32xf32> to vector<32x32xbf16>
    %c0_93 = arith.constant 0 : index
    %c0_94 = arith.constant 0 : index
    %191 = vector.load %arg16[%c0_93, %c0_94] : memref<32x32xbf16, #tpu.memory_space<vmem>>, vector<32x32xbf16>
    %cst_95 = arith.constant dense<0.000000e+00> : vector<32x32xf32>
    %192 = tpu.matmul %190, %191, %cst_95 {dimension_numbers = #tpu.dot_dimension_numbers<[1], [0], [0], [1], [0, 0, 1, 1], [], []>} : vector<32x32xbf16>, vector<32x32xbf16>, vector<32x32xf32> -> vector<32x32xf32>
    %c0_96 = arith.constant 0 : index
    %c0_97 = arith.constant 0 : index
    %193 = vector.load %arg17[%c0_96, %c0_97] : memref<1x32xf32, #tpu.memory_space<vmem>>, vector<1x32xf32>
    %194 = vector.broadcast %193 : vector<1x32xf32> to vector<32x32xf32>
    %195 = arith.addf %192, %194 : vector<32x32xf32>
    %196 = arith.addf %0, %89 : vector<32x32xf32>
    %197 = arith.addf %196, %195 : vector<32x32xf32>
    %c0_98 = arith.constant 0 : index
    %c0_99 = arith.constant 0 : index
    %198 = vector.load %arg18[%c0_98, %c0_99] : memref<32x32xf32, #tpu.memory_space<vmem>>, vector<32x32xf32>
    tpu.vector_store %arg18[%c0_98, %c0_99], %197 {strides = array<i32>} : memref<32x32xf32, #tpu.memory_space<vmem>>, vector<32x32xf32>,
    return
  }
  func.func @transform_0(%arg0: i32) -> (i32, i32) {
    %c0_i32 = arith.constant 0 : i32
    %c0_i32_0 = arith.constant 0 : i32
    return %arg0, %c0_i32 : i32, i32
  }
  func.func @transform_1(%arg0: i32) -> (i32, i32) {
    %c0_i32 = arith.constant 0 : i32
    %c0_i32_0 = arith.constant 0 : i32
    %c0_i32_1 = arith.constant 0 : i32
    return %c0_i32, %c0_i32_0 : i32, i32
  }
  func.func @transform_2(%arg0: i32) -> (i32, i32) {
    %c0_i32 = arith.constant 0 : i32
    %c0_i32_0 = arith.constant 0 : i32
    %c0_i32_1 = arith.constant 0 : i32
    return %c0_i32, %c0_i32_0 : i32, i32
  }
  func.func @transform_3(%arg0: i32) -> (i32, i32) {
    %c0_i32 = arith.constant 0 : i32
    %c0_i32_0 = arith.constant 0 : i32
    %c0_i32_1 = arith.constant 0 : i32
    return %c0_i32, %c0_i32_0 : i32, i32
  }
  func.func @transform_4(%arg0: i32) -> (i32, i32) {
    %c0_i32 = arith.constant 0 : i32
    %c0_i32_0 = arith.constant 0 : i32
    %c0_i32_1 = arith.constant 0 : i32
    return %c0_i32, %c0_i32_0 : i32, i32
  }
  func.func @transform_5(%arg0: i32) -> (i32, i32, i32) {
    %c0_i32 = arith.constant 0 : i32
    %c0_i32_0 = arith.constant 0 : i32
    %c0_i32_1 = arith.constant 0 : i32
    %c0_i32_2 = arith.constant 0 : i32
    return %c0_i32, %c0_i32_0, %c0_i32_1 : i32, i32, i32
  }
  func.func @transform_6(%arg0: i32) -> (i32, i32) {
    %c0_i32 = arith.constant 0 : i32
    %c0_i32_0 = arith.constant 0 : i32
    %c0_i32_1 = arith.constant 0 : i32
    return %c0_i32, %c0_i32_0 : i32, i32
  }
  func.func @transform_7(%arg0: i32) -> (i32, i32) {
    %c0_i32 = arith.constant 0 : i32
    %c0_i32_0 = arith.constant 0 : i32
    %c0_i32_1 = arith.constant 0 : i32
    return %c0_i32, %c0_i32_0 : i32, i32
  }
  func.func @transform_8(%arg0: i32) -> (i32, i32) {
    %c0_i32 = arith.constant 0 : i32
    %c0_i32_0 = arith.constant 0 : i32
    %c0_i32_1 = arith.constant 0 : i32
    return %c0_i32, %c0_i32_0 : i32, i32
  }
  func.func @transform_9(%arg0: i32) -> (i32, i32) {
    %c0_i32 = arith.constant 0 : i32
    %c0_i32_0 = arith.constant 0 : i32
    %c0_i32_1 = arith.constant 0 : i32
    return %c0_i32, %c0_i32_0 : i32, i32
  }
  func.func @transform_10(%arg0: i32) -> (i32, i32) {
    %c0_i32 = arith.constant 0 : i32
    %c0_i32_0 = arith.constant 0 : i32
    %c0_i32_1 = arith.constant 0 : i32
    return %c0_i32, %c0_i32_0 : i32, i32
  }
  func.func @transform_11(%arg0: i32) -> (i32, i32) {
    %c0_i32 = arith.constant 0 : i32
    %c0_i32_0 = arith.constant 0 : i32
    %c0_i32_1 = arith.constant 0 : i32
    return %c0_i32, %c0_i32_0 : i32, i32
  }
  func.func @transform_12(%arg0: i32) -> (i32, i32) {
    %c0_i32 = arith.constant 0 : i32
    %c0_i32_0 = arith.constant 0 : i32
    %c0_i32_1 = arith.constant 0 : i32
    return %c0_i32, %c0_i32_0 : i32, i32
  }
  func.func @transform_13(%arg0: i32) -> (i32, i32, i32) {
    %c0_i32 = arith.constant 0 : i32
    %c0_i32_0 = arith.constant 0 : i32
    %c0_i32_1 = arith.constant 0 : i32
    %c0_i32_2 = arith.constant 0 : i32
    return %c0_i32, %c0_i32_0, %c0_i32_1 : i32, i32, i32
  }
  func.func @transform_14(%arg0: i32) -> (i32, i32) {
    %c0_i32 = arith.constant 0 : i32
    %c0_i32_0 = arith.constant 0 : i32
    %c0_i32_1 = arith.constant 0 : i32
    return %c0_i32, %c0_i32_0 : i32, i32
  }
  func.func @transform_15(%arg0: i32) -> (i32, i32) {
    %c0_i32 = arith.constant 0 : i32
    %c0_i32_0 = arith.constant 0 : i32
    %c0_i32_1 = arith.constant 0 : i32
    return %c0_i32, %c0_i32_0 : i32, i32
  }
  func.func @transform_16(%arg0: i32) -> (i32, i32) {
    %c0_i32 = arith.constant 0 : i32
    %c0_i32_0 = arith.constant 0 : i32
    %c0_i32_1 = arith.constant 0 : i32
    return %c0_i32, %c0_i32_0 : i32, i32
  }
  func.func @transform_17(%arg0: i32) -> (i32, i32) {
    %c0_i32 = arith.constant 0 : i32
    %c0_i32_0 = arith.constant 0 : i32
    return %arg0, %c0_i32 : i32, i32
  }
}

module attributes {stable_mosaic.version = 11 : i64} {
  func.func @_conv_mm_ln_kernel(%arg0: memref<64x144xf32, #tpu.memory_space<vmem>>, %arg1: memref<144x32xbf16, #tpu.memory_space<vmem>>, %arg2: memref<1x32xf32, #tpu.memory_space<vmem>>, %arg3: memref<1x32xf32, #tpu.memory_space<vmem>>, %arg4: memref<1x32xf32, #tpu.memory_space<vmem>>, %arg5: memref<64x32xf32, #tpu.memory_space<vmem>>) attributes {dimension_semantics = [], scalar_prefetch = 0 : i64, scratch_operands = 0 : i64, tpu.core_type = #tpu.core_type<tc>} {
    %c0 = arith.constant 0 : index
    %c0_0 = arith.constant 0 : index
    %0 = vector.load %arg0[%c0, %c0_0] : memref<64x144xf32, #tpu.memory_space<vmem>>, vector<64x144xf32>
    %1 = arith.truncf %0 : vector<64x144xf32> to vector<64x144xbf16>
    %c0_1 = arith.constant 0 : index
    %c0_2 = arith.constant 0 : index
    %2 = vector.load %arg1[%c0_1, %c0_2] : memref<144x32xbf16, #tpu.memory_space<vmem>>, vector<144x32xbf16>
    %cst = arith.constant dense<0.000000e+00> : vector<64x32xf32>
    %3 = tpu.matmul %1, %2, %cst {dimension_numbers = #tpu.dot_dimension_numbers<[1], [0], [0], [1], [0, 0, 1, 1], [], []>} : vector<64x144xbf16>, vector<144x32xbf16>, vector<64x32xf32> -> vector<64x32xf32>
    %c0_3 = arith.constant 0 : index
    %c0_4 = arith.constant 0 : index
    %4 = vector.load %arg2[%c0_3, %c0_4] : memref<1x32xf32, #tpu.memory_space<vmem>>, vector<1x32xf32>
    %5 = vector.broadcast %4 : vector<1x32xf32> to vector<64x32xf32>
    %6 = arith.addf %3, %5 : vector<64x32xf32>
    %c0_5 = arith.constant 0 : index
    %c0_6 = arith.constant 0 : index
    %7 = vector.load %arg3[%c0_5, %c0_6] : memref<1x32xf32, #tpu.memory_space<vmem>>, vector<1x32xf32>
    %c0_7 = arith.constant 0 : index
    %c0_8 = arith.constant 0 : index
    %8 = vector.load %arg4[%c0_7, %c0_8] : memref<1x32xf32, #tpu.memory_space<vmem>>, vector<1x32xf32>
    %cst_9 = arith.constant dense<0.000000e+00> : vector<64xf32>
    %9 = vector.multi_reduction <add>, %6, %cst_9 [1] : vector<64x32xf32> to vector<64xf32>
    %10 = vector.shape_cast %9 : vector<64xf32> to vector<64x1xf32>
    %cst_10 = arith.constant 3.200000e+01 : f32
    %11 = vector.broadcast %cst_10 : f32 to vector<64x1xf32>
    %12 = arith.divf %10, %11 : vector<64x1xf32>
    %13 = vector.broadcast %12 : vector<64x1xf32> to vector<64x32xf32>
    %14 = arith.subf %6, %13 : vector<64x32xf32>
    %15 = arith.mulf %14, %14 : vector<64x32xf32>
    %cst_11 = arith.constant dense<0.000000e+00> : vector<64xf32>
    %16 = vector.multi_reduction <add>, %15, %cst_11 [1] : vector<64x32xf32> to vector<64xf32>
    %17 = vector.shape_cast %16 : vector<64xf32> to vector<64x1xf32>
    %cst_12 = arith.constant 3.200000e+01 : f32
    %18 = vector.broadcast %cst_12 : f32 to vector<64x1xf32>
    %19 = arith.divf %17, %18 : vector<64x1xf32>
    %20 = vector.broadcast %12 : vector<64x1xf32> to vector<64x32xf32>
    %21 = arith.subf %6, %20 : vector<64x32xf32>
    %cst_13 = arith.constant 9.99999974E-6 : f32
    %22 = vector.broadcast %cst_13 : f32 to vector<64x1xf32>
    %23 = arith.addf %19, %22 : vector<64x1xf32>
    %24 = math.rsqrt %23 : vector<64x1xf32>
    %25 = vector.broadcast %24 : vector<64x1xf32> to vector<64x32xf32>
    %26 = arith.mulf %21, %25 : vector<64x32xf32>
    %27 = vector.broadcast %7 : vector<1x32xf32> to vector<64x32xf32>
    %28 = arith.mulf %26, %27 : vector<64x32xf32>
    %29 = vector.broadcast %8 : vector<1x32xf32> to vector<64x32xf32>
    %30 = arith.addf %28, %29 : vector<64x32xf32>
    %c0_14 = arith.constant 0 : index
    %c0_15 = arith.constant 0 : index
    %31 = vector.load %arg5[%c0_14, %c0_15] : memref<64x32xf32, #tpu.memory_space<vmem>>, vector<64x32xf32>
    tpu.vector_store %arg5[%c0_14, %c0_15], %30 {strides = array<i32>} : memref<64x32xf32, #tpu.memory_space<vmem>>, vector<64x32xf32>,
    return
  }
}

module attributes {stable_mosaic.version = 11 : i64} {
  func.func @_norm_pool_head_kernel(%arg0: memref<2x32x32xf32, #tpu.memory_space<vmem>>, %arg1: memref<1x32xf32, #tpu.memory_space<vmem>>, %arg2: memref<1x32xf32, #tpu.memory_space<vmem>>, %arg3: memref<32x10xbf16, #tpu.memory_space<vmem>>, %arg4: memref<1x10xf32, #tpu.memory_space<vmem>>, %arg5: memref<2x10xf32, #tpu.memory_space<vmem>>) attributes {dimension_semantics = [], scalar_prefetch = 0 : i64, scratch_operands = 0 : i64, tpu.core_type = #tpu.core_type<tc>} {
    %c0 = arith.constant 0 : index
    %c0_0 = arith.constant 0 : index
    %c0_1 = arith.constant 0 : index
    %0 = vector.load %arg0[%c0, %c0_0, %c0_1] : memref<2x32x32xf32, #tpu.memory_space<vmem>>, vector<2x32x32xf32>
    %c0_2 = arith.constant 0 : index
    %c0_3 = arith.constant 0 : index
    %1 = vector.load %arg1[%c0_2, %c0_3] : memref<1x32xf32, #tpu.memory_space<vmem>>, vector<1x32xf32>
    %c0_4 = arith.constant 0 : index
    %c0_5 = arith.constant 0 : index
    %2 = vector.load %arg2[%c0_4, %c0_5] : memref<1x32xf32, #tpu.memory_space<vmem>>, vector<1x32xf32>
    %cst = arith.constant dense<0.000000e+00> : vector<2x32xf32>
    %3 = vector.multi_reduction <add>, %0, %cst [2] : vector<2x32x32xf32> to vector<2x32xf32>
    %4 = vector.shape_cast %3 : vector<2x32xf32> to vector<2x32x1xf32>
    %cst_6 = arith.constant 3.200000e+01 : f32
    %5 = vector.broadcast %cst_6 : f32 to vector<2x32x1xf32>
    %6 = arith.divf %4, %5 : vector<2x32x1xf32>
    %7 = vector.broadcast %6 : vector<2x32x1xf32> to vector<2x32x32xf32>
    %8 = arith.subf %0, %7 : vector<2x32x32xf32>
    %9 = arith.mulf %8, %8 : vector<2x32x32xf32>
    %cst_7 = arith.constant dense<0.000000e+00> : vector<2x32xf32>
    %10 = vector.multi_reduction <add>, %9, %cst_7 [2] : vector<2x32x32xf32> to vector<2x32xf32>
    %11 = vector.shape_cast %10 : vector<2x32xf32> to vector<2x32x1xf32>
    %cst_8 = arith.constant 3.200000e+01 : f32
    %12 = vector.broadcast %cst_8 : f32 to vector<2x32x1xf32>
    %13 = arith.divf %11, %12 : vector<2x32x1xf32>
    %14 = vector.broadcast %6 : vector<2x32x1xf32> to vector<2x32x32xf32>
    %15 = arith.subf %0, %14 : vector<2x32x32xf32>
    %cst_9 = arith.constant 9.99999974E-6 : f32
    %16 = vector.broadcast %cst_9 : f32 to vector<2x32x1xf32>
    %17 = arith.addf %13, %16 : vector<2x32x1xf32>
    %18 = math.rsqrt %17 : vector<2x32x1xf32>
    %19 = vector.broadcast %18 : vector<2x32x1xf32> to vector<2x32x32xf32>
    %20 = arith.mulf %15, %19 : vector<2x32x32xf32>
    %21 = vector.shape_cast %1 : vector<1x32xf32> to vector<1x1x32xf32>
    %22 = vector.broadcast %21 : vector<1x1x32xf32> to vector<2x32x32xf32>
    %23 = arith.mulf %20, %22 : vector<2x32x32xf32>
    %24 = vector.shape_cast %2 : vector<1x32xf32> to vector<1x1x32xf32>
    %25 = vector.broadcast %24 : vector<1x1x32xf32> to vector<2x32x32xf32>
    %26 = arith.addf %23, %25 : vector<2x32x32xf32>
    %cst_10 = arith.constant dense<0.000000e+00> : vector<2x32xf32>
    %27 = vector.multi_reduction <add>, %26, %cst_10 [1] : vector<2x32x32xf32> to vector<2x32xf32>
    %cst_11 = arith.constant 3.200000e+01 : f32
    %28 = vector.broadcast %cst_11 : f32 to vector<2x32xf32>
    %29 = arith.divf %27, %28 : vector<2x32xf32>
    %30 = arith.truncf %29 : vector<2x32xf32> to vector<2x32xbf16>
    %c0_12 = arith.constant 0 : index
    %c0_13 = arith.constant 0 : index
    %31 = vector.load %arg3[%c0_12, %c0_13] : memref<32x10xbf16, #tpu.memory_space<vmem>>, vector<32x10xbf16>
    %cst_14 = arith.constant dense<0.000000e+00> : vector<2x10xf32>
    %32 = tpu.matmul %30, %31, %cst_14 {dimension_numbers = #tpu.dot_dimension_numbers<[1], [0], [0], [1], [0, 0, 1, 1], [], []>} : vector<2x32xbf16>, vector<32x10xbf16>, vector<2x10xf32> -> vector<2x10xf32>
    %c0_15 = arith.constant 0 : index
    %c0_16 = arith.constant 0 : index
    %33 = vector.load %arg4[%c0_15, %c0_16] : memref<1x10xf32, #tpu.memory_space<vmem>>, vector<1x10xf32>
    %34 = vector.broadcast %33 : vector<1x10xf32> to vector<2x10xf32>
    %35 = arith.addf %32, %34 : vector<2x10xf32>
    %c0_17 = arith.constant 0 : index
    %c0_18 = arith.constant 0 : index
    %36 = vector.load %arg5[%c0_17, %c0_18] : memref<2x10xf32, #tpu.memory_space<vmem>>, vector<2x10xf32>
    tpu.vector_store %arg5[%c0_17, %c0_18], %35 {strides = array<i32>} : memref<2x10xf32, #tpu.memory_space<vmem>>, vector<2x10xf32>,
    return
  }
}

</mosaic_0001>

<llo_original>
// kernel: forward.9
$region0: #{forward.9}
  #allocation0 [shape = 'u32[]', space=smem, size = 0x4, offset = 0x4, fixed_abs, tag = 'smem constant byte address 0x4 - core index']
  #allocation1 [shape = 'u32[144,128]{1,0:T(1,128)}', space=vmem, size = 0x12000, scoped, tag = 'internal scratch']
  %s0 = inlined_call_operand.vmem [shape: f32[256,72], index: 0, kind: input, shape index: {}]
  %s1 = inlined_call_operand.vmem [shape: bf16[72,16], index: 1, kind: input, shape index: {}]
  %s2 = inlined_call_operand.vmem [shape: f32[1,16], index: 2, kind: input, shape index: {}]
  %s3 = inlined_call_operand.vmem [shape: f32[256,16], index: 3, kind: output, shape index: {}]
  %s4 = sld [smem:[#allocation0]]
  $region22: #{forward.9} parent=0
    _
  %s6 = ssub.s32 1, %s4
  %s7 = scalar_select 0, %s6, %s4
  // Predicated region
  $region2: #{forward.9} parent=0 // pred_check
    _
  $region3: #{forward.9} parent=0 // pred_check_branch
    %9 = sbr.rel (0) target = $region5
  $region4: #{forward.9} parent=0 // pred_region
    _
  $region5: #{forward.9} parent=0 // pred_fallthru
    _
  // Predicated region
  $region6: #{forward.9} parent=0 // pred_check
    _
  $region7: #{forward.9} parent=0 // pred_check_branch
    %11 = sbr.rel (0) target = $region9
  $region8: #{forward.9} parent=0 // pred_region
    _
  $region9: #{forward.9} parent=0 // pred_fallthru
    _
  // Predicated region
  $region10: #{forward.9} parent=0 // pred_check
    _
  $region11: #{forward.9} parent=0 // pred_check_branch
    %13 = sbr.rel (0) target = $region13
  $region12: #{forward.9} parent=0 // pred_region
    _
  $region13: #{forward.9} parent=0 // pred_fallthru
    _
  %v15 = vld [vmem:[%s0] sm:$0xff]
  %v16 = vld [vmem:[%s0 + $0x8] sm:$0xff]
  %v17 = vld [vmem:[%s0 + $0x10] sm:$0xff]
  %v18 = vld [vmem:[%s0 + $0x18] sm:$0xff]
  %v19 = vld [vmem:[%s0 + $0x20] sm:$0xff]
  %v20 = vld [vmem:[%s0 + $0x28] sm:$0xff]
  %v21 = vld [vmem:[%s0 + $0x30] sm:$0xff]
  %v22 = vld [vmem:[%s0 + $0x38] sm:$0xff]
  %v23 = vld [vmem:[%s0 + $0x40] sm:$0xff]
  %v24 = vld [vmem:[%s0 + $0x48] sm:$0xff]
  %v25 = vld [vmem:[%s0 + $0x50] sm:$0xff]
  %v26 = vld [vmem:[%s0 + $0x58] sm:$0xff]
  %v27 = vld [vmem:[%s0 + $0x60] sm:$0xff]
  %v28 = vld [vmem:[%s0 + $0x68] sm:$0xff]
  %v29 = vld [vmem:[%s0 + $0x70] sm:$0xff]
  %v30 = vld [vmem:[%s0 + $0x78] sm:$0xff]
  %v31 = vld [vmem:[%s0 + $0x80] sm:$0xff]
  %v32 = vld [vmem:[%s0 + $0x88] sm:$0xff]
  %v33 = vld [vmem:[%s0 + $0x90] sm:$0xff]
  %v34 = vld [vmem:[%s0 + $0x98] sm:$0xff]
  %v35 = vld [vmem:[%s0 + $0xa0] sm:$0xff]
  %v36 = vld [vmem:[%s0 + $0xa8] sm:$0xff]
  %v37 = vld [vmem:[%s0 + $0xb0] sm:$0xff]
  %v38 = vld [vmem:[%s0 + $0xb8] sm:$0xff]
  %v39 = vld [vmem:[%s0 + $0xc0] sm:$0xff]
  %v40 = vld [vmem:[%s0 + $0xc8] sm:$0xff]
  %v41 = vld [vmem:[%s0 + $0xd0] sm:$0xff]
  %v42 = vld [vmem:[%s0 + $0xd8] sm:$0xff]
  %v43 = vld [vmem:[%s0 + $0xe0] sm:$0xff]
  %v44 = vld [vmem:[%s0 + $0xe8] sm:$0xff]
  %v45 = vld [vmem:[%s0 + $0xf0] sm:$0xff]
  %v46 = vld [vmem:[%s0 + $0xf8] sm:$0xff]
  %v47 = vpack.c.bf16 %v16, %v15
  %v48 = vpack.c.bf16 %v18, %v17
  %v49 = vpack.c.bf16 %v20, %v19
  %v50 = vpack.c.bf16 %v22, %v21
  %v51 = vpack.c.bf16 %v24, %v23
  %v52 = vpack.c.bf16 %v26, %v25
  %v53 = vpack.c.bf16 %v28, %v27
  %v54 = vpack.c.bf16 %v30, %v29
  %v55 = vpack.c.bf16 %v32, %v31
  %v56 = vpack.c.bf16 %v34, %v33
  %v57 = vpack.c.bf16 %v36, %v35
  %v58 = vpack.c.bf16 %v38, %v37
  %v59 = vpack.c.bf16 %v40, %v39
  %v60 = vpack.c.bf16 %v42, %v41
  %v61 = vpack.c.bf16 %v44, %v43
  %v62 = vpack.c.bf16 %v46, %v45
  %v63 = vld [vmem:[%s1] sm:$0xf]
  %v64 = vld [vmem:[%s1 + $0x4] sm:$0xf]
  %v65 = vld [vmem:[%s1 + $0x8] sm:$0xf]
  %v66 = vld [vmem:[%s1 + $0xc] sm:$0xf]
  %v67 = vld [vmem:[%s1 + $0x10] sm:$0xf]
  %v68 = vld [vmem:[%s1 + $0x14] sm:$0xf]
  %v69 = vld [vmem:[%s1 + $0x18] sm:$0xf]
  %v70 = vld [vmem:[%s1 + $0x1c] sm:$0xf]
  %v71 = vld [vmem:[%s1 + $0x20] sm:$0xf]
  %v72 = vld [vmem:[%s2] sm:$0x1]
  %v74 = vlaneseq
  %v75 = vshrl.u32 %v74, 7
  %v76 = vsub.s32 0, %v75
  %v77 = vrot.slane %v72, %v76
  %v88 = vunpack.c.l.b16 %v63
  %v89 = vunpack.c.l.b16 %v64
  %v90 = vunpack.c.l.b16 %v65
  %v91 = vunpack.c.l.b16 %v66
  %v92 = vunpack.c.l.b16 %v67
  %v93 = vunpack.c.l.b16 %v68
  %v94 = vunpack.c.l.b16 %v69
  %v95 = vunpack.c.l.b16 %v70
  %v96 = vunpack.c.l.b16 %v71
  %v97 = vpack.c.b16 %v89, %v88
  %v98 = vpack.c.b16 %v91, %v90
  %v99 = vpack.c.b16 %v93, %v92
  %v100 = vpack.c.b16 %v95, %v94
  %v101 = vpack.c.b16 %v96, %v96
  %vm106 = vcmask 588800
  %v108 = vsel %vm106, %v47, 0
  %v111 = vsel %vm106, %v48, 0
  %v114 = vsel %vm106, %v49, 0
  %v117 = vsel %vm106, %v50, 0
  %v120 = vsel %vm106, %v51, 0
  %v123 = vsel %vm106, %v52, 0
  %v126 = vsel %vm106, %v53, 0
  %v129 = vsel %vm106, %v54, 0
  %v132 = vsel %vm106, %v55, 0
  %v135 = vsel %vm106, %v56, 0
  %v138 = vsel %vm106, %v57, 0
  %v141 = vsel %vm106, %v58, 0
  %v144 = vsel %vm106, %v59, 0
  %v147 = vsel %vm106, %v60, 0
  %v150 = vsel %vm106, %v61, 0
  %v153 = vsel %vm106, %v62, 0
  %vm155 = vcmask 1043456
  %v157 = vsel %vm155, %v101, 0
  %159 = vmatprep.subr.bf16.mxu0 0
  %160 = vmatpush1.bf16.msra.mxu0 %v97
  %161 = vmatprep.subr.bf16.mxu0 0
  %162 = vmatpush1.bf16.msra.mxu0 %v98
  %163 = vmatprep.subr.bf16.mxu0 0
  %164 = vmatpush1.bf16.msra.mxu0 %v99
  %165 = vmatprep.subr.bf16.mxu0 0
  %166 = vmatpush1.bf16.msra.mxu0 %v100
  %167 = vmatprep.subr.bf16.mxu0 0
  %168 = vmatpush1.bf16.msra.mxu0 %v157
  %169 = vmatprep.subr.bf16.mxu0 0
  %170 = vmatpush1.bf16.msra.mxu0 0
  %171 = vmatprep.subr.bf16.mxu0 0
  %172 = vmatpush1.bf16.msra.mxu0 0
  %173 = vmatprep.subr.bf16.mxu0 0
  %174 = vmatpush1.bf16.msra.mxu0 0
  %175 = vmatprep.subr.bf16.mxu0 0
  %176 = vmatpush1.bf16.msra.mxu0 0
  %177 = vmatprep.subr.bf16.mxu0 0
  %178 = vmatpush1.bf16.msra.mxu0 0
  %179 = vmatprep.subr.bf16.mxu0 0
  %180 = vmatpush1.bf16.msra.mxu0 0
  %181 = vmatprep.subr.bf16.mxu0 0
  %182 = vmatpush1.bf16.msra.mxu0 0
  %183 = vmatprep.subr.bf16.mxu0 0
  %184 = vmatpush1.bf16.msra.mxu0 0
  %185 = vmatprep.subr.bf16.mxu0 0
  %186 = vmatpush1.bf16.msra.mxu0 0
  %187 = vmatprep.subr.bf16.mxu0 0
  %188 = vmatpush1.bf16.msra.mxu0 0
  %189 = vmatprep.subr.bf16.mxu0 0
  %190 = vmatpush1.bf16.msra.mxu0 0
  %191 = vmatprep.mubr.bf16.mxu0 0
  %192 = vmatmul.mubr.bf16.gmra.mrb[0].mxu0 %v108
  %v193 = vpop.f32.mrb[0].mxu0
  %v194 = vadd.f32 %v77, %v193
  %v195 = vpop.f32.mrb[0].mxu0
  %v196 = vpop.f32.mrb[0].mxu0
  %v197 = vadd.f32 %v77, %v196
  %v198 = vpop.f32.mrb[0].mxu0
  %199 = vmatprep.mubr.bf16.mxu0 0
  %200 = vmatmul.mubr.bf16.gmra.mrb[0].mxu0 %v111
  %v201 = vpop.f32.mrb[0].mxu0
  %v202 = vadd.f32 %v77, %v201
  %v203 = vpop.f32.mrb[0].mxu0
  %v204 = vpop.f32.mrb[0].mxu0
  %v205 = vadd.f32 %v77, %v204
  %v206 = vpop.f32.mrb[0].mxu0
  %207 = vmatprep.mubr.bf16.mxu0 0
  %208 = vmatmul.mubr.bf16.gmra.mrb[0].mxu0 %v114
  %v209 = vpop.f32.mrb[0].mxu0
  %v210 = vadd.f32 %v77, %v209
  %v211 = vpop.f32.mrb[0].mxu0
  %v212 = vpop.f32.mrb[0].mxu0
  %v213 = vadd.f32 %v77, %v212
  %v214 = vpop.f32.mrb[0].mxu0
  %215 = vmatprep.mubr.bf16.mxu0 0
  %216 = vmatmul.mubr.bf16.gmra.mrb[0].mxu0 %v117
  %v217 = vpop.f32.mrb[0].mxu0
  %v218 = vadd.f32 %v77, %v217
  %v219 = vpop.f32.mrb[0].mxu0
  %v220 = vpop.f32.mrb[0].mxu0
  %v221 = vadd.f32 %v77, %v220
  %v222 = vpop.f32.mrb[0].mxu0
  %223 = vmatprep.mubr.bf16.mxu0 0
  %224 = vmatmul.mubr.bf16.gmra.mrb[0].mxu0 %v120
  %v225 = vpop.f32.mrb[0].mxu0
  %v226 = vadd.f32 %v77, %v225
  %v227 = vpop.f32.mrb[0].mxu0
  %v228 = vpop.f32.mrb[0].mxu0
  %v229 = vadd.f32 %v77, %v228
  %v230 = vpop.f32.mrb[0].mxu0
  %231 = vmatprep.mubr.bf16.mxu0 0
  %232 = vmatmul.mubr.bf16.gmra.mrb[0].mxu0 %v123
  %v233 = vpop.f32.mrb[0].mxu0
  %v234 = vadd.f32 %v77, %v233
  %v235 = vpop.f32.mrb[0].mxu0
  %v236 = vpop.f32.mrb[0].mxu0
  %v237 = vadd.f32 %v77, %v236
  %v238 = vpop.f32.mrb[0].mxu0
  %239 = vmatprep.mubr.bf16.mxu0 0
  %240 = vmatmul.mubr.bf16.gmra.mrb[0].mxu0 %v126
  %v241 = vpop.f32.mrb[0].mxu0
  %v242 = vadd.f32 %v77, %v241
  %v243 = vpop.f32.mrb[0].mxu0
  %v244 = vpop.f32.mrb[0].mxu0
  %v245 = vadd.f32 %v77, %v244
  %v246 = vpop.f32.mrb[0].mxu0
  %247 = vmatprep.mubr.bf16.mxu0 0
  %248 = vmatmul.mubr.bf16.gmra.mrb[0].mxu0 %v129
  %v249 = vpop.f32.mrb[0].mxu0
  %v250 = vadd.f32 %v77, %v249
  %v251 = vpop.f32.mrb[0].mxu0
  %v252 = vpop.f32.mrb[0].mxu0
  %v253 = vadd.f32 %v77, %v252
  %v254 = vpop.f32.mrb[0].mxu0
  %255 = vmatprep.mubr.bf16.mxu0 0
  %256 = vmatmul.mubr.bf16.gmra.mrb[0].mxu0 %v132
  %v257 = vpop.f32.mrb[0].mxu0
  %v258 = vadd.f32 %v77, %v257
  %v259 = vpop.f32.mrb[0].mxu0
  %v260 = vpop.f32.mrb[0].mxu0
  %v261 = vadd.f32 %v77, %v260
  %v262 = vpop.f32.mrb[0].mxu0
  %263 = vmatprep.mubr.bf16.mxu0 0
  %264 = vmatmul.mubr.bf16.gmra.mrb[0].mxu0 %v135
  %v265 = vpop.f32.mrb[0].mxu0
  %v266 = vadd.f32 %v77, %v265
  %v267 = vpop.f32.mrb[0].mxu0
  %v268 = vpop.f32.mrb[0].mxu0
  %v269 = vadd.f32 %v77, %v268
  %v270 = vpop.f32.mrb[0].mxu0
  %271 = vmatprep.mubr.bf16.mxu0 0
  %272 = vmatmul.mubr.bf16.gmra.mrb[0].mxu0 %v138
  %v273 = vpop.f32.mrb[0].mxu0
  %v274 = vadd.f32 %v77, %v273
  %v275 = vpop.f32.mrb[0].mxu0
  %v276 = vpop.f32.mrb[0].mxu0
  %v277 = vadd.f32 %v77, %v276
  %v278 = vpop.f32.mrb[0].mxu0
  %279 = vmatprep.mubr.bf16.mxu0 0
  %280 = vmatmul.mubr.bf16.gmra.mrb[0].mxu0 %v141
  %v281 = vpop.f32.mrb[0].mxu0
  %v282 = vadd.f32 %v77, %v281
  %v283 = vpop.f32.mrb[0].mxu0
  %v284 = vpop.f32.mrb[0].mxu0
  %v285 = vadd.f32 %v77, %v284
  %v286 = vpop.f32.mrb[0].mxu0
  %287 = vmatprep.mubr.bf16.mxu0 0
  %288 = vmatmul.mubr.bf16.gmra.mrb[0].mxu0 %v144
  %v289 = vpop.f32.mrb[0].mxu0
  %v290 = vadd.f32 %v77, %v289
  %v291 = vpop.f32.mrb[0].mxu0
  %v292 = vpop.f32.mrb[0].mxu0
  %v293 = vadd.f32 %v77, %v292
  %v294 = vpop.f32.mrb[0].mxu0
  %295 = vmatprep.mubr.bf16.mxu0 0
  %296 = vmatmul.mubr.bf16.gmra.mrb[0].mxu0 %v147
  %v297 = vpop.f32.mrb[0].mxu0
  %v298 = vadd.f32 %v77, %v297
  %v299 = vpop.f32.mrb[0].mxu0
  %v300 = vpop.f32.mrb[0].mxu0
  %v301 = vadd.f32 %v77, %v300
  %v302 = vpop.f32.mrb[0].mxu0
  %303 = vmatprep.mubr.bf16.mxu0 0
  %304 = vmatmul.mubr.bf16.gmra.mrb[0].mxu0 %v150
  %v305 = vpop.f32.mrb[0].mxu0
  %v306 = vadd.f32 %v77, %v305
  %v307 = vpop.f32.mrb[0].mxu0
  %v308 = vpop.f32.mrb[0].mxu0
  %v309 = vadd.f32 %v77, %v308
  %v310 = vpop.f32.mrb[0].mxu0
  %311 = vmatprep.mubr.bf16.mxu0 0
  %312 = vmatmul.mubr.bf16.gmra.mrb[0].mxu0 %v153
  %v313 = vpop.f32.mrb[0].mxu0
  %v314 = vadd.f32 %v77, %v313
  %v315 = vpop.f32.mrb[0].mxu0
  %v316 = vpop.f32.mrb[0].mxu0
  %v317 = vadd.f32 %v77, %v316
  %v318 = vpop.f32.mrb[0].mxu0
  %319 = vdwg.mxu0
  %vm320 = vcmask 130048
  %321 = vst.msk [vmem:[%s3] sm:$0xff] %vm320, %v194
  %322 = vst.msk [vmem:[%s3 + $0x8] sm:$0xff] %vm320, %v197
  %323 = vst.msk [vmem:[%s3 + $0x10] sm:$0xff] %vm320, %v202
  %324 = vst.msk [vmem:[%s3 + $0x18] sm:$0xff] %vm320, %v205
  %325 = vst.msk [vmem:[%s3 + $0x20] sm:$0xff] %vm320, %v210
  %326 = vst.msk [vmem:[%s3 + $0x28] sm:$0xff] %vm320, %v213
  %327 = vst.msk [vmem:[%s3 + $0x30] sm:$0xff] %vm320, %v218
  %328 = vst.msk [vmem:[%s3 + $0x38] sm:$0xff] %vm320, %v221
  %329 = vst.msk [vmem:[%s3 + $0x40] sm:$0xff] %vm320, %v226
  %330 = vst.msk [vmem:[%s3 + $0x48] sm:$0xff] %vm320, %v229
  %331 = vst.msk [vmem:[%s3 + $0x50] sm:$0xff] %vm320, %v234
  %332 = vst.msk [vmem:[%s3 + $0x58] sm:$0xff] %vm320, %v237
  %333 = vst.msk [vmem:[%s3 + $0x60] sm:$0xff] %vm320, %v242
  %334 = vst.msk [vmem:[%s3 + $0x68] sm:$0xff] %vm320, %v245
  %335 = vst.msk [vmem:[%s3 + $0x70] sm:$0xff] %vm320, %v250
  %336 = vst.msk [vmem:[%s3 + $0x78] sm:$0xff] %vm320, %v253
  %337 = vst.msk [vmem:[%s3 + $0x80] sm:$0xff] %vm320, %v258
  %338 = vst.msk [vmem:[%s3 + $0x88] sm:$0xff] %vm320, %v261
  %339 = vst.msk [vmem:[%s3 + $0x90] sm:$0xff] %vm320, %v266
  %340 = vst.msk [vmem:[%s3 + $0x98] sm:$0xff] %vm320, %v269
  %341 = vst.msk [vmem:[%s3 + $0xa0] sm:$0xff] %vm320, %v274
  %342 = vst.msk [vmem:[%s3 + $0xa8] sm:$0xff] %vm320, %v277
  %343 = vst.msk [vmem:[%s3 + $0xb0] sm:$0xff] %vm320, %v282
  %344 = vst.msk [vmem:[%s3 + $0xb8] sm:$0xff] %vm320, %v285
  %345 = vst.msk [vmem:[%s3 + $0xc0] sm:$0xff] %vm320, %v290
  %346 = vst.msk [vmem:[%s3 + $0xc8] sm:$0xff] %vm320, %v293
  %347 = vst.msk [vmem:[%s3 + $0xd0] sm:$0xff] %vm320, %v298
  %348 = vst.msk [vmem:[%s3 + $0xd8] sm:$0xff] %vm320, %v301
  %349 = vst.msk [vmem:[%s3 + $0xe0] sm:$0xff] %vm320, %v306
  %350 = vst.msk [vmem:[%s3 + $0xe8] sm:$0xff] %vm320, %v309
  %351 = vst.msk [vmem:[%s3 + $0xf0] sm:$0xff] %vm320, %v314
  %352 = vst.msk [vmem:[%s3 + $0xf8] sm:$0xff] %vm320, %v317
  // Predicated region
  $region14: #{forward.9} parent=0 // pred_check
    _
  $region15: #{forward.9} parent=0 // pred_check_branch
    %354 = sbr.rel (0) target = $region17
  $region16: #{forward.9} parent=0 // pred_region
    _
  $region17: #{forward.9} parent=0 // pred_fallthru
    _
  // Predicated region
  $region18: #{forward.9} parent=0 // pred_check
    _
  $region19: #{forward.9} parent=0 // pred_check_branch
    %356 = sbr.rel (0) target = $region21
  $region20: #{forward.9} parent=0 // pred_region
    _
  $region21: #{forward.9} parent=0 // pred_fallthru
    _

// kernel: forward.8
$region0: #{forward.8}
  #allocation0 [shape = 'u32[]', space=smem, size = 0x4, offset = 0x4, fixed_abs, tag = 'smem constant byte address 0x4 - core index']
  #allocation1 [shape = 'u32[144,128]{1,0:T(1,128)}', space=vmem, size = 0x12000, scoped, tag = 'internal scratch']
  %s0 = inlined_call_operand.vmem [shape: f32[1024,27], index: 0, kind: input, shape index: {}]
  %s1 = inlined_call_operand.vmem [shape: bf16[27,8], index: 1, kind: input, shape index: {}]
  %s2 = inlined_call_operand.vmem [shape: f32[1,8], index: 2, kind: input, shape index: {}]
  %s3 = inlined_call_operand.vmem [shape: f32[1024,8], index: 3, kind: output, shape index: {}]
  %s4 = sld [smem:[#allocation0]]
  $region22: #{forward.8} parent=0
    _
  %s6 = ssub.s32 1, %s4
  %s7 = scalar_select 0, %s6, %s4
  // Predicated region
  $region2: #{forward.8} parent=0 // pred_check
    _
  $region3: #{forward.8} parent=0 // pred_check_branch
    %9 = sbr.rel (0) target = $region5
  $region4: #{forward.8} parent=0 // pred_region
    _
  $region5: #{forward.8} parent=0 // pred_fallthru
    _
  // Predicated region
  $region6: #{forward.8} parent=0 // pred_check
    _
  $region7: #{forward.8} parent=0 // pred_check_branch
    %11 = sbr.rel (0) target = $region9
  $region8: #{forward.8} parent=0 // pred_region
    _
  $region9: #{forward.8} parent=0 // pred_fallthru
    _
  // Predicated region
  $region10: #{forward.8} parent=0 // pred_check
    _
  $region11: #{forward.8} parent=0 // pred_check_branch
    %13 = sbr.rel (0) target = $region13
  $region12: #{forward.8} parent=0 // pred_region
    _
  $region13: #{forward.8} parent=0 // pred_fallthru
    _
  %v15 = vld [vmem:[%s0] sm:$0xff]
  %v16 = vld [vmem:[%s0 + $0x8] sm:$0xff]
  %v17 = vld [vmem:[%s0 + $0x10] sm:$0xff]
  %v18 = vld [vmem:[%s0 + $0x18] sm:$0xff]
  %v19 = vld [vmem:[%s0 + $0x20] sm:$0xff]
  %v20 = vld [vmem:[%s0 + $0x28] sm:$0xff]
  %v21 = vld [vmem:[%s0 + $0x30] sm:$0xff]
  %v22 = vld [vmem:[%s0 + $0x38] sm:$0xff]
  %v23 = vld [vmem:[%s0 + $0x40] sm:$0xff]
  %v24 = vld [vmem:[%s0 + $0x48] sm:$0xff]
  %v25 = vld [vmem:[%s0 + $0x50] sm:$0xff]
  %v26 = vld [vmem:[%s0 + $0x58] sm:$0xff]
  %v27 = vld [vmem:[%s0 + $0x60] sm:$0xff]
  %v28 = vld [vmem:[%s0 + $0x68] sm:$0xff]
  %v29 = vld [vmem:[%s0 + $0x70] sm:$0xff]
  %v30 = vld [vmem:[%s0 + $0x78] sm:$0xff]
  %v31 = vld [vmem:[%s0 + $0x80] sm:$0xff]
  %v32 = vld [vmem:[%s0 + $0x88] sm:$0xff]
  %v33 = vld [vmem:[%s0 + $0x90] sm:$0xff]
  %v34 = vld [vmem:[%s0 + $0x98] sm:$0xff]
  %v35 = vld [vmem:[%s0 + $0xa0] sm:$0xff]
  %v36 = vld [vmem:[%s0 + $0xa8] sm:$0xff]
  %v37 = vld [vmem:[%s0 + $0xb0] sm:$0xff]
  %v38 = vld [vmem:[%s0 + $0xb8] sm:$0xff]
  %v39 = vld [vmem:[%s0 + $0xc0] sm:$0xff]
  %v40 = vld [vmem:[%s0 + $0xc8] sm:$0xff]
  %v41 = vld [vmem:[%s0 + $0xd0] sm:$0xff]
  %v42 = vld [vmem:[%s0 + $0xd8] sm:$0xff]
  %v43 = vld [vmem:[%s0 + $0xe0] sm:$0xff]
  %v44 = vld [vmem:[%s0 + $0xe8] sm:$0xff]
  %v45 = vld [vmem:[%s0 + $0xf0] sm:$0xff]
  %v46 = vld [vmem:[%s0 + $0xf8] sm:$0xff]
  %v47 = vld [vmem:[%s0 + $0x100] sm:$0xff]
  %v48 = vld [vmem:[%s0 + $0x108] sm:$0xff]
  %v49 = vld [vmem:[%s0 + $0x110] sm:$0xff]
  %v50 = vld [vmem:[%s0 + $0x118] sm:$0xff]
  %v51 = vld [vmem:[%s0 + $0x120] sm:$0xff]
  %v52 = vld [vmem:[%s0 + $0x128] sm:$0xff]
  %v53 = vld [vmem:[%s0 + $0x130] sm:$0xff]
  %v54 = vld [vmem:[%s0 + $0x138] sm:$0xff]
  %v55 = vld [vmem:[%s0 + $0x140] sm:$0xff]
  %v56 = vld [vmem:[%s0 + $0x148] sm:$0xff]
  %v57 = vld [vmem:[%s0 + $0x150] sm:$0xff]
  %v58 = vld [vmem:[%s0 + $0x158] sm:$0xff]
  %v59 = vld [vmem:[%s0 + $0x160] sm:$0xff]
  %v60 = vld [vmem:[%s0 + $0x168] sm:$0xff]
  %v61 = vld [vmem:[%s0 + $0x170] sm:$0xff]
  %v62 = vld [vmem:[%s0 + $0x178] sm:$0xff]
  %v63 = vld [vmem:[%s0 + $0x180] sm:$0xff]
  %v64 = vld [vmem:[%s0 + $0x188] sm:$0xff]
  %v65 = vld [vmem:[%s0 + $0x190] sm:$0xff]
  %v66 = vld [vmem:[%s0 + $0x198] sm:$0xff]
  %v67 = vld [vmem:[%s0 + $0x1a0] sm:$0xff]
  %v68 = vld [vmem:[%s0 + $0x1a8] sm:$0xff]
  %v69 = vld [vmem:[%s0 + $0x1b0] sm:$0xff]
  %v70 = vld [vmem:[%s0 + $0x1b8] sm:$0xff]
  %v71 = vld [vmem:[%s0 + $0x1c0] sm:$0xff]
  %v72 = vld [vmem:[%s0 + $0x1c8] sm:$0xff]
  %v73 = vld [vmem:[%s0 + $0x1d0] sm:$0xff]
  %v74 = vld [vmem:[%s0 + $0x1d8] sm:$0xff]
  %v75 = vld [vmem:[%s0 + $0x1e0] sm:$0xff]
  %v76 = vld [vmem:[%s0 + $0x1e8] sm:$0xff]
  %v77 = vld [vmem:[%s0 + $0x1f0] sm:$0xff]
  %v78 = vld [vmem:[%s0 + $0x1f8] sm:$0xff]
  %v79 = vld [vmem:[%s0 + $0x200] sm:$0xff]
  %v80 = vld [vmem:[%s0 + $0x208] sm:$0xff]
  %v81 = vld [vmem:[%s0 + $0x210] sm:$0xff]
  %v82 = vld [vmem:[%s0 + $0x218] sm:$0xff]
  %v83 = vld [vmem:[%s0 + $0x220] sm:$0xff]
  %v84 = vld [vmem:[%s0 + $0x228] sm:$0xff]
  %v85 = vld [vmem:[%s0 + $0x230] sm:$0xff]
  %v86 = vld [vmem:[%s0 + $0x238] sm:$0xff]
  %v87 = vld [vmem:[%s0 + $0x240] sm:$0xff]
  %v88 = vld [vmem:[%s0 + $0x248] sm:$0xff]
  %v89 = vld [vmem:[%s0 + $0x250] sm:$0xff]
  %v90 = vld [vmem:[%s0 + $0x258] sm:$0xff]
  %v91 = vld [vmem:[%s0 + $0x260] sm:$0xff]
  %v92 = vld [vmem:[%s0 + $0x268] sm:$0xff]
  %v93 = vld [vmem:[%s0 + $0x270] sm:$0xff]
  %v94 = vld [vmem:[%s0 + $0x278] sm:$0xff]
  %v95 = vld [vmem:[%s0 + $0x280] sm:$0xff]
  %v96 = vld [vmem:[%s0 + $0x288] sm:$0xff]
  %v97 = vld [vmem:[%s0 + $0x290] sm:$0xff]
  %v98 = vld [vmem:[%s0 + $0x298] sm:$0xff]
  %v99 = vld [vmem:[%s0 + $0x2a0] sm:$0xff]
  %v100 = vld [vmem:[%s0 + $0x2a8] sm:$0xff]
  %v101 = vld [vmem:[%s0 + $0x2b0] sm:$0xff]
  %v102 = vld [vmem:[%s0 + $0x2b8] sm:$0xff]
  %v103 = vld [vmem:[%s0 + $0x2c0] sm:$0xff]
  %v104 = vld [vmem:[%s0 + $0x2c8] sm:$0xff]
  %v105 = vld [vmem:[%s0 + $0x2d0] sm:$0xff]
  %v106 = vld [vmem:[%s0 + $0x2d8] sm:$0xff]
  %v107 = vld [vmem:[%s0 + $0x2e0] sm:$0xff]
  %v108 = vld [vmem:[%s0 + $0x2e8] sm:$0xff]
  %v109 = vld [vmem:[%s0 + $0x2f0] sm:$0xff]
  %v110 = vld [vmem:[%s0 + $0x2f8] sm:$0xff]
  %v111 = vld [vmem:[%s0 + $0x300] sm:$0xff]
  %v112 = vld [vmem:[%s0 + $0x308] sm:$0xff]
  %v113 = vld [vmem:[%s0 + $0x310] sm:$0xff]
  %v114 = vld [vmem:[%s0 + $0x318] sm:$0xff]
  %v115 = vld [vmem:[%s0 + $0x320] sm:$0xff]
  %v116 = vld [vmem:[%s0 + $0x328] sm:$0xff]
  %v117 = vld [vmem:[%s0 + $0x330] sm:$0xff]
  %v118 = vld [vmem:[%s0 + $0x338] sm:$0xff]
  %v119 = vld [vmem:[%s0 + $0x340] sm:$0xff]
  %v120 = vld [vmem:[%s0 + $0x348] sm:$0xff]
  %v121 = vld [vmem:[%s0 + $0x350] sm:$0xff]
  %v122 = vld [vmem:[%s0 + $0x358] sm:$0xff]
  %v123 = vld [vmem:[%s0 + $0x360] sm:$0xff]
  %v124 = vld [vmem:[%s0 + $0x368] sm:$0xff]
  %v125 = vld [vmem:[%s0 + $0x370] sm:$0xff]
  %v126 = vld [vmem:[%s0 + $0x378] sm:$0xff]
  %v127 = vld [vmem:[%s0 + $0x380] sm:$0xff]
  %v128 = vld [vmem:[%s0 + $0x388] sm:$0xff]
  %v129 = vld [vmem:[%s0 + $0x390] sm:$0xff]
  %v130 = vld [vmem:[%s0 + $0x398] sm:$0xff]
  %v131 = vld [vmem:[%s0 + $0x3a0] sm:$0xff]
  %v132 = vld [vmem:[%s0 + $0x3a8] sm:$0xff]
  %v133 = vld [vmem:[%s0 + $0x3b0] sm:$0xff]
  %v134 = vld [vmem:[%s0 + $0x3b8] sm:$0xff]
  %v135 = vld [vmem:[%s0 + $0x3c0] sm:$0xff]
  %v136 = vld [vmem:[%s0 + $0x3c8] sm:$0xff]
  %v137 = vld [vmem:[%s0 + $0x3d0] sm:$0xff]
  %v138 = vld [vmem:[%s0 + $0x3d8] sm:$0xff]
  %v139 = vld [vmem:[%s0 + $0x3e0] sm:$0xff]
  %v140 = vld [vmem:[%s0 + $0x3e8] sm:$0xff]
  %v141 = vld [vmem:[%s0 + $0x3f0] sm:$0xff]
  %v142 = vld [vmem:[%s0 + $0x3f8] sm:$0xff]
  %v143 = vpack.c.bf16 %v16, %v15
  %v144 = vpack.c.bf16 %v18, %v17
  %v145 = vpack.c.bf16 %v20, %v19
  %v146 = vpack.c.bf16 %v22, %v21
  %v147 = vpack.c.bf16 %v24, %v23
  %v148 = vpack.c.bf16 %v26, %v25
  %v149 = vpack.c.bf16 %v28, %v27
  %v150 = vpack.c.bf16 %v30, %v29
  %v151 = vpack.c.bf16 %v32, %v31
  %v152 = vpack.c.bf16 %v34, %v33
  %v153 = vpack.c.bf16 %v36, %v35
  %v154 = vpack.c.bf16 %v38, %v37
  %v155 = vpack.c.bf16 %v40, %v39
  %v156 = vpack.c.bf16 %v42, %v41
  %v157 = vpack.c.bf16 %v44, %v43
  %v158 = vpack.c.bf16 %v46, %v45
  %v159 = vpack.c.bf16 %v48, %v47
  %v160 = vpack.c.bf16 %v50, %v49
  %v161 = vpack.c.bf16 %v52, %v51
  %v162 = vpack.c.bf16 %v54, %v53
  %v163 = vpack.c.bf16 %v56, %v55
  %v164 = vpack.c.bf16 %v58, %v57
  %v165 = vpack.c.bf16 %v60, %v59
  %v166 = vpack.c.bf16 %v62, %v61
  %v167 = vpack.c.bf16 %v64, %v63
  %v168 = vpack.c.bf16 %v66, %v65
  %v169 = vpack.c.bf16 %v68, %v67
  %v170 = vpack.c.bf16 %v70, %v69
  %v171 = vpack.c.bf16 %v72, %v71
  %v172 = vpack.c.bf16 %v74, %v73
  %v173 = vpack.c.bf16 %v76, %v75
  %v174 = vpack.c.bf16 %v78, %v77
  %v175 = vpack.c.bf16 %v80, %v79
  %v176 = vpack.c.bf16 %v82, %v81
  %v177 = vpack.c.bf16 %v84, %v83
  %v178 = vpack.c.bf16 %v86, %v85
  %v179 = vpack.c.bf16 %v88, %v87
  %v180 = vpack.c.bf16 %v90, %v89
  %v181 = vpack.c.bf16 %v92, %v91
  %v182 = vpack.c.bf16 %v94, %v93
  %v183 = vpack.c.bf16 %v96, %v95
  %v184 = vpack.c.bf16 %v98, %v97
  %v185 = vpack.c.bf16 %v100, %v99
  %v186 = vpack.c.bf16 %v102, %v101
  %v187 = vpack.c.bf16 %v104, %v103
  %v188 = vpack.c.bf16 %v106, %v105
  %v189 = vpack.c.bf16 %v108, %v107
  %v190 = vpack.c.bf16 %v110, %v109
  %v191 = vpack.c.bf16 %v112, %v111
  %v192 = vpack.c.bf16 %v114, %v113
  %v193 = vpack.c.bf16 %v116, %v115
  %v194 = vpack.c.bf16 %v118, %v117
  %v195 = vpack.c.bf16 %v120, %v119
  %v196 = vpack.c.bf16 %v122, %v121
  %v197 = vpack.c.bf16 %v124, %v123
  %v198 = vpack.c.bf16 %v126, %v125
  %v199 = vpack.c.bf16 %v128, %v127
  %v200 = vpack.c.bf16 %v130, %v129
  %v201 = vpack.c.bf16 %v132, %v131
  %v202 = vpack.c.bf16 %v134, %v133
  %v203 = vpack.c.bf16 %v136, %v135
  %v204 = vpack.c.bf16 %v138, %v137
  %v205 = vpack.c.bf16 %v140, %v139
  %v206 = vpack.c.bf16 %v142, %v141
  %v207 = vld [vmem:[%s1] sm:$0xf]
  %v208 = vld [vmem:[%s1 + $0x4] sm:$0xf]
  %v209 = vld [vmem:[%s1 + $0x8] sm:$0xf]
  %v210 = vld [vmem:[%s1 + $0xc] sm:$0x3]
  %v211 = vld [vmem:[%s2] sm:$0x1]
  %v213 = vlaneseq
  %v214 = vshrl.u32 %v213, 7
  %v215 = vsub.s32 0, %v214
  %v216 = vrot.slane %v211, %v215
  %v222 = vunpack.c.l.b16 %v207
  %v223 = vunpack.c.l.b16 %v208
  %v224 = vunpack.c.l.b16 %v209
  %v225 = vunpack.c.l.b16 %v210
  %v226 = vpack.c.b16 %v223, %v222
  %v227 = vpack.c.b16 %v225, %v224
  %vm229 = vcmask 220160
  %v231 = vsel %vm229, %v143, 0
  %v234 = vsel %vm229, %v144, 0
  %v237 = vsel %vm229, %v145, 0
  %v240 = vsel %vm229, %v146, 0
  %v243 = vsel %vm229, %v147, 0
  %v246 = vsel %vm229, %v148, 0
  %v249 = vsel %vm229, %v149, 0
  %v252 = vsel %vm229, %v150, 0
  %v255 = vsel %vm229, %v151, 0
  %v258 = vsel %vm229, %v152, 0
  %v261 = vsel %vm229, %v153, 0
  %v264 = vsel %vm229, %v154, 0
  %v267 = vsel %vm229, %v155, 0
  %v270 = vsel %vm229, %v156, 0
  %v273 = vsel %vm229, %v157, 0
  %v276 = vsel %vm229, %v158, 0
  %v279 = vsel %vm229, %v159, 0
  %v282 = vsel %vm229, %v160, 0
  %v285 = vsel %vm229, %v161, 0
  %v288 = vsel %vm229, %v162, 0
  %v291 = vsel %vm229, %v163, 0
  %v294 = vsel %vm229, %v164, 0
  %v297 = vsel %vm229, %v165, 0
  %v300 = vsel %vm229, %v166, 0
  %v303 = vsel %vm229, %v167, 0
  %v306 = vsel %vm229, %v168, 0
  %v309 = vsel %vm229, %v169, 0
  %v312 = vsel %vm229, %v170, 0
  %v315 = vsel %vm229, %v171, 0
  %v318 = vsel %vm229, %v172, 0
  %v321 = vsel %vm229, %v173, 0
  %v324 = vsel %vm229, %v174, 0
  %v327 = vsel %vm229, %v175, 0
  %v330 = vsel %vm229, %v176, 0
  %v333 = vsel %vm229, %v177, 0
  %v336 = vsel %vm229, %v178, 0
  %v339 = vsel %vm229, %v179, 0
  %v342 = vsel %vm229, %v180, 0
  %v345 = vsel %vm229, %v181, 0
  %v348 = vsel %vm229, %v182, 0
  %v351 = vsel %vm229, %v183, 0
  %v354 = vsel %vm229, %v184, 0
  %v357 = vsel %vm229, %v185, 0
  %v360 = vsel %vm229, %v186, 0
  %v363 = vsel %vm229, %v187, 0
  %v366 = vsel %vm229, %v188, 0
  %v369 = vsel %vm229, %v189, 0
  %v372 = vsel %vm229, %v190, 0
  %v375 = vsel %vm229, %v191, 0
  %v378 = vsel %vm229, %v192, 0
  %v381 = vsel %vm229, %v193, 0
  %v384 = vsel %vm229, %v194, 0
  %v387 = vsel %vm229, %v195, 0
  %v390 = vsel %vm229, %v196, 0
  %v393 = vsel %vm229, %v197, 0
  %v396 = vsel %vm229, %v198, 0
  %v399 = vsel %vm229, %v199, 0
  %v402 = vsel %vm229, %v200, 0
  %v405 = vsel %vm229, %v201, 0
  %v408 = vsel %vm229, %v202, 0
  %v411 = vsel %vm229, %v203, 0
  %v414 = vsel %vm229, %v204, 0
  %v417 = vsel %vm229, %v205, 0
  %v420 = vsel %vm229, %v206, 0
  %vm422 = vcmask 1044480
  %vm423 = vcmask 1045504
  %v424 = vsel %vm422, 4294967295, 65535
  %v425 = vsel %vm423, %v424, 0
  %v427 = vand.u32 %v227, %v425
  %429 = vmatprep.subr.bf16.mxu0 0
  %430 = vmatpush1.bf16.msra.mxu0 %v226
  %431 = vmatprep.subr.bf16.mxu0 0
  %432 = vmatpush1.bf16.msra.mxu0 %v427
  %433 = vmatprep.subr.bf16.mxu0 0
  %434 = vmatpush1.bf16.msra.mxu0 0
  %435 = vmatprep.subr.bf16.mxu0 0
  %436 = vmatpush1.bf16.msra.mxu0 0
  %437 = vmatprep.subr.bf16.mxu0 0
  %438 = vmatpush1.bf16.msra.mxu0 0
  %439 = vmatprep.subr.bf16.mxu0 0
  %440 = vmatpush1.bf16.msra.mxu0 0
  %441 = vmatprep.subr.bf16.mxu0 0
  %442 = vmatpush1.bf16.msra.mxu0 0
  %443 = vmatprep.subr.bf16.mxu0 0
  %444 = vmatpush1.bf16.msra.mxu0 0
  %445 = vmatprep.subr.bf16.mxu0 0
  %446 = vmatpush1.bf16.msra.mxu0 0
  %447 = vmatprep.subr.bf16.mxu0 0
  %448 = vmatpush1.bf16.msra.mxu0 0
  %449 = vmatprep.subr.bf16.mxu0 0
  %450 = vmatpush1.bf16.msra.mxu0 0
  %451 = vmatprep.subr.bf16.mxu0 0
  %452 = vmatpush1.bf16.msra.mxu0 0
  %453 = vmatprep.subr.bf16.mxu0 0
  %454 = vmatpush1.bf16.msra.mxu0 0
  %455 = vmatprep.subr.bf16.mxu0 0
  %456 = vmatpush1.bf16.msra.mxu0 0
  %457 = vmatprep.subr.bf16.mxu0 0
  %458 = vmatpush1.bf16.msra.mxu0 0
  %459 = vmatprep.subr.bf16.mxu0 0
  %460 = vmatpush1.bf16.msra.mxu0 0
  %461 = vmatprep.mubr.bf16.mxu0 0
  %462 = vmatmul.mubr.bf16.gmra.mrb[0].mxu0 %v231
  %v463 = vpop.f32.mrb[0].mxu0
  %v464 = vadd.f32 %v216, %v463
  %v465 = vpop.f32.mrb[0].mxu0
  %v466 = vpop.f32.mrb[0].mxu0
  %v467 = vadd.f32 %v216, %v466
  %v468 = vpop.f32.mrb[0].mxu0
  %469 = vmatprep.mubr.bf16.mxu0 0
  %470 = vmatmul.mubr.bf16.gmra.mrb[0].mxu0 %v234
  %v471 = vpop.f32.mrb[0].mxu0
  %v472 = vadd.f32 %v216, %v471
  %v473 = vpop.f32.mrb[0].mxu0
  %v474 = vpop.f32.mrb[0].mxu0
  %v475 = vadd.f32 %v216, %v474
  %v476 = vpop.f32.mrb[0].mxu0
  %477 = vmatprep.mubr.bf16.mxu0 0
  %478 = vmatmul.mubr.bf16.gmra.mrb[0].mxu0 %v237
  %v479 = vpop.f32.mrb[0].mxu0
  %v480 = vadd.f32 %v216, %v479
  %v481 = vpop.f32.mrb[0].mxu0
  %v482 = vpop.f32.mrb[0].mxu0
  %v483 = vadd.f32 %v216, %v482
  %v484 = vpop.f32.mrb[0].mxu0
  %485 = vmatprep.mubr.bf16.mxu0 0
  %486 = vmatmul.mubr.bf16.gmra.mrb[0].mxu0 %v240
  %v487 = vpop.f32.mrb[0].mxu0
  %v488 = vadd.f32 %v216, %v487
  %v489 = vpop.f32.mrb[0].mxu0
  %v490 = vpop.f32.mrb[0].mxu0
  %v491 = vadd.f32 %v216, %v490
  %v492 = vpop.f32.mrb[0].mxu0
  %493 = vmatprep.mubr.bf16.mxu0 0
  %494 = vmatmul.mubr.bf16.gmra.mrb[0].mxu0 %v243
  %v495 = vpop.f32.mrb[0].mxu0
  %v496 = vadd.f32 %v216, %v495
  %v497 = vpop.f32.mrb[0].mxu0
  %v498 = vpop.f32.mrb[0].mxu0
  %v499 = vadd.f32 %v216, %v498
  %v500 = vpop.f32.mrb[0].mxu0
  %501 = vmatprep.mubr.bf16.mxu0 0
  %502 = vmatmul.mubr.bf16.gmra.mrb[0].mxu0 %v246
  %v503 = vpop.f32.mrb[0].mxu0
  %v504 = vadd.f32 %v216, %v503
  %v505 = vpop.f32.mrb[0].mxu0
  %v506 = vpop.f32.mrb[0].mxu0
  %v507 = vadd.f32 %v216, %v506
  %v508 = vpop.f32.mrb[0].mxu0
  %509 = vmatprep.mubr.bf16.mxu0 0
  %510 = vmatmul.mubr.bf16.gmra.mrb[0].mxu0 %v249
  %v511 = vpop.f32.mrb[0].mxu0
  %v512 = vadd.f32 %v216, %v511
  %v513 = vpop.f32.mrb[0].mxu0
  %v514 = vpop.f32.mrb[0].mxu0
  %v515 = vadd.f32 %v216, %v514
  %v516 = vpop.f32.mrb[0].mxu0
  %517 = vmatprep.mubr.bf16.mxu0 0
  %518 = vmatmul.mubr.bf16.gmra.mrb[0].mxu0 %v252
  %v519 = vpop.f32.mrb[0].mxu0
  %v520 = vadd.f32 %v216, %v519
  %v521 = vpop.f32.mrb[0].mxu0
  %v522 = vpop.f32.mrb[0].mxu0
  %v523 = vadd.f32 %v216, %v522
  %v524 = vpop.f32.mrb[0].mxu0
  %525 = vmatprep.mubr.bf16.mxu0 0
  %526 = vmatmul.mubr.bf16.gmra.mrb[0].mxu0 %v255
  %v527 = vpop.f32.mrb[0].mxu0
  %v528 = vadd.f32 %v216, %v527
  %v529 = vpop.f32.mrb[0].mxu0
  %v530 = vpop.f32.mrb[0].mxu0
  %v531 = vadd.f32 %v216, %v530
  %v532 = vpop.f32.mrb[0].mxu0
  %533 = vmatprep.mubr.bf16.mxu0 0
  %534 = vmatmul.mubr.bf16.gmra.mrb[0].mxu0 %v258
  %v535 = vpop.f32.mrb[0].mxu0
  %v536 = vadd.f32 %v216, %v535
  %v537 = vpop.f32.mrb[0].mxu0
  %v538 = vpop.f32.mrb[0].mxu0
  %v539 = vadd.f32 %v216, %v538
  %v540 = vpop.f32.mrb[0].mxu0
  %541 = vmatprep.mubr.bf16.mxu0 0
  %542 = vmatmul.mubr.bf16.gmra.mrb[0].mxu0 %v261
  %v543 = vpop.f32.mrb[0].mxu0
  %v544 = vadd.f32 %v216, %v543
  %v545 = vpop.f32.mrb[0].mxu0
  %v546 = vpop.f32.mrb[0].mxu0
  %v547 = vadd.f32 %v216, %v546
  %v548 = vpop.f32.mrb[0].mxu0
  %549 = vmatprep.mubr.bf16.mxu0 0
  %550 = vmatmul.mubr.bf16.gmra.mrb[0].mxu0 %v264
  %v551 = vpop.f32.mrb[0].mxu0
  %v552 = vadd.f32 %v216, %v551
  %v553 = vpop.f32.mrb[0].mxu0
  %v554 = vpop.f32.mrb[0].mxu0
  %v555 = vadd.f32 %v216, %v554
  %v556 = vpop.f32.mrb[0].mxu0
  %557 = vmatprep.mubr.bf16.mxu0 0
  %558 = vmatmul.mubr.bf16.gmra.mrb[0].mxu0 %v267
  %v559 = vpop.f32.mrb[0].mxu0
  %v560 = vadd.f32 %v216, %v559
  %v561 = vpop.f32.mrb[0].mxu0
  %v562 = vpop.f32.mrb[0].mxu0
  %v563 = vadd.f32 %v216, %v562
  %v564 = vpop.f32.mrb[0].mxu0
  %565 = vmatprep.mubr.bf16.mxu0 0
  %566 = vmatmul.mubr.bf16.gmra.mrb[0].mxu0 %v270
  %v567 = vpop.f32.mrb[0].mxu0
  %v568 = vadd.f32 %v216, %v567
  %v569 = vpop.f32.mrb[0].mxu0
  %v570 = vpop.f32.mrb[0].mxu0
  %v571 = vadd.f32 %v216, %v570
  %v572 = vpop.f32.mrb[0].mxu0
  %573 = vmatprep.mubr.bf16.mxu0 0
  %574 = vmatmul.mubr.bf16.gmra.mrb[0].mxu0 %v273
  %v575 = vpop.f32.mrb[0].mxu0
  %v576 = vadd.f32 %v216, %v575
  %v577 = vpop.f32.mrb[0].mxu0
  %v578 = vpop.f32.mrb[0].mxu0
  %v579 = vadd.f32 %v216, %v578
  %v580 = vpop.f32.mrb[0].mxu0
  %581 = vmatprep.mubr.bf16.mxu0 0
  %582 = vmatmul.mubr.bf16.gmra.mrb[0].mxu0 %v276
  %v583 = vpop.f32.mrb[0].mxu0
  %v584 = vadd.f32 %v216, %v583
  %v585 = vpop.f32.mrb[0].mxu0
  %v586 = vpop.f32.mrb[0].mxu0
  %v587 = vadd.f32 %v216, %v586
  %v588 = vpop.f32.mrb[0].mxu0
  %589 = vmatprep.mubr.bf16.mxu0 0
  %590 = vmatmul.mubr.bf16.gmra.mrb[0].mxu0 %v279
  %v591 = vpop.f32.mrb[0].mxu0
  %v592 = vadd.f32 %v216, %v591
  %v593 = vpop.f32.mrb[0].mxu0
  %v594 = vpop.f32.mrb[0].mxu0
  %v595 = vadd.f32 %v216, %v594
  %v596 = vpop.f32.mrb[0].mxu0
  %597 = vmatprep.mubr.bf16.mxu0 0
  %598 = vmatmul.mubr.bf16.gmra.mrb[0].mxu0 %v282
  %v599 = vpop.f32.mrb[0].mxu0
  %v600 = vadd.f32 %v216, %v599
  %v601 = vpop.f32.mrb[0].mxu0
  %v602 = vpop.f32.mrb[0].mxu0
  %v603 = vadd.f32 %v216, %v602
  %v604 = vpop.f32.mrb[0].mxu0
  %605 = vmatprep.mubr.bf16.mxu0 0
  %606 = vmatmul.mubr.bf16.gmra.mrb[0].mxu0 %v285
  %v607 = vpop.f32.mrb[0].mxu0
  %v608 = vadd.f32 %v216, %v607
  %v609 = vpop.f32.mrb[0].mxu0
  %v610 = vpop.f32.mrb[0].mxu0
  %v611 = vadd.f32 %v216, %v610
  %v612 = vpop.f32.mrb[0].mxu0
  %613 = vmatprep.mubr.bf16.mxu0 0
  %614 = vmatmul.mubr.bf16.gmra.mrb[0].mxu0 %v288
  %v615 = vpop.f32.mrb[0].mxu0
  %v616 = vadd.f32 %v216, %v615
  %v617 = vpop.f32.mrb[0].mxu0
  %v618 = vpop.f32.mrb[0].mxu0
  %v619 = vadd.f32 %v216, %v618
  %v620 = vpop.f32.mrb[0].mxu0
  %621 = vmatprep.mubr.bf16.mxu0 0
  %622 = vmatmul.mubr.bf16.gmra.mrb[0].mxu0 %v291
  %v623 = vpop.f32.mrb[0].mxu0
  %v624 = vadd.f32 %v216, %v623
  %v625 = vpop.f32.mrb[0].mxu0
  %v626 = vpop.f32.mrb[0].mxu0
  %v627 = vadd.f32 %v216, %v626
  %v628 = vpop.f32.mrb[0].mxu0
  %629 = vmatprep.mubr.bf16.mxu0 0
  %630 = vmatmul.mubr.bf16.gmra.mrb[0].mxu0 %v294
  %v631 = vpop.f32.mrb[0].mxu0
  %v632 = vadd.f32 %v216, %v631
  %v633 = vpop.f32.mrb[0].mxu0
  %v634 = vpop.f32.mrb[0].mxu0
  %v635 = vadd.f32 %v216, %v634
  %v636 = vpop.f32.mrb[0].mxu0
  %637 = vmatprep.mubr.bf16.mxu0 0
  %638 = vmatmul.mubr.bf16.gmra.mrb[0].mxu0 %v297
  %v639 = vpop.f32.mrb[0].mxu0
  %v640 = vadd.f32 %v216, %v639
  %v641 = vpop.f32.mrb[0].mxu0
  %v642 = vpop.f32.mrb[0].mxu0
  %v643 = vadd.f32 %v216, %v642
  %v644 = vpop.f32.mrb[0].mxu0
  %645 = vmatprep.mubr.bf16.mxu0 0
  %646 = vmatmul.mubr.bf16.gmra.mrb[0].mxu0 %v300
  %v647 = vpop.f32.mrb[0].mxu0
  %v648 = vadd.f32 %v216, %v647
  %v649 = vpop.f32.mrb[0].mxu0
  %v650 = vpop.f32.mrb[0].mxu0
  %v651 = vadd.f32 %v216, %v650
  %v652 = vpop.f32.mrb[0].mxu0
  %653 = vmatprep.mubr.bf16.mxu0 0
  %654 = vmatmul.mubr.bf16.gmra.mrb[0].mxu0 %v303
  %v655 = vpop.f32.mrb[0].mxu0
  %v656 = vadd.f32 %v216, %v655
  %v657 = vpop.f32.mrb[0].mxu0
  %v658 = vpop.f32.mrb[0].mxu0
  %v659 = vadd.f32 %v216, %v658
  %v660 = vpop.f32.mrb[0].mxu0
  %661 = vmatprep.mubr.bf16.mxu0 0
  %662 = vmatmul.mubr.bf16.gmra.mrb[0].mxu0 %v306
  %v663 = vpop.f32.mrb[0].mxu0
  %v664 = vadd.f32 %v216, %v663
  %v665 = vpop.f32.mrb[0].mxu0
  %v666 = vpop.f32.mrb[0].mxu0
  %v667 = vadd.f32 %v216, %v666
  %v668 = vpop.f32.mrb[0].mxu0
  %669 = vmatprep.mubr.bf16.mxu0 0
  %670 = vmatmul.mubr.bf16.gmra.mrb[0].mxu0 %v309
  %v671 = vpop.f32.mrb[0].mxu0
  %v672 = vadd.f32 %v216, %v671
  %v673 = vpop.f32.mrb[0].mxu0
  %v674 = vpop.f32.mrb[0].mxu0
  %v675 = vadd.f32 %v216, %v674
  %v676 = vpop.f32.mrb[0].mxu0
  %677 = vmatprep.mubr.bf16.mxu0 0
  %678 = vmatmul.mubr.bf16.gmra.mrb[0].mxu0 %v312
  %v679 = vpop.f32.mrb[0].mxu0
  %v680 = vadd.f32 %v216, %v679
  %v681 = vpop.f32.mrb[0].mxu0
  %v682 = vpop.f32.mrb[0].mxu0
  %v683 = vadd.f32 %v216, %v682
  %v684 = vpop.f32.mrb[0].mxu0
  %685 = vmatprep.mubr.bf16.mxu0 0
  %686 = vmatmul.mubr.bf16.gmra.mrb[0].mxu0 %v315
  %v687 = vpop.f32.mrb[0].mxu0
  %v688 = vadd.f32 %v216, %v687
  %v689 = vpop.f32.mrb[0].mxu0
  %v690 = vpop.f32.mrb[0].mxu0
  %v691 = vadd.f32 %v216, %v690
  %v692 = vpop.f32.mrb[0].mxu0
  %693 = vmatprep.mubr.bf16.mxu0 0
  %694 = vmatmul.mubr.bf16.gmra.mrb[0].mxu0 %v318
  %v695 = vpop.f32.mrb[0].mxu0
  %v696 = vadd.f32 %v216, %v695
  %v697 = vpop.f32.mrb[0].mxu0
  %v698 = vpop.f32.mrb[0].mxu0
  %v699 = vadd.f32 %v216, %v698
  %v700 = vpop.f32.mrb[0].mxu0
  %701 = vmatprep.mubr.bf16.mxu0 0
  %702 = vmatmul.mubr.bf16.gmra.mrb[0].mxu0 %v321
  %v703 = vpop.f32.mrb[0].mxu0
  %v704 = vadd.f32 %v216, %v703
  %v705 = vpop.f32.mrb[0].mxu0
  %v706 = vpop.f32.mrb[0].mxu0
  %v707 = vadd.f32 %v216, %v706
  %v708 = vpop.f32.mrb[0].mxu0
  %709 = vmatprep.mubr.bf16.mxu0 0
  %710 = vmatmul.mubr.bf16.gmra.mrb[0].mxu0 %v324
  %v711 = vpop.f32.mrb[0].mxu0
  %v712 = vadd.f32 %v216, %v711
  %v713 = vpop.f32.mrb[0].mxu0
  %v714 = vpop.f32.mrb[0].mxu0
  %v715 = vadd.f32 %v216, %v714
  %v716 = vpop.f32.mrb[0].mxu0
  %717 = vmatprep.mubr.bf16.mxu0 0
  %718 = vmatmul.mubr.bf16.gmra.mrb[0].mxu0 %v327
  %v719 = vpop.f32.mrb[0].mxu0
  %v720 = vadd.f32 %v216, %v719
  %v721 = vpop.f32.mrb[0].mxu0
  %v722 = vpop.f32.mrb[0].mxu0
  %v723 = vadd.f32 %v216, %v722
  %v724 = vpop.f32.mrb[0].mxu0
  %725 = vmatprep.mubr.bf16.mxu0 0
  %726 = vmatmul.mubr.bf16.gmra.mrb[0].mxu0 %v330
  %v727 = vpop.f32.mrb[0].mxu0
  %v728 = vadd.f32 %v216, %v727
  %v729 = vpop.f32.mrb[0].mxu0
  %v730 = vpop.f32.mrb[0].mxu0
  %v731 = vadd.f32 %v216, %v730
  %v732 = vpop.f32.mrb[0].mxu0
  %733 = vmatprep.mubr.bf16.mxu0 0
  %734 = vmatmul.mubr.bf16.gmra.mrb[0].mxu0 %v333
  %v735 = vpop.f32.mrb[0].mxu0
  %v736 = vadd.f32 %v216, %v735
  %v737 = vpop.f32.mrb[0].mxu0
  %v738 = vpop.f32.mrb[0].mxu0
  %v739 = vadd.f32 %v216, %v738
  %v740 = vpop.f32.mrb[0].mxu0
  %741 = vmatprep.mubr.bf16.mxu0 0
  %742 = vmatmul.mubr.bf16.gmra.mrb[0].mxu0 %v336
  %v743 = vpop.f32.mrb[0].mxu0
  %v744 = vadd.f32 %v216, %v743
  %v745 = vpop.f32.mrb[0].mxu0
  %v746 = vpop.f32.mrb[0].mxu0
  %v747 = vadd.f32 %v216, %v746
  %v748 = vpop.f32.mrb[0].mxu0
  %749 = vmatprep.mubr.bf16.mxu0 0
  %750 = vmatmul.mubr.bf16.gmra.mrb[0].mxu0 %v339
  %v751 = vpop.f32.mrb[0].mxu0
  %v752 = vadd.f32 %v216, %v751
  %v753 = vpop.f32.mrb[0].mxu0
  %v754 = vpop.f32.mrb[0].mxu0
  %v755 = vadd.f32 %v216, %v754
  %v756 = vpop.f32.mrb[0].mxu0
  %757 = vmatprep.mubr.bf16.mxu0 0
  %758 = vmatmul.mubr.bf16.gmra.mrb[0].mxu0 %v342
  %v759 = vpop.f32.mrb[0].mxu0
  %v760 = vadd.f32 %v216, %v759
  %v761 = vpop.f32.mrb[0].mxu0
  %v762 = vpop.f32.mrb[0].mxu0
  %v763 = vadd.f32 %v216, %v762
  %v764 = vpop.f32.mrb[0].mxu0
  %765 = vmatprep.mubr.bf16.mxu0 0
  %766 = vmatmul.mubr.bf16.gmra.mrb[0].mxu0 %v345
  %v767 = vpop.f32.mrb[0].mxu0
  %v768 = vadd.f32 %v216, %v767
  %v769 = vpop.f32.mrb[0].mxu0
  %v770 = vpop.f32.mrb[0].mxu0
  %v771 = vadd.f32 %v216, %v770
  %v772 = vpop.f32.mrb[0].mxu0
  %773 = vmatprep.mubr.bf16.mxu0 0
  %774 = vmatmul.mubr.bf16.gmra.mrb[0].mxu0 %v348
  %v775 = vpop.f32.mrb[0].mxu0
  %v776 = vadd.f32 %v216, %v775
  %v777 = vpop.f32.mrb[0].mxu0
  %v778 = vpop.f32.mrb[0].mxu0
  %v779 = vadd.f32 %v216, %v778
  %v780 = vpop.f32.mrb[0].mxu0
  %781 = vmatprep.mubr.bf16.mxu0 0
  %782 = vmatmul.mubr.bf16.gmra.mrb[0].mxu0 %v351
  %v783 = vpop.f32.mrb[0].mxu0
  %v784 = vadd.f32 %v216, %v783
  %v785 = vpop.f32.mrb[0].mxu0
  %v786 = vpop.f32.mrb[0].mxu0
  %v787 = vadd.f32 %v216, %v786
  %v788 = vpop.f32.mrb[0].mxu0
  %789 = vmatprep.mubr.bf16.mxu0 0
  %790 = vmatmul.mubr.bf16.gmra.mrb[0].mxu0 %v354
  %v791 = vpop.f32.mrb[0].mxu0
  %v792 = vadd.f32 %v216, %v791
  %v793 = vpop.f32.mrb[0].mxu0
  %v794 = vpop.f32.mrb[0].mxu0
  %v795 = vadd.f32 %v216, %v794
  %v796 = vpop.f32.mrb[0].mxu0
  %797 = vmatprep.mubr.bf16.mxu0 0
  %798 = vmatmul.mubr.bf16.gmra.mrb[0].mxu0 %v357
  %v799 = vpop.f32.mrb[0].mxu0
  %v800 = vadd.f32 %v216, %v799
  %v801 = vpop.f32.mrb[0].mxu0
  %v802 = vpop.f32.mrb[0].mxu0
  %v803 = vadd.f32 %v216, %v802
  %v804 = vpop.f32.mrb[0].mxu0
  %805 = vmatprep.mubr.bf16.mxu0 0
  %806 = vmatmul.mubr.bf16.gmra.mrb[0].mxu0 %v360
  %v807 = vpop.f32.mrb[0].mxu0
  %v808 = vadd.f32 %v216, %v807
  %v809 = vpop.f32.mrb[0].mxu0
  %v810 = vpop.f32.mrb[0].mxu0
  %v811 = vadd.f32 %v216, %v810
  %v812 = vpop.f32.mrb[0].mxu0
  %813 = vmatprep.mubr.bf16.mxu0 0
  %814 = vmatmul.mubr.bf16.gmra.mrb[0].mxu0 %v363
  %v815 = vpop.f32.mrb[0].mxu0
  %v816 = vadd.f32 %v216, %v815
  %v817 = vpop.f32.mrb[0].mxu0
  %v818 = vpop.f32.mrb[0].mxu0
  %v819 = vadd.f32 %v216, %v818
  %v820 = vpop.f32.mrb[0].mxu0
  %821 = vmatprep.mubr.bf16.mxu0 0
  %822 = vmatmul.mubr.bf16.gmra.mrb[0].mxu0 %v366
  %v823 = vpop.f32.mrb[0].mxu0
  %v824 = vadd.f32 %v216, %v823
  %v825 = vpop.f32.mrb[0].mxu0
  %v826 = vpop.f32.mrb[0].mxu0
  %v827 = vadd.f32 %v216, %v826
  %v828 = vpop.f32.mrb[0].mxu0
  %829 = vmatprep.mubr.bf16.mxu0 0
  %830 = vmatmul.mubr.bf16.gmra.mrb[0].mxu0 %v369
  %v831 = vpop.f32.mrb[0].mxu0
  %v832 = vadd.f32 %v216, %v831
  %v833 = vpop.f32.mrb[0].mxu0
  %v834 = vpop.f32.mrb[0].mxu0
  %v835 = vadd.f32 %v216, %v834
  %v836 = vpop.f32.mrb[0].mxu0
  %837 = vmatprep.mubr.bf16.mxu0 0
  %838 = vmatmul.mubr.bf16.gmra.mrb[0].mxu0 %v372
  %v839 = vpop.f32.mrb[0].mxu0
  %v840 = vadd.f32 %v216, %v839
  %v841 = vpop.f32.mrb[0].mxu0
  %v842 = vpop.f32.mrb[0].mxu0
  %v843 = vadd.f32 %v216, %v842
  %v844 = vpop.f32.mrb[0].mxu0
  %845 = vmatprep.mubr.bf16.mxu0 0
  %846 = vmatmul.mubr.bf16.gmra.mrb[0].mxu0 %v375
  %v847 = vpop.f32.mrb[0].mxu0
  %v848 = vadd.f32 %v216, %v847
  %v849 = vpop.f32.mrb[0].mxu0
  %v850 = vpop.f32.mrb[0].mxu0
  %v851 = vadd.f32 %v216, %v850
  %v852 = vpop.f32.mrb[0].mxu0
  %853 = vmatprep.mubr.bf16.mxu0 0
  %854 = vmatmul.mubr.bf16.gmra.mrb[0].mxu0 %v378
  %v855 = vpop.f32.mrb[0].mxu0
  %v856 = vadd.f32 %v216, %v855
  %v857 = vpop.f32.mrb[0].mxu0
  %v858 = vpop.f32.mrb[0].mxu0
  %v859 = vadd.f32 %v216, %v858
  %v860 = vpop.f32.mrb[0].mxu0
  %861 = vmatprep.mubr.bf16.mxu0 0
  %862 = vmatmul.mubr.bf16.gmra.mrb[0].mxu0 %v381
  %v863 = vpop.f32.mrb[0].mxu0
  %v864 = vadd.f32 %v216, %v863
  %v865 = vpop.f32.mrb[0].mxu0
  %v866 = vpop.f32.mrb[0].mxu0
  %v867 = vadd.f32 %v216, %v866
  %v868 = vpop.f32.mrb[0].mxu0
  %869 = vmatprep.mubr.bf16.mxu0 0
  %870 = vmatmul.mubr.bf16.gmra.mrb[0].mxu0 %v384
  %v871 = vpop.f32.mrb[0].mxu0
  %v872 = vadd.f32 %v216, %v871
  %v873 = vpop.f32.mrb[0].mxu0
  %v874 = vpop.f32.mrb[0].mxu0
  %v875 = vadd.f32 %v216, %v874
  %v876 = vpop.f32.mrb[0].mxu0
  %877 = vmatprep.mubr.bf16.mxu0 0
  %878 = vmatmul.mubr.bf16.gmra.mrb[0].mxu0 %v387
  %v879 = vpop.f32.mrb[0].mxu0
  %v880 = vadd.f32 %v216, %v879
  %v881 = vpop.f32.mrb[0].mxu0
  %v882 = vpop.f32.mrb[0].mxu0
  %v883 = vadd.f32 %v216, %v882
  %v884 = vpop.f32.mrb[0].mxu0
  %885 = vmatprep.mubr.bf16.mxu0 0
  %886 = vmatmul.mubr.bf16.gmra.mrb[0].mxu0 %v390
  %v887 = vpop.f32.mrb[0].mxu0
  %v888 = vadd.f32 %v216, %v887
  %v889 = vpop.f32.mrb[0].mxu0
  %v890 = vpop.f32.mrb[0].mxu0
  %v891 = vadd.f32 %v216, %v890
  %v892 = vpop.f32.mrb[0].mxu0
  %893 = vmatprep.mubr.bf16.mxu0 0
  %894 = vmatmul.mubr.bf16.gmra.mrb[0].mxu0 %v393
  %v895 = vpop.f32.mrb[0].mxu0
  %v896 = vadd.f32 %v216, %v895
  %v897 = vpop.f32.mrb[0].mxu0
  %v898 = vpop.f32.mrb[0].mxu0
  %v899 = vadd.f32 %v216, %v898
  %v900 = vpop.f32.mrb[0].mxu0
  %901 = vmatprep.mubr.bf16.mxu0 0
  %902 = vmatmul.mubr.bf16.gmra.mrb[0].mxu0 %v396
  %v903 = vpop.f32.mrb[0].mxu0
  %v904 = vadd.f32 %v216, %v903
  %v905 = vpop.f32.mrb[0].mxu0
  %v906 = vpop.f32.mrb[0].mxu0
  %v907 = vadd.f32 %v216, %v906
  %v908 = vpop.f32.mrb[0].mxu0
  %909 = vmatprep.mubr.bf16.mxu0 0
  %910 = vmatmul.mubr.bf16.gmra.mrb[0].mxu0 %v399
  %v911 = vpop.f32.mrb[0].mxu0
  %v912 = vadd.f32 %v216, %v911
  %v913 = vpop.f32.mrb[0].mxu0
  %v914 = vpop.f32.mrb[0].mxu0
  %v915 = vadd.f32 %v216, %v914
  %v916 = vpop.f32.mrb[0].mxu0
  %917 = vmatprep.mubr.bf16.mxu0 0
  %918 = vmatmul.mubr.bf16.gmra.mrb[0].mxu0 %v402
  %v919 = vpop.f32.mrb[0].mxu0
  %v920 = vadd.f32 %v216, %v919
  %v921 = vpop.f32.mrb[0].mxu0
  %v922 = vpop.f32.mrb[0].mxu0
  %v923 = vadd.f32 %v216, %v922
  %v924 = vpop.f32.mrb[0].mxu0
  %925 = vmatprep.mubr.bf16.mxu0 0
  %926 = vmatmul.mubr.bf16.gmra.mrb[0].mxu0 %v405
  %v927 = vpop.f32.mrb[0].mxu0
  %v928 = vadd.f32 %v216, %v927
  %v929 = vpop.f32.mrb[0].mxu0
  %v930 = vpop.f32.mrb[0].mxu0
  %v931 = vadd.f32 %v216, %v930
  %v932 = vpop.f32.mrb[0].mxu0
  %933 = vmatprep.mubr.bf16.mxu0 0
  %934 = vmatmul.mubr.bf16.gmra.mrb[0].mxu0 %v408
  %v935 = vpop.f32.mrb[0].mxu0
  %v936 = vadd.f32 %v216, %v935
  %v937 = vpop.f32.mrb[0].mxu0
  %v938 = vpop.f32.mrb[0].mxu0
  %v939 = vadd.f32 %v216, %v938
  %v940 = vpop.f32.mrb[0].mxu0
  %941 = vmatprep.mubr.bf16.mxu0 0
  %942 = vmatmul.mubr.bf16.gmra.mrb[0].mxu0 %v411
  %v943 = vpop.f32.mrb[0].mxu0
  %v944 = vadd.f32 %v216, %v943
  %v945 = vpop.f32.mrb[0].mxu0
  %v946 = vpop.f32.mrb[0].mxu0
  %v947 = vadd.f32 %v216, %v946
  %v948 = vpop.f32.mrb[0].mxu0
  %949 = vmatprep.mubr.bf16.mxu0 0
  %950 = vmatmul.mubr.bf16.gmra.mrb[0].mxu0 %v414
  %v951 = vpop.f32.mrb[0].mxu0
  %v952 = vadd.f32 %v216, %v951
  %v953 = vpop.f32.mrb[0].mxu0
  %v954 = vpop.f32.mrb[0].mxu0
  %v955 = vadd.f32 %v216, %v954
  %v956 = vpop.f32.mrb[0].mxu0
  %957 = vmatprep.mubr.bf16.mxu0 0
  %958 = vmatmul.mubr.bf16.gmra.mrb[0].mxu0 %v417
  %v959 = vpop.f32.mrb[0].mxu0
  %v960 = vadd.f32 %v216, %v959
  %v961 = vpop.f32.mrb[0].mxu0
  %v962 = vpop.f32.mrb[0].mxu0
  %v963 = vadd.f32 %v216, %v962
  %v964 = vpop.f32.mrb[0].mxu0
  %965 = vmatprep.mubr.bf16.mxu0 0
  %966 = vmatmul.mubr.bf16.gmra.mrb[0].mxu0 %v420
  %v967 = vpop.f32.mrb[0].mxu0
  %v968 = vadd.f32 %v216, %v967
  %v969 = vpop.f32.mrb[0].mxu0
  %v970 = vpop.f32.mrb[0].mxu0
  %v971 = vadd.f32 %v216, %v970
  %v972 = vpop.f32.mrb[0].mxu0
  %973 = vdwg.mxu0
  %v974 = vmul.f32 %v464, 0.5
  %v975 = vmul.f32 %v467, 0.5
  %v976 = vmul.f32 %v472, 0.5
  %v977 = vmul.f32 %v475, 0.5
  %v978 = vmul.f32 %v480, 0.5
  %v979 = vmul.f32 %v483, 0.5
  %v980 = vmul.f32 %v488, 0.5
  %v981 = vmul.f32 %v491, 0.5
  %v982 = vmul.f32 %v496, 0.5
  %v983 = vmul.f32 %v499, 0.5
  %v984 = vmul.f32 %v504, 0.5
  %v985 = vmul.f32 %v507, 0.5
  %v986 = vmul.f32 %v512, 0.5
  %v987 = vmul.f32 %v515, 0.5
  %v988 = vmul.f32 %v520, 0.5
  %v989 = vmul.f32 %v523, 0.5
  %v990 = vmul.f32 %v528, 0.5
  %v991 = vmul.f32 %v531, 0.5
  %v992 = vmul.f32 %v536, 0.5
  %v993 = vmul.f32 %v539, 0.5
  %v994 = vmul.f32 %v544, 0.5
  %v995 = vmul.f32 %v547, 0.5
  %v996 = vmul.f32 %v552, 0.5
  %v997 = vmul.f32 %v555, 0.5
  %v998 = vmul.f32 %v560, 0.5
  %v999 = vmul.f32 %v563, 0.5
  %v1000 = vmul.f32 %v568, 0.5
  %v1001 = vmul.f32 %v571, 0.5
  %v1002 = vmul.f32 %v576, 0.5
  %v1003 = vmul.f32 %v579, 0.5
  %v1004 = vmul.f32 %v584, 0.5
  %v1005 = vmul.f32 %v587, 0.5
  %v1006 = vmul.f32 %v592, 0.5
  %v1007 = vmul.f32 %v595, 0.5
  %v1008 = vmul.f32 %v600, 0.5
  %v1009 = vmul.f32 %v603, 0.5
  %v1010 = vmul.f32 %v608, 0.5
  %v1011 = vmul.f32 %v611, 0.5
  %v1012 = vmul.f32 %v616, 0.5
  %v1013 = vmul.f32 %v619, 0.5
  %v1014 = vmul.f32 %v624, 0.5
  %v1015 = vmul.f32 %v627, 0.5
  %v1016 = vmul.f32 %v632, 0.5
  %v1017 = vmul.f32 %v635, 0.5
  %v1018 = vmul.f32 %v640, 0.5
  %v1019 = vmul.f32 %v643, 0.5
  %v1020 = vmul.f32 %v648, 0.5
  %v1021 = vmul.f32 %v651, 0.5
  %v1022 = vmul.f32 %v656, 0.5
  %v1023 = vmul.f32 %v659, 0.5
  %v1024 = vmul.f32 %v664, 0.5
  %v1025 = vmul.f32 %v667, 0.5
  %v1026 = vmul.f32 %v672, 0.5
  %v1027 = vmul.f32 %v675, 0.5
  %v1028 = vmul.f32 %v680, 0.5
  %v1029 = vmul.f32 %v683, 0.5
  %v1030 = vmul.f32 %v688, 0.5
  %v1031 = vmul.f32 %v691, 0.5
  %v1032 = vmul.f32 %v696, 0.5
  %v1033 = vmul.f32 %v699, 0.5
  %v1034 = vmul.f32 %v704, 0.5
  %v1035 = vmul.f32 %v707, 0.5
  %v1036 = vmul.f32 %v712, 0.5
  %v1037 = vmul.f32 %v715, 0.5
  %v1038 = vmul.f32 %v720, 0.5
  %v1039 = vmul.f32 %v723, 0.5
  %v1040 = vmul.f32 %v728, 0.5
  %v1041 = vmul.f32 %v731, 0.5
  %v1042 = vmul.f32 %v736, 0.5
  %v1043 = vmul.f32 %v739, 0.5
  %v1044 = vmul.f32 %v744, 0.5
  %v1045 = vmul.f32 %v747, 0.5
  %v1046 = vmul.f32 %v752, 0.5
  %v1047 = vmul.f32 %v755, 0.5
  %v1048 = vmul.f32 %v760, 0.5
  %v1049 = vmul.f32 %v763, 0.5
  %v1050 = vmul.f32 %v768, 0.5
  %v1051 = vmul.f32 %v771, 0.5
  %v1052 = vmul.f32 %v776, 0.5
  %v1053 = vmul.f32 %v779, 0.5
  %v1054 = vmul.f32 %v784, 0.5
  %v1055 = vmul.f32 %v787, 0.5
  %v1056 = vmul.f32 %v792, 0.5
  %v1057 = vmul.f32 %v795, 0.5
  %v1058 = vmul.f32 %v800, 0.5
  %v1059 = vmul.f32 %v803, 0.5
  %v1060 = vmul.f32 %v808, 0.5
  %v1061 = vmul.f32 %v811, 0.5
  %v1062 = vmul.f32 %v816, 0.5
  %v1063 = vmul.f32 %v819, 0.5
  %v1064 = vmul.f32 %v824, 0.5
  %v1065 = vmul.f32 %v827, 0.5
  %v1066 = vmul.f32 %v832, 0.5
  %v1067 = vmul.f32 %v835, 0.5
  %v1068 = vmul.f32 %v840, 0.5
  %v1069 = vmul.f32 %v843, 0.5
  %v1070 = vmul.f32 %v848, 0.5
  %v1071 = vmul.f32 %v851, 0.5
  %v1072 = vmul.f32 %v856, 0.5
  %v1073 = vmul.f32 %v859, 0.5
  %v1074 = vmul.f32 %v864, 0.5
  %v1075 = vmul.f32 %v867, 0.5
  %v1076 = vmul.f32 %v872, 0.5
  %v1077 = vmul.f32 %v875, 0.5
  %v1078 = vmul.f32 %v880, 0.5
  %v1079 = vmul.f32 %v883, 0.5
  %v1080 = vmul.f32 %v888, 0.5
  %v1081 = vmul.f32 %v891, 0.5
  %v1082 = vmul.f32 %v896, 0.5
  %v1083 = vmul.f32 %v899, 0.5
  %v1084 = vmul.f32 %v904, 0.5
  %v1085 = vmul.f32 %v907, 0.5
  %v1086 = vmul.f32 %v912, 0.5
  %v1087 = vmul.f32 %v915, 0.5
  %v1088 = vmul.f32 %v920, 0.5
  %v1089 = vmul.f32 %v923, 0.5
  %v1090 = vmul.f32 %v928, 0.5
  %v1091 = vmul.f32 %v931, 0.5
  %v1092 = vmul.f32 %v936, 0.5
  %v1093 = vmul.f32 %v939, 0.5
  %v1094 = vmul.f32 %v944, 0.5
  %v1095 = vmul.f32 %v947, 0.5
  %v1096 = vmul.f32 %v952, 0.5
  %v1097 = vmul.f32 %v955, 0.5
  %v1098 = vmul.f32 %v960, 0.5
  %v1099 = vmul.f32 %v963, 0.5
  %v1100 = vmul.f32 %v968, 0.5
  %v1101 = vmul.f32 %v971, 0.5
  %v1102 = vmul.f32 %v464, 0.70710677
  %v1103 = vmul.f32 %v467, 0.70710677
  %v1104 = vmul.f32 %v472, 0.70710677
  %v1105 = vmul.f32 %v475, 0.70710677
  %v1106 = vmul.f32 %v480, 0.70710677
  %v1107 = vmul.f32 %v483, 0.70710677
  %v1108 = vmul.f32 %v488, 0.70710677
  %v1109 = vmul.f32 %v491, 0.70710677
  %v1110 = vmul.f32 %v496, 0.70710677
  %v1111 = vmul.f32 %v499, 0.70710677
  %v1112 = vmul.f32 %v504, 0.70710677
  %v1113 = vmul.f32 %v507, 0.70710677
  %v1114 = vmul.f32 %v512, 0.70710677
  %v1115 = vmul.f32 %v515, 0.70710677
  %v1116 = vmul.f32 %v520, 0.70710677
  %v1117 = vmul.f32 %v523, 0.70710677
  %v1118 = vmul.f32 %v528, 0.70710677
  %v1119 = vmul.f32 %v531, 0.70710677
  %v1120 = vmul.f32 %v536, 0.70710677
  %v1121 = vmul.f32 %v539, 0.70710677
  %v1122 = vmul.f32 %v544, 0.70710677
  %v1123 = vmul.f32 %v547, 0.70710677
  %v1124 = vmul.f32 %v552, 0.70710677
  %v1125 = vmul.f32 %v555, 0.70710677
  %v1126 = vmul.f32 %v560, 0.70710677
  %v1127 = vmul.f32 %v563, 0.70710677
  %v1128 = vmul.f32 %v568, 0.70710677
  %v1129 = vmul.f32 %v571, 0.70710677
  %v1130 = vmul.f32 %v576, 0.70710677
  %v1131 = vmul.f32 %v579, 0.70710677
  %v1132 = vmul.f32 %v584, 0.70710677
  %v1133 = vmul.f32 %v587, 0.70710677
  %v1134 = vmul.f32 %v592, 0.70710677
  %v1135 = vmul.f32 %v595, 0.70710677
  %v1136 = vmul.f32 %v600, 0.70710677
  %v1137 = vmul.f32 %v603, 0.70710677
  %v1138 = vmul.f32 %v608, 0.70710677
  %v1139 = vmul.f32 %v611, 0.70710677
  %v1140 = vmul.f32 %v616, 0.70710677
  %v1141 = vmul.f32 %v619, 0.70710677
  %v1142 = vmul.f32 %v624, 0.70710677
  %v1143 = vmul.f32 %v627, 0.70710677
  %v1144 = vmul.f32 %v632, 0.70710677
  %v1145 = vmul.f32 %v635, 0.70710677
  %v1146 = vmul.f32 %v640, 0.70710677
  %v1147 = vmul.f32 %v643, 0.70710677
  %v1148 = vmul.f32 %v648, 0.70710677
  %v1149 = vmul.f32 %v651, 0.70710677
  %v1150 = vmul.f32 %v656, 0.70710677
  %v1151 = vmul.f32 %v659, 0.70710677
  %v1152 = vmul.f32 %v664, 0.70710677
  %v1153 = vmul.f32 %v667, 0.70710677
  %v1154 = vmul.f32 %v672, 0.70710677
  %v1155 = vmul.f32 %v675, 0.70710677
  %v1156 = vmul.f32 %v680, 0.70710677
  %v1157 = vmul.f32 %v683, 0.70710677
  %v1158 = vmul.f32 %v688, 0.70710677
  %v1159 = vmul.f32 %v691, 0.70710677
  %v1160 = vmul.f32 %v696, 0.70710677
  %v1161 = vmul.f32 %v699, 0.70710677
  %v1162 = vmul.f32 %v704, 0.70710677
  %v1163 = vmul.f32 %v707, 0.70710677
  %v1164 = vmul.f32 %v712, 0.70710677
  %v1165 = vmul.f32 %v715, 0.70710677
  %v1166 = vmul.f32 %v720, 0.70710677
  %v1167 = vmul.f32 %v723, 0.70710677
  %v1168 = vmul.f32 %v728, 0.70710677
  %v1169 = vmul.f32 %v731, 0.70710677
  %v1170 = vmul.f32 %v736, 0.70710677
  %v1171 = vmul.f32 %v739, 0.70710677
  %v1172 = vmul.f32 %v744, 0.70710677
  %v1173 = vmul.f32 %v747, 0.70710677
  %v1174 = vmul.f32 %v752, 0.70710677
  %v1175 = vmul.f32 %v755, 0.70710677
  %v1176 = vmul.f32 %v760, 0.70710677
  %v1177 = vmul.f32 %v763, 0.70710677
  %v1178 = vmul.f32 %v768, 0.70710677
  %v1179 = vmul.f32 %v771, 0.70710677
  %v1180 = vmul.f32 %v776, 0.70710677
  %v1181 = vmul.f32 %v779, 0.70710677
  %v1182 = vmul.f32 %v784, 0.70710677
  %v1183 = vmul.f32 %v787, 0.70710677
  %v1184 = vmul.f32 %v792, 0.70710677
  %v1185 = vmul.f32 %v795, 0.70710677
  %v1186 = vmul.f32 %v800, 0.70710677
  %v1187 = vmul.f32 %v803, 0.70710677
  %v1188 = vmul.f32 %v808, 0.70710677
  %v1189 = vmul.f32 %v811, 0.70710677
  %v1190 = vmul.f32 %v816, 0.70710677
  %v1191 = vmul.f32 %v819, 0.70710677
  %v1192 = vmul.f32 %v824, 0.70710677
  %v1193 = vmul.f32 %v827, 0.70710677
  %v1194 = vmul.f32 %v832, 0.70710677
  %v1195 = vmul.f32 %v835, 0.70710677
  %v1196 = vmul.f32 %v840, 0.70710677
  %v1197 = vmul.f32 %v843, 0.70710677
  %v1198 = vmul.f32 %v848, 0.70710677
  %v1199 = vmul.f32 %v851, 0.70710677
  %v1200 = vmul.f32 %v856, 0.70710677
  %v1201 = vmul.f32 %v859, 0.70710677
  %v1202 = vmul.f32 %v864, 0.70710677
  %v1203 = vmul.f32 %v867, 0.70710677
  %v1204 = vmul.f32 %v872, 0.70710677
  %v1205 = vmul.f32 %v875, 0.70710677
  %v1206 = vmul.f32 %v880, 0.70710677
  %v1207 = vmul.f32 %v883, 0.70710677
  %v1208 = vmul.f32 %v888, 0.70710677
  %v1209 = vmul.f32 %v891, 0.70710677
  %v1210 = vmul.f32 %v896, 0.70710677
  %v1211 = vmul.f32 %v899, 0.70710677
  %v1212 = vmul.f32 %v904, 0.70710677
  %v1213 = vmul.f32 %v907, 0.70710677
  %v1214 = vmul.f32 %v912, 0.70710677
  %v1215 = vmul.f32 %v915, 0.70710677
  %v1216 = vmul.f32 %v920, 0.70710677
  %v1217 = vmul.f32 %v923, 0.70710677
  %v1218 = vmul.f32 %v928, 0.70710677
  %v1219 = vmul.f32 %v931, 0.70710677
  %v1220 = vmul.f32 %v936, 0.70710677
  %v1221 = vmul.f32 %v939, 0.70710677
  %v1222 = vmul.f32 %v944, 0.70710677
  %v1223 = vmul.f32 %v947, 0.70710677
  %v1224 = vmul.f32 %v952, 0.70710677
  %v1225 = vmul.f32 %v955, 0.70710677
  %v1226 = vmul.f32 %v960, 0.70710677
  %v1227 = vmul.f32 %v963, 0.70710677
  %v1228 = vmul.f32 %v968, 0.70710677
  %v1229 = vmul.f32 %v971, 0.70710677
  %v1230 = vand.u32 2147483647, %v1102
  %v1231 = vand.u32 2147483647, %v1103
  %v1232 = vand.u32 2147483647, %v1104
  %v1233 = vand.u32 2147483647, %v1105
  %v1234 = vand.u32 2147483647, %v1106
  %v1235 = vand.u32 2147483647, %v1107
  %v1236 = vand.u32 2147483647, %v1108
  %v1237 = vand.u32 2147483647, %v1109
  %v1238 = vand.u32 2147483647, %v1110
  %v1239 = vand.u32 2147483647, %v1111
  %v1240 = vand.u32 2147483647, %v1112
  %v1241 = vand.u32 2147483647, %v1113
  %v1242 = vand.u32 2147483647, %v1114
  %v1243 = vand.u32 2147483647, %v1115
  %v1244 = vand.u32 2147483647, %v1116
  %v1245 = vand.u32 2147483647, %v1117
  %v1246 = vand.u32 2147483647, %v1118
  %v1247 = vand.u32 2147483647, %v1119
  %v1248 = vand.u32 2147483647, %v1120
  %v1249 = vand.u32 2147483647, %v1121
  %v1250 = vand.u32 2147483647, %v1122
  %v1251 = vand.u32 2147483647, %v1123
  %v1252 = vand.u32 2147483647, %v1124
  %v1253 = vand.u32 2147483647, %v1125
  %v1254 = vand.u32 2147483647, %v1126
  %v1255 = vand.u32 2147483647, %v1127
  %v1256 = vand.u32 2147483647, %v1128
  %v1257 = vand.u32 2147483647, %v1129
  %v1258 = vand.u32 2147483647, %v1130
  %v1259 = vand.u32 2147483647, %v1131
  %v1260 = vand.u32 2147483647, %v1132
  %v1261 = vand.u32 2147483647, %v1133
  %v1262 = vand.u32 2147483647, %v1134
  %v1263 = vand.u32 2147483647, %v1135
  %v1264 = vand.u32 2147483647, %v1136
  %v1265 = vand.u32 2147483647, %v1137
  %v1266 = vand.u32 2147483647, %v1138
  %v1267 = vand.u32 2147483647, %v1139
  %v1268 = vand.u32 2147483647, %v1140
  %v1269 = vand.u32 2147483647, %v1141
  %v1270 = vand.u32 2147483647, %v1142
  %v1271 = vand.u32 2147483647, %v1143
  %v1272 = vand.u32 2147483647, %v1144
  %v1273 = vand.u32 2147483647, %v1145
  %v1274 = vand.u32 2147483647, %v1146
  %v1275 = vand.u32 2147483647, %v1147
  %v1276 = vand.u32 2147483647, %v1148
  %v1277 = vand.u32 2147483647, %v1149
  %v1278 = vand.u32 2147483647, %v1150
  %v1279 = vand.u32 2147483647, %v1151
  %v1280 = vand.u32 2147483647, %v1152
  %v1281 = vand.u32 2147483647, %v1153
  %v1282 = vand.u32 2147483647, %v1154
  %v1283 = vand.u32 2147483647, %v1155
  %v1284 = vand.u32 2147483647, %v1156
  %v1285 = vand.u32 2147483647, %v1157
  %v1286 = vand.u32 2147483647, %v1158
  %v1287 = vand.u32 2147483647, %v1159
  %v1288 = vand.u32 2147483647, %v1160
  %v1289 = vand.u32 2147483647, %v1161
  %v1290 = vand.u32 2147483647, %v1162
  %v1291 = vand.u32 2147483647, %v1163
  %v1292 = vand.u32 2147483647, %v1164
  %v1293 = vand.u32 2147483647, %v1165
  %v1294 = vand.u32 2147483647, %v1166
  %v1295 = vand.u32 2147483647, %v1167
  %v1296 = vand.u32 2147483647, %v1168
  %v1297 = vand.u32 2147483647, %v1169
  %v1298 = vand.u32 2147483647, %v1170
  %v1299 = vand.u32 2147483647, %v1171
  %v1300 = vand.u32 2147483647, %v1172
  %v1301 = vand.u32 2147483647, %v1173
  %v1302 = vand.u32 2147483647, %v1174
  %v1303 = vand.u32 2147483647, %v1175
  %v1304 = vand.u32 2147483647, %v1176
  %v1305 = vand.u32 2147483647, %v1177
  %v1306 = vand.u32 2147483647, %v1178
  %v1307 = vand.u32 2147483647, %v1179
  %v1308 = vand.u32 2147483647, %v1180
  %v1309 = vand.u32 2147483647, %v1181
  %v1310 = vand.u32 2147483647, %v1182
  %v1311 = vand.u32 2147483647, %v1183
  %v1312 = vand.u32 2147483647, %v1184
  %v1313 = vand.u32 2147483647, %v1185
  %v1314 = vand.u32 2147483647, %v1186
  %v1315 = vand.u32 2147483647, %v1187
  %v1316 = vand.u32 2147483647, %v1188
  %v1317 = vand.u32 2147483647, %v1189
  %v1318 = vand.u32 2147483647, %v1190
  %v1319 = vand.u32 2147483647, %v1191
  %v1320 = vand.u32 2147483647, %v1192
  %v1321 = vand.u32 2147483647, %v1193
  %v1322 = vand.u32 2147483647, %v1194
  %v1323 = vand.u32 2147483647, %v1195
  %v1324 = vand.u32 2147483647, %v1196
  %v1325 = vand.u32 2147483647, %v1197
  %v1326 = vand.u32 2147483647, %v1198
  %v1327 = vand.u32 2147483647, %v1199
  %v1328 = vand.u32 2147483647, %v1200
  %v1329 = vand.u32 2147483647, %v1201
  %v1330 = vand.u32 2147483647, %v1202
  %v1331 = vand.u32 2147483647, %v1203
  %v1332 = vand.u32 2147483647, %v1204
  %v1333 = vand.u32 2147483647, %v1205
  %v1334 = vand.u32 2147483647, %v1206
  %v1335 = vand.u32 2147483647, %v1207
  %v1336 = vand.u32 2147483647, %v1208
  %v1337 = vand.u32 2147483647, %v1209
  %v1338 = vand.u32 2147483647, %v1210
  %v1339 = vand.u32 2147483647, %v1211
  %v1340 = vand.u32 2147483647, %v1212
  %v1341 = vand.u32 2147483647, %v1213
  %v1342 = vand.u32 2147483647, %v1214
  %v1343 = vand.u32 2147483647, %v1215
  %v1344 = vand.u32 2147483647, %v1216
  %v1345 = vand.u32 2147483647, %v1217
  %v1346 = vand.u32 2147483647, %v1218
  %v1347 = vand.u32 2147483647, %v1219
  %v1348 = vand.u32 2147483647, %v1220
  %v1349 = vand.u32 2147483647, %v1221
  %v1350 = vand.u32 2147483647, %v1222
  %v1351 = vand.u32 2147483647, %v1223
  %v1352 = vand.u32 2147483647, %v1224
  %v1353 = vand.u32 2147483647, %v1225
  %v1354 = vand.u32 2147483647, %v1226
  %v1355 = vand.u32 2147483647, %v1227
  %v1356 = vand.u32 2147483647, %v1228
  %v1357 = vand.u32 2147483647, %v1229
  %v1358 = vmul.f32 %v1230, 0.3275911
  %v1359 = vmul.f32 %v1231, 0.3275911
  %v1360 = vmul.f32 %v1232, 0.3275911
  %v1361 = vmul.f32 %v1233, 0.3275911
  %v1362 = vmul.f32 %v1234, 0.3275911
  %v1363 = vmul.f32 %v1235, 0.3275911
  %v1364 = vmul.f32 %v1236, 0.3275911
  %v1365 = vmul.f32 %v1237, 0.3275911
  %v1366 = vmul.f32 %v1238, 0.3275911
  %v1367 = vmul.f32 %v1239, 0.3275911
  %v1368 = vmul.f32 %v1240, 0.3275911
  %v1369 = vmul.f32 %v1241, 0.3275911
  %v1370 = vmul.f32 %v1242, 0.3275911
  %v1371 = vmul.f32 %v1243, 0.3275911
  %v1372 = vmul.f32 %v1244, 0.3275911
  %v1373 = vmul.f32 %v1245, 0.3275911
  %v1374 = vmul.f32 %v1246, 0.3275911
  %v1375 = vmul.f32 %v1247, 0.3275911
  %v1376 = vmul.f32 %v1248, 0.3275911
  %v1377 = vmul.f32 %v1249, 0.3275911
  %v1378 = vmul.f32 %v1250, 0.3275911
  %v1379 = vmul.f32 %v1251, 0.3275911
  %v1380 = vmul.f32 %v1252, 0.3275911
  %v1381 = vmul.f32 %v1253, 0.3275911
  %v1382 = vmul.f32 %v1254, 0.3275911
  %v1383 = vmul.f32 %v1255, 0.3275911
  %v1384 = vmul.f32 %v1256, 0.3275911
  %v1385 = vmul.f32 %v1257, 0.3275911
  %v1386 = vmul.f32 %v1258, 0.3275911
  %v1387 = vmul.f32 %v1259, 0.3275911
  %v1388 = vmul.f32 %v1260, 0.3275911
  %v1389 = vmul.f32 %v1261, 0.3275911
  %v1390 = vmul.f32 %v1262, 0.3275911
  %v1391 = vmul.f32 %v1263, 0.3275911
  %v1392 = vmul.f32 %v1264, 0.3275911
  %v1393 = vmul.f32 %v1265, 0.3275911
  %v1394 = vmul.f32 %v1266, 0.3275911
  %v1395 = vmul.f32 %v1267, 0.3275911
  %v1396 = vmul.f32 %v1268, 0.3275911
  %v1397 = vmul.f32 %v1269, 0.3275911
  %v1398 = vmul.f32 %v1270, 0.3275911
  %v1399 = vmul.f32 %v1271, 0.3275911
  %v1400 = vmul.f32 %v1272, 0.3275911
  %v1401 = vmul.f32 %v1273, 0.3275911
  %v1402 = vmul.f32 %v1274, 0.3275911
  %v1403 = vmul.f32 %v1275, 0.3275911
  %v1404 = vmul.f32 %v1276, 0.3275911
  %v1405 = vmul.f32 %v1277, 0.3275911
  %v1406 = vmul.f32 %v1278, 0.3275911
  %v1407 = vmul.f32 %v1279, 0.3275911
  %v1408 = vmul.f32 %v1280, 0.3275911
  %v1409 = vmul.f32 %v1281, 0.3275911
  %v1410 = vmul.f32 %v1282, 0.3275911
  %v1411 = vmul.f32 %v1283, 0.3275911
  %v1412 = vmul.f32 %v1284, 0.3275911
  %v1413 = vmul.f32 %v1285, 0.3275911
  %v1414 = vmul.f32 %v1286, 0.3275911
  %v1415 = vmul.f32 %v1287, 0.3275911
  %v1416 = vmul.f32 %v1288, 0.3275911
  %v1417 = vmul.f32 %v1289, 0.3275911
  %v1418 = vmul.f32 %v1290, 0.3275911
  %v1419 = vmul.f32 %v1291, 0.3275911
  %v1420 = vmul.f32 %v1292, 0.3275911
  %v1421 = vmul.f32 %v1293, 0.3275911
  %v1422 = vmul.f32 %v1294, 0.3275911
  %v1423 = vmul.f32 %v1295, 0.3275911
  %v1424 = vmul.f32 %v1296, 0.3275911
  %v1425 = vmul.f32 %v1297, 0.3275911
  %v1426 = vmul.f32 %v1298, 0.3275911
  %v1427 = vmul.f32 %v1299, 0.3275911
  %v1428 = vmul.f32 %v1300, 0.3275911
  %v1429 = vmul.f32 %v1301, 0.3275911
  %v1430 = vmul.f32 %v1302, 0.3275911
  %v1431 = vmul.f32 %v1303, 0.3275911
  %v1432 = vmul.f32 %v1304, 0.3275911
  %v1433 = vmul.f32 %v1305, 0.3275911
  %v1434 = vmul.f32 %v1306, 0.3275911
  %v1435 = vmul.f32 %v1307, 0.3275911
  %v1436 = vmul.f32 %v1308, 0.3275911
  %v1437 = vmul.f32 %v1309, 0.3275911
  %v1438 = vmul.f32 %v1310, 0.3275911
  %v1439 = vmul.f32 %v1311, 0.3275911
  %v1440 = vmul.f32 %v1312, 0.3275911
  %v1441 = vmul.f32 %v1313, 0.3275911
  %v1442 = vmul.f32 %v1314, 0.3275911
  %v1443 = vmul.f32 %v1315, 0.3275911
  %v1444 = vmul.f32 %v1316, 0.3275911
  %v1445 = vmul.f32 %v1317, 0.3275911
  %v1446 = vmul.f32 %v1318, 0.3275911
  %v1447 = vmul.f32 %v1319, 0.3275911
  %v1448 = vmul.f32 %v1320, 0.3275911
  %v1449 = vmul.f32 %v1321, 0.3275911
  %v1450 = vmul.f32 %v1322, 0.3275911
  %v1451 = vmul.f32 %v1323, 0.3275911
  %v1452 = vmul.f32 %v1324, 0.3275911
  %v1453 = vmul.f32 %v1325, 0.3275911
  %v1454 = vmul.f32 %v1326, 0.3275911
  %v1455 = vmul.f32 %v1327, 0.3275911
  %v1456 = vmul.f32 %v1328, 0.3275911
  %v1457 = vmul.f32 %v1329, 0.3275911
  %v1458 = vmul.f32 %v1330, 0.3275911
  %v1459 = vmul.f32 %v1331, 0.3275911
  %v1460 = vmul.f32 %v1332, 0.3275911
  %v1461 = vmul.f32 %v1333, 0.3275911
  %v1462 = vmul.f32 %v1334, 0.3275911
  %v1463 = vmul.f32 %v1335, 0.3275911
  %v1464 = vmul.f32 %v1336, 0.3275911
  %v1465 = vmul.f32 %v1337, 0.3275911
  %v1466 = vmul.f32 %v1338, 0.3275911
  %v1467 = vmul.f32 %v1339, 0.3275911
  %v1468 = vmul.f32 %v1340, 0.3275911
  %v1469 = vmul.f32 %v1341, 0.3275911
  %v1470 = vmul.f32 %v1342, 0.3275911
  %v1471 = vmul.f32 %v1343, 0.3275911
  %v1472 = vmul.f32 %v1344, 0.3275911
  %v1473 = vmul.f32 %v1345, 0.3275911
  %v1474 = vmul.f32 %v1346, 0.3275911
  %v1475 = vmul.f32 %v1347, 0.3275911
  %v1476 = vmul.f32 %v1348, 0.3275911
  %v1477 = vmul.f32 %v1349, 0.3275911
  %v1478 = vmul.f32 %v1350, 0.3275911
  %v1479 = vmul.f32 %v1351, 0.3275911
  %v1480 = vmul.f32 %v1352, 0.3275911
  %v1481 = vmul.f32 %v1353, 0.3275911
  %v1482 = vmul.f32 %v1354, 0.3275911
  %v1483 = vmul.f32 %v1355, 0.3275911
  %v1484 = vmul.f32 %v1356, 0.3275911
  %v1485 = vmul.f32 %v1357, 0.3275911
  %v1486 = vadd.f32 %v1358, 1.0
  %v1487 = vadd.f32 %v1359, 1.0
  %v1488 = vadd.f32 %v1360, 1.0
  %v1489 = vadd.f32 %v1361, 1.0
  %v1490 = vadd.f32 %v1362, 1.0
  %v1491 = vadd.f32 %v1363, 1.0
  %v1492 = vadd.f32 %v1364, 1.0
  %v1493 = vadd.f32 %v1365, 1.0
  %v1494 = vadd.f32 %v1366, 1.0
  %v1495 = vadd.f32 %v1367, 1.0
  %v1496 = vadd.f32 %v1368, 1.0
  %v1497 = vadd.f32 %v1369, 1.0
  %v1498 = vadd.f32 %v1370, 1.0
  %v1499 = vadd.f32 %v1371, 1.0
  %v1500 = vadd.f32 %v1372, 1.0
  %v1501 = vadd.f32 %v1373, 1.0
  %v1502 = vadd.f32 %v1374, 1.0
  %v1503 = vadd.f32 %v1375, 1.0
  %v1504 = vadd.f32 %v1376, 1.0
  %v1505 = vadd.f32 %v1377, 1.0
  %v1506 = vadd.f32 %v1378, 1.0
  %v1507 = vadd.f32 %v1379, 1.0
  %v1508 = vadd.f32 %v1380, 1.0
  %v1509 = vadd.f32 %v1381, 1.0
  %v1510 = vadd.f32 %v1382, 1.0
  %v1511 = vadd.f32 %v1383, 1.0
  %v1512 = vadd.f32 %v1384, 1.0
  %v1513 = vadd.f32 %v1385, 1.0
  %v1514 = vadd.f32 %v1386, 1.0
  %v1515 = vadd.f32 %v1387, 1.0
  %v1516 = vadd.f32 %v1388, 1.0
  %v1517 = vadd.f32 %v1389, 1.0
  %v1518 = vadd.f32 %v1390, 1.0
  %v1519 = vadd.f32 %v1391, 1.0
  %v1520 = vadd.f32 %v1392, 1.0
  %v1521 = vadd.f32 %v1393, 1.0
  %v1522 = vadd.f32 %v1394, 1.0
  %v1523 = vadd.f32 %v1395, 1.0
  %v1524 = vadd.f32 %v1396, 1.0
  %v1525 = vadd.f32 %v1397, 1.0
  %v1526 = vadd.f32 %v1398, 1.0
  %v1527 = vadd.f32 %v1399, 1.0
  %v1528 = vadd.f32 %v1400, 1.0
  %v1529 = vadd.f32 %v1401, 1.0
  %v1530 = vadd.f32 %v1402, 1.0
  %v1531 = vadd.f32 %v1403, 1.0
  %v1532 = vadd.f32 %v1404, 1.0
  %v1533 = vadd.f32 %v1405, 1.0
  %v1534 = vadd.f32 %v1406, 1.0
  %v1535 = vadd.f32 %v1407, 1.0
  %v1536 = vadd.f32 %v1408, 1.0
  %v1537 = vadd.f32 %v1409, 1.0
  %v1538 = vadd.f32 %v1410, 1.0
  %v1539 = vadd.f32 %v1411, 1.0
  %v1540 = vadd.f32 %v1412, 1.0
  %v1541 = vadd.f32 %v1413, 1.0
  %v1542 = vadd.f32 %v1414, 1.0
  %v1543 = vadd.f32 %v1415, 1.0
  %v1544 = vadd.f32 %v1416, 1.0
  %v1545 = vadd.f32 %v1417, 1.0
  %v1546 = vadd.f32 %v1418, 1.0
  %v1547 = vadd.f32 %v1419, 1.0
  %v1548 = vadd.f32 %v1420, 1.0
  %v1549 = vadd.f32 %v1421, 1.0
  %v1550 = vadd.f32 %v1422, 1.0
  %v1551 = vadd.f32 %v1423, 1.0
  %v1552 = vadd.f32 %v1424, 1.0
  %v1553 = vadd.f32 %v1425, 1.0
  %v1554 = vadd.f32 %v1426, 1.0
  %v1555 = vadd.f32 %v1427, 1.0
  %v1556 = vadd.f32 %v1428, 1.0
  %v1557 = vadd.f32 %v1429, 1.0
  %v1558 = vadd.f32 %v1430, 1.0
  %v1559 = vadd.f32 %v1431, 1.0
  %v1560 = vadd.f32 %v1432, 1.0
  %v1561 = vadd.f32 %v1433, 1.0
  %v1562 = vadd.f32 %v1434, 1.0
  %v1563 = vadd.f32 %v1435, 1.0
  %v1564 = vadd.f32 %v1436, 1.0
  %v1565 = vadd.f32 %v1437, 1.0
  %v1566 = vadd.f32 %v1438, 1.0
  %v1567 = vadd.f32 %v1439, 1.0
  %v1568 = vadd.f32 %v1440, 1.0
  %v1569 = vadd.f32 %v1441, 1.0
  %v1570 = vadd.f32 %v1442, 1.0
  %v1571 = vadd.f32 %v1443, 1.0
  %v1572 = vadd.f32 %v1444, 1.0
  %v1573 = vadd.f32 %v1445, 1.0
  %v1574 = vadd.f32 %v1446, 1.0
  %v1575 = vadd.f32 %v1447, 1.0
  %v1576 = vadd.f32 %v1448, 1.0
  %v1577 = vadd.f32 %v1449, 1.0
  %v1578 = vadd.f32 %v1450, 1.0
  %v1579 = vadd.f32 %v1451, 1.0
  %v1580 = vadd.f32 %v1452, 1.0
  %v1581 = vadd.f32 %v1453, 1.0
  %v1582 = vadd.f32 %v1454, 1.0
  %v1583 = vadd.f32 %v1455, 1.0
  %v1584 = vadd.f32 %v1456, 1.0
  %v1585 = vadd.f32 %v1457, 1.0
  %v1586 = vadd.f32 %v1458, 1.0
  %v1587 = vadd.f32 %v1459, 1.0
  %v1588 = vadd.f32 %v1460, 1.0
  %v1589 = vadd.f32 %v1461, 1.0
  %v1590 = vadd.f32 %v1462, 1.0
  %v1591 = vadd.f32 %v1463, 1.0
  %v1592 = vadd.f32 %v1464, 1.0
  %v1593 = vadd.f32 %v1465, 1.0
  %v1594 = vadd.f32 %v1466, 1.0
  %v1595 = vadd.f32 %v1467, 1.0
  %v1596 = vadd.f32 %v1468, 1.0
  %v1597 = vadd.f32 %v1469, 1.0
  %v1598 = vadd.f32 %v1470, 1.0
  %v1599 = vadd.f32 %v1471, 1.0
  %v1600 = vadd.f32 %v1472, 1.0
  %v1601 = vadd.f32 %v1473, 1.0
  %v1602 = vadd.f32 %v1474, 1.0
  %v1603 = vadd.f32 %v1475, 1.0
  %v1604 = vadd.f32 %v1476, 1.0
  %v1605 = vadd.f32 %v1477, 1.0
  %v1606 = vadd.f32 %v1478, 1.0
  %v1607 = vadd.f32 %v1479, 1.0
  %v1608 = vadd.f32 %v1480, 1.0
  %v1609 = vadd.f32 %v1481, 1.0
  %v1610 = vadd.f32 %v1482, 1.0
  %v1611 = vadd.f32 %v1483, 1.0
  %v1612 = vadd.f32 %v1484, 1.0
  %v1613 = vadd.f32 %v1485, 1.0
  %v1614 = vrcp.pop %v1486
  %v1615 = vmul.f32 1.0, %v1614
  %v1616 = vrcp.pop %v1487
  %v1617 = vmul.f32 1.0, %v1616
  %v1618 = vrcp.pop %v1488
  %v1619 = vmul.f32 1.0, %v1618
  %v1620 = vrcp.pop %v1489
  %v1621 = vmul.f32 1.0, %v1620
  %v1622 = vrcp.pop %v1490
  %v1623 = vmul.f32 1.0, %v1622
  %v1624 = vrcp.pop %v1491
  %v1625 = vmul.f32 1.0, %v1624
  %v1626 = vrcp.pop %v1492
  %v1627 = vmul.f32 1.0, %v1626
  %v1628 = vrcp.pop %v1493
  %v1629 = vmul.f32 1.0, %v1628
  %v1630 = vrcp.pop %v1494
  %v1631 = vmul.f32 1.0, %v1630
  %v1632 = vrcp.pop %v1495
  %v1633 = vmul.f32 1.0, %v1632
  %v1634 = vrcp.pop %v1496
  %v1635 = vmul.f32 1.0, %v1634
  %v1636 = vrcp.pop %v1497
  %v1637 = vmul.f32 1.0, %v1636
  %v1638 = vrcp.pop %v1498
  %v1639 = vmul.f32 1.0, %v1638
  %v1640 = vrcp.pop %v1499
  %v1641 = vmul.f32 1.0, %v1640
  %v1642 = vrcp.pop %v1500
  %v1643 = vmul.f32 1.0, %v1642
  %v1644 = vrcp.pop %v1501
  %v1645 = vmul.f32 1.0, %v1644
  %v1646 = vrcp.pop %v1502
  %v1647 = vmul.f32 1.0, %v1646
  %v1648 = vrcp.pop %v1503
  %v1649 = vmul.f32 1.0, %v1648
  %v1650 = vrcp.pop %v1504
  %v1651 = vmul.f32 1.0, %v1650
  %v1652 = vrcp.pop %v1505
  %v1653 = vmul.f32 1.0, %v1652
  %v1654 = vrcp.pop %v1506
  %v1655 = vmul.f32 1.0, %v1654
  %v1656 = vrcp.pop %v1507
  %v1657 = vmul.f32 1.0, %v1656
  %v1658 = vrcp.pop %v1508
  %v1659 = vmul.f32 1.0, %v1658
  %v1660 = vrcp.pop %v1509
  %v1661 = vmul.f32 1.0, %v1660
  %v1662 = vrcp.pop %v1510
  %v1663 = vmul.f32 1.0, %v1662
  %v1664 = vrcp.pop %v1511
  %v1665 = vmul.f32 1.0, %v1664
  %v1666 = vrcp.pop %v1512
  %v1667 = vmul.f32 1.0, %v1666
  %v1668 = vrcp.pop %v1513
  %v1669 = vmul.f32 1.0, %v1668
  %v1670 = vrcp.pop %v1514
  %v1671 = vmul.f32 1.0, %v1670
  %v1672 = vrcp.pop %v1515
  %v1673 = vmul.f32 1.0, %v1672
  %v1674 = vrcp.pop %v1516
  %v1675 = vmul.f32 1.0, %v1674
  %v1676 = vrcp.pop %v1517
  %v1677 = vmul.f32 1.0, %v1676
  %v1678 = vrcp.pop %v1518
  %v1679 = vmul.f32 1.0, %v1678
  %v1680 = vrcp.pop %v1519
  %v1681 = vmul.f32 1.0, %v1680
  %v1682 = vrcp.pop %v1520
  %v1683 = vmul.f32 1.0, %v1682
  %v1684 = vrcp.pop %v1521
  %v1685 = vmul.f32 1.0, %v1684
  %v1686 = vrcp.pop %v1522
  %v1687 = vmul.f32 1.0, %v1686
  %v1688 = vrcp.pop %v1523
  %v1689 = vmul.f32 1.0, %v1688
  %v1690 = vrcp.pop %v1524
  %v1691 = vmul.f32 1.0, %v1690
  %v1692 = vrcp.pop %v1525
  %v1693 = vmul.f32 1.0, %v1692
  %v1694 = vrcp.pop %v1526
  %v1695 = vmul.f32 1.0, %v1694
  %v1696 = vrcp.pop %v1527
  %v1697 = vmul.f32 1.0, %v1696
  %v1698 = vrcp.pop %v1528
  %v1699 = vmul.f32 1.0, %v1698
  %v1700 = vrcp.pop %v1529
  %v1701 = vmul.f32 1.0, %v1700
  %v1702 = vrcp.pop %v1530
  %v1703 = vmul.f32 1.0, %v1702
  %v1704 = vrcp.pop %v1531
  %v1705 = vmul.f32 1.0, %v1704
  %v1706 = vrcp.pop %v1532
  %v1707 = vmul.f32 1.0, %v1706
  %v1708 = vrcp.pop %v1533
  %v1709 = vmul.f32 1.0, %v1708
  %v1710 = vrcp.pop %v1534
  %v1711 = vmul.f32 1.0, %v1710
  %v1712 = vrcp.pop %v1535
  %v1713 = vmul.f32 1.0, %v1712
  %v1714 = vrcp.pop %v1536
  %v1715 = vmul.f32 1.0, %v1714
  %v1716 = vrcp.pop %v1537
  %v1717 = vmul.f32 1.0, %v1716
  %v1718 = vrcp.pop %v1538
  %v1719 = vmul.f32 1.0, %v1718
  %v1720 = vrcp.pop %v1539
  %v1721 = vmul.f32 1.0, %v1720
  %v1722 = vrcp.pop %v1540
  %v1723 = vmul.f32 1.0, %v1722
  %v1724 = vrcp.pop %v1541
  %v1725 = vmul.f32 1.0, %v1724
  %v1726 = vrcp.pop %v1542
  %v1727 = vmul.f32 1.0, %v1726
  %v1728 = vrcp.pop %v1543
  %v1729 = vmul.f32 1.0, %v1728
  %v1730 = vrcp.pop %v1544
  %v1731 = vmul.f32 1.0, %v1730
  %v1732 = vrcp.pop %v1545
  %v1733 = vmul.f32 1.0, %v1732
  %v1734 = vrcp.pop %v1546
  %v1735 = vmul.f32 1.0, %v1734
  %v1736 = vrcp.pop %v1547
  %v1737 = vmul.f32 1.0, %v1736
  %v1738 = vrcp.pop %v1548
  %v1739 = vmul.f32 1.0, %v1738
  %v1740 = vrcp.pop %v1549
  %v1741 = vmul.f32 1.0, %v1740
  %v1742 = vrcp.pop %v1550
  %v1743 = vmul.f32 1.0, %v1742
  %v1744 = vrcp.pop %v1551
  %v1745 = vmul.f32 1.0, %v1744
  %v1746 = vrcp.pop %v1552
  %v1747 = vmul.f32 1.0, %v1746
  %v1748 = vrcp.pop %v1553
  %v1749 = vmul.f32 1.0, %v1748
  %v1750 = vrcp.pop %v1554
  %v1751 = vmul.f32 1.0, %v1750
  %v1752 = vrcp.pop %v1555
  %v1753 = vmul.f32 1.0, %v1752
  %v1754 = vrcp.pop %v1556
  %v1755 = vmul.f32 1.0, %v1754
  %v1756 = vrcp.pop %v1557
  %v1757 = vmul.f32 1.0, %v1756
  %v1758 = vrcp.pop %v1558
  %v1759 = vmul.f32 1.0, %v1758
  %v1760 = vrcp.pop %v1559
  %v1761 = vmul.f32 1.0, %v1760
  %v1762 = vrcp.pop %v1560
  %v1763 = vmul.f32 1.0, %v1762
  %v1764 = vrcp.pop %v1561
  %v1765 = vmul.f32 1.0, %v1764
  %v1766 = vrcp.pop %v1562
  %v1767 = vmul.f32 1.0, %v1766
  %v1768 = vrcp.pop %v1563
  %v1769 = vmul.f32 1.0, %v1768
  %v1770 = vrcp.pop %v1564
  %v1771 = vmul.f32 1.0, %v1770
  %v1772 = vrcp.pop %v1565
  %v1773 = vmul.f32 1.0, %v1772
  %v1774 = vrcp.pop %v1566
  %v1775 = vmul.f32 1.0, %v1774
  %v1776 = vrcp.pop %v1567
  %v1777 = vmul.f32 1.0, %v1776
  %v1778 = vrcp.pop %v1568
  %v1779 = vmul.f32 1.0, %v1778
  %v1780 = vrcp.pop %v1569
  %v1781 = vmul.f32 1.0, %v1780
  %v1782 = vrcp.pop %v1570
  %v1783 = vmul.f32 1.0, %v1782
  %v1784 = vrcp.pop %v1571
  %v1785 = vmul.f32 1.0, %v1784
  %v1786 = vrcp.pop %v1572
  %v1787 = vmul.f32 1.0, %v1786
  %v1788 = vrcp.pop %v1573
  %v1789 = vmul.f32 1.0, %v1788
  %v1790 = vrcp.pop %v1574
  %v1791 = vmul.f32 1.0, %v1790
  %v1792 = vrcp.pop %v1575
  %v1793 = vmul.f32 1.0, %v1792
  %v1794 = vrcp.pop %v1576
  %v1795 = vmul.f32 1.0, %v1794
  %v1796 = vrcp.pop %v1577
  %v1797 = vmul.f32 1.0, %v1796
  %v1798 = vrcp.pop %v1578
  %v1799 = vmul.f32 1.0, %v1798
  %v1800 = vrcp.pop %v1579
  %v1801 = vmul.f32 1.0, %v1800
  %v1802 = vrcp.pop %v1580
  %v1803 = vmul.f32 1.0, %v1802
  %v1804 = vrcp.pop %v1581
  %v1805 = vmul.f32 1.0, %v1804
  %v1806 = vrcp.pop %v1582
  %v1807 = vmul.f32 1.0, %v1806
  %v1808 = vrcp.pop %v1583
  %v1809 = vmul.f32 1.0, %v1808
  %v1810 = vrcp.pop %v1584
  %v1811 = vmul.f32 1.0, %v1810
  %v1812 = vrcp.pop %v1585
  %v1813 = vmul.f32 1.0, %v1812
  %v1814 = vrcp.pop %v1586
  %v1815 = vmul.f32 1.0, %v1814
  %v1816 = vrcp.pop %v1587
  %v1817 = vmul.f32 1.0, %v1816
  %v1818 = vrcp.pop %v1588
  %v1819 = vmul.f32 1.0, %v1818
  %v1820 = vrcp.pop %v1589
  %v1821 = vmul.f32 1.0, %v1820
  %v1822 = vrcp.pop %v1590
  %v1823 = vmul.f32 1.0, %v1822
  %v1824 = vrcp.pop %v1591
  %v1825 = vmul.f32 1.0, %v1824
  %v1826 = vrcp.pop %v1592
  %v1827 = vmul.f32 1.0, %v1826
  %v1828 = vrcp.pop %v1593
  %v1829 = vmul.f32 1.0, %v1828
  %v1830 = vrcp.pop %v1594
  %v1831 = vmul.f32 1.0, %v1830
  %v1832 = vrcp.pop %v1595
  %v1833 = vmul.f32 1.0, %v1832
  %v1834 = vrcp.pop %v1596
  %v1835 = vmul.f32 1.0, %v1834
  %v1836 = vrcp.pop %v1597
  %v1837 = vmul.f32 1.0, %v1836
  %v1838 = vrcp.pop %v1598
  %v1839 = vmul.f32 1.0, %v1838
  %v1840 = vrcp.pop %v1599
  %v1841 = vmul.f32 1.0, %v1840
  %v1842 = vrcp.pop %v1600
  %v1843 = vmul.f32 1.0, %v1842
  %v1844 = vrcp.pop %v1601
  %v1845 = vmul.f32 1.0, %v1844
  %v1846 = vrcp.pop %v1602
  %v1847 = vmul.f32 1.0, %v1846
  %v1848 = vrcp.pop %v1603
  %v1849 = vmul.f32 1.0, %v1848
  %v1850 = vrcp.pop %v1604
  %v1851 = vmul.f32 1.0, %v1850
  %v1852 = vrcp.pop %v1605
  %v1853 = vmul.f32 1.0, %v1852
  %v1854 = vrcp.pop %v1606
  %v1855 = vmul.f32 1.0, %v1854
  %v1856 = vrcp.pop %v1607
  %v1857 = vmul.f32 1.0, %v1856
  %v1858 = vrcp.pop %v1608
  %v1859 = vmul.f32 1.0, %v1858
  %v1860 = vrcp.pop %v1609
  %v1861 = vmul.f32 1.0, %v1860
  %v1862 = vrcp.pop %v1610
  %v1863 = vmul.f32 1.0, %v1862
  %v1864 = vrcp.pop %v1611
  %v1865 = vmul.f32 1.0, %v1864
  %v1866 = vrcp.pop %v1612
  %v1867 = vmul.f32 1.0, %v1866
  %v1868 = vrcp.pop %v1613
  %v1869 = vmul.f32 1.0, %v1868
  %v1870 = vmul.f32 %v1615, 1.0614054
  %v1871 = vmul.f32 %v1617, 1.0614054
  %v1872 = vmul.f32 %v1619, 1.0614054
  %v1873 = vmul.f32 %v1621, 1.0614054
  %v1874 = vmul.f32 %v1623, 1.0614054
  %v1875 = vmul.f32 %v1625, 1.0614054
  %v1876 = vmul.f32 %v1627, 1.0614054
  %v1877 = vmul.f32 %v1629, 1.0614054
  %v1878 = vmul.f32 %v1631, 1.0614054
  %v1879 = vmul.f32 %v1633, 1.0614054
  %v1880 = vmul.f32 %v1635, 1.0614054
  %v1881 = vmul.f32 %v1637, 1.0614054
  %v1882 = vmul.f32 %v1639, 1.0614054
  %v1883 = vmul.f32 %v1641, 1.0614054
  %v1884 = vmul.f32 %v1643, 1.0614054
  %v1885 = vmul.f32 %v1645, 1.0614054
  %v1886 = vmul.f32 %v1647, 1.0614054
  %v1887 = vmul.f32 %v1649, 1.0614054
  %v1888 = vmul.f32 %v1651, 1.0614054
  %v1889 = vmul.f32 %v1653, 1.0614054
  %v1890 = vmul.f32 %v1655, 1.0614054
  %v1891 = vmul.f32 %v1657, 1.0614054
  %v1892 = vmul.f32 %v1659, 1.0614054
  %v1893 = vmul.f32 %v1661, 1.0614054
  %v1894 = vmul.f32 %v1663, 1.0614054
  %v1895 = vmul.f32 %v1665, 1.0614054
  %v1896 = vmul.f32 %v1667, 1.0614054
  %v1897 = vmul.f32 %v1669, 1.0614054
  %v1898 = vmul.f32 %v1671, 1.0614054
  %v1899 = vmul.f32 %v1673, 1.0614054
  %v1900 = vmul.f32 %v1675, 1.0614054
  %v1901 = vmul.f32 %v1677, 1.0614054
  %v1902 = vmul.f32 %v1679, 1.0614054
  %v1903 = vmul.f32 %v1681, 1.0614054
  %v1904 = vmul.f32 %v1683, 1.0614054
  %v1905 = vmul.f32 %v1685, 1.0614054
  %v1906 = vmul.f32 %v1687, 1.0614054
  %v1907 = vmul.f32 %v1689, 1.0614054
  %v1908 = vmul.f32 %v1691, 1.0614054
  %v1909 = vmul.f32 %v1693, 1.0614054
  %v1910 = vmul.f32 %v1695, 1.0614054
  %v1911 = vmul.f32 %v1697, 1.0614054
  %v1912 = vmul.f32 %v1699, 1.0614054
  %v1913 = vmul.f32 %v1701, 1.0614054
  %v1914 = vmul.f32 %v1703, 1.0614054
  %v1915 = vmul.f32 %v1705, 1.0614054
  %v1916 = vmul.f32 %v1707, 1.0614054
  %v1917 = vmul.f32 %v1709, 1.0614054
  %v1918 = vmul.f32 %v1711, 1.0614054
  %v1919 = vmul.f32 %v1713, 1.0614054
  %v1920 = vmul.f32 %v1715, 1.0614054
  %v1921 = vmul.f32 %v1717, 1.0614054
  %v1922 = vmul.f32 %v1719, 1.0614054
  %v1923 = vmul.f32 %v1721, 1.0614054
  %v1924 = vmul.f32 %v1723, 1.0614054
  %v1925 = vmul.f32 %v1725, 1.0614054
  %v1926 = vmul.f32 %v1727, 1.0614054
  %v1927 = vmul.f32 %v1729, 1.0614054
  %v1928 = vmul.f32 %v1731, 1.0614054
  %v1929 = vmul.f32 %v1733, 1.0614054
  %v1930 = vmul.f32 %v1735, 1.0614054
  %v1931 = vmul.f32 %v1737, 1.0614054
  %v1932 = vmul.f32 %v1739, 1.0614054
  %v1933 = vmul.f32 %v1741, 1.0614054
  %v1934 = vmul.f32 %v1743, 1.0614054
  %v1935 = vmul.f32 %v1745, 1.0614054
  %v1936 = vmul.f32 %v1747, 1.0614054
  %v1937 = vmul.f32 %v1749, 1.0614054
  %v1938 = vmul.f32 %v1751, 1.0614054
  %v1939 = vmul.f32 %v1753, 1.0614054
  %v1940 = vmul.f32 %v1755, 1.0614054
  %v1941 = vmul.f32 %v1757, 1.0614054
  %v1942 = vmul.f32 %v1759, 1.0614054
  %v1943 = vmul.f32 %v1761, 1.0614054
  %v1944 = vmul.f32 %v1763, 1.0614054
  %v1945 = vmul.f32 %v1765, 1.0614054
  %v1946 = vmul.f32 %v1767, 1.0614054
  %v1947 = vmul.f32 %v1769, 1.0614054
  %v1948 = vmul.f32 %v1771, 1.0614054
  %v1949 = vmul.f32 %v1773, 1.0614054
  %v1950 = vmul.f32 %v1775, 1.0614054
  %v1951 = vmul.f32 %v1777, 1.0614054
  %v1952 = vmul.f32 %v1779, 1.0614054
  %v1953 = vmul.f32 %v1781, 1.0614054
  %v1954 = vmul.f32 %v1783, 1.0614054
  %v1955 = vmul.f32 %v1785, 1.0614054
  %v1956 = vmul.f32 %v1787, 1.0614054
  %v1957 = vmul.f32 %v1789, 1.0614054
  %v1958 = vmul.f32 %v1791, 1.0614054
  %v1959 = vmul.f32 %v1793, 1.0614054
  %v1960 = vmul.f32 %v1795, 1.0614054
  %v1961 = vmul.f32 %v1797, 1.0614054
  %v1962 = vmul.f32 %v1799, 1.0614054
  %v1963 = vmul.f32 %v1801, 1.0614054
  %v1964 = vmul.f32 %v1803, 1.0614054
  %v1965 = vmul.f32 %v1805, 1.0614054
  %v1966 = vmul.f32 %v1807, 1.0614054
  %v1967 = vmul.f32 %v1809, 1.0614054
  %v1968 = vmul.f32 %v1811, 1.0614054
  %v1969 = vmul.f32 %v1813, 1.0614054
  %v1970 = vmul.f32 %v1815, 1.0614054
  %v1971 = vmul.f32 %v1817, 1.0614054
  %v1972 = vmul.f32 %v1819, 1.0614054
  %v1973 = vmul.f32 %v1821, 1.0614054
  %v1974 = vmul.f32 %v1823, 1.0614054
  %v1975 = vmul.f32 %v1825, 1.0614054
  %v1976 = vmul.f32 %v1827, 1.0614054
  %v1977 = vmul.f32 %v1829, 1.0614054
  %v1978 = vmul.f32 %v1831, 1.0614054
  %v1979 = vmul.f32 %v1833, 1.0614054
  %v1980 = vmul.f32 %v1835, 1.0614054
  %v1981 = vmul.f32 %v1837, 1.0614054
  %v1982 = vmul.f32 %v1839, 1.0614054
  %v1983 = vmul.f32 %v1841, 1.0614054
  %v1984 = vmul.f32 %v1843, 1.0614054
  %v1985 = vmul.f32 %v1845, 1.0614054
  %v1986 = vmul.f32 %v1847, 1.0614054
  %v1987 = vmul.f32 %v1849, 1.0614054
  %v1988 = vmul.f32 %v1851, 1.0614054
  %v1989 = vmul.f32 %v1853, 1.0614054
  %v1990 = vmul.f32 %v1855, 1.0614054
  %v1991 = vmul.f32 %v1857, 1.0614054
  %v1992 = vmul.f32 %v1859, 1.0614054
  %v1993 = vmul.f32 %v1861, 1.0614054
  %v1994 = vmul.f32 %v1863, 1.0614054
  %v1995 = vmul.f32 %v1865, 1.0614054
  %v1996 = vmul.f32 %v1867, 1.0614054
  %v1997 = vmul.f32 %v1869, 1.0614054
  %v1998 = vadd.f32 %v1870, -1.4531521
  %v1999 = vadd.f32 %v1871, -1.4531521
  %v2000 = vadd.f32 %v1872, -1.4531521
  %v2001 = vadd.f32 %v1873, -1.4531521
  %v2002 = vadd.f32 %v1874, -1.4531521
  %v2003 = vadd.f32 %v1875, -1.4531521
  %v2004 = vadd.f32 %v1876, -1.4531521
  %v2005 = vadd.f32 %v1877, -1.4531521
  %v2006 = vadd.f32 %v1878, -1.4531521
  %v2007 = vadd.f32 %v1879, -1.4531521
  %v2008 = vadd.f32 %v1880, -1.4531521
  %v2009 = vadd.f32 %v1881, -1.4531521
  %v2010 = vadd.f32 %v1882, -1.4531521
  %v2011 = vadd.f32 %v1883, -1.4531521
  %v2012 = vadd.f32 %v1884, -1.4531521
  %v2013 = vadd.f32 %v1885, -1.4531521
  %v2014 = vadd.f32 %v1886, -1.4531521
  %v2015 = vadd.f32 %v1887, -1.4531521
  %v2016 = vadd.f32 %v1888, -1.4531521
  %v2017 = vadd.f32 %v1889, -1.4531521
  %v2018 = vadd.f32 %v1890, -1.4531521
  %v2019 = vadd.f32 %v1891, -1.4531521
  %v2020 = vadd.f32 %v1892, -1.4531521
  %v2021 = vadd.f32 %v1893, -1.4531521
  %v2022 = vadd.f32 %v1894, -1.4531521
  %v2023 = vadd.f32 %v1895, -1.4531521
  %v2024 = vadd.f32 %v1896, -1.4531521
  %v2025 = vadd.f32 %v1897, -1.4531521
  %v2026 = vadd.f32 %v1898, -1.4531521
  %v2027 = vadd.f32 %v1899, -1.4531521
  %v2028 = vadd.f32 %v1900, -1.4531521
  %v2029 = vadd.f32 %v1901, -1.4531521
  %v2030 = vadd.f32 %v1902, -1.4531521
  %v2031 = vadd.f32 %v1903, -1.4531521
  %v2032 = vadd.f32 %v1904, -1.4531521
  %v2033 = vadd.f32 %v1905, -1.4531521
  %v2034 = vadd.f32 %v1906, -1.4531521
  %v2035 = vadd.f32 %v1907, -1.4531521
  %v2036 = vadd.f32 %v1908, -1.4531521
  %v2037 = vadd.f32 %v1909, -1.4531521
  %v2038 = vadd.f32 %v1910, -1.4531521
  %v2039 = vadd.f32 %v1911, -1.4531521
  %v2040 = vadd.f32 %v1912, -1.4531521
  %v2041 = vadd.f32 %v1913, -1.4531521
  %v2042 = vadd.f32 %v1914, -1.4531521
  %v2043 = vadd.f32 %v1915, -1.4531521
  %v2044 = vadd.f32 %v1916, -1.4531521
  %v2045 = vadd.f32 %v1917, -1.4531521
  %v2046 = vadd.f32 %v1918, -1.4531521
  %v2047 = vadd.f32 %v1919, -1.4531521
  %v2048 = vadd.f32 %v1920, -1.4531521
  %v2049 = vadd.f32 %v1921, -1.4531521
  %v2050 = vadd.f32 %v1922, -1.4531521
  %v2051 = vadd.f32 %v1923, -1.4531521
  %v2052 = vadd.f32 %v1924, -1.4531521
  %v2053 = vadd.f32 %v1925, -1.4531521
  %v2054 = vadd.f32 %v1926, -1.4531521
  %v2055 = vadd.f32 %v1927, -1.4531521
  %v2056 = vadd.f32 %v1928, -1.4531521
  %v2057 = vadd.f32 %v1929, -1.4531521
  %v2058 = vadd.f32 %v1930, -1.4531521
  %v2059 = vadd.f32 %v1931, -1.4531521
  %v2060 = vadd.f32 %v1932, -1.4531521
  %v2061 = vadd.f32 %v1933, -1.4531521
  %v2062 = vadd.f32 %v1934, -1.4531521
  %v2063 = vadd.f32 %v1935, -1.4531521
  %v2064 = vadd.f32 %v1936, -1.4531521
  %v2065 = vadd.f32 %v1937, -1.4531521
  %v2066 = vadd.f32 %v1938, -1.4531521
  %v2067 = vadd.f32 %v1939, -1.4531521
  %v2068 = vadd.f32 %v1940, -1.4531521
  %v2069 = vadd.f32 %v1941, -1.4531521
  %v2070 = vadd.f32 %v1942, -1.4531521
  %v2071 = vadd.f32 %v1943, -1.4531521
  %v2072 = vadd.f32 %v1944, -1.4531521
  %v2073 = vadd.f32 %v1945, -1.4531521
  %v2074 = vadd.f32 %v1946, -1.4531521
  %v2075 = vadd.f32 %v1947, -1.4531521
  %v2076 = vadd.f32 %v1948, -1.4531521
  %v2077 = vadd.f32 %v1949, -1.4531521
  %v2078 = vadd.f32 %v1950, -1.4531521
  %v2079 = vadd.f32 %v1951, -1.4531521
  %v2080 = vadd.f32 %v1952, -1.4531521
  %v2081 = vadd.f32 %v1953, -1.4531521
  %v2082 = vadd.f32 %v1954, -1.4531521
  %v2083 = vadd.f32 %v1955, -1.4531521
  %v2084 = vadd.f32 %v1956, -1.4531521
  %v2085 = vadd.f32 %v1957, -1.4531521
  %v2086 = vadd.f32 %v1958, -1.4531521
  %v2087 = vadd.f32 %v1959, -1.4531521
  %v2088 = vadd.f32 %v1960, -1.4531521
  %v2089 = vadd.f32 %v1961, -1.4531521
  %v2090 = vadd.f32 %v1962, -1.4531521
  %v2091 = vadd.f32 %v1963, -1.4531521
  %v2092 = vadd.f32 %v1964, -1.4531521
  %v2093 = vadd.f32 %v1965, -1.4531521
  %v2094 = vadd.f32 %v1966, -1.4531521
  %v2095 = vadd.f32 %v1967, -1.4531521
  %v2096 = vadd.f32 %v1968, -1.4531521
  %v2097 = vadd.f32 %v1969, -1.4531521
  %v2098 = vadd.f32 %v1970, -1.4531521
  %v2099 = vadd.f32 %v1971, -1.4531521
  %v2100 = vadd.f32 %v1972, -1.4531521
  %v2101 = vadd.f32 %v1973, -1.4531521
  %v2102 = vadd.f32 %v1974, -1.4531521
  %v2103 = vadd.f32 %v1975, -1.4531521
  %v2104 = vadd.f32 %v1976, -1.4531521
  %v2105 = vadd.f32 %v1977, -1.4531521
  %v2106 = vadd.f32 %v1978, -1.4531521
  %v2107 = vadd.f32 %v1979, -1.4531521
  %v2108 = vadd.f32 %v1980, -1.4531521
  %v2109 = vadd.f32 %v1981, -1.4531521
  %v2110 = vadd.f32 %v1982, -1.4531521
  %v2111 = vadd.f32 %v1983, -1.4531521
  %v2112 = vadd.f32 %v1984, -1.4531521
  %v2113 = vadd.f32 %v1985, -1.4531521
  %v2114 = vadd.f32 %v1986, -1.4531521
  %v2115 = vadd.f32 %v1987, -1.4531521
  %v2116 = vadd.f32 %v1988, -1.4531521
  %v2117 = vadd.f32 %v1989, -1.4531521
  %v2118 = vadd.f32 %v1990, -1.4531521
  %v2119 = vadd.f32 %v1991, -1.4531521
  %v2120 = vadd.f32 %v1992, -1.4531521
  %v2121 = vadd.f32 %v1993, -1.4531521
  %v2122 = vadd.f32 %v1994, -1.4531521
  %v2123 = vadd.f32 %v1995, -1.4531521
  %v2124 = vadd.f32 %v1996, -1.4531521
  %v2125 = vadd.f32 %v1997, -1.4531521
  %v2126 = vmul.f32 %v1998, %v1615
  %v2127 = vmul.f32 %v1999, %v1617
  %v2128 = vmul.f32 %v2000, %v1619
  %v2129 = vmul.f32 %v2001, %v1621
  %v2130 = vmul.f32 %v2002, %v1623
  %v2131 = vmul.f32 %v2003, %v1625
  %v2132 = vmul.f32 %v2004, %v1627
  %v2133 = vmul.f32 %v2005, %v1629
  %v2134 = vmul.f32 %v2006, %v1631
  %v2135 = vmul.f32 %v2007, %v1633
  %v2136 = vmul.f32 %v2008, %v1635
  %v2137 = vmul.f32 %v2009, %v1637
  %v2138 = vmul.f32 %v2010, %v1639
  %v2139 = vmul.f32 %v2011, %v1641
  %v2140 = vmul.f32 %v2012, %v1643
  %v2141 = vmul.f32 %v2013, %v1645
  %v2142 = vmul.f32 %v2014, %v1647
  %v2143 = vmul.f32 %v2015, %v1649
  %v2144 = vmul.f32 %v2016, %v1651
  %v2145 = vmul.f32 %v2017, %v1653
  %v2146 = vmul.f32 %v2018, %v1655
  %v2147 = vmul.f32 %v2019, %v1657
  %v2148 = vmul.f32 %v2020, %v1659
  %v2149 = vmul.f32 %v2021, %v1661
  %v2150 = vmul.f32 %v2022, %v1663
  %v2151 = vmul.f32 %v2023, %v1665
  %v2152 = vmul.f32 %v2024, %v1667
  %v2153 = vmul.f32 %v2025, %v1669
  %v2154 = vmul.f32 %v2026, %v1671
  %v2155 = vmul.f32 %v2027, %v1673
  %v2156 = vmul.f32 %v2028, %v1675
  %v2157 = vmul.f32 %v2029, %v1677
  %v2158 = vmul.f32 %v2030, %v1679
  %v2159 = vmul.f32 %v2031, %v1681
  %v2160 = vmul.f32 %v2032, %v1683
  %v2161 = vmul.f32 %v2033, %v1685
  %v2162 = vmul.f32 %v2034, %v1687
  %v2163 = vmul.f32 %v2035, %v1689
  %v2164 = vmul.f32 %v2036, %v1691
  %v2165 = vmul.f32 %v2037, %v1693
  %v2166 = vmul.f32 %v2038, %v1695
  %v2167 = vmul.f32 %v2039, %v1697
  %v2168 = vmul.f32 %v2040, %v1699
  %v2169 = vmul.f32 %v2041, %v1701
  %v2170 = vmul.f32 %v2042, %v1703
  %v2171 = vmul.f32 %v2043, %v1705
  %v2172 = vmul.f32 %v2044, %v1707
  %v2173 = vmul.f32 %v2045, %v1709
  %v2174 = vmul.f32 %v2046, %v1711
  %v2175 = vmul.f32 %v2047, %v1713
  %v2176 = vmul.f32 %v2048, %v1715
  %v2177 = vmul.f32 %v2049, %v1717
  %v2178 = vmul.f32 %v2050, %v1719
  %v2179 = vmul.f32 %v2051, %v1721
  %v2180 = vmul.f32 %v2052, %v1723
  %v2181 = vmul.f32 %v2053, %v1725
  %v2182 = vmul.f32 %v2054, %v1727
  %v2183 = vmul.f32 %v2055, %v1729
  %v2184 = vmul.f32 %v2056, %v1731
  %v2185 = vmul.f32 %v2057, %v1733
  %v2186 = vmul.f32 %v2058, %v1735
  %v2187 = vmul.f32 %v2059, %v1737
  %v2188 = vmul.f32 %v2060, %v1739
  %v2189 = vmul.f32 %v2061, %v1741
  %v2190 = vmul.f32 %v2062, %v1743
  %v2191 = vmul.f32 %v2063, %v1745
  %v2192 = vmul.f32 %v2064, %v1747
  %v2193 = vmul.f32 %v2065, %v1749
  %v2194 = vmul.f32 %v2066, %v1751
  %v2195 = vmul.f32 %v2067, %v1753
  %v2196 = vmul.f32 %v2068, %v1755
  %v2197 = vmul.f32 %v2069, %v1757
  %v2198 = vmul.f32 %v2070, %v1759
  %v2199 = vmul.f32 %v2071, %v1761
  %v2200 = vmul.f32 %v2072, %v1763
  %v2201 = vmul.f32 %v2073, %v1765
  %v2202 = vmul.f32 %v2074, %v1767
  %v2203 = vmul.f32 %v2075, %v1769
  %v2204 = vmul.f32 %v2076, %v1771
  %v2205 = vmul.f32 %v2077, %v1773
  %v2206 = vmul.f32 %v2078, %v1775
  %v2207 = vmul.f32 %v2079, %v1777
  %v2208 = vmul.f32 %v2080, %v1779
  %v2209 = vmul.f32 %v2081, %v1781
  %v2210 = vmul.f32 %v2082, %v1783
  %v2211 = vmul.f32 %v2083, %v1785
  %v2212 = vmul.f32 %v2084, %v1787
  %v2213 = vmul.f32 %v2085, %v1789
  %v2214 = vmul.f32 %v2086, %v1791
  %v2215 = vmul.f32 %v2087, %v1793
  %v2216 = vmul.f32 %v2088, %v1795
  %v2217 = vmul.f32 %v2089, %v1797
  %v2218 = vmul.f32 %v2090, %v1799
  %v2219 = vmul.f32 %v2091, %v1801
  %v2220 = vmul.f32 %v2092, %v1803
  %v2221 = vmul.f32 %v2093, %v1805
  %v2222 = vmul.f32 %v2094, %v1807
  %v2223 = vmul.f32 %v2095, %v1809
  %v2224 = vmul.f32 %v2096, %v1811
  %v2225 = vmul.f32 %v2097, %v1813
  %v2226 = vmul.f32 %v2098, %v1815
  %v2227 = vmul.f32 %v2099, %v1817
  %v2228 = vmul.f32 %v2100, %v1819
  %v2229 = vmul.f32 %v2101, %v1821
  %v2230 = vmul.f32 %v2102, %v1823
  %v2231 = vmul.f32 %v2103, %v1825
  %v2232 = vmul.f32 %v2104, %v1827
  %v2233 = vmul.f32 %v2105, %v1829
  %v2234 = vmul.f32 %v2106, %v1831
  %v2235 = vmul.f32 %v2107, %v1833
  %v2236 = vmul.f32 %v2108, %v1835
  %v2237 = vmul.f32 %v2109, %v1837
  %v2238 = vmul.f32 %v2110, %v1839
  %v2239 = vmul.f32 %v2111, %v1841
  %v2240 = vmul.f32 %v2112, %v1843
  %v2241 = vmul.f32 %v2113, %v1845
  %v2242 = vmul.f32 %v2114, %v1847
  %v2243 = vmul.f32 %v2115, %v1849
  %v2244 = vmul.f32 %v2116, %v1851
  %v2245 = vmul.f32 %v2117, %v1853
  %v2246 = vmul.f32 %v2118, %v1855
  %v2247 = vmul.f32 %v2119, %v1857
  %v2248 = vmul.f32 %v2120, %v1859
  %v2249 = vmul.f32 %v2121, %v1861
  %v2250 = vmul.f32 %v2122, %v1863
  %v2251 = vmul.f32 %v2123, %v1865
  %v2252 = vmul.f32 %v2124, %v1867
  %v2253 = vmul.f32 %v2125, %v1869
  %v2254 = vadd.f32 %v2126, 1.4214138
  %v2255 = vadd.f32 %v2127, 1.4214138
  %v2256 = vadd.f32 %v2128, 1.4214138
  %v2257 = vadd.f32 %v2129, 1.4214138
  %v2258 = vadd.f32 %v2130, 1.4214138
  %v2259 = vadd.f32 %v2131, 1.4214138
  %v2260 = vadd.f32 %v2132, 1.4214138
  %v2261 = vadd.f32 %v2133, 1.4214138
  %v2262 = vadd.f32 %v2134, 1.4214138
  %v2263 = vadd.f32 %v2135, 1.4214138
  %v2264 = vadd.f32 %v2136, 1.4214138
  %v2265 = vadd.f32 %v2137, 1.4214138
  %v2266 = vadd.f32 %v2138, 1.4214138
  %v2267 = vadd.f32 %v2139, 1.4214138
  %v2268 = vadd.f32 %v2140, 1.4214138
  %v2269 = vadd.f32 %v2141, 1.4214138
  %v2270 = vadd.f32 %v2142, 1.4214138
  %v2271 = vadd.f32 %v2143, 1.4214138
  %v2272 = vadd.f32 %v2144, 1.4214138
  %v2273 = vadd.f32 %v2145, 1.4214138
  %v2274 = vadd.f32 %v2146, 1.4214138
  %v2275 = vadd.f32 %v2147, 1.4214138
  %v2276 = vadd.f32 %v2148, 1.4214138
  %v2277 = vadd.f32 %v2149, 1.4214138
  %v2278 = vadd.f32 %v2150, 1.4214138
  %v2279 = vadd.f32 %v2151, 1.4214138
  %v2280 = vadd.f32 %v2152, 1.4214138
  %v2281 = vadd.f32 %v2153, 1.4214138
  %v2282 = vadd.f32 %v2154, 1.4214138
  %v2283 = vadd.f32 %v2155, 1.4214138
  %v2284 = vadd.f32 %v2156, 1.4214138
  %v2285 = vadd.f32 %v2157, 1.4214138
  %v2286 = vadd.f32 %v2158, 1.4214138
  %v2287 = vadd.f32 %v2159, 1.4214138
  %v2288 = vadd.f32 %v2160, 1.4214138
  %v2289 = vadd.f32 %v2161, 1.4214138
  %v2290 = vadd.f32 %v2162, 1.4214138
  %v2291 = vadd.f32 %v2163, 1.4214138
  %v2292 = vadd.f32 %v2164, 1.4214138
  %v2293 = vadd.f32 %v2165, 1.4214138
  %v2294 = vadd.f32 %v2166, 1.4214138
  %v2295 = vadd.f32 %v2167, 1.4214138
  %v2296 = vadd.f32 %v2168, 1.4214138
  %v2297 = vadd.f32 %v2169, 1.4214138
  %v2298 = vadd.f32 %v2170, 1.4214138
  %v2299 = vadd.f32 %v2171, 1.4214138
  %v2300 = vadd.f32 %v2172, 1.4214138
  %v2301 = vadd.f32 %v2173, 1.4214138
  %v2302 = vadd.f32 %v2174, 1.4214138
  %v2303 = vadd.f32 %v2175, 1.4214138
  %v2304 = vadd.f32 %v2176, 1.4214138
  %v2305 = vadd.f32 %v2177, 1.4214138
  %v2306 = vadd.f32 %v2178, 1.4214138
  %v2307 = vadd.f32 %v2179, 1.4214138
  %v2308 = vadd.f32 %v2180, 1.4214138
  %v2309 = vadd.f32 %v2181, 1.4214138
  %v2310 = vadd.f32 %v2182, 1.4214138
  %v2311 = vadd.f32 %v2183, 1.4214138
  %v2312 = vadd.f32 %v2184, 1.4214138
  %v2313 = vadd.f32 %v2185, 1.4214138
  %v2314 = vadd.f32 %v2186, 1.4214138
  %v2315 = vadd.f32 %v2187, 1.4214138
  %v2316 = vadd.f32 %v2188, 1.4214138
  %v2317 = vadd.f32 %v2189, 1.4214138
  %v2318 = vadd.f32 %v2190, 1.4214138
  %v2319 = vadd.f32 %v2191, 1.4214138
  %v2320 = vadd.f32 %v2192, 1.4214138
  %v2321 = vadd.f32 %v2193, 1.4214138
  %v2322 = vadd.f32 %v2194, 1.4214138
  %v2323 = vadd.f32 %v2195, 1.4214138
  %v2324 = vadd.f32 %v2196, 1.4214138
  %v2325 = vadd.f32 %v2197, 1.4214138
  %v2326 = vadd.f32 %v2198, 1.4214138
  %v2327 = vadd.f32 %v2199, 1.4214138
  %v2328 = vadd.f32 %v2200, 1.4214138
  %v2329 = vadd.f32 %v2201, 1.4214138
  %v2330 = vadd.f32 %v2202, 1.4214138
  %v2331 = vadd.f32 %v2203, 1.4214138
  %v2332 = vadd.f32 %v2204, 1.4214138
  %v2333 = vadd.f32 %v2205, 1.4214138
  %v2334 = vadd.f32 %v2206, 1.4214138
  %v2335 = vadd.f32 %v2207, 1.4214138
  %v2336 = vadd.f32 %v2208, 1.4214138
  %v2337 = vadd.f32 %v2209, 1.4214138
  %v2338 = vadd.f32 %v2210, 1.4214138
  %v2339 = vadd.f32 %v2211, 1.4214138
  %v2340 = vadd.f32 %v2212, 1.4214138
  %v2341 = vadd.f32 %v2213, 1.4214138
  %v2342 = vadd.f32 %v2214, 1.4214138
  %v2343 = vadd.f32 %v2215, 1.4214138
  %v2344 = vadd.f32 %v2216, 1.4214138
  %v2345 = vadd.f32 %v2217, 1.4214138
  %v2346 = vadd.f32 %v2218, 1.4214138
  %v2347 = vadd.f32 %v2219, 1.4214138
  %v2348 = vadd.f32 %v2220, 1.4214138
  %v2349 = vadd.f32 %v2221, 1.4214138
  %v2350 = vadd.f32 %v2222, 1.4214138
  %v2351 = vadd.f32 %v2223, 1.4214138
  %v2352 = vadd.f32 %v2224, 1.4214138
  %v2353 = vadd.f32 %v2225, 1.4214138
  %v2354 = vadd.f32 %v2226, 1.4214138
  %v2355 = vadd.f32 %v2227, 1.4214138
  %v2356 = vadd.f32 %v2228, 1.4214138
  %v2357 = vadd.f32 %v2229, 1.4214138
  %v2358 = vadd.f32 %v2230, 1.4214138
  %v2359 = vadd.f32 %v2231, 1.4214138
  %v2360 = vadd.f32 %v2232, 1.4214138
  %v2361 = vadd.f32 %v2233, 1.4214138
  %v2362 = vadd.f32 %v2234, 1.4214138
  %v2363 = vadd.f32 %v2235, 1.4214138
  %v2364 = vadd.f32 %v2236, 1.4214138
  %v2365 = vadd.f32 %v2237, 1.4214138
  %v2366 = vadd.f32 %v2238, 1.4214138
  %v2367 = vadd.f32 %v2239, 1.4214138
  %v2368 = vadd.f32 %v2240, 1.4214138
  %v2369 = vadd.f32 %v2241, 1.4214138
  %v2370 = vadd.f32 %v2242, 1.4214138
  %v2371 = vadd.f32 %v2243, 1.4214138
  %v2372 = vadd.f32 %v2244, 1.4214138
  %v2373 = vadd.f32 %v2245, 1.4214138
  %v2374 = vadd.f32 %v2246, 1.4214138
  %v2375 = vadd.f32 %v2247, 1.4214138
  %v2376 = vadd.f32 %v2248, 1.4214138
  %v2377 = vadd.f32 %v2249, 1.4214138
  %v2378 = vadd.f32 %v2250, 1.4214138
  %v2379 = vadd.f32 %v2251, 1.4214138
  %v2380 = vadd.f32 %v2252, 1.4214138
  %v2381 = vadd.f32 %v2253, 1.4214138
  %v2382 = vmul.f32 %v2254, %v1615
  %v2383 = vmul.f32 %v2255, %v1617
  %v2384 = vmul.f32 %v2256, %v1619
  %v2385 = vmul.f32 %v2257, %v1621
  %v2386 = vmul.f32 %v2258, %v1623
  %v2387 = vmul.f32 %v2259, %v1625
  %v2388 = vmul.f32 %v2260, %v1627
  %v2389 = vmul.f32 %v2261, %v1629
  %v2390 = vmul.f32 %v2262, %v1631
  %v2391 = vmul.f32 %v2263, %v1633
  %v2392 = vmul.f32 %v2264, %v1635
  %v2393 = vmul.f32 %v2265, %v1637
  %v2394 = vmul.f32 %v2266, %v1639
  %v2395 = vmul.f32 %v2267, %v1641
  %v2396 = vmul.f32 %v2268, %v1643
  %v2397 = vmul.f32 %v2269, %v1645
  %v2398 = vmul.f32 %v2270, %v1647
  %v2399 = vmul.f32 %v2271, %v1649
  %v2400 = vmul.f32 %v2272, %v1651
  %v2401 = vmul.f32 %v2273, %v1653
  %v2402 = vmul.f32 %v2274, %v1655
  %v2403 = vmul.f32 %v2275, %v1657
  %v2404 = vmul.f32 %v2276, %v1659
  %v2405 = vmul.f32 %v2277, %v1661
  %v2406 = vmul.f32 %v2278, %v1663
  %v2407 = vmul.f32 %v2279, %v1665
  %v2408 = vmul.f32 %v2280, %v1667
  %v2409 = vmul.f32 %v2281, %v1669
  %v2410 = vmul.f32 %v2282, %v1671
  %v2411 = vmul.f32 %v2283, %v1673
  %v2412 = vmul.f32 %v2284, %v1675
  %v2413 = vmul.f32 %v2285, %v1677
  %v2414 = vmul.f32 %v2286, %v1679
  %v2415 = vmul.f32 %v2287, %v1681
  %v2416 = vmul.f32 %v2288, %v1683
  %v2417 = vmul.f32 %v2289, %v1685
  %v2418 = vmul.f32 %v2290, %v1687
  %v2419 = vmul.f32 %v2291, %v1689
  %v2420 = vmul.f32 %v2292, %v1691
  %v2421 = vmul.f32 %v2293, %v1693
  %v2422 = vmul.f32 %v2294, %v1695
  %v2423 = vmul.f32 %v2295, %v1697
  %v2424 = vmul.f32 %v2296, %v1699
  %v2425 = vmul.f32 %v2297, %v1701
  %v2426 = vmul.f32 %v2298, %v1703
  %v2427 = vmul.f32 %v2299, %v1705
  %v2428 = vmul.f32 %v2300, %v1707
  %v2429 = vmul.f32 %v2301, %v1709
  %v2430 = vmul.f32 %v2302, %v1711
  %v2431 = vmul.f32 %v2303, %v1713
  %v2432 = vmul.f32 %v2304, %v1715
  %v2433 = vmul.f32 %v2305, %v1717
  %v2434 = vmul.f32 %v2306, %v1719
  %v2435 = vmul.f32 %v2307, %v1721
  %v2436 = vmul.f32 %v2308, %v1723
  %v2437 = vmul.f32 %v2309, %v1725
  %v2438 = vmul.f32 %v2310, %v1727
  %v2439 = vmul.f32 %v2311, %v1729
  %v2440 = vmul.f32 %v2312, %v1731
  %v2441 = vmul.f32 %v2313, %v1733
  %v2442 = vmul.f32 %v2314, %v1735
  %v2443 = vmul.f32 %v2315, %v1737
  %v2444 = vmul.f32 %v2316, %v1739
  %v2445 = vmul.f32 %v2317, %v1741
  %v2446 = vmul.f32 %v2318, %v1743
  %v2447 = vmul.f32 %v2319, %v1745
  %v2448 = vmul.f32 %v2320, %v1747
  %v2449 = vmul.f32 %v2321, %v1749
  %v2450 = vmul.f32 %v2322, %v1751
  %v2451 = vmul.f32 %v2323, %v1753
  %v2452 = vmul.f32 %v2324, %v1755
  %v2453 = vmul.f32 %v2325, %v1757
  %v2454 = vmul.f32 %v2326, %v1759
  %v2455 = vmul.f32 %v2327, %v1761
  %v2456 = vmul.f32 %v2328, %v1763
  %v2457 = vmul.f32 %v2329, %v1765
  %v2458 = vmul.f32 %v2330, %v1767
  %v2459 = vmul.f32 %v2331, %v1769
  %v2460 = vmul.f32 %v2332, %v1771
  %v2461 = vmul.f32 %v2333, %v1773
  %v2462 = vmul.f32 %v2334, %v1775
  %v2463 = vmul.f32 %v2335, %v1777
  %v2464 = vmul.f32 %v2336, %v1779
  %v2465 = vmul.f32 %v2337, %v1781
  %v2466 = vmul.f32 %v2338, %v1783
  %v2467 = vmul.f32 %v2339, %v1785
  %v2468 = vmul.f32 %v2340, %v1787
  %v2469 = vmul.f32 %v2341, %v1789
  %v2470 = vmul.f32 %v2342, %v1791
  %v2471 = vmul.f32 %v2343, %v1793
  %v2472 = vmul.f32 %v2344, %v1795
  %v2473 = vmul.f32 %v2345, %v1797
  %v2474 = vmul.f32 %v2346, %v1799
  %v2475 = vmul.f32 %v2347, %v1801
  %v2476 = vmul.f32 %v2348, %v1803
  %v2477 = vmul.f32 %v2349, %v1805
  %v2478 = vmul.f32 %v2350, %v1807
  %v2479 = vmul.f32 %v2351, %v1809
  %v2480 = vmul.f32 %v2352, %v1811
  %v2481 = vmul.f32 %v2353, %v1813
  %v2482 = vmul.f32 %v2354, %v1815
  %v2483 = vmul.f32 %v2355, %v1817
  %v2484 = vmul.f32 %v2356, %v1819
  %v2485 = vmul.f32 %v2357, %v1821
  %v2486 = vmul.f32 %v2358, %v1823
  %v2487 = vmul.f32 %v2359, %v1825
  %v2488 = vmul.f32 %v2360, %v1827
  %v2489 = vmul.f32 %v2361, %v1829
  %v2490 = vmul.f32 %v2362, %v1831
  %v2491 = vmul.f32 %v2363, %v1833
  %v2492 = vmul.f32 %v2364, %v1835
  %v2493 = vmul.f32 %v2365, %v1837
  %v2494 = vmul.f32 %v2366, %v1839
  %v2495 = vmul.f32 %v2367, %v1841
  %v2496 = vmul.f32 %v2368, %v1843
  %v2497 = vmul.f32 %v2369, %v1845
  %v2498 = vmul.f32 %v2370, %v1847
  %v2499 = vmul.f32 %v2371, %v1849
  %v2500 = vmul.f32 %v2372, %v1851
  %v2501 = vmul.f32 %v2373, %v1853
  %v2502 = vmul.f32 %v2374, %v1855
  %v2503 = vmul.f32 %v2375, %v1857
  %v2504 = vmul.f32 %v2376, %v1859
  %v2505 = vmul.f32 %v2377, %v1861
  %v2506 = vmul.f32 %v2378, %v1863
  %v2507 = vmul.f32 %v2379, %v1865
  %v2508 = vmul.f32 %v2380, %v1867
  %v2509 = vmul.f32 %v2381, %v1869
  %v2510 = vadd.f32 %v2382, -0.28449672
  %v2511 = vadd.f32 %v2383, -0.28449672
  %v2512 = vadd.f32 %v2384, -0.28449672
  %v2513 = vadd.f32 %v2385, -0.28449672
  %v2514 = vadd.f32 %v2386, -0.28449672
  %v2515 = vadd.f32 %v2387, -0.28449672
  %v2516 = vadd.f32 %v2388, -0.28449672
  %v2517 = vadd.f32 %v2389, -0.28449672
  %v2518 = vadd.f32 %v2390, -0.28449672
  %v2519 = vadd.f32 %v2391, -0.28449672
  %v2520 = vadd.f32 %v2392, -0.28449672
  %v2521 = vadd.f32 %v2393, -0.28449672
  %v2522 = vadd.f32 %v2394, -0.28449672
  %v2523 = vadd.f32 %v2395, -0.28449672
  %v2524 = vadd.f32 %v2396, -0.28449672
  %v2525 = vadd.f32 %v2397, -0.28449672
  %v2526 = vadd.f32 %v2398, -0.28449672
  %v2527 = vadd.f32 %v2399, -0.28449672
  %v2528 = vadd.f32 %v2400, -0.28449672
  %v2529 = vadd.f32 %v2401, -0.28449672
  %v2530 = vadd.f32 %v2402, -0.28449672
  %v2531 = vadd.f32 %v2403, -0.28449672
  %v2532 = vadd.f32 %v2404, -0.28449672
  %v2533 = vadd.f32 %v2405, -0.28449672
  %v2534 = vadd.f32 %v2406, -0.28449672
  %v2535 = vadd.f32 %v2407, -0.28449672
  %v2536 = vadd.f32 %v2408, -0.28449672
  %v2537 = vadd.f32 %v2409, -0.28449672
  %v2538 = vadd.f32 %v2410, -0.28449672
  %v2539 = vadd.f32 %v2411, -0.28449672
  %v2540 = vadd.f32 %v2412, -0.28449672
  %v2541 = vadd.f32 %v2413, -0.28449672
  %v2542 = vadd.f32 %v2414, -0.28449672
  %v2543 = vadd.f32 %v2415, -0.28449672
  %v2544 = vadd.f32 %v2416, -0.28449672
  %v2545 = vadd.f32 %v2417, -0.28449672
  %v2546 = vadd.f32 %v2418, -0.28449672
  %v2547 = vadd.f32 %v2419, -0.28449672
  %v2548 = vadd.f32 %v2420, -0.28449672
  %v2549 = vadd.f32 %v2421, -0.28449672
  %v2550 = vadd.f32 %v2422, -0.28449672
  %v2551 = vadd.f32 %v2423, -0.28449672
  %v2552 = vadd.f32 %v2424, -0.28449672
  %v2553 = vadd.f32 %v2425, -0.28449672
  %v2554 = vadd.f32 %v2426, -0.28449672
  %v2555 = vadd.f32 %v2427, -0.28449672
  %v2556 = vadd.f32 %v2428, -0.28449672
  %v2557 = vadd.f32 %v2429, -0.28449672
  %v2558 = vadd.f32 %v2430, -0.28449672
  %v2559 = vadd.f32 %v2431, -0.28449672
  %v2560 = vadd.f32 %v2432, -0.28449672
  %v2561 = vadd.f32 %v2433, -0.28449672
  %v2562 = vadd.f32 %v2434, -0.28449672
  %v2563 = vadd.f32 %v2435, -0.28449672
  %v2564 = vadd.f32 %v2436, -0.28449672
  %v2565 = vadd.f32 %v2437, -0.28449672
  %v2566 = vadd.f32 %v2438, -0.28449672
  %v2567 = vadd.f32 %v2439, -0.28449672
  %v2568 = vadd.f32 %v2440, -0.28449672
  %v2569 = vadd.f32 %v2441, -0.28449672
  %v2570 = vadd.f32 %v2442, -0.28449672
  %v2571 = vadd.f32 %v2443, -0.28449672
  %v2572 = vadd.f32 %v2444, -0.28449672
  %v2573 = vadd.f32 %v2445, -0.28449672
  %v2574 = vadd.f32 %v2446, -0.28449672
  %v2575 = vadd.f32 %v2447, -0.28449672
  %v2576 = vadd.f32 %v2448, -0.28449672
  %v2577 = vadd.f32 %v2449, -0.28449672
  %v2578 = vadd.f32 %v2450, -0.28449672
  %v2579 = vadd.f32 %v2451, -0.28449672
  %v2580 = vadd.f32 %v2452, -0.28449672
  %v2581 = vadd.f32 %v2453, -0.28449672
  %v2582 = vadd.f32 %v2454, -0.28449672
  %v2583 = vadd.f32 %v2455, -0.28449672
  %v2584 = vadd.f32 %v2456, -0.28449672
  %v2585 = vadd.f32 %v2457, -0.28449672
  %v2586 = vadd.f32 %v2458, -0.28449672
  %v2587 = vadd.f32 %v2459, -0.28449672
  %v2588 = vadd.f32 %v2460, -0.28449672
  %v2589 = vadd.f32 %v2461, -0.28449672
  %v2590 = vadd.f32 %v2462, -0.28449672
  %v2591 = vadd.f32 %v2463, -0.28449672
  %v2592 = vadd.f32 %v2464, -0.28449672
  %v2593 = vadd.f32 %v2465, -0.28449672
  %v2594 = vadd.f32 %v2466, -0.28449672
  %v2595 = vadd.f32 %v2467, -0.28449672
  %v2596 = vadd.f32 %v2468, -0.28449672
  %v2597 = vadd.f32 %v2469, -0.28449672
  %v2598 = vadd.f32 %v2470, -0.28449672
  %v2599 = vadd.f32 %v2471, -0.28449672
  %v2600 = vadd.f32 %v2472, -0.28449672
  %v2601 = vadd.f32 %v2473, -0.28449672
  %v2602 = vadd.f32 %v2474, -0.28449672
  %v2603 = vadd.f32 %v2475, -0.28449672
  %v2604 = vadd.f32 %v2476, -0.28449672
  %v2605 = vadd.f32 %v2477, -0.28449672
  %v2606 = vadd.f32 %v2478, -0.28449672
  %v2607 = vadd.f32 %v2479, -0.28449672
  %v2608 = vadd.f32 %v2480, -0.28449672
  %v2609 = vadd.f32 %v2481, -0.28449672
  %v2610 = vadd.f32 %v2482, -0.28449672
  %v2611 = vadd.f32 %v2483, -0.28449672
  %v2612 = vadd.f32 %v2484, -0.28449672
  %v2613 = vadd.f32 %v2485, -0.28449672
  %v2614 = vadd.f32 %v2486, -0.28449672
  %v2615 = vadd.f32 %v2487, -0.28449672
  %v2616 = vadd.f32 %v2488, -0.28449672
  %v2617 = vadd.f32 %v2489, -0.28449672
  %v2618 = vadd.f32 %v2490, -0.28449672
  %v2619 = vadd.f32 %v2491, -0.28449672
  %v2620 = vadd.f32 %v2492, -0.28449672
  %v2621 = vadd.f32 %v2493, -0.28449672
  %v2622 = vadd.f32 %v2494, -0.28449672
  %v2623 = vadd.f32 %v2495, -0.28449672
  %v2624 = vadd.f32 %v2496, -0.28449672
  %v2625 = vadd.f32 %v2497, -0.28449672
  %v2626 = vadd.f32 %v2498, -0.28449672
  %v2627 = vadd.f32 %v2499, -0.28449672
  %v2628 = vadd.f32 %v2500, -0.28449672
  %v2629 = vadd.f32 %v2501, -0.28449672
  %v2630 = vadd.f32 %v2502, -0.28449672
  %v2631 = vadd.f32 %v2503, -0.28449672
  %v2632 = vadd.f32 %v2504, -0.28449672
  %v2633 = vadd.f32 %v2505, -0.28449672
  %v2634 = vadd.f32 %v2506, -0.28449672
  %v2635 = vadd.f32 %v2507, -0.28449672
  %v2636 = vadd.f32 %v2508, -0.28449672
  %v2637 = vadd.f32 %v2509, -0.28449672
  %v2638 = vmul.f32 %v2510, %v1615
  %v2639 = vmul.f32 %v2511, %v1617
  %v2640 = vmul.f32 %v2512, %v1619
  %v2641 = vmul.f32 %v2513, %v1621
  %v2642 = vmul.f32 %v2514, %v1623
  %v2643 = vmul.f32 %v2515, %v1625
  %v2644 = vmul.f32 %v2516, %v1627
  %v2645 = vmul.f32 %v2517, %v1629
  %v2646 = vmul.f32 %v2518, %v1631
  %v2647 = vmul.f32 %v2519, %v1633
  %v2648 = vmul.f32 %v2520, %v1635
  %v2649 = vmul.f32 %v2521, %v1637
  %v2650 = vmul.f32 %v2522, %v1639
  %v2651 = vmul.f32 %v2523, %v1641
  %v2652 = vmul.f32 %v2524, %v1643
  %v2653 = vmul.f32 %v2525, %v1645
  %v2654 = vmul.f32 %v2526, %v1647
  %v2655 = vmul.f32 %v2527, %v1649
  %v2656 = vmul.f32 %v2528, %v1651
  %v2657 = vmul.f32 %v2529, %v1653
  %v2658 = vmul.f32 %v2530, %v1655
  %v2659 = vmul.f32 %v2531, %v1657
  %v2660 = vmul.f32 %v2532, %v1659
  %v2661 = vmul.f32 %v2533, %v1661
  %v2662 = vmul.f32 %v2534, %v1663
  %v2663 = vmul.f32 %v2535, %v1665
  %v2664 = vmul.f32 %v2536, %v1667
  %v2665 = vmul.f32 %v2537, %v1669
  %v2666 = vmul.f32 %v2538, %v1671
  %v2667 = vmul.f32 %v2539, %v1673
  %v2668 = vmul.f32 %v2540, %v1675
  %v2669 = vmul.f32 %v2541, %v1677
  %v2670 = vmul.f32 %v2542, %v1679
  %v2671 = vmul.f32 %v2543, %v1681
  %v2672 = vmul.f32 %v2544, %v1683
  %v2673 = vmul.f32 %v2545, %v1685
  %v2674 = vmul.f32 %v2546, %v1687
  %v2675 = vmul.f32 %v2547, %v1689
  %v2676 = vmul.f32 %v2548, %v1691
  %v2677 = vmul.f32 %v2549, %v1693
  %v2678 = vmul.f32 %v2550, %v1695
  %v2679 = vmul.f32 %v2551, %v1697
  %v2680 = vmul.f32 %v2552, %v1699
  %v2681 = vmul.f32 %v2553, %v1701
  %v2682 = vmul.f32 %v2554, %v1703
  %v2683 = vmul.f32 %v2555, %v1705
  %v2684 = vmul.f32 %v2556, %v1707
  %v2685 = vmul.f32 %v2557, %v1709
  %v2686 = vmul.f32 %v2558, %v1711
  %v2687 = vmul.f32 %v2559, %v1713
  %v2688 = vmul.f32 %v2560, %v1715
  %v2689 = vmul.f32 %v2561, %v1717
  %v2690 = vmul.f32 %v2562, %v1719
  %v2691 = vmul.f32 %v2563, %v1721
  %v2692 = vmul.f32 %v2564, %v1723
  %v2693 = vmul.f32 %v2565, %v1725
  %v2694 = vmul.f32 %v2566, %v1727
  %v2695 = vmul.f32 %v2567, %v1729
  %v2696 = vmul.f32 %v2568, %v1731
  %v2697 = vmul.f32 %v2569, %v1733
  %v2698 = vmul.f32 %v2570, %v1735
  %v2699 = vmul.f32 %v2571, %v1737
  %v2700 = vmul.f32 %v2572, %v1739
  %v2701 = vmul.f32 %v2573, %v1741
  %v2702 = vmul.f32 %v2574, %v1743
  %v2703 = vmul.f32 %v2575, %v1745
  %v2704 = vmul.f32 %v2576, %v1747
  %v2705 = vmul.f32 %v2577, %v1749
  %v2706 = vmul.f32 %v2578, %v1751
  %v2707 = vmul.f32 %v2579, %v1753
  %v2708 = vmul.f32 %v2580, %v1755
  %v2709 = vmul.f32 %v2581, %v1757
  %v2710 = vmul.f32 %v2582, %v1759
  %v2711 = vmul.f32 %v2583, %v1761
  %v2712 = vmul.f32 %v2584, %v1763
  %v2713 = vmul.f32 %v2585, %v1765
  %v2714 = vmul.f32 %v2586, %v1767
  %v2715 = vmul.f32 %v2587, %v1769
  %v2716 = vmul.f32 %v2588, %v1771
  %v2717 = vmul.f32 %v2589, %v1773
  %v2718 = vmul.f32 %v2590, %v1775
  %v2719 = vmul.f32 %v2591, %v1777
  %v2720 = vmul.f32 %v2592, %v1779
  %v2721 = vmul.f32 %v2593, %v1781
  %v2722 = vmul.f32 %v2594, %v1783
  %v2723 = vmul.f32 %v2595, %v1785
  %v2724 = vmul.f32 %v2596, %v1787
  %v2725 = vmul.f32 %v2597, %v1789
  %v2726 = vmul.f32 %v2598, %v1791
  %v2727 = vmul.f32 %v2599, %v1793
  %v2728 = vmul.f32 %v2600, %v1795
  %v2729 = vmul.f32 %v2601, %v1797
  %v2730 = vmul.f32 %v2602, %v1799
  %v2731 = vmul.f32 %v2603, %v1801
  %v2732 = vmul.f32 %v2604, %v1803
  %v2733 = vmul.f32 %v2605, %v1805
  %v2734 = vmul.f32 %v2606, %v1807
  %v2735 = vmul.f32 %v2607, %v1809
  %v2736 = vmul.f32 %v2608, %v1811
  %v2737 = vmul.f32 %v2609, %v1813
  %v2738 = vmul.f32 %v2610, %v1815
  %v2739 = vmul.f32 %v2611, %v1817
  %v2740 = vmul.f32 %v2612, %v1819
  %v2741 = vmul.f32 %v2613, %v1821
  %v2742 = vmul.f32 %v2614, %v1823
  %v2743 = vmul.f32 %v2615, %v1825
  %v2744 = vmul.f32 %v2616, %v1827
  %v2745 = vmul.f32 %v2617, %v1829
  %v2746 = vmul.f32 %v2618, %v1831
  %v2747 = vmul.f32 %v2619, %v1833
  %v2748 = vmul.f32 %v2620, %v1835
  %v2749 = vmul.f32 %v2621, %v1837
  %v2750 = vmul.f32 %v2622, %v1839
  %v2751 = vmul.f32 %v2623, %v1841
  %v2752 = vmul.f32 %v2624, %v1843
  %v2753 = vmul.f32 %v2625, %v1845
  %v2754 = vmul.f32 %v2626, %v1847
  %v2755 = vmul.f32 %v2627, %v1849
  %v2756 = vmul.f32 %v2628, %v1851
  %v2757 = vmul.f32 %v2629, %v1853
  %v2758 = vmul.f32 %v2630, %v1855
  %v2759 = vmul.f32 %v2631, %v1857
  %v2760 = vmul.f32 %v2632, %v1859
  %v2761 = vmul.f32 %v2633, %v1861
  %v2762 = vmul.f32 %v2634, %v1863
  %v2763 = vmul.f32 %v2635, %v1865
  %v2764 = vmul.f32 %v2636, %v1867
  %v2765 = vmul.f32 %v2637, %v1869
  %v2766 = vadd.f32 %v2638, 0.2548296
  %v2767 = vadd.f32 %v2639, 0.2548296
  %v2768 = vadd.f32 %v2640, 0.2548296
  %v2769 = vadd.f32 %v2641, 0.2548296
  %v2770 = vadd.f32 %v2642, 0.2548296
  %v2771 = vadd.f32 %v2643, 0.2548296
  %v2772 = vadd.f32 %v2644, 0.2548296
  %v2773 = vadd.f32 %v2645, 0.2548296
  %v2774 = vadd.f32 %v2646, 0.2548296
  %v2775 = vadd.f32 %v2647, 0.2548296
  %v2776 = vadd.f32 %v2648, 0.2548296
  %v2777 = vadd.f32 %v2649, 0.2548296
  %v2778 = vadd.f32 %v2650, 0.2548296
  %v2779 = vadd.f32 %v2651, 0.2548296
  %v2780 = vadd.f32 %v2652, 0.2548296
  %v2781 = vadd.f32 %v2653, 0.2548296
  %v2782 = vadd.f32 %v2654, 0.2548296
  %v2783 = vadd.f32 %v2655, 0.2548296
  %v2784 = vadd.f32 %v2656, 0.2548296
  %v2785 = vadd.f32 %v2657, 0.2548296
  %v2786 = vadd.f32 %v2658, 0.2548296
  %v2787 = vadd.f32 %v2659, 0.2548296
  %v2788 = vadd.f32 %v2660, 0.2548296
  %v2789 = vadd.f32 %v2661, 0.2548296
  %v2790 = vadd.f32 %v2662, 0.2548296
  %v2791 = vadd.f32 %v2663, 0.2548296
  %v2792 = vadd.f32 %v2664, 0.2548296
  %v2793 = vadd.f32 %v2665, 0.2548296
  %v2794 = vadd.f32 %v2666, 0.2548296
  %v2795 = vadd.f32 %v2667, 0.2548296
  %v2796 = vadd.f32 %v2668, 0.2548296
  %v2797 = vadd.f32 %v2669, 0.2548296
  %v2798 = vadd.f32 %v2670, 0.2548296
  %v2799 = vadd.f32 %v2671, 0.2548296
  %v2800 = vadd.f32 %v2672, 0.2548296
  %v2801 = vadd.f32 %v2673, 0.2548296
  %v2802 = vadd.f32 %v2674, 0.2548296
  %v2803 = vadd.f32 %v2675, 0.2548296
  %v2804 = vadd.f32 %v2676, 0.2548296
  %v2805 = vadd.f32 %v2677, 0.2548296
  %v2806 = vadd.f32 %v2678, 0.2548296
  %v2807 = vadd.f32 %v2679, 0.2548296
  %v2808 = vadd.f32 %v2680, 0.2548296
  %v2809 = vadd.f32 %v2681, 0.2548296
  %v2810 = vadd.f32 %v2682, 0.2548296
  %v2811 = vadd.f32 %v2683, 0.2548296
  %v2812 = vadd.f32 %v2684, 0.2548296
  %v2813 = vadd.f32 %v2685, 0.2548296
  %v2814 = vadd.f32 %v2686, 0.2548296
  %v2815 = vadd.f32 %v2687, 0.2548296
  %v2816 = vadd.f32 %v2688, 0.2548296
  %v2817 = vadd.f32 %v2689, 0.2548296
  %v2818 = vadd.f32 %v2690, 0.2548296
  %v2819 = vadd.f32 %v2691, 0.2548296
  %v2820 = vadd.f32 %v2692, 0.2548296
  %v2821 = vadd.f32 %v2693, 0.2548296
  %v2822 = vadd.f32 %v2694, 0.2548296
  %v2823 = vadd.f32 %v2695, 0.2548296
  %v2824 = vadd.f32 %v2696, 0.2548296
  %v2825 = vadd.f32 %v2697, 0.2548296
  %v2826 = vadd.f32 %v2698, 0.2548296
  %v2827 = vadd.f32 %v2699, 0.2548296
  %v2828 = vadd.f32 %v2700, 0.2548296
  %v2829 = vadd.f32 %v2701, 0.2548296
  %v2830 = vadd.f32 %v2702, 0.2548296
  %v2831 = vadd.f32 %v2703, 0.2548296
  %v2832 = vadd.f32 %v2704, 0.2548296
  %v2833 = vadd.f32 %v2705, 0.2548296
  %v2834 = vadd.f32 %v2706, 0.2548296
  %v2835 = vadd.f32 %v2707, 0.2548296
  %v2836 = vadd.f32 %v2708, 0.2548296
  %v2837 = vadd.f32 %v2709, 0.2548296
  %v2838 = vadd.f32 %v2710, 0.2548296
  %v2839 = vadd.f32 %v2711, 0.2548296
  %v2840 = vadd.f32 %v2712, 0.2548296
  %v2841 = vadd.f32 %v2713, 0.2548296
  %v2842 = vadd.f32 %v2714, 0.2548296
  %v2843 = vadd.f32 %v2715, 0.2548296
  %v2844 = vadd.f32 %v2716, 0.2548296
  %v2845 = vadd.f32 %v2717, 0.2548296
  %v2846 = vadd.f32 %v2718, 0.2548296
  %v2847 = vadd.f32 %v2719, 0.2548296
  %v2848 = vadd.f32 %v2720, 0.2548296
  %v2849 = vadd.f32 %v2721, 0.2548296
  %v2850 = vadd.f32 %v2722, 0.2548296
  %v2851 = vadd.f32 %v2723, 0.2548296
  %v2852 = vadd.f32 %v2724, 0.2548296
  %v2853 = vadd.f32 %v2725, 0.2548296
  %v2854 = vadd.f32 %v2726, 0.2548296
  %v2855 = vadd.f32 %v2727, 0.2548296
  %v2856 = vadd.f32 %v2728, 0.2548296
  %v2857 = vadd.f32 %v2729, 0.2548296
  %v2858 = vadd.f32 %v2730, 0.2548296
  %v2859 = vadd.f32 %v2731, 0.2548296
  %v2860 = vadd.f32 %v2732, 0.2548296
  %v2861 = vadd.f32 %v2733, 0.2548296
  %v2862 = vadd.f32 %v2734, 0.2548296
  %v2863 = vadd.f32 %v2735, 0.2548296
  %v2864 = vadd.f32 %v2736, 0.2548296
  %v2865 = vadd.f32 %v2737, 0.2548296
  %v2866 = vadd.f32 %v2738, 0.2548296
  %v2867 = vadd.f32 %v2739, 0.2548296
  %v2868 = vadd.f32 %v2740, 0.2548296
  %v2869 = vadd.f32 %v2741, 0.2548296
  %v2870 = vadd.f32 %v2742, 0.2548296
  %v2871 = vadd.f32 %v2743, 0.2548296
  %v2872 = vadd.f32 %v2744, 0.2548296
  %v2873 = vadd.f32 %v2745, 0.2548296
  %v2874 = vadd.f32 %v2746, 0.2548296
  %v2875 = vadd.f32 %v2747, 0.2548296
  %v2876 = vadd.f32 %v2748, 0.2548296
  %v2877 = vadd.f32 %v2749, 0.2548296
  %v2878 = vadd.f32 %v2750, 0.2548296
  %v2879 = vadd.f32 %v2751, 0.2548296
  %v2880 = vadd.f32 %v2752, 0.2548296
  %v2881 = vadd.f32 %v2753, 0.2548296
  %v2882 = vadd.f32 %v2754, 0.2548296
  %v2883 = vadd.f32 %v2755, 0.2548296
  %v2884 = vadd.f32 %v2756, 0.2548296
  %v2885 = vadd.f32 %v2757, 0.2548296
  %v2886 = vadd.f32 %v2758, 0.2548296
  %v2887 = vadd.f32 %v2759, 0.2548296
  %v2888 = vadd.f32 %v2760, 0.2548296
  %v2889 = vadd.f32 %v2761, 0.2548296
  %v2890 = vadd.f32 %v2762, 0.2548296
  %v2891 = vadd.f32 %v2763, 0.2548296
  %v2892 = vadd.f32 %v2764, 0.2548296
  %v2893 = vadd.f32 %v2765, 0.2548296
  %v2894 = vmul.f32 %v2766, %v1615
  %v2895 = vmul.f32 %v2767, %v1617
  %v2896 = vmul.f32 %v2768, %v1619
  %v2897 = vmul.f32 %v2769, %v1621
  %v2898 = vmul.f32 %v2770, %v1623
  %v2899 = vmul.f32 %v2771, %v1625
  %v2900 = vmul.f32 %v2772, %v1627
  %v2901 = vmul.f32 %v2773, %v1629
  %v2902 = vmul.f32 %v2774, %v1631
  %v2903 = vmul.f32 %v2775, %v1633
  %v2904 = vmul.f32 %v2776, %v1635
  %v2905 = vmul.f32 %v2777, %v1637
  %v2906 = vmul.f32 %v2778, %v1639
  %v2907 = vmul.f32 %v2779, %v1641
  %v2908 = vmul.f32 %v2780, %v1643
  %v2909 = vmul.f32 %v2781, %v1645
  %v2910 = vmul.f32 %v2782, %v1647
  %v2911 = vmul.f32 %v2783, %v1649
  %v2912 = vmul.f32 %v2784, %v1651
  %v2913 = vmul.f32 %v2785, %v1653
  %v2914 = vmul.f32 %v2786, %v1655
  %v2915 = vmul.f32 %v2787, %v1657
  %v2916 = vmul.f32 %v2788, %v1659
  %v2917 = vmul.f32 %v2789, %v1661
  %v2918 = vmul.f32 %v2790, %v1663
  %v2919 = vmul.f32 %v2791, %v1665
  %v2920 = vmul.f32 %v2792, %v1667
  %v2921 = vmul.f32 %v2793, %v1669
  %v2922 = vmul.f32 %v2794, %v1671
  %v2923 = vmul.f32 %v2795, %v1673
  %v2924 = vmul.f32 %v2796, %v1675
  %v2925 = vmul.f32 %v2797, %v1677
  %v2926 = vmul.f32 %v2798, %v1679
  %v2927 = vmul.f32 %v2799, %v1681
  %v2928 = vmul.f32 %v2800, %v1683
  %v2929 = vmul.f32 %v2801, %v1685
  %v2930 = vmul.f32 %v2802, %v1687
  %v2931 = vmul.f32 %v2803, %v1689
  %v2932 = vmul.f32 %v2804, %v1691
  %v2933 = vmul.f32 %v2805, %v1693
  %v2934 = vmul.f32 %v2806, %v1695
  %v2935 = vmul.f32 %v2807, %v1697
  %v2936 = vmul.f32 %v2808, %v1699
  %v2937 = vmul.f32 %v2809, %v1701
  %v2938 = vmul.f32 %v2810, %v1703
  %v2939 = vmul.f32 %v2811, %v1705
  %v2940 = vmul.f32 %v2812, %v1707
  %v2941 = vmul.f32 %v2813, %v1709
  %v2942 = vmul.f32 %v2814, %v1711
  %v2943 = vmul.f32 %v2815, %v1713
  %v2944 = vmul.f32 %v2816, %v1715
  %v2945 = vmul.f32 %v2817, %v1717
  %v2946 = vmul.f32 %v2818, %v1719
  %v2947 = vmul.f32 %v2819, %v1721
  %v2948 = vmul.f32 %v2820, %v1723
  %v2949 = vmul.f32 %v2821, %v1725
  %v2950 = vmul.f32 %v2822, %v1727
  %v2951 = vmul.f32 %v2823, %v1729
  %v2952 = vmul.f32 %v2824, %v1731
  %v2953 = vmul.f32 %v2825, %v1733
  %v2954 = vmul.f32 %v2826, %v1735
  %v2955 = vmul.f32 %v2827, %v1737
  %v2956 = vmul.f32 %v2828, %v1739
  %v2957 = vmul.f32 %v2829, %v1741
  %v2958 = vmul.f32 %v2830, %v1743
  %v2959 = vmul.f32 %v2831, %v1745
  %v2960 = vmul.f32 %v2832, %v1747
  %v2961 = vmul.f32 %v2833, %v1749
  %v2962 = vmul.f32 %v2834, %v1751
  %v2963 = vmul.f32 %v2835, %v1753
  %v2964 = vmul.f32 %v2836, %v1755
  %v2965 = vmul.f32 %v2837, %v1757
  %v2966 = vmul.f32 %v2838, %v1759
  %v2967 = vmul.f32 %v2839, %v1761
  %v2968 = vmul.f32 %v2840, %v1763
  %v2969 = vmul.f32 %v2841, %v1765
  %v2970 = vmul.f32 %v2842, %v1767
  %v2971 = vmul.f32 %v2843, %v1769
  %v2972 = vmul.f32 %v2844, %v1771
  %v2973 = vmul.f32 %v2845, %v1773
  %v2974 = vmul.f32 %v2846, %v1775
  %v2975 = vmul.f32 %v2847, %v1777
  %v2976 = vmul.f32 %v2848, %v1779
  %v2977 = vmul.f32 %v2849, %v1781
  %v2978 = vmul.f32 %v2850, %v1783
  %v2979 = vmul.f32 %v2851, %v1785
  %v2980 = vmul.f32 %v2852, %v1787
  %v2981 = vmul.f32 %v2853, %v1789
  %v2982 = vmul.f32 %v2854, %v1791
  %v2983 = vmul.f32 %v2855, %v1793
  %v2984 = vmul.f32 %v2856, %v1795
  %v2985 = vmul.f32 %v2857, %v1797
  %v2986 = vmul.f32 %v2858, %v1799
  %v2987 = vmul.f32 %v2859, %v1801
  %v2988 = vmul.f32 %v2860, %v1803
  %v2989 = vmul.f32 %v2861, %v1805
  %v2990 = vmul.f32 %v2862, %v1807
  %v2991 = vmul.f32 %v2863, %v1809
  %v2992 = vmul.f32 %v2864, %v1811
  %v2993 = vmul.f32 %v2865, %v1813
  %v2994 = vmul.f32 %v2866, %v1815
  %v2995 = vmul.f32 %v2867, %v1817
  %v2996 = vmul.f32 %v2868, %v1819
  %v2997 = vmul.f32 %v2869, %v1821
  %v2998 = vmul.f32 %v2870, %v1823
  %v2999 = vmul.f32 %v2871, %v1825
  %v3000 = vmul.f32 %v2872, %v1827
  %v3001 = vmul.f32 %v2873, %v1829
  %v3002 = vmul.f32 %v2874, %v1831
  %v3003 = vmul.f32 %v2875, %v1833
  %v3004 = vmul.f32 %v2876, %v1835
  %v3005 = vmul.f32 %v2877, %v1837
  %v3006 = vmul.f32 %v2878, %v1839
  %v3007 = vmul.f32 %v2879, %v1841
  %v3008 = vmul.f32 %v2880, %v1843
  %v3009 = vmul.f32 %v2881, %v1845
  %v3010 = vmul.f32 %v2882, %v1847
  %v3011 = vmul.f32 %v2883, %v1849
  %v3012 = vmul.f32 %v2884, %v1851
  %v3013 = vmul.f32 %v2885, %v1853
  %v3014 = vmul.f32 %v2886, %v1855
  %v3015 = vmul.f32 %v2887, %v1857
  %v3016 = vmul.f32 %v2888, %v1859
  %v3017 = vmul.f32 %v2889, %v1861
  %v3018 = vmul.f32 %v2890, %v1863
  %v3019 = vmul.f32 %v2891, %v1865
  %v3020 = vmul.f32 %v2892, %v1867
  %v3021 = vmul.f32 %v2893, %v1869
  %v3022 = vsub.f32 0.0, %v1230
  %v3023 = vsub.f32 0.0, %v1231
  %v3024 = vsub.f32 0.0, %v1232
  %v3025 = vsub.f32 0.0, %v1233
  %v3026 = vsub.f32 0.0, %v1234
  %v3027 = vsub.f32 0.0, %v1235
  %v3028 = vsub.f32 0.0, %v1236
  %v3029 = vsub.f32 0.0, %v1237
  %v3030 = vsub.f32 0.0, %v1238
  %v3031 = vsub.f32 0.0, %v1239
  %v3032 = vsub.f32 0.0, %v1240
  %v3033 = vsub.f32 0.0, %v1241
  %v3034 = vsub.f32 0.0, %v1242
  %v3035 = vsub.f32 0.0, %v1243
  %v3036 = vsub.f32 0.0, %v1244
  %v3037 = vsub.f32 0.0, %v1245
  %v3038 = vsub.f32 0.0, %v1246
  %v3039 = vsub.f32 0.0, %v1247
  %v3040 = vsub.f32 0.0, %v1248
  %v3041 = vsub.f32 0.0, %v1249
  %v3042 = vsub.f32 0.0, %v1250
  %v3043 = vsub.f32 0.0, %v1251
  %v3044 = vsub.f32 0.0, %v1252
  %v3045 = vsub.f32 0.0, %v1253
  %v3046 = vsub.f32 0.0, %v1254
  %v3047 = vsub.f32 0.0, %v1255
  %v3048 = vsub.f32 0.0, %v1256
  %v3049 = vsub.f32 0.0, %v1257
  %v3050 = vsub.f32 0.0, %v1258
  %v3051 = vsub.f32 0.0, %v1259
  %v3052 = vsub.f32 0.0, %v1260
  %v3053 = vsub.f32 0.0, %v1261
  %v3054 = vsub.f32 0.0, %v1262
  %v3055 = vsub.f32 0.0, %v1263
  %v3056 = vsub.f32 0.0, %v1264
  %v3057 = vsub.f32 0.0, %v1265
  %v3058 = vsub.f32 0.0, %v1266
  %v3059 = vsub.f32 0.0, %v1267
  %v3060 = vsub.f32 0.0, %v1268
  %v3061 = vsub.f32 0.0, %v1269
  %v3062 = vsub.f32 0.0, %v1270
  %v3063 = vsub.f32 0.0, %v1271
  %v3064 = vsub.f32 0.0, %v1272
  %v3065 = vsub.f32 0.0, %v1273
  %v3066 = vsub.f32 0.0, %v1274
  %v3067 = vsub.f32 0.0, %v1275
  %v3068 = vsub.f32 0.0, %v1276
  %v3069 = vsub.f32 0.0, %v1277
  %v3070 = vsub.f32 0.0, %v1278
  %v3071 = vsub.f32 0.0, %v1279
  %v3072 = vsub.f32 0.0, %v1280
  %v3073 = vsub.f32 0.0, %v1281
  %v3074 = vsub.f32 0.0, %v1282
  %v3075 = vsub.f32 0.0, %v1283
  %v3076 = vsub.f32 0.0, %v1284
  %v3077 = vsub.f32 0.0, %v1285
  %v3078 = vsub.f32 0.0, %v1286
  %v3079 = vsub.f32 0.0, %v1287
  %v3080 = vsub.f32 0.0, %v1288
  %v3081 = vsub.f32 0.0, %v1289
  %v3082 = vsub.f32 0.0, %v1290
  %v3083 = vsub.f32 0.0, %v1291
  %v3084 = vsub.f32 0.0, %v1292
  %v3085 = vsub.f32 0.0, %v1293
  %v3086 = vsub.f32 0.0, %v1294
  %v3087 = vsub.f32 0.0, %v1295
  %v3088 = vsub.f32 0.0, %v1296
  %v3089 = vsub.f32 0.0, %v1297
  %v3090 = vsub.f32 0.0, %v1298
  %v3091 = vsub.f32 0.0, %v1299
  %v3092 = vsub.f32 0.0, %v1300
  %v3093 = vsub.f32 0.0, %v1301
  %v3094 = vsub.f32 0.0, %v1302
  %v3095 = vsub.f32 0.0, %v1303
  %v3096 = vsub.f32 0.0, %v1304
  %v3097 = vsub.f32 0.0, %v1305
  %v3098 = vsub.f32 0.0, %v1306
  %v3099 = vsub.f32 0.0, %v1307
  %v3100 = vsub.f32 0.0, %v1308
  %v3101 = vsub.f32 0.0, %v1309
  %v3102 = vsub.f32 0.0, %v1310
  %v3103 = vsub.f32 0.0, %v1311
  %v3104 = vsub.f32 0.0, %v1312
  %v3105 = vsub.f32 0.0, %v1313
  %v3106 = vsub.f32 0.0, %v1314
  %v3107 = vsub.f32 0.0, %v1315
  %v3108 = vsub.f32 0.0, %v1316
  %v3109 = vsub.f32 0.0, %v1317
  %v3110 = vsub.f32 0.0, %v1318
  %v3111 = vsub.f32 0.0, %v1319
  %v3112 = vsub.f32 0.0, %v1320
  %v3113 = vsub.f32 0.0, %v1321
  %v3114 = vsub.f32 0.0, %v1322
  %v3115 = vsub.f32 0.0, %v1323
  %v3116 = vsub.f32 0.0, %v1324
  %v3117 = vsub.f32 0.0, %v1325
  %v3118 = vsub.f32 0.0, %v1326
  %v3119 = vsub.f32 0.0, %v1327
  %v3120 = vsub.f32 0.0, %v1328
  %v3121 = vsub.f32 0.0, %v1329
  %v3122 = vsub.f32 0.0, %v1330
  %v3123 = vsub.f32 0.0, %v1331
  %v3124 = vsub.f32 0.0, %v1332
  %v3125 = vsub.f32 0.0, %v1333
  %v3126 = vsub.f32 0.0, %v1334
  %v3127 = vsub.f32 0.0, %v1335
  %v3128 = vsub.f32 0.0, %v1336
  %v3129 = vsub.f32 0.0, %v1337
  %v3130 = vsub.f32 0.0, %v1338
  %v3131 = vsub.f32 0.0, %v1339
  %v3132 = vsub.f32 0.0, %v1340
  %v3133 = vsub.f32 0.0, %v1341
  %v3134 = vsub.f32 0.0, %v1342
  %v3135 = vsub.f32 0.0, %v1343
  %v3136 = vsub.f32 0.0, %v1344
  %v3137 = vsub.f32 0.0, %v1345
  %v3138 = vsub.f32 0.0, %v1346
  %v3139 = vsub.f32 0.0, %v1347
  %v3140 = vsub.f32 0.0, %v1348
  %v3141 = vsub.f32 0.0, %v1349
  %v3142 = vsub.f32 0.0, %v1350
  %v3143 = vsub.f32 0.0, %v1351
  %v3144 = vsub.f32 0.0, %v1352
  %v3145 = vsub.f32 0.0, %v1353
  %v3146 = vsub.f32 0.0, %v1354
  %v3147 = vsub.f32 0.0, %v1355
  %v3148 = vsub.f32 0.0, %v1356
  %v3149 = vsub.f32 0.0, %v1357
  %v3150 = vmul.f32 %v3022, %v1230
  %v3151 = vmul.f32 %v3023, %v1231
  %v3152 = vmul.f32 %v3024, %v1232
  %v3153 = vmul.f32 %v3025, %v1233
  %v3154 = vmul.f32 %v3026, %v1234
  %v3155 = vmul.f32 %v3027, %v1235
  %v3156 = vmul.f32 %v3028, %v1236
  %v3157 = vmul.f32 %v3029, %v1237
  %v3158 = vmul.f32 %v3030, %v1238
  %v3159 = vmul.f32 %v3031, %v1239
  %v3160 = vmul.f32 %v3032, %v1240
  %v3161 = vmul.f32 %v3033, %v1241
  %v3162 = vmul.f32 %v3034, %v1242
  %v3163 = vmul.f32 %v3035, %v1243
  %v3164 = vmul.f32 %v3036, %v1244
  %v3165 = vmul.f32 %v3037, %v1245
  %v3166 = vmul.f32 %v3038, %v1246
  %v3167 = vmul.f32 %v3039, %v1247
  %v3168 = vmul.f32 %v3040, %v1248
  %v3169 = vmul.f32 %v3041, %v1249
  %v3170 = vmul.f32 %v3042, %v1250
  %v3171 = vmul.f32 %v3043, %v1251
  %v3172 = vmul.f32 %v3044, %v1252
  %v3173 = vmul.f32 %v3045, %v1253
  %v3174 = vmul.f32 %v3046, %v1254
  %v3175 = vmul.f32 %v3047, %v1255
  %v3176 = vmul.f32 %v3048, %v1256
  %v3177 = vmul.f32 %v3049, %v1257
  %v3178 = vmul.f32 %v3050, %v1258
  %v3179 = vmul.f32 %v3051, %v1259
  %v3180 = vmul.f32 %v3052, %v1260
  %v3181 = vmul.f32 %v3053, %v1261
  %v3182 = vmul.f32 %v3054, %v1262
  %v3183 = vmul.f32 %v3055, %v1263
  %v3184 = vmul.f32 %v3056, %v1264
  %v3185 = vmul.f32 %v3057, %v1265
  %v3186 = vmul.f32 %v3058, %v1266
  %v3187 = vmul.f32 %v3059, %v1267
  %v3188 = vmul.f32 %v3060, %v1268
  %v3189 = vmul.f32 %v3061, %v1269
  %v3190 = vmul.f32 %v3062, %v1270
  %v3191 = vmul.f32 %v3063, %v1271
  %v3192 = vmul.f32 %v3064, %v1272
  %v3193 = vmul.f32 %v3065, %v1273
  %v3194 = vmul.f32 %v3066, %v1274
  %v3195 = vmul.f32 %v3067, %v1275
  %v3196 = vmul.f32 %v3068, %v1276
  %v3197 = vmul.f32 %v3069, %v1277
  %v3198 = vmul.f32 %v3070, %v1278
  %v3199 = vmul.f32 %v3071, %v1279
  %v3200 = vmul.f32 %v3072, %v1280
  %v3201 = vmul.f32 %v3073, %v1281
  %v3202 = vmul.f32 %v3074, %v1282
  %v3203 = vmul.f32 %v3075, %v1283
  %v3204 = vmul.f32 %v3076, %v1284
  %v3205 = vmul.f32 %v3077, %v1285
  %v3206 = vmul.f32 %v3078, %v1286
  %v3207 = vmul.f32 %v3079, %v1287
  %v3208 = vmul.f32 %v3080, %v1288
  %v3209 = vmul.f32 %v3081, %v1289
  %v3210 = vmul.f32 %v3082, %v1290
  %v3211 = vmul.f32 %v3083, %v1291
  %v3212 = vmul.f32 %v3084, %v1292
  %v3213 = vmul.f32 %v3085, %v1293
  %v3214 = vmul.f32 %v3086, %v1294
  %v3215 = vmul.f32 %v3087, %v1295
  %v3216 = vmul.f32 %v3088, %v1296
  %v3217 = vmul.f32 %v3089, %v1297
  %v3218 = vmul.f32 %v3090, %v1298
  %v3219 = vmul.f32 %v3091, %v1299
  %v3220 = vmul.f32 %v3092, %v1300
  %v3221 = vmul.f32 %v3093, %v1301
  %v3222 = vmul.f32 %v3094, %v1302
  %v3223 = vmul.f32 %v3095, %v1303
  %v3224 = vmul.f32 %v3096, %v1304
  %v3225 = vmul.f32 %v3097, %v1305
  %v3226 = vmul.f32 %v3098, %v1306
  %v3227 = vmul.f32 %v3099, %v1307
  %v3228 = vmul.f32 %v3100, %v1308
  %v3229 = vmul.f32 %v3101, %v1309
  %v3230 = vmul.f32 %v3102, %v1310
  %v3231 = vmul.f32 %v3103, %v1311
  %v3232 = vmul.f32 %v3104, %v1312
  %v3233 = vmul.f32 %v3105, %v1313
  %v3234 = vmul.f32 %v3106, %v1314
  %v3235 = vmul.f32 %v3107, %v1315
  %v3236 = vmul.f32 %v3108, %v1316
  %v3237 = vmul.f32 %v3109, %v1317
  %v3238 = vmul.f32 %v3110, %v1318
  %v3239 = vmul.f32 %v3111, %v1319
  %v3240 = vmul.f32 %v3112, %v1320
  %v3241 = vmul.f32 %v3113, %v1321
  %v3242 = vmul.f32 %v3114, %v1322
  %v3243 = vmul.f32 %v3115, %v1323
  %v3244 = vmul.f32 %v3116, %v1324
  %v3245 = vmul.f32 %v3117, %v1325
  %v3246 = vmul.f32 %v3118, %v1326
  %v3247 = vmul.f32 %v3119, %v1327
  %v3248 = vmul.f32 %v3120, %v1328
  %v3249 = vmul.f32 %v3121, %v1329
  %v3250 = vmul.f32 %v3122, %v1330
  %v3251 = vmul.f32 %v3123, %v1331
  %v3252 = vmul.f32 %v3124, %v1332
  %v3253 = vmul.f32 %v3125, %v1333
  %v3254 = vmul.f32 %v3126, %v1334
  %v3255 = vmul.f32 %v3127, %v1335
  %v3256 = vmul.f32 %v3128, %v1336
  %v3257 = vmul.f32 %v3129, %v1337
  %v3258 = vmul.f32 %v3130, %v1338
  %v3259 = vmul.f32 %v3131, %v1339
  %v3260 = vmul.f32 %v3132, %v1340
  %v3261 = vmul.f32 %v3133, %v1341
  %v3262 = vmul.f32 %v3134, %v1342
  %v3263 = vmul.f32 %v3135, %v1343
  %v3264 = vmul.f32 %v3136, %v1344
  %v3265 = vmul.f32 %v3137, %v1345
  %v3266 = vmul.f32 %v3138, %v1346
  %v3267 = vmul.f32 %v3139, %v1347
  %v3268 = vmul.f32 %v3140, %v1348
  %v3269 = vmul.f32 %v3141, %v1349
  %v3270 = vmul.f32 %v3142, %v1350
  %v3271 = vmul.f32 %v3143, %v1351
  %v3272 = vmul.f32 %v3144, %v1352
  %v3273 = vmul.f32 %v3145, %v1353
  %v3274 = vmul.f32 %v3146, %v1354
  %v3275 = vmul.f32 %v3147, %v1355
  %v3276 = vmul.f32 %v3148, %v1356
  %v3277 = vmul.f32 %v3149, %v1357
  %v3278 = vmul.f32 %v3150, 1.442695
  %v3279 = vpow.pop %v3278
  %v3280 = vmul.f32 %v3151, 1.442695
  %v3281 = vpow.pop %v3280
  %v3282 = vmul.f32 %v3152, 1.442695
  %v3283 = vpow.pop %v3282
  %v3284 = vmul.f32 %v3153, 1.442695
  %v3285 = vpow.pop %v3284
  %v3286 = vmul.f32 %v3154, 1.442695
  %v3287 = vpow.pop %v3286
  %v3288 = vmul.f32 %v3155, 1.442695
  %v3289 = vpow.pop %v3288
  %v3290 = vmul.f32 %v3156, 1.442695
  %v3291 = vpow.pop %v3290
  %v3292 = vmul.f32 %v3157, 1.442695
  %v3293 = vpow.pop %v3292
  %v3294 = vmul.f32 %v3158, 1.442695
  %v3295 = vpow.pop %v3294
  %v3296 = vmul.f32 %v3159, 1.442695
  %v3297 = vpow.pop %v3296
  %v3298 = vmul.f32 %v3160, 1.442695
  %v3299 = vpow.pop %v3298
  %v3300 = vmul.f32 %v3161, 1.442695
  %v3301 = vpow.pop %v3300
  %v3302 = vmul.f32 %v3162, 1.442695
  %v3303 = vpow.pop %v3302
  %v3304 = vmul.f32 %v3163, 1.442695
  %v3305 = vpow.pop %v3304
  %v3306 = vmul.f32 %v3164, 1.442695
  %v3307 = vpow.pop %v3306
  %v3308 = vmul.f32 %v3165, 1.442695
  %v3309 = vpow.pop %v3308
  %v3310 = vmul.f32 %v3166, 1.442695
  %v3311 = vpow.pop %v3310
  %v3312 = vmul.f32 %v3167, 1.442695
  %v3313 = vpow.pop %v3312
  %v3314 = vmul.f32 %v3168, 1.442695
  %v3315 = vpow.pop %v3314
  %v3316 = vmul.f32 %v3169, 1.442695
  %v3317 = vpow.pop %v3316
  %v3318 = vmul.f32 %v3170, 1.442695
  %v3319 = vpow.pop %v3318
  %v3320 = vmul.f32 %v3171, 1.442695
  %v3321 = vpow.pop %v3320
  %v3322 = vmul.f32 %v3172, 1.442695
  %v3323 = vpow.pop %v3322
  %v3324 = vmul.f32 %v3173, 1.442695
  %v3325 = vpow.pop %v3324
  %v3326 = vmul.f32 %v3174, 1.442695
  %v3327 = vpow.pop %v3326
  %v3328 = vmul.f32 %v3175, 1.442695
  %v3329 = vpow.pop %v3328
  %v3330 = vmul.f32 %v3176, 1.442695
  %v3331 = vpow.pop %v3330
  %v3332 = vmul.f32 %v3177, 1.442695
  %v3333 = vpow.pop %v3332
  %v3334 = vmul.f32 %v3178, 1.442695
  %v3335 = vpow.pop %v3334
  %v3336 = vmul.f32 %v3179, 1.442695
  %v3337 = vpow.pop %v3336
  %v3338 = vmul.f32 %v3180, 1.442695
  %v3339 = vpow.pop %v3338
  %v3340 = vmul.f32 %v3181, 1.442695
  %v3341 = vpow.pop %v3340
  %v3342 = vmul.f32 %v3182, 1.442695
  %v3343 = vpow.pop %v3342
  %v3344 = vmul.f32 %v3183, 1.442695
  %v3345 = vpow.pop %v3344
  %v3346 = vmul.f32 %v3184, 1.442695
  %v3347 = vpow.pop %v3346
  %v3348 = vmul.f32 %v3185, 1.442695
  %v3349 = vpow.pop %v3348
  %v3350 = vmul.f32 %v3186, 1.442695
  %v3351 = vpow.pop %v3350
  %v3352 = vmul.f32 %v3187, 1.442695
  %v3353 = vpow.pop %v3352
  %v3354 = vmul.f32 %v3188, 1.442695
  %v3355 = vpow.pop %v3354
  %v3356 = vmul.f32 %v3189, 1.442695
  %v3357 = vpow.pop %v3356
  %v3358 = vmul.f32 %v3190, 1.442695
  %v3359 = vpow.pop %v3358
  %v3360 = vmul.f32 %v3191, 1.442695
  %v3361 = vpow.pop %v3360
  %v3362 = vmul.f32 %v3192, 1.442695
  %v3363 = vpow.pop %v3362
  %v3364 = vmul.f32 %v3193, 1.442695
  %v3365 = vpow.pop %v3364
  %v3366 = vmul.f32 %v3194, 1.442695
  %v3367 = vpow.pop %v3366
  %v3368 = vmul.f32 %v3195, 1.442695
  %v3369 = vpow.pop %v3368
  %v3370 = vmul.f32 %v3196, 1.442695
  %v3371 = vpow.pop %v3370
  %v3372 = vmul.f32 %v3197, 1.442695
  %v3373 = vpow.pop %v3372
  %v3374 = vmul.f32 %v3198, 1.442695
  %v3375 = vpow.pop %v3374
  %v3376 = vmul.f32 %v3199, 1.442695
  %v3377 = vpow.pop %v3376
  %v3378 = vmul.f32 %v3200, 1.442695
  %v3379 = vpow.pop %v3378
  %v3380 = vmul.f32 %v3201, 1.442695
  %v3381 = vpow.pop %v3380
  %v3382 = vmul.f32 %v3202, 1.442695
  %v3383 = vpow.pop %v3382
  %v3384 = vmul.f32 %v3203, 1.442695
  %v3385 = vpow.pop %v3384
  %v3386 = vmul.f32 %v3204, 1.442695
  %v3387 = vpow.pop %v3386
  %v3388 = vmul.f32 %v3205, 1.442695
  %v3389 = vpow.pop %v3388
  %v3390 = vmul.f32 %v3206, 1.442695
  %v3391 = vpow.pop %v3390
  %v3392 = vmul.f32 %v3207, 1.442695
  %v3393 = vpow.pop %v3392
  %v3394 = vmul.f32 %v3208, 1.442695
  %v3395 = vpow.pop %v3394
  %v3396 = vmul.f32 %v3209, 1.442695
  %v3397 = vpow.pop %v3396
  %v3398 = vmul.f32 %v3210, 1.442695
  %v3399 = vpow.pop %v3398
  %v3400 = vmul.f32 %v3211, 1.442695
  %v3401 = vpow.pop %v3400
  %v3402 = vmul.f32 %v3212, 1.442695
  %v3403 = vpow.pop %v3402
  %v3404 = vmul.f32 %v3213, 1.442695
  %v3405 = vpow.pop %v3404
  %v3406 = vmul.f32 %v3214, 1.442695
  %v3407 = vpow.pop %v3406
  %v3408 = vmul.f32 %v3215, 1.442695
  %v3409 = vpow.pop %v3408
  %v3410 = vmul.f32 %v3216, 1.442695
  %v3411 = vpow.pop %v3410
  %v3412 = vmul.f32 %v3217, 1.442695
  %v3413 = vpow.pop %v3412
  %v3414 = vmul.f32 %v3218, 1.442695
  %v3415 = vpow.pop %v3414
  %v3416 = vmul.f32 %v3219, 1.442695
  %v3417 = vpow.pop %v3416
  %v3418 = vmul.f32 %v3220, 1.442695
  %v3419 = vpow.pop %v3418
  %v3420 = vmul.f32 %v3221, 1.442695
  %v3421 = vpow.pop %v3420
  %v3422 = vmul.f32 %v3222, 1.442695
  %v3423 = vpow.pop %v3422
  %v3424 = vmul.f32 %v3223, 1.442695
  %v3425 = vpow.pop %v3424
  %v3426 = vmul.f32 %v3224, 1.442695
  %v3427 = vpow.pop %v3426
  %v3428 = vmul.f32 %v3225, 1.442695
  %v3429 = vpow.pop %v3428
  %v3430 = vmul.f32 %v3226, 1.442695
  %v3431 = vpow.pop %v3430
  %v3432 = vmul.f32 %v3227, 1.442695
  %v3433 = vpow.pop %v3432
  %v3434 = vmul.f32 %v3228, 1.442695
  %v3435 = vpow.pop %v3434
  %v3436 = vmul.f32 %v3229, 1.442695
  %v3437 = vpow.pop %v3436
  %v3438 = vmul.f32 %v3230, 1.442695
  %v3439 = vpow.pop %v3438
  %v3440 = vmul.f32 %v3231, 1.442695
  %v3441 = vpow.pop %v3440
  %v3442 = vmul.f32 %v3232, 1.442695
  %v3443 = vpow.pop %v3442
  %v3444 = vmul.f32 %v3233, 1.442695
  %v3445 = vpow.pop %v3444
  %v3446 = vmul.f32 %v3234, 1.442695
  %v3447 = vpow.pop %v3446
  %v3448 = vmul.f32 %v3235, 1.442695
  %v3449 = vpow.pop %v3448
  %v3450 = vmul.f32 %v3236, 1.442695
  %v3451 = vpow.pop %v3450
  %v3452 = vmul.f32 %v3237, 1.442695
  %v3453 = vpow.pop %v3452
  %v3454 = vmul.f32 %v3238, 1.442695
  %v3455 = vpow.pop %v3454
  %v3456 = vmul.f32 %v3239, 1.442695
  %v3457 = vpow.pop %v3456
  %v3458 = vmul.f32 %v3240, 1.442695
  %v3459 = vpow.pop %v3458
  %v3460 = vmul.f32 %v3241, 1.442695
  %v3461 = vpow.pop %v3460
  %v3462 = vmul.f32 %v3242, 1.442695
  %v3463 = vpow.pop %v3462
  %v3464 = vmul.f32 %v3243, 1.442695
  %v3465 = vpow.pop %v3464
  %v3466 = vmul.f32 %v3244, 1.442695
  %v3467 = vpow.pop %v3466
  %v3468 = vmul.f32 %v3245, 1.442695
  %v3469 = vpow.pop %v3468
  %v3470 = vmul.f32 %v3246, 1.442695
  %v3471 = vpow.pop %v3470
  %v3472 = vmul.f32 %v3247, 1.442695
  %v3473 = vpow.pop %v3472
  %v3474 = vmul.f32 %v3248, 1.442695
  %v3475 = vpow.pop %v3474
  %v3476 = vmul.f32 %v3249, 1.442695
  %v3477 = vpow.pop %v3476
  %v3478 = vmul.f32 %v3250, 1.442695
  %v3479 = vpow.pop %v3478
  %v3480 = vmul.f32 %v3251, 1.442695
  %v3481 = vpow.pop %v3480
  %v3482 = vmul.f32 %v3252, 1.442695
  %v3483 = vpow.pop %v3482
  %v3484 = vmul.f32 %v3253, 1.442695
  %v3485 = vpow.pop %v3484
  %v3486 = vmul.f32 %v3254, 1.442695
  %v3487 = vpow.pop %v3486
  %v3488 = vmul.f32 %v3255, 1.442695
  %v3489 = vpow.pop %v3488
  %v3490 = vmul.f32 %v3256, 1.442695
  %v3491 = vpow.pop %v3490
  %v3492 = vmul.f32 %v3257, 1.442695
  %v3493 = vpow.pop %v3492
  %v3494 = vmul.f32 %v3258, 1.442695
  %v3495 = vpow.pop %v3494
  %v3496 = vmul.f32 %v3259, 1.442695
  %v3497 = vpow.pop %v3496
  %v3498 = vmul.f32 %v3260, 1.442695
  %v3499 = vpow.pop %v3498
  %v3500 = vmul.f32 %v3261, 1.442695
  %v3501 = vpow.pop %v3500
  %v3502 = vmul.f32 %v3262, 1.442695
  %v3503 = vpow.pop %v3502
  %v3504 = vmul.f32 %v3263, 1.442695
  %v3505 = vpow.pop %v3504
  %v3506 = vmul.f32 %v3264, 1.442695
  %v3507 = vpow.pop %v3506
  %v3508 = vmul.f32 %v3265, 1.442695
  %v3509 = vpow.pop %v3508
  %v3510 = vmul.f32 %v3266, 1.442695
  %v3511 = vpow.pop %v3510
  %v3512 = vmul.f32 %v3267, 1.442695
  %v3513 = vpow.pop %v3512
  %v3514 = vmul.f32 %v3268, 1.442695
  %v3515 = vpow.pop %v3514
  %v3516 = vmul.f32 %v3269, 1.442695
  %v3517 = vpow.pop %v3516
  %v3518 = vmul.f32 %v3270, 1.442695
  %v3519 = vpow.pop %v3518
  %v3520 = vmul.f32 %v3271, 1.442695
  %v3521 = vpow.pop %v3520
  %v3522 = vmul.f32 %v3272, 1.442695
  %v3523 = vpow.pop %v3522
  %v3524 = vmul.f32 %v3273, 1.442695
  %v3525 = vpow.pop %v3524
  %v3526 = vmul.f32 %v3274, 1.442695
  %v3527 = vpow.pop %v3526
  %v3528 = vmul.f32 %v3275, 1.442695
  %v3529 = vpow.pop %v3528
  %v3530 = vmul.f32 %v3276, 1.442695
  %v3531 = vpow.pop %v3530
  %v3532 = vmul.f32 %v3277, 1.442695
  %v3533 = vpow.pop %v3532
  %v3534 = vmul.f32 %v2894, %v3279
  %v3535 = vmul.f32 %v2895, %v3281
  %v3536 = vmul.f32 %v2896, %v3283
  %v3537 = vmul.f32 %v2897, %v3285
  %v3538 = vmul.f32 %v2898, %v3287
  %v3539 = vmul.f32 %v2899, %v3289
  %v3540 = vmul.f32 %v2900, %v3291
  %v3541 = vmul.f32 %v2901, %v3293
  %v3542 = vmul.f32 %v2902, %v3295
  %v3543 = vmul.f32 %v2903, %v3297
  %v3544 = vmul.f32 %v2904, %v3299
  %v3545 = vmul.f32 %v2905, %v3301
  %v3546 = vmul.f32 %v2906, %v3303
  %v3547 = vmul.f32 %v2907, %v3305
  %v3548 = vmul.f32 %v2908, %v3307
  %v3549 = vmul.f32 %v2909, %v3309
  %v3550 = vmul.f32 %v2910, %v3311
  %v3551 = vmul.f32 %v2911, %v3313
  %v3552 = vmul.f32 %v2912, %v3315
  %v3553 = vmul.f32 %v2913, %v3317
  %v3554 = vmul.f32 %v2914, %v3319
  %v3555 = vmul.f32 %v2915, %v3321
  %v3556 = vmul.f32 %v2916, %v3323
  %v3557 = vmul.f32 %v2917, %v3325
  %v3558 = vmul.f32 %v2918, %v3327
  %v3559 = vmul.f32 %v2919, %v3329
  %v3560 = vmul.f32 %v2920, %v3331
  %v3561 = vmul.f32 %v2921, %v3333
  %v3562 = vmul.f32 %v2922, %v3335
  %v3563 = vmul.f32 %v2923, %v3337
  %v3564 = vmul.f32 %v2924, %v3339
  %v3565 = vmul.f32 %v2925, %v3341
  %v3566 = vmul.f32 %v2926, %v3343
  %v3567 = vmul.f32 %v2927, %v3345
  %v3568 = vmul.f32 %v2928, %v3347
  %v3569 = vmul.f32 %v2929, %v3349
  %v3570 = vmul.f32 %v2930, %v3351
  %v3571 = vmul.f32 %v2931, %v3353
  %v3572 = vmul.f32 %v2932, %v3355
  %v3573 = vmul.f32 %v2933, %v3357
  %v3574 = vmul.f32 %v2934, %v3359
  %v3575 = vmul.f32 %v2935, %v3361
  %v3576 = vmul.f32 %v2936, %v3363
  %v3577 = vmul.f32 %v2937, %v3365
  %v3578 = vmul.f32 %v2938, %v3367
  %v3579 = vmul.f32 %v2939, %v3369
  %v3580 = vmul.f32 %v2940, %v3371
  %v3581 = vmul.f32 %v2941, %v3373
  %v3582 = vmul.f32 %v2942, %v3375
  %v3583 = vmul.f32 %v2943, %v3377
  %v3584 = vmul.f32 %v2944, %v3379
  %v3585 = vmul.f32 %v2945, %v3381
  %v3586 = vmul.f32 %v2946, %v3383
  %v3587 = vmul.f32 %v2947, %v3385
  %v3588 = vmul.f32 %v2948, %v3387
  %v3589 = vmul.f32 %v2949, %v3389
  %v3590 = vmul.f32 %v2950, %v3391
  %v3591 = vmul.f32 %v2951, %v3393
  %v3592 = vmul.f32 %v2952, %v3395
  %v3593 = vmul.f32 %v2953, %v3397
  %v3594 = vmul.f32 %v2954, %v3399
  %v3595 = vmul.f32 %v2955, %v3401
  %v3596 = vmul.f32 %v2956, %v3403
  %v3597 = vmul.f32 %v2957, %v3405
  %v3598 = vmul.f32 %v2958, %v3407
  %v3599 = vmul.f32 %v2959, %v3409
  %v3600 = vmul.f32 %v2960, %v3411
  %v3601 = vmul.f32 %v2961, %v3413
  %v3602 = vmul.f32 %v2962, %v3415
  %v3603 = vmul.f32 %v2963, %v3417
  %v3604 = vmul.f32 %v2964, %v3419
  %v3605 = vmul.f32 %v2965, %v3421
  %v3606 = vmul.f32 %v2966, %v3423
  %v3607 = vmul.f32 %v2967, %v3425
  %v3608 = vmul.f32 %v2968, %v3427
  %v3609 = vmul.f32 %v2969, %v3429
  %v3610 = vmul.f32 %v2970, %v3431
  %v3611 = vmul.f32 %v2971, %v3433
  %v3612 = vmul.f32 %v2972, %v3435
  %v3613 = vmul.f32 %v2973, %v3437
  %v3614 = vmul.f32 %v2974, %v3439
  %v3615 = vmul.f32 %v2975, %v3441
  %v3616 = vmul.f32 %v2976, %v3443
  %v3617 = vmul.f32 %v2977, %v3445
  %v3618 = vmul.f32 %v2978, %v3447
  %v3619 = vmul.f32 %v2979, %v3449
  %v3620 = vmul.f32 %v2980, %v3451
  %v3621 = vmul.f32 %v2981, %v3453
  %v3622 = vmul.f32 %v2982, %v3455
  %v3623 = vmul.f32 %v2983, %v3457
  %v3624 = vmul.f32 %v2984, %v3459
  %v3625 = vmul.f32 %v2985, %v3461
  %v3626 = vmul.f32 %v2986, %v3463
  %v3627 = vmul.f32 %v2987, %v3465
  %v3628 = vmul.f32 %v2988, %v3467
  %v3629 = vmul.f32 %v2989, %v3469
  %v3630 = vmul.f32 %v2990, %v3471
  %v3631 = vmul.f32 %v2991, %v3473
  %v3632 = vmul.f32 %v2992, %v3475
  %v3633 = vmul.f32 %v2993, %v3477
  %v3634 = vmul.f32 %v2994, %v3479
  %v3635 = vmul.f32 %v2995, %v3481
  %v3636 = vmul.f32 %v2996, %v3483
  %v3637 = vmul.f32 %v2997, %v3485
  %v3638 = vmul.f32 %v2998, %v3487
  %v3639 = vmul.f32 %v2999, %v3489
  %v3640 = vmul.f32 %v3000, %v3491
  %v3641 = vmul.f32 %v3001, %v3493
  %v3642 = vmul.f32 %v3002, %v3495
  %v3643 = vmul.f32 %v3003, %v3497
  %v3644 = vmul.f32 %v3004, %v3499
  %v3645 = vmul.f32 %v3005, %v3501
  %v3646 = vmul.f32 %v3006, %v3503
  %v3647 = vmul.f32 %v3007, %v3505
  %v3648 = vmul.f32 %v3008, %v3507
  %v3649 = vmul.f32 %v3009, %v3509
  %v3650 = vmul.f32 %v3010, %v3511
  %v3651 = vmul.f32 %v3011, %v3513
  %v3652 = vmul.f32 %v3012, %v3515
  %v3653 = vmul.f32 %v3013, %v3517
  %v3654 = vmul.f32 %v3014, %v3519
  %v3655 = vmul.f32 %v3015, %v3521
  %v3656 = vmul.f32 %v3016, %v3523
  %v3657 = vmul.f32 %v3017, %v3525
  %v3658 = vmul.f32 %v3018, %v3527
  %v3659 = vmul.f32 %v3019, %v3529
  %v3660 = vmul.f32 %v3020, %v3531
  %v3661 = vmul.f32 %v3021, %v3533
  %v3662 = vsub.f32 1.0, %v3534
  %v3663 = vsub.f32 1.0, %v3535
  %v3664 = vsub.f32 1.0, %v3536
  %v3665 = vsub.f32 1.0, %v3537
  %v3666 = vsub.f32 1.0, %v3538
  %v3667 = vsub.f32 1.0, %v3539
  %v3668 = vsub.f32 1.0, %v3540
  %v3669 = vsub.f32 1.0, %v3541
  %v3670 = vsub.f32 1.0, %v3542
  %v3671 = vsub.f32 1.0, %v3543
  %v3672 = vsub.f32 1.0, %v3544
  %v3673 = vsub.f32 1.0, %v3545
  %v3674 = vsub.f32 1.0, %v3546
  %v3675 = vsub.f32 1.0, %v3547
  %v3676 = vsub.f32 1.0, %v3548
  %v3677 = vsub.f32 1.0, %v3549
  %v3678 = vsub.f32 1.0, %v3550
  %v3679 = vsub.f32 1.0, %v3551
  %v3680 = vsub.f32 1.0, %v3552
  %v3681 = vsub.f32 1.0, %v3553
  %v3682 = vsub.f32 1.0, %v3554
  %v3683 = vsub.f32 1.0, %v3555
  %v3684 = vsub.f32 1.0, %v3556
  %v3685 = vsub.f32 1.0, %v3557
  %v3686 = vsub.f32 1.0, %v3558
  %v3687 = vsub.f32 1.0, %v3559
  %v3688 = vsub.f32 1.0, %v3560
  %v3689 = vsub.f32 1.0, %v3561
  %v3690 = vsub.f32 1.0, %v3562
  %v3691 = vsub.f32 1.0, %v3563
  %v3692 = vsub.f32 1.0, %v3564
  %v3693 = vsub.f32 1.0, %v3565
  %v3694 = vsub.f32 1.0, %v3566
  %v3695 = vsub.f32 1.0, %v3567
  %v3696 = vsub.f32 1.0, %v3568
  %v3697 = vsub.f32 1.0, %v3569
  %v3698 = vsub.f32 1.0, %v3570
  %v3699 = vsub.f32 1.0, %v3571
  %v3700 = vsub.f32 1.0, %v3572
  %v3701 = vsub.f32 1.0, %v3573
  %v3702 = vsub.f32 1.0, %v3574
  %v3703 = vsub.f32 1.0, %v3575
  %v3704 = vsub.f32 1.0, %v3576
  %v3705 = vsub.f32 1.0, %v3577
  %v3706 = vsub.f32 1.0, %v3578
  %v3707 = vsub.f32 1.0, %v3579
  %v3708 = vsub.f32 1.0, %v3580
  %v3709 = vsub.f32 1.0, %v3581
  %v3710 = vsub.f32 1.0, %v3582
  %v3711 = vsub.f32 1.0, %v3583
  %v3712 = vsub.f32 1.0, %v3584
  %v3713 = vsub.f32 1.0, %v3585
  %v3714 = vsub.f32 1.0, %v3586
  %v3715 = vsub.f32 1.0, %v3587
  %v3716 = vsub.f32 1.0, %v3588
  %v3717 = vsub.f32 1.0, %v3589
  %v3718 = vsub.f32 1.0, %v3590
  %v3719 = vsub.f32 1.0, %v3591
  %v3720 = vsub.f32 1.0, %v3592
  %v3721 = vsub.f32 1.0, %v3593
  %v3722 = vsub.f32 1.0, %v3594
  %v3723 = vsub.f32 1.0, %v3595
  %v3724 = vsub.f32 1.0, %v3596
  %v3725 = vsub.f32 1.0, %v3597
  %v3726 = vsub.f32 1.0, %v3598
  %v3727 = vsub.f32 1.0, %v3599
  %v3728 = vsub.f32 1.0, %v3600
  %v3729 = vsub.f32 1.0, %v3601
  %v3730 = vsub.f32 1.0, %v3602
  %v3731 = vsub.f32 1.0, %v3603
  %v3732 = vsub.f32 1.0, %v3604
  %v3733 = vsub.f32 1.0, %v3605
  %v3734 = vsub.f32 1.0, %v3606
  %v3735 = vsub.f32 1.0, %v3607
  %v3736 = vsub.f32 1.0, %v3608
  %v3737 = vsub.f32 1.0, %v3609
  %v3738 = vsub.f32 1.0, %v3610
  %v3739 = vsub.f32 1.0, %v3611
  %v3740 = vsub.f32 1.0, %v3612
  %v3741 = vsub.f32 1.0, %v3613
  %v3742 = vsub.f32 1.0, %v3614
  %v3743 = vsub.f32 1.0, %v3615
  %v3744 = vsub.f32 1.0, %v3616
  %v3745 = vsub.f32 1.0, %v3617
  %v3746 = vsub.f32 1.0, %v3618
  %v3747 = vsub.f32 1.0, %v3619
  %v3748 = vsub.f32 1.0, %v3620
  %v3749 = vsub.f32 1.0, %v3621
  %v3750 = vsub.f32 1.0, %v3622
  %v3751 = vsub.f32 1.0, %v3623
  %v3752 = vsub.f32 1.0, %v3624
  %v3753 = vsub.f32 1.0, %v3625
  %v3754 = vsub.f32 1.0, %v3626
  %v3755 = vsub.f32 1.0, %v3627
  %v3756 = vsub.f32 1.0, %v3628
  %v3757 = vsub.f32 1.0, %v3629
  %v3758 = vsub.f32 1.0, %v3630
  %v3759 = vsub.f32 1.0, %v3631
  %v3760 = vsub.f32 1.0, %v3632
  %v3761 = vsub.f32 1.0, %v3633
  %v3762 = vsub.f32 1.0, %v3634
  %v3763 = vsub.f32 1.0, %v3635
  %v3764 = vsub.f32 1.0, %v3636
  %v3765 = vsub.f32 1.0, %v3637
  %v3766 = vsub.f32 1.0, %v3638
  %v3767 = vsub.f32 1.0, %v3639
  %v3768 = vsub.f32 1.0, %v3640
  %v3769 = vsub.f32 1.0, %v3641
  %v3770 = vsub.f32 1.0, %v3642
  %v3771 = vsub.f32 1.0, %v3643
  %v3772 = vsub.f32 1.0, %v3644
  %v3773 = vsub.f32 1.0, %v3645
  %v3774 = vsub.f32 1.0, %v3646
  %v3775 = vsub.f32 1.0, %v3647
  %v3776 = vsub.f32 1.0, %v3648
  %v3777 = vsub.f32 1.0, %v3649
  %v3778 = vsub.f32 1.0, %v3650
  %v3779 = vsub.f32 1.0, %v3651
  %v3780 = vsub.f32 1.0, %v3652
  %v3781 = vsub.f32 1.0, %v3653
  %v3782 = vsub.f32 1.0, %v3654
  %v3783 = vsub.f32 1.0, %v3655
  %v3784 = vsub.f32 1.0, %v3656
  %v3785 = vsub.f32 1.0, %v3657
  %v3786 = vsub.f32 1.0, %v3658
  %v3787 = vsub.f32 1.0, %v3659
  %v3788 = vsub.f32 1.0, %v3660
  %v3789 = vsub.f32 1.0, %v3661
  %vm3790 = vcmp.ge.f32.partialorder %v1102, 0.0
  %vm3791 = vcmp.ge.f32.partialorder %v1103, 0.0
  %vm3792 = vcmp.ge.f32.partialorder %v1104, 0.0
  %vm3793 = vcmp.ge.f32.partialorder %v1105, 0.0
  %vm3794 = vcmp.ge.f32.partialorder %v1106, 0.0
  %vm3795 = vcmp.ge.f32.partialorder %v1107, 0.0
  %vm3796 = vcmp.ge.f32.partialorder %v1108, 0.0
  %vm3797 = vcmp.ge.f32.partialorder %v1109, 0.0
  %vm3798 = vcmp.ge.f32.partialorder %v1110, 0.0
  %vm3799 = vcmp.ge.f32.partialorder %v1111, 0.0
  %vm3800 = vcmp.ge.f32.partialorder %v1112, 0.0
  %vm3801 = vcmp.ge.f32.partialorder %v1113, 0.0
  %vm3802 = vcmp.ge.f32.partialorder %v1114, 0.0
  %vm3803 = vcmp.ge.f32.partialorder %v1115, 0.0
  %vm3804 = vcmp.ge.f32.partialorder %v1116, 0.0
  %vm3805 = vcmp.ge.f32.partialorder %v1117, 0.0
  %vm3806 = vcmp.ge.f32.partialorder %v1118, 0.0
  %vm3807 = vcmp.ge.f32.partialorder %v1119, 0.0
  %vm3808 = vcmp.ge.f32.partialorder %v1120, 0.0
  %vm3809 = vcmp.ge.f32.partialorder %v1121, 0.0
  %vm3810 = vcmp.ge.f32.partialorder %v1122, 0.0
  %vm3811 = vcmp.ge.f32.partialorder %v1123, 0.0
  %vm3812 = vcmp.ge.f32.partialorder %v1124, 0.0
  %vm3813 = vcmp.ge.f32.partialorder %v1125, 0.0
  %vm3814 = vcmp.ge.f32.partialorder %v1126, 0.0
  %vm3815 = vcmp.ge.f32.partialorder %v1127, 0.0
  %vm3816 = vcmp.ge.f32.partialorder %v1128, 0.0
  %vm3817 = vcmp.ge.f32.partialorder %v1129, 0.0
  %vm3818 = vcmp.ge.f32.partialorder %v1130, 0.0
  %vm3819 = vcmp.ge.f32.partialorder %v1131, 0.0
  %vm3820 = vcmp.ge.f32.partialorder %v1132, 0.0
  %vm3821 = vcmp.ge.f32.partialorder %v1133, 0.0
  %vm3822 = vcmp.ge.f32.partialorder %v1134, 0.0
  %vm3823 = vcmp.ge.f32.partialorder %v1135, 0.0
  %vm3824 = vcmp.ge.f32.partialorder %v1136, 0.0
  %vm3825 = vcmp.ge.f32.partialorder %v1137, 0.0
  %vm3826 = vcmp.ge.f32.partialorder %v1138, 0.0
  %vm3827 = vcmp.ge.f32.partialorder %v1139, 0.0
  %vm3828 = vcmp.ge.f32.partialorder %v1140, 0.0
  %vm3829 = vcmp.ge.f32.partialorder %v1141, 0.0
  %vm3830 = vcmp.ge.f32.partialorder %v1142, 0.0
  %vm3831 = vcmp.ge.f32.partialorder %v1143, 0.0
  %vm3832 = vcmp.ge.f32.partialorder %v1144, 0.0
  %vm3833 = vcmp.ge.f32.partialorder %v1145, 0.0
  %vm3834 = vcmp.ge.f32.partialorder %v1146, 0.0
  %vm3835 = vcmp.ge.f32.partialorder %v1147, 0.0
  %vm3836 = vcmp.ge.f32.partialorder %v1148, 0.0
  %vm3837 = vcmp.ge.f32.partialorder %v1149, 0.0
  %vm3838 = vcmp.ge.f32.partialorder %v1150, 0.0
  %vm3839 = vcmp.ge.f32.partialorder %v1151, 0.0
  %vm3840 = vcmp.ge.f32.partialorder %v1152, 0.0
  %vm3841 = vcmp.ge.f32.partialorder %v1153, 0.0
  %vm3842 = vcmp.ge.f32.partialorder %v1154, 0.0
  %vm3843 = vcmp.ge.f32.partialorder %v1155, 0.0
  %vm3844 = vcmp.ge.f32.partialorder %v1156, 0.0
  %vm3845 = vcmp.ge.f32.partialorder %v1157, 0.0
  %vm3846 = vcmp.ge.f32.partialorder %v1158, 0.0
  %vm3847 = vcmp.ge.f32.partialorder %v1159, 0.0
  %vm3848 = vcmp.ge.f32.partialorder %v1160, 0.0
  %vm3849 = vcmp.ge.f32.partialorder %v1161, 0.0
  %vm3850 = vcmp.ge.f32.partialorder %v1162, 0.0
  %vm3851 = vcmp.ge.f32.partialorder %v1163, 0.0
  %vm3852 = vcmp.ge.f32.partialorder %v1164, 0.0
  %vm3853 = vcmp.ge.f32.partialorder %v1165, 0.0
  %vm3854 = vcmp.ge.f32.partialorder %v1166, 0.0
  %vm3855 = vcmp.ge.f32.partialorder %v1167, 0.0
  %vm3856 = vcmp.ge.f32.partialorder %v1168, 0.0
  %vm3857 = vcmp.ge.f32.partialorder %v1169, 0.0
  %vm3858 = vcmp.ge.f32.partialorder %v1170, 0.0
  %vm3859 = vcmp.ge.f32.partialorder %v1171, 0.0
  %vm3860 = vcmp.ge.f32.partialorder %v1172, 0.0
  %vm3861 = vcmp.ge.f32.partialorder %v1173, 0.0
  %vm3862 = vcmp.ge.f32.partialorder %v1174, 0.0
  %vm3863 = vcmp.ge.f32.partialorder %v1175, 0.0
  %vm3864 = vcmp.ge.f32.partialorder %v1176, 0.0
  %vm3865 = vcmp.ge.f32.partialorder %v1177, 0.0
  %vm3866 = vcmp.ge.f32.partialorder %v1178, 0.0
  %vm3867 = vcmp.ge.f32.partialorder %v1179, 0.0
  %vm3868 = vcmp.ge.f32.partialorder %v1180, 0.0
  %vm3869 = vcmp.ge.f32.partialorder %v1181, 0.0
  %vm3870 = vcmp.ge.f32.partialorder %v1182, 0.0
  %vm3871 = vcmp.ge.f32.partialorder %v1183, 0.0
  %vm3872 = vcmp.ge.f32.partialorder %v1184, 0.0
  %vm3873 = vcmp.ge.f32.partialorder %v1185, 0.0
  %vm3874 = vcmp.ge.f32.partialorder %v1186, 0.0
  %vm3875 = vcmp.ge.f32.partialorder %v1187, 0.0
  %vm3876 = vcmp.ge.f32.partialorder %v1188, 0.0
  %vm3877 = vcmp.ge.f32.partialorder %v1189, 0.0
  %vm3878 = vcmp.ge.f32.partialorder %v1190, 0.0
  %vm3879 = vcmp.ge.f32.partialorder %v1191, 0.0
  %vm3880 = vcmp.ge.f32.partialorder %v1192, 0.0
  %vm3881 = vcmp.ge.f32.partialorder %v1193, 0.0
  %vm3882 = vcmp.ge.f32.partialorder %v1194, 0.0
  %vm3883 = vcmp.ge.f32.partialorder %v1195, 0.0
  %vm3884 = vcmp.ge.f32.partialorder %v1196, 0.0
  %vm3885 = vcmp.ge.f32.partialorder %v1197, 0.0
  %vm3886 = vcmp.ge.f32.partialorder %v1198, 0.0
  %vm3887 = vcmp.ge.f32.partialorder %v1199, 0.0
  %vm3888 = vcmp.ge.f32.partialorder %v1200, 0.0
  %vm3889 = vcmp.ge.f32.partialorder %v1201, 0.0
  %vm3890 = vcmp.ge.f32.partialorder %v1202, 0.0
  %vm3891 = vcmp.ge.f32.partialorder %v1203, 0.0
  %vm3892 = vcmp.ge.f32.partialorder %v1204, 0.0
  %vm3893 = vcmp.ge.f32.partialorder %v1205, 0.0
  %vm3894 = vcmp.ge.f32.partialorder %v1206, 0.0
  %vm3895 = vcmp.ge.f32.partialorder %v1207, 0.0
  %vm3896 = vcmp.ge.f32.partialorder %v1208, 0.0
  %vm3897 = vcmp.ge.f32.partialorder %v1209, 0.0
  %vm3898 = vcmp.ge.f32.partialorder %v1210, 0.0
  %vm3899 = vcmp.ge.f32.partialorder %v1211, 0.0
  %vm3900 = vcmp.ge.f32.partialorder %v1212, 0.0
  %vm3901 = vcmp.ge.f32.partialorder %v1213, 0.0
  %vm3902 = vcmp.ge.f32.partialorder %v1214, 0.0
  %vm3903 = vcmp.ge.f32.partialorder %v1215, 0.0
  %vm3904 = vcmp.ge.f32.partialorder %v1216, 0.0
  %vm3905 = vcmp.ge.f32.partialorder %v1217, 0.0
  %vm3906 = vcmp.ge.f32.partialorder %v1218, 0.0
  %vm3907 = vcmp.ge.f32.partialorder %v1219, 0.0
  %vm3908 = vcmp.ge.f32.partialorder %v1220, 0.0
  %vm3909 = vcmp.ge.f32.partialorder %v1221, 0.0
  %vm3910 = vcmp.ge.f32.partialorder %v1222, 0.0
  %vm3911 = vcmp.ge.f32.partialorder %v1223, 0.0
  %vm3912 = vcmp.ge.f32.partialorder %v1224, 0.0
  %vm3913 = vcmp.ge.f32.partialorder %v1225, 0.0
  %vm3914 = vcmp.ge.f32.partialorder %v1226, 0.0
  %vm3915 = vcmp.ge.f32.partialorder %v1227, 0.0
  %vm3916 = vcmp.ge.f32.partialorder %v1228, 0.0
  %vm3917 = vcmp.ge.f32.partialorder %v1229, 0.0
  %v3918 = vsub.f32 0.0, %v3662
  %v3919 = vsub.f32 0.0, %v3663
  %v3920 = vsub.f32 0.0, %v3664
  %v3921 = vsub.f32 0.0, %v3665
  %v3922 = vsub.f32 0.0, %v3666
  %v3923 = vsub.f32 0.0, %v3667
  %v3924 = vsub.f32 0.0, %v3668
  %v3925 = vsub.f32 0.0, %v3669
  %v3926 = vsub.f32 0.0, %v3670
  %v3927 = vsub.f32 0.0, %v3671
  %v3928 = vsub.f32 0.0, %v3672
  %v3929 = vsub.f32 0.0, %v3673
  %v3930 = vsub.f32 0.0, %v3674
  %v3931 = vsub.f32 0.0, %v3675
  %v3932 = vsub.f32 0.0, %v3676
  %v3933 = vsub.f32 0.0, %v3677
  %v3934 = vsub.f32 0.0, %v3678
  %v3935 = vsub.f32 0.0, %v3679
  %v3936 = vsub.f32 0.0, %v3680
  %v3937 = vsub.f32 0.0, %v3681
  %v3938 = vsub.f32 0.0, %v3682
  %v3939 = vsub.f32 0.0, %v3683
  %v3940 = vsub.f32 0.0, %v3684
  %v3941 = vsub.f32 0.0, %v3685
  %v3942 = vsub.f32 0.0, %v3686
  %v3943 = vsub.f32 0.0, %v3687
  %v3944 = vsub.f32 0.0, %v3688
  %v3945 = vsub.f32 0.0, %v3689
  %v3946 = vsub.f32 0.0, %v3690
  %v3947 = vsub.f32 0.0, %v3691
  %v3948 = vsub.f32 0.0, %v3692
  %v3949 = vsub.f32 0.0, %v3693
  %v3950 = vsub.f32 0.0, %v3694
  %v3951 = vsub.f32 0.0, %v3695
  %v3952 = vsub.f32 0.0, %v3696
  %v3953 = vsub.f32 0.0, %v3697
  %v3954 = vsub.f32 0.0, %v3698
  %v3955 = vsub.f32 0.0, %v3699
  %v3956 = vsub.f32 0.0, %v3700
  %v3957 = vsub.f32 0.0, %v3701
  %v3958 = vsub.f32 0.0, %v3702
  %v3959 = vsub.f32 0.0, %v3703
  %v3960 = vsub.f32 0.0, %v3704
  %v3961 = vsub.f32 0.0, %v3705
  %v3962 = vsub.f32 0.0, %v3706
  %v3963 = vsub.f32 0.0, %v3707
  %v3964 = vsub.f32 0.0, %v3708
  %v3965 = vsub.f32 0.0, %v3709
  %v3966 = vsub.f32 0.0, %v3710
  %v3967 = vsub.f32 0.0, %v3711
  %v3968 = vsub.f32 0.0, %v3712
  %v3969 = vsub.f32 0.0, %v3713
  %v3970 = vsub.f32 0.0, %v3714
  %v3971 = vsub.f32 0.0, %v3715
  %v3972 = vsub.f32 0.0, %v3716
  %v3973 = vsub.f32 0.0, %v3717
  %v3974 = vsub.f32 0.0, %v3718
  %v3975 = vsub.f32 0.0, %v3719
  %v3976 = vsub.f32 0.0, %v3720
  %v3977 = vsub.f32 0.0, %v3721
  %v3978 = vsub.f32 0.0, %v3722
  %v3979 = vsub.f32 0.0, %v3723
  %v3980 = vsub.f32 0.0, %v3724
  %v3981 = vsub.f32 0.0, %v3725
  %v3982 = vsub.f32 0.0, %v3726
  %v3983 = vsub.f32 0.0, %v3727
  %v3984 = vsub.f32 0.0, %v3728
  %v3985 = vsub.f32 0.0, %v3729
  %v3986 = vsub.f32 0.0, %v3730
  %v3987 = vsub.f32 0.0, %v3731
  %v3988 = vsub.f32 0.0, %v3732
  %v3989 = vsub.f32 0.0, %v3733
  %v3990 = vsub.f32 0.0, %v3734
  %v3991 = vsub.f32 0.0, %v3735
  %v3992 = vsub.f32 0.0, %v3736
  %v3993 = vsub.f32 0.0, %v3737
  %v3994 = vsub.f32 0.0, %v3738
  %v3995 = vsub.f32 0.0, %v3739
  %v3996 = vsub.f32 0.0, %v3740
  %v3997 = vsub.f32 0.0, %v3741
  %v3998 = vsub.f32 0.0, %v3742
  %v3999 = vsub.f32 0.0, %v3743
  %v4000 = vsub.f32 0.0, %v3744
  %v4001 = vsub.f32 0.0, %v3745
  %v4002 = vsub.f32 0.0, %v3746
  %v4003 = vsub.f32 0.0, %v3747
  %v4004 = vsub.f32 0.0, %v3748
  %v4005 = vsub.f32 0.0, %v3749
  %v4006 = vsub.f32 0.0, %v3750
  %v4007 = vsub.f32 0.0, %v3751
  %v4008 = vsub.f32 0.0, %v3752
  %v4009 = vsub.f32 0.0, %v3753
  %v4010 = vsub.f32 0.0, %v3754
  %v4011 = vsub.f32 0.0, %v3755
  %v4012 = vsub.f32 0.0, %v3756
  %v4013 = vsub.f32 0.0, %v3757
  %v4014 = vsub.f32 0.0, %v3758
  %v4015 = vsub.f32 0.0, %v3759
  %v4016 = vsub.f32 0.0, %v3760
  %v4017 = vsub.f32 0.0, %v3761
  %v4018 = vsub.f32 0.0, %v3762
  %v4019 = vsub.f32 0.0, %v3763
  %v4020 = vsub.f32 0.0, %v3764
  %v4021 = vsub.f32 0.0, %v3765
  %v4022 = vsub.f32 0.0, %v3766
  %v4023 = vsub.f32 0.0, %v3767
  %v4024 = vsub.f32 0.0, %v3768
  %v4025 = vsub.f32 0.0, %v3769
  %v4026 = vsub.f32 0.0, %v3770
  %v4027 = vsub.f32 0.0, %v3771
  %v4028 = vsub.f32 0.0, %v3772
  %v4029 = vsub.f32 0.0, %v3773
  %v4030 = vsub.f32 0.0, %v3774
  %v4031 = vsub.f32 0.0, %v3775
  %v4032 = vsub.f32 0.0, %v3776
  %v4033 = vsub.f32 0.0, %v3777
  %v4034 = vsub.f32 0.0, %v3778
  %v4035 = vsub.f32 0.0, %v3779
  %v4036 = vsub.f32 0.0, %v3780
  %v4037 = vsub.f32 0.0, %v3781
  %v4038 = vsub.f32 0.0, %v3782
  %v4039 = vsub.f32 0.0, %v3783
  %v4040 = vsub.f32 0.0, %v3784
  %v4041 = vsub.f32 0.0, %v3785
  %v4042 = vsub.f32 0.0, %v3786
  %v4043 = vsub.f32 0.0, %v3787
  %v4044 = vsub.f32 0.0, %v3788
  %v4045 = vsub.f32 0.0, %v3789
  %v4046 = vsel %vm3790, %v3662, %v3918
  %v4047 = vsel %vm3791, %v3663, %v3919
  %v4048 = vsel %vm3792, %v3664, %v3920
  %v4049 = vsel %vm3793, %v3665, %v3921
  %v4050 = vsel %vm3794, %v3666, %v3922
  %v4051 = vsel %vm3795, %v3667, %v3923
  %v4052 = vsel %vm3796, %v3668, %v3924
  %v4053 = vsel %vm3797, %v3669, %v3925
  %v4054 = vsel %vm3798, %v3670, %v3926
  %v4055 = vsel %vm3799, %v3671, %v3927
  %v4056 = vsel %vm3800, %v3672, %v3928
  %v4057 = vsel %vm3801, %v3673, %v3929
  %v4058 = vsel %vm3802, %v3674, %v3930
  %v4059 = vsel %vm3803, %v3675, %v3931
  %v4060 = vsel %vm3804, %v3676, %v3932
  %v4061 = vsel %vm3805, %v3677, %v3933
  %v4062 = vsel %vm3806, %v3678, %v3934
  %v4063 = vsel %vm3807, %v3679, %v3935
  %v4064 = vsel %vm3808, %v3680, %v3936
  %v4065 = vsel %vm3809, %v3681, %v3937
  %v4066 = vsel %vm3810, %v3682, %v3938
  %v4067 = vsel %vm3811, %v3683, %v3939
  %v4068 = vsel %vm3812, %v3684, %v3940
  %v4069 = vsel %vm3813, %v3685, %v3941
  %v4070 = vsel %vm3814, %v3686, %v3942
  %v4071 = vsel %vm3815, %v3687, %v3943
  %v4072 = vsel %vm3816, %v3688, %v3944
  %v4073 = vsel %vm3817, %v3689, %v3945
  %v4074 = vsel %vm3818, %v3690, %v3946
  %v4075 = vsel %vm3819, %v3691, %v3947
  %v4076 = vsel %vm3820, %v3692, %v3948
  %v4077 = vsel %vm3821, %v3693, %v3949
  %v4078 = vsel %vm3822, %v3694, %v3950
  %v4079 = vsel %vm3823, %v3695, %v3951
  %v4080 = vsel %vm3824, %v3696, %v3952
  %v4081 = vsel %vm3825, %v3697, %v3953
  %v4082 = vsel %vm3826, %v3698, %v3954
  %v4083 = vsel %vm3827, %v3699, %v3955
  %v4084 = vsel %vm3828, %v3700, %v3956
  %v4085 = vsel %vm3829, %v3701, %v3957
  %v4086 = vsel %vm3830, %v3702, %v3958
  %v4087 = vsel %vm3831, %v3703, %v3959
  %v4088 = vsel %vm3832, %v3704, %v3960
  %v4089 = vsel %vm3833, %v3705, %v3961
  %v4090 = vsel %vm3834, %v3706, %v3962
  %v4091 = vsel %vm3835, %v3707, %v3963
  %v4092 = vsel %vm3836, %v3708, %v3964
  %v4093 = vsel %vm3837, %v3709, %v3965
  %v4094 = vsel %vm3838, %v3710, %v3966
  %v4095 = vsel %vm3839, %v3711, %v3967
  %v4096 = vsel %vm3840, %v3712, %v3968
  %v4097 = vsel %vm3841, %v3713, %v3969
  %v4098 = vsel %vm3842, %v3714, %v3970
  %v4099 = vsel %vm3843, %v3715, %v3971
  %v4100 = vsel %vm3844, %v3716, %v3972
  %v4101 = vsel %vm3845, %v3717, %v3973
  %v4102 = vsel %vm3846, %v3718, %v3974
  %v4103 = vsel %vm3847, %v3719, %v3975
  %v4104 = vsel %vm3848, %v3720, %v3976
  %v4105 = vsel %vm3849, %v3721, %v3977
  %v4106 = vsel %vm3850, %v3722, %v3978
  %v4107 = vsel %vm3851, %v3723, %v3979
  %v4108 = vsel %vm3852, %v3724, %v3980
  %v4109 = vsel %vm3853, %v3725, %v3981
  %v4110 = vsel %vm3854, %v3726, %v3982
  %v4111 = vsel %vm3855, %v3727, %v3983
  %v4112 = vsel %vm3856, %v3728, %v3984
  %v4113 = vsel %vm3857, %v3729, %v3985
  %v4114 = vsel %vm3858, %v3730, %v3986
  %v4115 = vsel %vm3859, %v3731, %v3987
  %v4116 = vsel %vm3860, %v3732, %v3988
  %v4117 = vsel %vm3861, %v3733, %v3989
  %v4118 = vsel %vm3862, %v3734, %v3990
  %v4119 = vsel %vm3863, %v3735, %v3991
  %v4120 = vsel %vm3864, %v3736, %v3992
  %v4121 = vsel %vm3865, %v3737, %v3993
  %v4122 = vsel %vm3866, %v3738, %v3994
  %v4123 = vsel %vm3867, %v3739, %v3995
  %v4124 = vsel %vm3868, %v3740, %v3996
  %v4125 = vsel %vm3869, %v3741, %v3997
  %v4126 = vsel %vm3870, %v3742, %v3998
  %v4127 = vsel %vm3871, %v3743, %v3999
  %v4128 = vsel %vm3872, %v3744, %v4000
  %v4129 = vsel %vm3873, %v3745, %v4001
  %v4130 = vsel %vm3874, %v3746, %v4002
  %v4131 = vsel %vm3875, %v3747, %v4003
  %v4132 = vsel %vm3876, %v3748, %v4004
  %v4133 = vsel %vm3877, %v3749, %v4005
  %v4134 = vsel %vm3878, %v3750, %v4006
  %v4135 = vsel %vm3879, %v3751, %v4007
  %v4136 = vsel %vm3880, %v3752, %v4008
  %v4137 = vsel %vm3881, %v3753, %v4009
  %v4138 = vsel %vm3882, %v3754, %v4010
  %v4139 = vsel %vm3883, %v3755, %v4011
  %v4140 = vsel %vm3884, %v3756, %v4012
  %v4141 = vsel %vm3885, %v3757, %v4013
  %v4142 = vsel %vm3886, %v3758, %v4014
  %v4143 = vsel %vm3887, %v3759, %v4015
  %v4144 = vsel %vm3888, %v3760, %v4016
  %v4145 = vsel %vm3889, %v3761, %v4017
  %v4146 = vsel %vm3890, %v3762, %v4018
  %v4147 = vsel %vm3891, %v3763, %v4019
  %v4148 = vsel %vm3892, %v3764, %v4020
  %v4149 = vsel %vm3893, %v3765, %v4021
  %v4150 = vsel %vm3894, %v3766, %v4022
  %v4151 = vsel %vm3895, %v3767, %v4023
  %v4152 = vsel %vm3896, %v3768, %v4024
  %v4153 = vsel %vm3897, %v3769, %v4025
  %v4154 = vsel %vm3898, %v3770, %v4026
  %v4155 = vsel %vm3899, %v3771, %v4027
  %v4156 = vsel %vm3900, %v3772, %v4028
  %v4157 = vsel %vm3901, %v3773, %v4029
  %v4158 = vsel %vm3902, %v3774, %v4030
  %v4159 = vsel %vm3903, %v3775, %v4031
  %v4160 = vsel %vm3904, %v3776, %v4032
  %v4161 = vsel %vm3905, %v3777, %v4033
  %v4162 = vsel %vm3906, %v3778, %v4034
  %v4163 = vsel %vm3907, %v3779, %v4035
  %v4164 = vsel %vm3908, %v3780, %v4036
  %v4165 = vsel %vm3909, %v3781, %v4037
  %v4166 = vsel %vm3910, %v3782, %v4038
  %v4167 = vsel %vm3911, %v3783, %v4039
  %v4168 = vsel %vm3912, %v3784, %v4040
  %v4169 = vsel %vm3913, %v3785, %v4041
  %v4170 = vsel %vm3914, %v3786, %v4042
  %v4171 = vsel %vm3915, %v3787, %v4043
  %v4172 = vsel %vm3916, %v3788, %v4044
  %v4173 = vsel %vm3917, %v3789, %v4045
  %v4174 = vadd.f32 %v4046, 1.0
  %v4175 = vadd.f32 %v4047, 1.0
  %v4176 = vadd.f32 %v4048, 1.0
  %v4177 = vadd.f32 %v4049, 1.0
  %v4178 = vadd.f32 %v4050, 1.0
  %v4179 = vadd.f32 %v4051, 1.0
  %v4180 = vadd.f32 %v4052, 1.0
  %v4181 = vadd.f32 %v4053, 1.0
  %v4182 = vadd.f32 %v4054, 1.0
  %v4183 = vadd.f32 %v4055, 1.0
  %v4184 = vadd.f32 %v4056, 1.0
  %v4185 = vadd.f32 %v4057, 1.0
  %v4186 = vadd.f32 %v4058, 1.0
  %v4187 = vadd.f32 %v4059, 1.0
  %v4188 = vadd.f32 %v4060, 1.0
  %v4189 = vadd.f32 %v4061, 1.0
  %v4190 = vadd.f32 %v4062, 1.0
  %v4191 = vadd.f32 %v4063, 1.0
  %v4192 = vadd.f32 %v4064, 1.0
  %v4193 = vadd.f32 %v4065, 1.0
  %v4194 = vadd.f32 %v4066, 1.0
  %v4195 = vadd.f32 %v4067, 1.0
  %v4196 = vadd.f32 %v4068, 1.0
  %v4197 = vadd.f32 %v4069, 1.0
  %v4198 = vadd.f32 %v4070, 1.0
  %v4199 = vadd.f32 %v4071, 1.0
  %v4200 = vadd.f32 %v4072, 1.0
  %v4201 = vadd.f32 %v4073, 1.0
  %v4202 = vadd.f32 %v4074, 1.0
  %v4203 = vadd.f32 %v4075, 1.0
  %v4204 = vadd.f32 %v4076, 1.0
  %v4205 = vadd.f32 %v4077, 1.0
  %v4206 = vadd.f32 %v4078, 1.0
  %v4207 = vadd.f32 %v4079, 1.0
  %v4208 = vadd.f32 %v4080, 1.0
  %v4209 = vadd.f32 %v4081, 1.0
  %v4210 = vadd.f32 %v4082, 1.0
  %v4211 = vadd.f32 %v4083, 1.0
  %v4212 = vadd.f32 %v4084, 1.0
  %v4213 = vadd.f32 %v4085, 1.0
  %v4214 = vadd.f32 %v4086, 1.0
  %v4215 = vadd.f32 %v4087, 1.0
  %v4216 = vadd.f32 %v4088, 1.0
  %v4217 = vadd.f32 %v4089, 1.0
  %v4218 = vadd.f32 %v4090, 1.0
  %v4219 = vadd.f32 %v4091, 1.0
  %v4220 = vadd.f32 %v4092, 1.0
  %v4221 = vadd.f32 %v4093, 1.0
  %v4222 = vadd.f32 %v4094, 1.0
  %v4223 = vadd.f32 %v4095, 1.0
  %v4224 = vadd.f32 %v4096, 1.0
  %v4225 = vadd.f32 %v4097, 1.0
  %v4226 = vadd.f32 %v4098, 1.0
  %v4227 = vadd.f32 %v4099, 1.0
  %v4228 = vadd.f32 %v4100, 1.0
  %v4229 = vadd.f32 %v4101, 1.0
  %v4230 = vadd.f32 %v4102, 1.0
  %v4231 = vadd.f32 %v4103, 1.0
  %v4232 = vadd.f32 %v4104, 1.0
  %v4233 = vadd.f32 %v4105, 1.0
  %v4234 = vadd.f32 %v4106, 1.0
  %v4235 = vadd.f32 %v4107, 1.0
  %v4236 = vadd.f32 %v4108, 1.0
  %v4237 = vadd.f32 %v4109, 1.0
  %v4238 = vadd.f32 %v4110, 1.0
  %v4239 = vadd.f32 %v4111, 1.0
  %v4240 = vadd.f32 %v4112, 1.0
  %v4241 = vadd.f32 %v4113, 1.0
  %v4242 = vadd.f32 %v4114, 1.0
  %v4243 = vadd.f32 %v4115, 1.0
  %v4244 = vadd.f32 %v4116, 1.0
  %v4245 = vadd.f32 %v4117, 1.0
  %v4246 = vadd.f32 %v4118, 1.0
  %v4247 = vadd.f32 %v4119, 1.0
  %v4248 = vadd.f32 %v4120, 1.0
  %v4249 = vadd.f32 %v4121, 1.0
  %v4250 = vadd.f32 %v4122, 1.0
  %v4251 = vadd.f32 %v4123, 1.0
  %v4252 = vadd.f32 %v4124, 1.0
  %v4253 = vadd.f32 %v4125, 1.0
  %v4254 = vadd.f32 %v4126, 1.0
  %v4255 = vadd.f32 %v4127, 1.0
  %v4256 = vadd.f32 %v4128, 1.0
  %v4257 = vadd.f32 %v4129, 1.0
  %v4258 = vadd.f32 %v4130, 1.0
  %v4259 = vadd.f32 %v4131, 1.0
  %v4260 = vadd.f32 %v4132, 1.0
  %v4261 = vadd.f32 %v4133, 1.0
  %v4262 = vadd.f32 %v4134, 1.0
  %v4263 = vadd.f32 %v4135, 1.0
  %v4264 = vadd.f32 %v4136, 1.0
  %v4265 = vadd.f32 %v4137, 1.0
  %v4266 = vadd.f32 %v4138, 1.0
  %v4267 = vadd.f32 %v4139, 1.0
  %v4268 = vadd.f32 %v4140, 1.0
  %v4269 = vadd.f32 %v4141, 1.0
  %v4270 = vadd.f32 %v4142, 1.0
  %v4271 = vadd.f32 %v4143, 1.0
  %v4272 = vadd.f32 %v4144, 1.0
  %v4273 = vadd.f32 %v4145, 1.0
  %v4274 = vadd.f32 %v4146, 1.0
  %v4275 = vadd.f32 %v4147, 1.0
  %v4276 = vadd.f32 %v4148, 1.0
  %v4277 = vadd.f32 %v4149, 1.0
  %v4278 = vadd.f32 %v4150, 1.0
  %v4279 = vadd.f32 %v4151, 1.0
  %v4280 = vadd.f32 %v4152, 1.0
  %v4281 = vadd.f32 %v4153, 1.0
  %v4282 = vadd.f32 %v4154, 1.0
  %v4283 = vadd.f32 %v4155, 1.0
  %v4284 = vadd.f32 %v4156, 1.0
  %v4285 = vadd.f32 %v4157, 1.0
  %v4286 = vadd.f32 %v4158, 1.0
  %v4287 = vadd.f32 %v4159, 1.0
  %v4288 = vadd.f32 %v4160, 1.0
  %v4289 = vadd.f32 %v4161, 1.0
  %v4290 = vadd.f32 %v4162, 1.0
  %v4291 = vadd.f32 %v4163, 1.0
  %v4292 = vadd.f32 %v4164, 1.0
  %v4293 = vadd.f32 %v4165, 1.0
  %v4294 = vadd.f32 %v4166, 1.0
  %v4295 = vadd.f32 %v4167, 1.0
  %v4296 = vadd.f32 %v4168, 1.0
  %v4297 = vadd.f32 %v4169, 1.0
  %v4298 = vadd.f32 %v4170, 1.0
  %v4299 = vadd.f32 %v4171, 1.0
  %v4300 = vadd.f32 %v4172, 1.0
  %v4301 = vadd.f32 %v4173, 1.0
  %v4302 = vmul.f32 %v974, %v4174
  %v4303 = vmul.f32 %v975, %v4175
  %v4304 = vmul.f32 %v976, %v4176
  %v4305 = vmul.f32 %v977, %v4177
  %v4306 = vmul.f32 %v978, %v4178
  %v4307 = vmul.f32 %v979, %v4179
  %v4308 = vmul.f32 %v980, %v4180
  %v4309 = vmul.f32 %v981, %v4181
  %v4310 = vmul.f32 %v982, %v4182
  %v4311 = vmul.f32 %v983, %v4183
  %v4312 = vmul.f32 %v984, %v4184
  %v4313 = vmul.f32 %v985, %v4185
  %v4314 = vmul.f32 %v986, %v4186
  %v4315 = vmul.f32 %v987, %v4187
  %v4316 = vmul.f32 %v988, %v4188
  %v4317 = vmul.f32 %v989, %v4189
  %v4318 = vmul.f32 %v990, %v4190
  %v4319 = vmul.f32 %v991, %v4191
  %v4320 = vmul.f32 %v992, %v4192
  %v4321 = vmul.f32 %v993, %v4193
  %v4322 = vmul.f32 %v994, %v4194
  %v4323 = vmul.f32 %v995, %v4195
  %v4324 = vmul.f32 %v996, %v4196
  %v4325 = vmul.f32 %v997, %v4197
  %v4326 = vmul.f32 %v998, %v4198
  %v4327 = vmul.f32 %v999, %v4199
  %v4328 = vmul.f32 %v1000, %v4200
  %v4329 = vmul.f32 %v1001, %v4201
  %v4330 = vmul.f32 %v1002, %v4202
  %v4331 = vmul.f32 %v1003, %v4203
  %v4332 = vmul.f32 %v1004, %v4204
  %v4333 = vmul.f32 %v1005, %v4205
  %v4334 = vmul.f32 %v1006, %v4206
  %v4335 = vmul.f32 %v1007, %v4207
  %v4336 = vmul.f32 %v1008, %v4208
  %v4337 = vmul.f32 %v1009, %v4209
  %v4338 = vmul.f32 %v1010, %v4210
  %v4339 = vmul.f32 %v1011, %v4211
  %v4340 = vmul.f32 %v1012, %v4212
  %v4341 = vmul.f32 %v1013, %v4213
  %v4342 = vmul.f32 %v1014, %v4214
  %v4343 = vmul.f32 %v1015, %v4215
  %v4344 = vmul.f32 %v1016, %v4216
  %v4345 = vmul.f32 %v1017, %v4217
  %v4346 = vmul.f32 %v1018, %v4218
  %v4347 = vmul.f32 %v1019, %v4219
  %v4348 = vmul.f32 %v1020, %v4220
  %v4349 = vmul.f32 %v1021, %v4221
  %v4350 = vmul.f32 %v1022, %v4222
  %v4351 = vmul.f32 %v1023, %v4223
  %v4352 = vmul.f32 %v1024, %v4224
  %v4353 = vmul.f32 %v1025, %v4225
  %v4354 = vmul.f32 %v1026, %v4226
  %v4355 = vmul.f32 %v1027, %v4227
  %v4356 = vmul.f32 %v1028, %v4228
  %v4357 = vmul.f32 %v1029, %v4229
  %v4358 = vmul.f32 %v1030, %v4230
  %v4359 = vmul.f32 %v1031, %v4231
  %v4360 = vmul.f32 %v1032, %v4232
  %v4361 = vmul.f32 %v1033, %v4233
  %v4362 = vmul.f32 %v1034, %v4234
  %v4363 = vmul.f32 %v1035, %v4235
  %v4364 = vmul.f32 %v1036, %v4236
  %v4365 = vmul.f32 %v1037, %v4237
  %v4366 = vmul.f32 %v1038, %v4238
  %v4367 = vmul.f32 %v1039, %v4239
  %v4368 = vmul.f32 %v1040, %v4240
  %v4369 = vmul.f32 %v1041, %v4241
  %v4370 = vmul.f32 %v1042, %v4242
  %v4371 = vmul.f32 %v1043, %v4243
  %v4372 = vmul.f32 %v1044, %v4244
  %v4373 = vmul.f32 %v1045, %v4245
  %v4374 = vmul.f32 %v1046, %v4246
  %v4375 = vmul.f32 %v1047, %v4247
  %v4376 = vmul.f32 %v1048, %v4248
  %v4377 = vmul.f32 %v1049, %v4249
  %v4378 = vmul.f32 %v1050, %v4250
  %v4379 = vmul.f32 %v1051, %v4251
  %v4380 = vmul.f32 %v1052, %v4252
  %v4381 = vmul.f32 %v1053, %v4253
  %v4382 = vmul.f32 %v1054, %v4254
  %v4383 = vmul.f32 %v1055, %v4255
  %v4384 = vmul.f32 %v1056, %v4256
  %v4385 = vmul.f32 %v1057, %v4257
  %v4386 = vmul.f32 %v1058, %v4258
  %v4387 = vmul.f32 %v1059, %v4259
  %v4388 = vmul.f32 %v1060, %v4260
  %v4389 = vmul.f32 %v1061, %v4261
  %v4390 = vmul.f32 %v1062, %v4262
  %v4391 = vmul.f32 %v1063, %v4263
  %v4392 = vmul.f32 %v1064, %v4264
  %v4393 = vmul.f32 %v1065, %v4265
  %v4394 = vmul.f32 %v1066, %v4266
  %v4395 = vmul.f32 %v1067, %v4267
  %v4396 = vmul.f32 %v1068, %v4268
  %v4397 = vmul.f32 %v1069, %v4269
  %v4398 = vmul.f32 %v1070, %v4270
  %v4399 = vmul.f32 %v1071, %v4271
  %v4400 = vmul.f32 %v1072, %v4272
  %v4401 = vmul.f32 %v1073, %v4273
  %v4402 = vmul.f32 %v1074, %v4274
  %v4403 = vmul.f32 %v1075, %v4275
  %v4404 = vmul.f32 %v1076, %v4276
  %v4405 = vmul.f32 %v1077, %v4277
  %v4406 = vmul.f32 %v1078, %v4278
  %v4407 = vmul.f32 %v1079, %v4279
  %v4408 = vmul.f32 %v1080, %v4280
  %v4409 = vmul.f32 %v1081, %v4281
  %v4410 = vmul.f32 %v1082, %v4282
  %v4411 = vmul.f32 %v1083, %v4283
  %v4412 = vmul.f32 %v1084, %v4284
  %v4413 = vmul.f32 %v1085, %v4285
  %v4414 = vmul.f32 %v1086, %v4286
  %v4415 = vmul.f32 %v1087, %v4287
  %v4416 = vmul.f32 %v1088, %v4288
  %v4417 = vmul.f32 %v1089, %v4289
  %v4418 = vmul.f32 %v1090, %v4290
  %v4419 = vmul.f32 %v1091, %v4291
  %v4420 = vmul.f32 %v1092, %v4292
  %v4421 = vmul.f32 %v1093, %v4293
  %v4422 = vmul.f32 %v1094, %v4294
  %v4423 = vmul.f32 %v1095, %v4295
  %v4424 = vmul.f32 %v1096, %v4296
  %v4425 = vmul.f32 %v1097, %v4297
  %v4426 = vmul.f32 %v1098, %v4298
  %v4427 = vmul.f32 %v1099, %v4299
  %v4428 = vmul.f32 %v1100, %v4300
  %v4429 = vmul.f32 %v1101, %v4301
  %vm4430 = vcmask 64512
  %4431 = vst.msk [vmem:[%s3] sm:$0xff] %vm4430, %v4302
  %4432 = vst.msk [vmem:[%s3 + $0x8] sm:$0xff] %vm4430, %v4303
  %4433 = vst.msk [vmem:[%s3 + $0x10] sm:$0xff] %vm4430, %v4304
  %4434 = vst.msk [vmem:[%s3 + $0x18] sm:$0xff] %vm4430, %v4305
  %4435 = vst.msk [vmem:[%s3 + $0x20] sm:$0xff] %vm4430, %v4306
  %4436 = vst.msk [vmem:[%s3 + $0x28] sm:$0xff] %vm4430, %v4307
  %4437 = vst.msk [vmem:[%s3 + $0x30] sm:$0xff] %vm4430, %v4308
  %4438 = vst.msk [vmem:[%s3 + $0x38] sm:$0xff] %vm4430, %v4309
  %4439 = vst.msk [vmem:[%s3 + $0x40] sm:$0xff] %vm4430, %v4310
  %4440 = vst.msk [vmem:[%s3 + $0x48] sm:$0xff] %vm4430, %v4311
  %4441 = vst.msk [vmem:[%s3 + $0x50] sm:$0xff] %vm4430, %v4312
  %4442 = vst.msk [vmem:[%s3 + $0x58] sm:$0xff] %vm4430, %v4313
  %4443 = vst.msk [vmem:[%s3 + $0x60] sm:$0xff] %vm4430, %v4314
  %4444 = vst.msk [vmem:[%s3 + $0x68] sm:$0xff] %vm4430, %v4315
  %4445 = vst.msk [vmem:[%s3 + $0x70] sm:$0xff] %vm4430, %v4316
  %4446 = vst.msk [vmem:[%s3 + $0x78] sm:$0xff] %vm4430, %v4317
  %4447 = vst.msk [vmem:[%s3 + $0x80] sm:$0xff] %vm4430, %v4318
  %4448 = vst.msk [vmem:[%s3 + $0x88] sm:$0xff] %vm4430, %v4319
  %4449 = vst.msk [vmem:[%s3 + $0x90] sm:$0xff] %vm4430, %v4320
  %4450 = vst.msk [vmem:[%s3 + $0x98] sm:$0xff] %vm4430, %v4321
  %4451 = vst.msk [vmem:[%s3 + $0xa0] sm:$0xff] %vm4430, %v4322
  %4452 = vst.msk [vmem:[%s3 + $0xa8] sm:$0xff] %vm4430, %v4323
  %4453 = vst.msk [vmem:[%s3 + $0xb0] sm:$0xff] %vm4430, %v4324
  %4454 = vst.msk [vmem:[%s3 + $0xb8] sm:$0xff] %vm4430, %v4325
  %4455 = vst.msk [vmem:[%s3 + $0xc0] sm:$0xff] %vm4430, %v4326
  %4456 = vst.msk [vmem:[%s3 + $0xc8] sm:$0xff] %vm4430, %v4327
  %4457 = vst.msk [vmem:[%s3 + $0xd0] sm:$0xff] %vm4430, %v4328
  %4458 = vst.msk [vmem:[%s3 + $0xd8] sm:$0xff] %vm4430, %v4329
  %4459 = vst.msk [vmem:[%s3 + $0xe0] sm:$0xff] %vm4430, %v4330
  %4460 = vst.msk [vmem:[%s3 + $0xe8] sm:$0xff] %vm4430, %v4331
  %4461 = vst.msk [vmem:[%s3 + $0xf0] sm:$0xff] %vm4430, %v4332
  %4462 = vst.msk [vmem:[%s3 + $0xf8] sm:$0xff] %vm4430, %v4333
  %4463 = vst.msk [vmem:[%s3 + $0x100] sm:$0xff] %vm4430, %v4334
  %4464 = vst.msk [vmem:[%s3 + $0x108] sm:$0xff] %vm4430, %v4335
  %4465 = vst.msk [vmem:[%s3 + $0x110] sm:$0xff] %vm4430, %v4336
  %4466 = vst.msk [vmem:[%s3 + $0x118] sm:$0xff] %vm4430, %v4337
  %4467 = vst.msk [vmem:[%s3 + $0x120] sm:$0xff] %vm4430, %v4338
  %4468 = vst.msk [vmem:[%s3 + $0x128] sm:$0xff] %vm4430, %v4339
  %4469 = vst.msk [vmem:[%s3 + $0x130] sm:$0xff] %vm4430, %v4340
  %4470 = vst.msk [vmem:[%s3 + $0x138] sm:$0xff] %vm4430, %v4341
  %4471 = vst.msk [vmem:[%s3 + $0x140] sm:$0xff] %vm4430, %v4342
  %4472 = vst.msk [vmem:[%s3 + $0x148] sm:$0xff] %vm4430, %v4343
  %4473 = vst.msk [vmem:[%s3 + $0x150] sm:$0xff] %vm4430, %v4344
  %4474 = vst.msk [vmem:[%s3 + $0x158] sm:$0xff] %vm4430, %v4345
  %4475 = vst.msk [vmem:[%s3 + $0x160] sm:$0xff] %vm4430, %v4346
  %4476 = vst.msk [vmem:[%s3 + $0x168] sm:$0xff] %vm4430, %v4347
  %4477 = vst.msk [vmem:[%s3 + $0x170] sm:$0xff] %vm4430, %v4348
  %4478 = vst.msk [vmem:[%s3 + $0x178] sm:$0xff] %vm4430, %v4349
  %4479 = vst.msk [vmem:[%s3 + $0x180] sm:$0xff] %vm4430, %v4350
  %4480 = vst.msk [vmem:[%s3 + $0x188] sm:$0xff] %vm4430, %v4351
  %4481 = vst.msk [vmem:[%s3 + $0x190] sm:$0xff] %vm4430, %v4352
  %4482 = vst.msk [vmem:[%s3 + $0x198] sm:$0xff] %vm4430, %v4353
  %4483 = vst.msk [vmem:[%s3 + $0x1a0] sm:$0xff] %vm4430, %v4354
  %4484 = vst.msk [vmem:[%s3 + $0x1a8] sm:$0xff] %vm4430, %v4355
  %4485 = vst.msk [vmem:[%s3 + $0x1b0] sm:$0xff] %vm4430, %v4356
  %4486 = vst.msk [vmem:[%s3 + $0x1b8] sm:$0xff] %vm4430, %v4357
  %4487 = vst.msk [vmem:[%s3 + $0x1c0] sm:$0xff] %vm4430, %v4358
  %4488 = vst.msk [vmem:[%s3 + $0x1c8] sm:$0xff] %vm4430, %v4359
  %4489 = vst.msk [vmem:[%s3 + $0x1d0] sm:$0xff] %vm4430, %v4360
  %4490 = vst.msk [vmem:[%s3 + $0x1d8] sm:$0xff] %vm4430, %v4361
  %4491 = vst.msk [vmem:[%s3 + $0x1e0] sm:$0xff] %vm4430, %v4362
  %4492 = vst.msk [vmem:[%s3 + $0x1e8] sm:$0xff] %vm4430, %v4363
  %4493 = vst.msk [vmem:[%s3 + $0x1f0] sm:$0xff] %vm4430, %v4364
  %4494 = vst.msk [vmem:[%s3 + $0x1f8] sm:$0xff] %vm4430, %v4365
  %4495 = vst.msk [vmem:[%s3 + $0x200] sm:$0xff] %vm4430, %v4366
  %4496 = vst.msk [vmem:[%s3 + $0x208] sm:$0xff] %vm4430, %v4367
  %4497 = vst.msk [vmem:[%s3 + $0x210] sm:$0xff] %vm4430, %v4368
  %4498 = vst.msk [vmem:[%s3 + $0x218] sm:$0xff] %vm4430, %v4369
  %4499 = vst.msk [vmem:[%s3 + $0x220] sm:$0xff] %vm4430, %v4370
  %4500 = vst.msk [vmem:[%s3 + $0x228] sm:$0xff] %vm4430, %v4371
  %4501 = vst.msk [vmem:[%s3 + $0x230] sm:$0xff] %vm4430, %v4372
  %4502 = vst.msk [vmem:[%s3 + $0x238] sm:$0xff] %vm4430, %v4373
  %4503 = vst.msk [vmem:[%s3 + $0x240] sm:$0xff] %vm4430, %v4374
  %4504 = vst.msk [vmem:[%s3 + $0x248] sm:$0xff] %vm4430, %v4375
  %4505 = vst.msk [vmem:[%s3 + $0x250] sm:$0xff] %vm4430, %v4376
  %4506 = vst.msk [vmem:[%s3 + $0x258] sm:$0xff] %vm4430, %v4377
  %4507 = vst.msk [vmem:[%s3 + $0x260] sm:$0xff] %vm4430, %v4378
  %4508 = vst.msk [vmem:[%s3 + $0x268] sm:$0xff] %vm4430, %v4379
  %4509 = vst.msk [vmem:[%s3 + $0x270] sm:$0xff] %vm4430, %v4380
  %4510 = vst.msk [vmem:[%s3 + $0x278] sm:$0xff] %vm4430, %v4381
  %4511 = vst.msk [vmem:[%s3 + $0x280] sm:$0xff] %vm4430, %v4382
  %4512 = vst.msk [vmem:[%s3 + $0x288] sm:$0xff] %vm4430, %v4383
  %4513 = vst.msk [vmem:[%s3 + $0x290] sm:$0xff] %vm4430, %v4384
  %4514 = vst.msk [vmem:[%s3 + $0x298] sm:$0xff] %vm4430, %v4385
  %4515 = vst.msk [vmem:[%s3 + $0x2a0] sm:$0xff] %vm4430, %v4386
  %4516 = vst.msk [vmem:[%s3 + $0x2a8] sm:$0xff] %vm4430, %v4387
  %4517 = vst.msk [vmem:[%s3 + $0x2b0] sm:$0xff] %vm4430, %v4388
  %4518 = vst.msk [vmem:[%s3 + $0x2b8] sm:$0xff] %vm4430, %v4389
  %4519 = vst.msk [vmem:[%s3 + $0x2c0] sm:$0xff] %vm4430, %v4390
  %4520 = vst.msk [vmem:[%s3 + $0x2c8] sm:$0xff] %vm4430, %v4391
  %4521 = vst.msk [vmem:[%s3 + $0x2d0] sm:$0xff] %vm4430, %v4392
  %4522 = vst.msk [vmem:[%s3 + $0x2d8] sm:$0xff] %vm4430, %v4393
  %4523 = vst.msk [vmem:[%s3 + $0x2e0] sm:$0xff] %vm4430, %v4394
  %4524 = vst.msk [vmem:[%s3 + $0x2e8] sm:$0xff] %vm4430, %v4395
  %4525 = vst.msk [vmem:[%s3 + $0x2f0] sm:$0xff] %vm4430, %v4396
  %4526 = vst.msk [vmem:[%s3 + $0x2f8] sm:$0xff] %vm4430, %v4397
  %4527 = vst.msk [vmem:[%s3 + $0x300] sm:$0xff] %vm4430, %v4398
  %4528 = vst.msk [vmem:[%s3 + $0x308] sm:$0xff] %vm4430, %v4399
  %4529 = vst.msk [vmem:[%s3 + $0x310] sm:$0xff] %vm4430, %v4400
  %4530 = vst.msk [vmem:[%s3 + $0x318] sm:$0xff] %vm4430, %v4401
  %4531 = vst.msk [vmem:[%s3 + $0x320] sm:$0xff] %vm4430, %v4402
  %4532 = vst.msk [vmem:[%s3 + $0x328] sm:$0xff] %vm4430, %v4403
  %4533 = vst.msk [vmem:[%s3 + $0x330] sm:$0xff] %vm4430, %v4404
  %4534 = vst.msk [vmem:[%s3 + $0x338] sm:$0xff] %vm4430, %v4405
  %4535 = vst.msk [vmem:[%s3 + $0x340] sm:$0xff] %vm4430, %v4406
  %4536 = vst.msk [vmem:[%s3 + $0x348] sm:$0xff] %vm4430, %v4407
  %4537 = vst.msk [vmem:[%s3 + $0x350] sm:$0xff] %vm4430, %v4408
  %4538 = vst.msk [vmem:[%s3 + $0x358] sm:$0xff] %vm4430, %v4409
  %4539 = vst.msk [vmem:[%s3 + $0x360] sm:$0xff] %vm4430, %v4410
  %4540 = vst.msk [vmem:[%s3 + $0x368] sm:$0xff] %vm4430, %v4411
  %4541 = vst.msk [vmem:[%s3 + $0x370] sm:$0xff] %vm4430, %v4412
  %4542 = vst.msk [vmem:[%s3 + $0x378] sm:$0xff] %vm4430, %v4413
  %4543 = vst.msk [vmem:[%s3 + $0x380] sm:$0xff] %vm4430, %v4414
  %4544 = vst.msk [vmem:[%s3 + $0x388] sm:$0xff] %vm4430, %v4415
  %4545 = vst.msk [vmem:[%s3 + $0x390] sm:$0xff] %vm4430, %v4416
  %4546 = vst.msk [vmem:[%s3 + $0x398] sm:$0xff] %vm4430, %v4417
  %4547 = vst.msk [vmem:[%s3 + $0x3a0] sm:$0xff] %vm4430, %v4418
  %4548 = vst.msk [vmem:[%s3 + $0x3a8] sm:$0xff] %vm4430, %v4419
  %4549 = vst.msk [vmem:[%s3 + $0x3b0] sm:$0xff] %vm4430, %v4420
  %4550 = vst.msk [vmem:[%s3 + $0x3b8] sm:$0xff] %vm4430, %v4421
  %4551 = vst.msk [vmem:[%s3 + $0x3c0] sm:$0xff] %vm4430, %v4422
  %4552 = vst.msk [vmem:[%s3 + $0x3c8] sm:$0xff] %vm4430, %v4423
  %4553 = vst.msk [vmem:[%s3 + $0x3d0] sm:$0xff] %vm4430, %v4424
  %4554 = vst.msk [vmem:[%s3 + $0x3d8] sm:$0xff] %vm4430, %v4425
  %4555 = vst.msk [vmem:[%s3 + $0x3e0] sm:$0xff] %vm4430, %v4426
  %4556 = vst.msk [vmem:[%s3 + $0x3e8] sm:$0xff] %vm4430, %v4427
  %4557 = vst.msk [vmem:[%s3 + $0x3f0] sm:$0xff] %vm4430, %v4428
  %4558 = vst.msk [vmem:[%s3 + $0x3f8] sm:$0xff] %vm4430, %v4429
  // Predicated region
  $region14: #{forward.8} parent=0 // pred_check
    _
  $region15: #{forward.8} parent=0 // pred_check_branch
    %4560 = sbr.rel (0) target = $region17
  $region16: #{forward.8} parent=0 // pred_region
    _
  $region17: #{forward.8} parent=0 // pred_fallthru
    _
  // Predicated region
  $region18: #{forward.8} parent=0 // pred_check
    _
  $region19: #{forward.8} parent=0 // pred_check_branch
    %4562 = sbr.rel (0) target = $region21
  $region20: #{forward.8} parent=0 // pred_region
    _
  $region21: #{forward.8} parent=0 // pred_fallthru
    _

// kernel: forward.10
$region0: #{forward.10}
  #allocation0 [shape = 'u32[]', space=smem, size = 0x4, offset = 0x4, fixed_abs, tag = 'smem constant byte address 0x4 - core index']
  #allocation1 [shape = 'u32[144,128]{1,0:T(1,128)}', space=vmem, size = 0x12000, scoped, tag = 'internal scratch']
  #allocation2 [shape = 'f32[128,16]{1,0:T(8,128)}', space=vmem, size = 0x10000, scoped, tag = 'scratch operand']
  %s0 = inlined_call_operand.vmem [shape: f32[256,16], index: 0, kind: input, shape index: {}]
  %s1 = inlined_call_operand.vmem [shape: f32[1,16], index: 1, kind: input, shape index: {}]
  %s2 = inlined_call_operand.vmem [shape: f32[1,16], index: 2, kind: input, shape index: {}]
  %s3 = inlined_call_operand.vmem [shape: bf16[16,32], index: 3, kind: input, shape index: {}]
  %s4 = inlined_call_operand.vmem [shape: f32[1,32], index: 4, kind: input, shape index: {}]
  %s5 = inlined_call_operand.vmem [shape: f32[2,128,16], index: 5, kind: input, shape index: {}]
  %s6 = inlined_call_operand.vmem [shape: f32[128,16], index: 6, kind: input, shape index: {}]
  %s7 = inlined_call_operand.vmem [shape: bf16[16,16], index: 7, kind: input, shape index: {}]
  %s8 = inlined_call_operand.vmem [shape: f32[1,16], index: 8, kind: input, shape index: {}]
  %s9 = inlined_call_operand.vmem [shape: f32[1,16], index: 9, kind: input, shape index: {}]
  %s10 = inlined_call_operand.vmem [shape: f32[1,16], index: 10, kind: input, shape index: {}]
  %s11 = inlined_call_operand.vmem [shape: bf16[16,32], index: 11, kind: input, shape index: {}]
  %s12 = inlined_call_operand.vmem [shape: f32[1,32], index: 12, kind: input, shape index: {}]
  %s13 = inlined_call_operand.vmem [shape: bf16[2,128,128], index: 13, kind: input, shape index: {}]
  %s14 = inlined_call_operand.vmem [shape: f32[128,16], index: 14, kind: input, shape index: {}]
  %s15 = inlined_call_operand.vmem [shape: bf16[16,16], index: 15, kind: input, shape index: {}]
  %s16 = inlined_call_operand.vmem [shape: f32[1,16], index: 16, kind: input, shape index: {}]
  %s17 = inlined_call_operand.vmem [shape: f32[256,16], index: 17, kind: output, shape index: {}]
  %s18 = sld [smem:[#allocation0]]
  $region101: #{forward.10} parent=0
    _
  %s20 = ssub.s32 1, %s18
  %s21 = scalar_select 0, %s20, %s18
  loop: start=0, step=1, limit=4
  $region2: #{forward.10} parent=0 // loop_pre_header
    _
  $region3: #{forward.10} parent=0 // loop_header
    %s23 = sphi 0, %s27
    %p24 = scmp.ge.s32.totalorder %s23, 4
    %s33 = sphi 0, %s35
    %s36 = sphi 0, %s33
    %s37 = sphi 0, %s36
    %s53 = sphi 0, %s37
    %s57 = sphi 0, %s57
    %s59 = sphi 0, %s57
    %s60 = sphi 0, %s59
    %s74 = sphi 0, %s60
    %s78 = sphi 0, %s78
    %s80 = sphi 0, %s78
    %s81 = sphi 0, %s80
    %s95 = sphi 0, %s81
    %s99 = sphi 0, %s99
    %s101 = sphi 0, %s99
    %s102 = sphi 0, %s101
    %s116 = sphi 0, %s102
    %s120 = sphi 0, %s120
    %s122 = sphi 0, %s120
    %s123 = sphi 0, %s122
    %s137 = sphi 0, %s123
    %s141 = sphi 0, %s141
    %s143 = sphi 0, %s141
    %s144 = sphi 0, %s143
    %s158 = sphi 0, %s144
    %s162 = sphi 0, %s162
    %s164 = sphi 0, %s162
    %s165 = sphi 0, %s164
    %s179 = sphi 0, %s165
    %s183 = sphi 0, %s183
    %s185 = sphi 0, %s183
    %s186 = sphi 0, %s185
    %s200 = sphi 0, %s186
    %s204 = sphi 0, %s204
    %s206 = sphi 0, %s204
    %s207 = sphi 0, %s206
    %s221 = sphi 0, %s207
    %s225 = sphi 0, %s225
    %s227 = sphi 0, %s225
    %s228 = sphi 0, %s227
    %s242 = sphi 0, %s228
    %s246 = sphi 0, %s246
    %s248 = sphi 0, %s246
    %s249 = sphi 0, %s248
    %s263 = sphi 0, %s249
    %s267 = sphi 0, %s267
    %s269 = sphi 0, %s267
    %s270 = sphi 0, %s269
    %s284 = sphi 0, %s270
    %s288 = sphi 0, %s288
    %s290 = sphi 0, %s288
    %s291 = sphi 0, %s290
    %s305 = sphi 0, %s291
    %s309 = sphi 0, %s309
    %s311 = sphi 0, %s309
    %s312 = sphi 0, %s311
    %s326 = sphi 0, %s312
    %s330 = sphi 0, %s330
    %s332 = sphi 0, %s330
    %s333 = sphi 0, %s332
    %s347 = sphi 0, %s333
    %s351 = sphi 0, %s351
    %s353 = sphi 0, %s351
    %s354 = sphi 0, %s353
    %s368 = sphi 0, %s354
    %s372 = sphi 0, %s372
    %s374 = sphi 0, %s372
    %s375 = sphi 0, %s374
    %s389 = sphi 0, %s375
    %s395 = sphi 0, %s397
    %s398 = sphi 0, %s395
    %s399 = sphi 0, %s398
    %s415 = sphi 0, %s399
  $region4: #{forward.10} parent=0 // loop_header_branch
    %26 = sbr.rel (%p24) target = $region8
  $region5: #{forward.10} parent=0 // loop_body
    %s28 = ssub.s32 %s23, 1
    %s29 = ssub.s32 %s23, 2
    %s30 = sadd.s32 %s23, 1
    %s31 = ssub.s32 %s23, %s30
    %p32 = scmp.eq.s32.totalorder %s31, 0
    %s34 = sadd.s32 %s33, 1
    %s35 = scalar_select %p32, %s33, %s34
    %p38 = pneg %p32
    %p39 = scmp.eq.s32.totalorder %s23, 1
    %p40 = por %p38, %p39
    %p41 = scmp.ne.s32.totalorder %s33, %s36
    %p42 = scmp.eq.s32.totalorder %s23, 0
    %p43 = por %p41, %p42
    %p44 = scmp.ne.s32.totalorder %s33, %s36
    %p45 = scmp.eq.s32.totalorder %s28, 1
    %p46 = por %p44, %p45
    %p47 = scmp.ne.s32.totalorder %s36, %s37
    %p48 = scmp.eq.s32.totalorder %s28, 0
    %p49 = por %p47, %p48
    %p50 = scmp.ne.s32.totalorder %s36, %s37
    %p51 = scmp.eq.s32.totalorder %s29, 1
    %p52 = por %p50, %p51
    %p54 = scmp.ne.s32.totalorder %s37, %s53
    %p55 = scmp.eq.s32.totalorder %s29, 0
    %p56 = por %p54, %p55
    %s58 = sadd.s32 %s57, 1
    %p61 = scmp.eq.s32.totalorder %s23, 1
    %p62 = scmp.ne.s32.totalorder %s57, %s59
    %p63 = scmp.eq.s32.totalorder %s23, 0
    %p64 = por %p62, %p63
    %p65 = scmp.ne.s32.totalorder %s57, %s59
    %p66 = scmp.eq.s32.totalorder %s28, 1
    %p67 = por %p65, %p66
    %p68 = scmp.ne.s32.totalorder %s59, %s60
    %p69 = scmp.eq.s32.totalorder %s28, 0
    %p70 = por %p68, %p69
    %p71 = scmp.ne.s32.totalorder %s59, %s60
    %p72 = scmp.eq.s32.totalorder %s29, 1
    %p73 = por %p71, %p72
    %p75 = scmp.ne.s32.totalorder %s60, %s74
    %p76 = scmp.eq.s32.totalorder %s29, 0
    %p77 = por %p75, %p76
    %s79 = sadd.s32 %s78, 1
    %p82 = scmp.eq.s32.totalorder %s23, 1
    %p83 = scmp.ne.s32.totalorder %s78, %s80
    %p84 = scmp.eq.s32.totalorder %s23, 0
    %p85 = por %p83, %p84
    %p86 = scmp.ne.s32.totalorder %s78, %s80
    %p87 = scmp.eq.s32.totalorder %s28, 1
    %p88 = por %p86, %p87
    %p89 = scmp.ne.s32.totalorder %s80, %s81
    %p90 = scmp.eq.s32.totalorder %s28, 0
    %p91 = por %p89, %p90
    %p92 = scmp.ne.s32.totalorder %s80, %s81
    %p93 = scmp.eq.s32.totalorder %s29, 1
    %p94 = por %p92, %p93
    %p96 = scmp.ne.s32.totalorder %s81, %s95
    %p97 = scmp.eq.s32.totalorder %s29, 0
    %p98 = por %p96, %p97
    %s100 = sadd.s32 %s99, 1
    %p103 = scmp.eq.s32.totalorder %s23, 1
    %p104 = scmp.ne.s32.totalorder %s99, %s101
    %p105 = scmp.eq.s32.totalorder %s23, 0
    %p106 = por %p104, %p105
    %p107 = scmp.ne.s32.totalorder %s99, %s101
    %p108 = scmp.eq.s32.totalorder %s28, 1
    %p109 = por %p107, %p108
    %p110 = scmp.ne.s32.totalorder %s101, %s102
    %p111 = scmp.eq.s32.totalorder %s28, 0
    %p112 = por %p110, %p111
    %p113 = scmp.ne.s32.totalorder %s101, %s102
    %p114 = scmp.eq.s32.totalorder %s29, 1
    %p115 = por %p113, %p114
    %p117 = scmp.ne.s32.totalorder %s102, %s116
    %p118 = scmp.eq.s32.totalorder %s29, 0
    %p119 = por %p117, %p118
    %s121 = sadd.s32 %s120, 1
    %p124 = scmp.eq.s32.totalorder %s23, 1
    %p125 = scmp.ne.s32.totalorder %s120, %s122
    %p126 = scmp.eq.s32.totalorder %s23, 0
    %p127 = por %p125, %p126
    %p128 = scmp.ne.s32.totalorder %s120, %s122
    %p129 = scmp.eq.s32.totalorder %s28, 1
    %p130 = por %p128, %p129
    %p131 = scmp.ne.s32.totalorder %s122, %s123
    %p132 = scmp.eq.s32.totalorder %s28, 0
    %p133 = por %p131, %p132
    %p134 = scmp.ne.s32.totalorder %s122, %s123
    %p135 = scmp.eq.s32.totalorder %s29, 1
    %p136 = por %p134, %p135
    %p138 = scmp.ne.s32.totalorder %s123, %s137
    %p139 = scmp.eq.s32.totalorder %s29, 0
    %p140 = por %p138, %p139
    %s142 = sadd.s32 %s141, 1
    %p145 = scmp.eq.s32.totalorder %s23, 1
    %p146 = scmp.ne.s32.totalorder %s141, %s143
    %p147 = scmp.eq.s32.totalorder %s23, 0
    %p148 = por %p146, %p147
    %p149 = scmp.ne.s32.totalorder %s141, %s143
    %p150 = scmp.eq.s32.totalorder %s28, 1
    %p151 = por %p149, %p150
    %p152 = scmp.ne.s32.totalorder %s143, %s144
    %p153 = scmp.eq.s32.totalorder %s28, 0
    %p154 = por %p152, %p153
    %p155 = scmp.ne.s32.totalorder %s143, %s144
    %p156 = scmp.eq.s32.totalorder %s29, 1
    %p157 = por %p155, %p156
    %p159 = scmp.ne.s32.totalorder %s144, %s158
    %p160 = scmp.eq.s32.totalorder %s29, 0
    %p161 = por %p159, %p160
    %s163 = sadd.s32 %s162, 1
    %p166 = scmp.eq.s32.totalorder %s23, 1
    %p167 = scmp.ne.s32.totalorder %s162, %s164
    %p168 = scmp.eq.s32.totalorder %s23, 0
    %p169 = por %p167, %p168
    %p170 = scmp.ne.s32.totalorder %s162, %s164
    %p171 = scmp.eq.s32.totalorder %s28, 1
    %p172 = por %p170, %p171
    %p173 = scmp.ne.s32.totalorder %s164, %s165
    %p174 = scmp.eq.s32.totalorder %s28, 0
    %p175 = por %p173, %p174
    %p176 = scmp.ne.s32.totalorder %s164, %s165
    %p177 = scmp.eq.s32.totalorder %s29, 1
    %p178 = por %p176, %p177
    %p180 = scmp.ne.s32.totalorder %s165, %s179
    %p181 = scmp.eq.s32.totalorder %s29, 0
    %p182 = por %p180, %p181
    %s184 = sadd.s32 %s183, 1
    %p187 = scmp.eq.s32.totalorder %s23, 1
    %p188 = scmp.ne.s32.totalorder %s183, %s185
    %p189 = scmp.eq.s32.totalorder %s23, 0
    %p190 = por %p188, %p189
    %p191 = scmp.ne.s32.totalorder %s183, %s185
    %p192 = scmp.eq.s32.totalorder %s28, 1
    %p193 = por %p191, %p192
    %p194 = scmp.ne.s32.totalorder %s185, %s186
    %p195 = scmp.eq.s32.totalorder %s28, 0
    %p196 = por %p194, %p195
    %p197 = scmp.ne.s32.totalorder %s185, %s186
    %p198 = scmp.eq.s32.totalorder %s29, 1
    %p199 = por %p197, %p198
    %p201 = scmp.ne.s32.totalorder %s186, %s200
    %p202 = scmp.eq.s32.totalorder %s29, 0
    %p203 = por %p201, %p202
    %s205 = sadd.s32 %s204, 1
    %p208 = scmp.eq.s32.totalorder %s23, 1
    %p209 = scmp.ne.s32.totalorder %s204, %s206
    %p210 = scmp.eq.s32.totalorder %s23, 0
    %p211 = por %p209, %p210
    %p212 = scmp.ne.s32.totalorder %s204, %s206
    %p213 = scmp.eq.s32.totalorder %s28, 1
    %p214 = por %p212, %p213
    %p215 = scmp.ne.s32.totalorder %s206, %s207
    %p216 = scmp.eq.s32.totalorder %s28, 0
    %p217 = por %p215, %p216
    %p218 = scmp.ne.s32.totalorder %s206, %s207
    %p219 = scmp.eq.s32.totalorder %s29, 1
    %p220 = por %p218, %p219
    %p222 = scmp.ne.s32.totalorder %s207, %s221
    %p223 = scmp.eq.s32.totalorder %s29, 0
    %p224 = por %p222, %p223
    %s226 = sadd.s32 %s225, 1
    %p229 = scmp.eq.s32.totalorder %s23, 1
    %p230 = scmp.ne.s32.totalorder %s225, %s227
    %p231 = scmp.eq.s32.totalorder %s23, 0
    %p232 = por %p230, %p231
    %p233 = scmp.ne.s32.totalorder %s225, %s227
    %p234 = scmp.eq.s32.totalorder %s28, 1
    %p235 = por %p233, %p234
    %p236 = scmp.ne.s32.totalorder %s227, %s228
    %p237 = scmp.eq.s32.totalorder %s28, 0
    %p238 = por %p236, %p237
    %p239 = scmp.ne.s32.totalorder %s227, %s228
    %p240 = scmp.eq.s32.totalorder %s29, 1
    %p241 = por %p239, %p240
    %p243 = scmp.ne.s32.totalorder %s228, %s242
    %p244 = scmp.eq.s32.totalorder %s29, 0
    %p245 = por %p243, %p244
    %s247 = sadd.s32 %s246, 1
    %p250 = scmp.eq.s32.totalorder %s23, 1
    %p251 = scmp.ne.s32.totalorder %s246, %s248
    %p252 = scmp.eq.s32.totalorder %s23, 0
    %p253 = por %p251, %p252
    %p254 = scmp.ne.s32.totalorder %s246, %s248
    %p255 = scmp.eq.s32.totalorder %s28, 1
    %p256 = por %p254, %p255
    %p257 = scmp.ne.s32.totalorder %s248, %s249
    %p258 = scmp.eq.s32.totalorder %s28, 0
    %p259 = por %p257, %p258
    %p260 = scmp.ne.s32.totalorder %s248, %s249
    %p261 = scmp.eq.s32.totalorder %s29, 1
    %p262 = por %p260, %p261
    %p264 = scmp.ne.s32.totalorder %s249, %s263
    %p265 = scmp.eq.s32.totalorder %s29, 0
    %p266 = por %p264, %p265
    %s268 = sadd.s32 %s267, 1
    %p271 = scmp.eq.s32.totalorder %s23, 1
    %p272 = scmp.ne.s32.totalorder %s267, %s269
    %p273 = scmp.eq.s32.totalorder %s23, 0
    %p274 = por %p272, %p273
    %p275 = scmp.ne.s32.totalorder %s267, %s269
    %p276 = scmp.eq.s32.totalorder %s28, 1
    %p277 = por %p275, %p276
    %p278 = scmp.ne.s32.totalorder %s269, %s270
    %p279 = scmp.eq.s32.totalorder %s28, 0
    %p280 = por %p278, %p279
    %p281 = scmp.ne.s32.totalorder %s269, %s270
    %p282 = scmp.eq.s32.totalorder %s29, 1
    %p283 = por %p281, %p282
    %p285 = scmp.ne.s32.totalorder %s270, %s284
    %p286 = scmp.eq.s32.totalorder %s29, 0
    %p287 = por %p285, %p286
    %s289 = sadd.s32 %s288, 1
    %p292 = scmp.eq.s32.totalorder %s23, 1
    %p293 = scmp.ne.s32.totalorder %s288, %s290
    %p294 = scmp.eq.s32.totalorder %s23, 0
    %p295 = por %p293, %p294
    %p296 = scmp.ne.s32.totalorder %s288, %s290
    %p297 = scmp.eq.s32.totalorder %s28, 1
    %p298 = por %p296, %p297
    %p299 = scmp.ne.s32.totalorder %s290, %s291
    %p300 = scmp.eq.s32.totalorder %s28, 0
    %p301 = por %p299, %p300
    %p302 = scmp.ne.s32.totalorder %s290, %s291
    %p303 = scmp.eq.s32.totalorder %s29, 1
    %p304 = por %p302, %p303
    %p306 = scmp.ne.s32.totalorder %s291, %s305
    %p307 = scmp.eq.s32.totalorder %s29, 0
    %p308 = por %p306, %p307
    %s310 = sadd.s32 %s309, 1
    %p313 = scmp.eq.s32.totalorder %s23, 1
    %p314 = scmp.ne.s32.totalorder %s309, %s311
    %p315 = scmp.eq.s32.totalorder %s23, 0
    %p316 = por %p314, %p315
    %p317 = scmp.ne.s32.totalorder %s309, %s311
    %p318 = scmp.eq.s32.totalorder %s28, 1
    %p319 = por %p317, %p318
    %p320 = scmp.ne.s32.totalorder %s311, %s312
    %p321 = scmp.eq.s32.totalorder %s28, 0
    %p322 = por %p320, %p321
    %p323 = scmp.ne.s32.totalorder %s311, %s312
    %p324 = scmp.eq.s32.totalorder %s29, 1
    %p325 = por %p323, %p324
    %p327 = scmp.ne.s32.totalorder %s312, %s326
    %p328 = scmp.eq.s32.totalorder %s29, 0
    %p329 = por %p327, %p328
    %s331 = sadd.s32 %s330, 1
    %p334 = scmp.eq.s32.totalorder %s23, 1
    %p335 = scmp.ne.s32.totalorder %s330, %s332
    %p336 = scmp.eq.s32.totalorder %s23, 0
    %p337 = por %p335, %p336
    %p338 = scmp.ne.s32.totalorder %s330, %s332
    %p339 = scmp.eq.s32.totalorder %s28, 1
    %p340 = por %p338, %p339
    %p341 = scmp.ne.s32.totalorder %s332, %s333
    %p342 = scmp.eq.s32.totalorder %s28, 0
    %p343 = por %p341, %p342
    %p344 = scmp.ne.s32.totalorder %s332, %s333
    %p345 = scmp.eq.s32.totalorder %s29, 1
    %p346 = por %p344, %p345
    %p348 = scmp.ne.s32.totalorder %s333, %s347
    %p349 = scmp.eq.s32.totalorder %s29, 0
    %p350 = por %p348, %p349
    %s352 = sadd.s32 %s351, 1
    %p355 = scmp.eq.s32.totalorder %s23, 1
    %p356 = scmp.ne.s32.totalorder %s351, %s353
    %p357 = scmp.eq.s32.totalorder %s23, 0
    %p358 = por %p356, %p357
    %p359 = scmp.ne.s32.totalorder %s351, %s353
    %p360 = scmp.eq.s32.totalorder %s28, 1
    %p361 = por %p359, %p360
    %p362 = scmp.ne.s32.totalorder %s353, %s354
    %p363 = scmp.eq.s32.totalorder %s28, 0
    %p364 = por %p362, %p363
    %p365 = scmp.ne.s32.totalorder %s353, %s354
    %p366 = scmp.eq.s32.totalorder %s29, 1
    %p367 = por %p365, %p366
    %p369 = scmp.ne.s32.totalorder %s354, %s368
    %p370 = scmp.eq.s32.totalorder %s29, 0
    %p371 = por %p369, %p370
    %s373 = sadd.s32 %s372, 1
    %p376 = scmp.eq.s32.totalorder %s23, 1
    %p377 = scmp.ne.s32.totalorder %s372, %s374
    %p378 = scmp.eq.s32.totalorder %s23, 0
    %p379 = por %p377, %p378
    %p380 = scmp.ne.s32.totalorder %s372, %s374
    %p381 = scmp.eq.s32.totalorder %s28, 1
    %p382 = por %p380, %p381
    %p383 = scmp.ne.s32.totalorder %s374, %s375
    %p384 = scmp.eq.s32.totalorder %s28, 0
    %p385 = por %p383, %p384
    %p386 = scmp.ne.s32.totalorder %s374, %s375
    %p387 = scmp.eq.s32.totalorder %s29, 1
    %p388 = por %p386, %p387
    %p390 = scmp.ne.s32.totalorder %s375, %s389
    %p391 = scmp.eq.s32.totalorder %s29, 0
    %p392 = por %p390, %p391
    %s393 = ssub.s32 %s23, %s30
    %p394 = scmp.eq.s32.totalorder %s393, 0
    %s396 = sadd.s32 %s395, 1
    %s397 = scalar_select %p394, %s395, %s396
    %p400 = pneg %p394
    %p401 = scmp.eq.s32.totalorder %s23, 1
    %p402 = por %p400, %p401
    %p403 = scmp.ne.s32.totalorder %s395, %s398
    %p404 = scmp.eq.s32.totalorder %s23, 0
    %p405 = por %p403, %p404
    %p406 = scmp.ne.s32.totalorder %s395, %s398
    %p407 = scmp.eq.s32.totalorder %s28, 1
    %p408 = por %p406, %p407
    %p409 = scmp.ne.s32.totalorder %s398, %s399
    %p410 = scmp.eq.s32.totalorder %s28, 0
    %p411 = por %p409, %p410
    %p412 = scmp.ne.s32.totalorder %s398, %s399
    %p413 = scmp.eq.s32.totalorder %s29, 1
    %p414 = por %p412, %p413
    %p416 = scmp.ne.s32.totalorder %s399, %s415
    %p417 = scmp.eq.s32.totalorder %s29, 0
    %p418 = por %p416, %p417
    %p419 = scmp.le.s32.totalorder 1, %s23
    %p420 = scmp.lt.s32.totalorder %s23, 3
    %p421 = pnand %p419, %p420
    %p422 = pneg %p421
    // Predicated region
    $region9: #{forward.10} parent=5 // pred_check
      _
    $region10: #{forward.10} parent=5 // pred_check_branch
      %424 = sbr.rel (%p421) target = $region12
    $region11: #{forward.10} parent=5 // pred_region
      %s425 = ssub.s32 %s23, 1
      // Predicated region
      $region13: #{forward.10} parent=11 // pred_check
        %p426 = pneg %p70
      $region14: #{forward.10} parent=11 // pred_check_branch
        %428 = sbr.rel (%p426) target = $region16
      $region15: #{forward.10} parent=11 // pred_region
        _
      $region16: #{forward.10} parent=11 // pred_fallthru
        _
      // Predicated region
      $region17: #{forward.10} parent=11 // pred_check
        %p429 = pneg %p91
      $region18: #{forward.10} parent=11 // pred_check_branch
        %431 = sbr.rel (%p429) target = $region20
      $region19: #{forward.10} parent=11 // pred_region
        _
      $region20: #{forward.10} parent=11 // pred_fallthru
        _
      // Predicated region
      $region21: #{forward.10} parent=11 // pred_check
        %p432 = pneg %p112
      $region22: #{forward.10} parent=11 // pred_check_branch
        %434 = sbr.rel (%p432) target = $region24
      $region23: #{forward.10} parent=11 // pred_region
        _
      $region24: #{forward.10} parent=11 // pred_fallthru
        _
      // Predicated region
      $region25: #{forward.10} parent=11 // pred_check
        %p435 = pneg %p133
      $region26: #{forward.10} parent=11 // pred_check_branch
        %437 = sbr.rel (%p435) target = $region28
      $region27: #{forward.10} parent=11 // pred_region
        _
      $region28: #{forward.10} parent=11 // pred_fallthru
        _
      // Predicated region
      $region29: #{forward.10} parent=11 // pred_check
        %p438 = pneg %p154
      $region30: #{forward.10} parent=11 // pred_check_branch
        %440 = sbr.rel (%p438) target = $region32
      $region31: #{forward.10} parent=11 // pred_region
        _
      $region32: #{forward.10} parent=11 // pred_fallthru
        _
      // Predicated region
      $region33: #{forward.10} parent=11 // pred_check
        %p441 = pneg %p175
      $region34: #{forward.10} parent=11 // pred_check_branch
        %443 = sbr.rel (%p441) target = $region36
      $region35: #{forward.10} parent=11 // pred_region
        _
      $region36: #{forward.10} parent=11 // pred_fallthru
        _
      // Predicated region
      $region37: #{forward.10} parent=11 // pred_check
        %p444 = pneg %p196
      $region38: #{forward.10} parent=11 // pred_check_branch
        %446 = sbr.rel (%p444) target = $region40
      $region39: #{forward.10} parent=11 // pred_region
        _
      $region40: #{forward.10} parent=11 // pred_fallthru
        _
      // Predicated region
      $region41: #{forward.10} parent=11 // pred_check
        %p447 = pneg %p217
      $region42: #{forward.10} parent=11 // pred_check_branch
        %449 = sbr.rel (%p447) target = $region44
      $region43: #{forward.10} parent=11 // pred_region
        _
      $region44: #{forward.10} parent=11 // pred_fallthru
        _
      // Predicated region
      $region45: #{forward.10} parent=11 // pred_check
        %p450 = pneg %p238
      $region46: #{forward.10} parent=11 // pred_check_branch
        %452 = sbr.rel (%p450) target = $region48
      $region47: #{forward.10} parent=11 // pred_region
        _
      $region48: #{forward.10} parent=11 // pred_fallthru
        _
      // Predicated region
      $region49: #{forward.10} parent=11 // pred_check
        %p453 = pneg %p259
      $region50: #{forward.10} parent=11 // pred_check_branch
        %455 = sbr.rel (%p453) target = $region52
      $region51: #{forward.10} parent=11 // pred_region
        _
      $region52: #{forward.10} parent=11 // pred_fallthru
        _
      // Predicated region
      $region53: #{forward.10} parent=11 // pred_check
        %p456 = pneg %p280
      $region54: #{forward.10} parent=11 // pred_check_branch
        %458 = sbr.rel (%p456) target = $region56
      $region55: #{forward.10} parent=11 // pred_region
        _
      $region56: #{forward.10} parent=11 // pred_fallthru
        _
      // Predicated region
      $region57: #{forward.10} parent=11 // pred_check
        %p459 = pneg %p301
      $region58: #{forward.10} parent=11 // pred_check_branch
        %461 = sbr.rel (%p459) target = $region60
      $region59: #{forward.10} parent=11 // pred_region
        _
      $region60: #{forward.10} parent=11 // pred_fallthru
        _
      // Predicated region
      $region61: #{forward.10} parent=11 // pred_check
        %p462 = pneg %p322
      $region62: #{forward.10} parent=11 // pred_check_branch
        %464 = sbr.rel (%p462) target = $region64
      $region63: #{forward.10} parent=11 // pred_region
        _
      $region64: #{forward.10} parent=11 // pred_fallthru
        _
      // Predicated region
      $region65: #{forward.10} parent=11 // pred_check
        %p465 = pneg %p343
      $region66: #{forward.10} parent=11 // pred_check_branch
        %467 = sbr.rel (%p465) target = $region68
      $region67: #{forward.10} parent=11 // pred_region
        _
      $region68: #{forward.10} parent=11 // pred_fallthru
        _
      // Predicated region
      $region69: #{forward.10} parent=11 // pred_check
        %p468 = pneg %p364
      $region70: #{forward.10} parent=11 // pred_check_branch
        %470 = sbr.rel (%p468) target = $region72
      $region71: #{forward.10} parent=11 // pred_region
        _
      $region72: #{forward.10} parent=11 // pred_fallthru
        _
      // Predicated region
      $region73: #{forward.10} parent=11 // pred_check
        %p471 = pneg %p385
      $region74: #{forward.10} parent=11 // pred_check_branch
        %473 = sbr.rel (%p471) target = $region76
      $region75: #{forward.10} parent=11 // pred_region
        _
      $region76: #{forward.10} parent=11 // pred_fallthru
        _
    $region12: #{forward.10} parent=5 // pred_fallthru
      _
    %p474 = scmp.lt.s32.totalorder %s23, 2
    // Predicated region
    $region77: #{forward.10} parent=5 // pred_check
      %p475 = pneg %p474
    $region78: #{forward.10} parent=5 // pred_check_branch
      %477 = sbr.rel (%p475) target = $region80
    $region79: #{forward.10} parent=5 // pred_region
      // Predicated region
      $region81: #{forward.10} parent=79 // pred_check
        %p478 = pneg %p43
      $region82: #{forward.10} parent=79 // pred_check_branch
        %480 = sbr.rel (%p478) target = $region84
      $region83: #{forward.10} parent=79 // pred_region
        %s481 = smul.u32 16, %s23
        %p482 = scmp.lt.s32.totalorder %s481, 31
        %s483 = scalar_select %p482, %s481, 31
        %s484 = smul.addr %s483, 8
        %s485 = scalar_lea.vmem %s0, %s484
        %s486 = smul.u32 16, %s23
      $region84: #{forward.10} parent=79 // pred_fallthru
        _
    $region80: #{forward.10} parent=5 // pred_fallthru
      _
    %p487 = scmp.le.s32.totalorder 1, %s23
    %p488 = scmp.lt.s32.totalorder %s23, 3
    %p489 = pnand %p487, %p488
    %p490 = pneg %p489
    // Predicated region
    $region85: #{forward.10} parent=5 // pred_check
      _
    $region86: #{forward.10} parent=5 // pred_check_branch
      %492 = sbr.rel (%p489) target = $region88
    $region87: #{forward.10} parent=5 // pred_region
      %s493 = ssub.s32 %s23, 1
      %s494 = smul.u32 16, %s28
      %p495 = scmp.lt.s32.totalorder %s494, 31
      %s496 = scalar_select %p495, %s494, 31
      %s497 = smul.addr %s496, 8
      %s498 = scalar_lea.vmem %s0, %s497
      %p499 = pneg %p49
      %p500 = pneg %p46
      %p501 = pneg %p70
      %p502 = pneg %p67
      %p503 = pneg %p91
      %p504 = pneg %p88
      %p505 = pneg %p112
      %p506 = pneg %p109
      %p507 = pneg %p133
      %p508 = pneg %p130
      %p509 = pneg %p154
      %p510 = pneg %p151
      %p511 = pneg %p175
      %p512 = pneg %p172
      %p513 = pneg %p196
      %p514 = pneg %p193
      %p515 = pneg %p217
      %p516 = pneg %p214
      %p517 = pneg %p238
      %p518 = pneg %p235
      %p519 = pneg %p259
      %p520 = pneg %p256
      %p521 = pneg %p280
      %p522 = pneg %p277
      %p523 = pneg %p301
      %p524 = pneg %p298
      %p525 = pneg %p322
      %p526 = pneg %p319
      %p527 = pneg %p343
      %p528 = pneg %p340
      %p529 = pneg %p364
      %p530 = pneg %p361
      %p531 = pneg %p385
      %p532 = pneg %p382
      %p533 = pneg %p411
      %p534 = pneg %p408
      %s535 = smul.u32 16, %s28
      %p536 = scmp.lt.s32.totalorder %s535, 31
      %s537 = scalar_select %p536, %s535, 31
      %s538 = smul.addr %s537, 8
      %s539 = scalar_lea.vmem %s17, %s538
      %s540 = smul.u32 16, %s28
      %p541 = scmp.lt.s32.totalorder %s540, 31
      %s542 = scalar_select %p541, %s540, 31
      %s543 = smul.addr %s542, 8
      %s544 = scalar_lea.vmem %s0, %s543
      %s545 = smul.u32 16, %s28
      %s546 = smul.u32 16, %s28
      %p547 = scmp.lt.s32.totalorder %s546, 31
      %s548 = scalar_select %p547, %s546, 31
      %s549 = smul.addr %s548, 8
      %s550 = scalar_lea.vmem %s17, %s549
      %s551 = smul.u32 16, %s28
      %v553 = vld [vmem:[%s544] sm:$0xff]
      %v554 = vld [vmem:[%s544 + $0x8] sm:$0xff]
      %v555 = vld [vmem:[%s544 + $0x10] sm:$0xff]
      %v556 = vld [vmem:[%s544 + $0x18] sm:$0xff]
      %v557 = vld [vmem:[%s544 + $0x20] sm:$0xff]
      %v558 = vld [vmem:[%s544 + $0x28] sm:$0xff]
      %v559 = vld [vmem:[%s544 + $0x30] sm:$0xff]
      %v560 = vld [vmem:[%s544 + $0x38] sm:$0xff]
      %v561 = vld [vmem:[%s544 + $0x40] sm:$0xff]
      %v562 = vld [vmem:[%s544 + $0x48] sm:$0xff]
      %v563 = vld [vmem:[%s544 + $0x50] sm:$0xff]
      %v564 = vld [vmem:[%s544 + $0x58] sm:$0xff]
      %v565 = vld [vmem:[%s544 + $0x60] sm:$0xff]
      %v566 = vld [vmem:[%s544 + $0x68] sm:$0xff]
      %v567 = vld [vmem:[%s544 + $0x70] sm:$0xff]
      %v568 = vld [vmem:[%s544 + $0x78] sm:$0xff]
      %v569 = vld [vmem:[%s1] sm:$0x1]
      %v570 = vld [vmem:[%s2] sm:$0x1]
      %vm571 = vcmask 130048
      %v572 = vsel %vm571, %v553, 0.0
      %573 = vadd.xlane.f32.xlu0 %v572
      %v574 = vpop.xlane.xlu0 %573
      %v575 = vsel %vm571, %v554, 0.0
      %576 = vadd.xlane.f32.xlu0 %v575
      %v577 = vpop.xlane.xlu0 %576
      %v578 = vsel %vm571, %v555, 0.0
      %579 = vadd.xlane.f32.xlu0 %v578
      %v580 = vpop.xlane.xlu0 %579
      %v581 = vsel %vm571, %v556, 0.0
      %582 = vadd.xlane.f32.xlu0 %v581
      %v583 = vpop.xlane.xlu0 %582
      %v584 = vsel %vm571, %v557, 0.0
      %585 = vadd.xlane.f32.xlu0 %v584
      %v586 = vpop.xlane.xlu0 %585
      %v587 = vsel %vm571, %v558, 0.0
      %588 = vadd.xlane.f32.xlu0 %v587
      %v589 = vpop.xlane.xlu0 %588
      %v590 = vsel %vm571, %v559, 0.0
      %591 = vadd.xlane.f32.xlu0 %v590
      %v592 = vpop.xlane.xlu0 %591
      %v593 = vsel %vm571, %v560, 0.0
      %594 = vadd.xlane.f32.xlu0 %v593
      %v595 = vpop.xlane.xlu0 %594
      %v596 = vsel %vm571, %v561, 0.0
      %597 = vadd.xlane.f32.xlu0 %v596
      %v598 = vpop.xlane.xlu0 %597
      %v599 = vsel %vm571, %v562, 0.0
      %600 = vadd.xlane.f32.xlu0 %v599
      %v601 = vpop.xlane.xlu0 %600
      %v602 = vsel %vm571, %v563, 0.0
      %603 = vadd.xlane.f32.xlu0 %v602
      %v604 = vpop.xlane.xlu0 %603
      %v605 = vsel %vm571, %v564, 0.0
      %606 = vadd.xlane.f32.xlu0 %v605
      %v607 = vpop.xlane.xlu0 %606
      %v608 = vsel %vm571, %v565, 0.0
      %609 = vadd.xlane.f32.xlu0 %v608
      %v610 = vpop.xlane.xlu0 %609
      %v611 = vsel %vm571, %v566, 0.0
      %612 = vadd.xlane.f32.xlu0 %v611
      %v613 = vpop.xlane.xlu0 %612
      %v614 = vsel %vm571, %v567, 0.0
      %615 = vadd.xlane.f32.xlu0 %v614
      %v616 = vpop.xlane.xlu0 %615
      %v617 = vsel %vm571, %v568, 0.0
      %618 = vadd.xlane.f32.xlu0 %v617
      %v619 = vpop.xlane.xlu0 %618
      %v620 = vrcp.pop 16.0
      %v621 = vmul.f32 %v574, %v620
      %v622 = vmul.f32 %v577, %v620
      %v623 = vmul.f32 %v580, %v620
      %v624 = vmul.f32 %v583, %v620
      %v625 = vmul.f32 %v586, %v620
      %v626 = vmul.f32 %v589, %v620
      %v627 = vmul.f32 %v592, %v620
      %v628 = vmul.f32 %v595, %v620
      %v629 = vmul.f32 %v598, %v620
      %v630 = vmul.f32 %v601, %v620
      %v631 = vmul.f32 %v604, %v620
      %v632 = vmul.f32 %v607, %v620
      %v633 = vmul.f32 %v610, %v620
      %v634 = vmul.f32 %v613, %v620
      %v635 = vmul.f32 %v616, %v620
      %v636 = vmul.f32 %v619, %v620
      %v637 = vsub.f32 %v553, %v621
      %v638 = vsub.f32 %v554, %v622
      %v639 = vsub.f32 %v555, %v623
      %v640 = vsub.f32 %v556, %v624
      %v641 = vsub.f32 %v557, %v625
      %v642 = vsub.f32 %v558, %v626
      %v643 = vsub.f32 %v559, %v627
      %v644 = vsub.f32 %v560, %v628
      %v645 = vsub.f32 %v561, %v629
      %v646 = vsub.f32 %v562, %v630
      %v647 = vsub.f32 %v563, %v631
      %v648 = vsub.f32 %v564, %v632
      %v649 = vsub.f32 %v565, %v633
      %v650 = vsub.f32 %v566, %v634
      %v651 = vsub.f32 %v567, %v635
      %v652 = vsub.f32 %v568, %v636
      %v653 = vmul.f32 %v637, %v637
      %v654 = vmul.f32 %v638, %v638
      %v655 = vmul.f32 %v639, %v639
      %v656 = vmul.f32 %v640, %v640
      %v657 = vmul.f32 %v641, %v641
      %v658 = vmul.f32 %v642, %v642
      %v659 = vmul.f32 %v643, %v643
      %v660 = vmul.f32 %v644, %v644
      %v661 = vmul.f32 %v645, %v645
      %v662 = vmul.f32 %v646, %v646
      %v663 = vmul.f32 %v647, %v647
      %v664 = vmul.f32 %v648, %v648
      %v665 = vmul.f32 %v649, %v649
      %v666 = vmul.f32 %v650, %v650
      %v667 = vmul.f32 %v651, %v651
      %v668 = vmul.f32 %v652, %v652
      %v669 = vsel %vm571, %v653, 0.0
      %670 = vadd.xlane.f32.xlu0 %v669
      %v671 = vpop.xlane.xlu0 %670
      %v672 = vsel %vm571, %v654, 0.0
      %673 = vadd.xlane.f32.xlu0 %v672
      %v674 = vpop.xlane.xlu0 %673
      %v675 = vsel %vm571, %v655, 0.0
      %676 = vadd.xlane.f32.xlu0 %v675
      %v677 = vpop.xlane.xlu0 %676
      %v678 = vsel %vm571, %v656, 0.0
      %679 = vadd.xlane.f32.xlu0 %v678
      %v680 = vpop.xlane.xlu0 %679
      %v681 = vsel %vm571, %v657, 0.0
      %682 = vadd.xlane.f32.xlu0 %v681
      %v683 = vpop.xlane.xlu0 %682
      %v684 = vsel %vm571, %v658, 0.0
      %685 = vadd.xlane.f32.xlu0 %v684
      %v686 = vpop.xlane.xlu0 %685
      %v687 = vsel %vm571, %v659, 0.0
      %688 = vadd.xlane.f32.xlu0 %v687
      %v689 = vpop.xlane.xlu0 %688
      %v690 = vsel %vm571, %v660, 0.0
      %691 = vadd.xlane.f32.xlu0 %v690
      %v692 = vpop.xlane.xlu0 %691
      %v693 = vsel %vm571, %v661, 0.0
      %694 = vadd.xlane.f32.xlu0 %v693
      %v695 = vpop.xlane.xlu0 %694
      %v696 = vsel %vm571, %v662, 0.0
      %697 = vadd.xlane.f32.xlu0 %v696
      %v698 = vpop.xlane.xlu0 %697
      %v699 = vsel %vm571, %v663, 0.0
      %700 = vadd.xlane.f32.xlu0 %v699
      %v701 = vpop.xlane.xlu0 %700
      %v702 = vsel %vm571, %v664, 0.0
      %703 = vadd.xlane.f32.xlu0 %v702
      %v704 = vpop.xlane.xlu0 %703
      %v705 = vsel %vm571, %v665, 0.0
      %706 = vadd.xlane.f32.xlu0 %v705
      %v707 = vpop.xlane.xlu0 %706
      %v708 = vsel %vm571, %v666, 0.0
      %709 = vadd.xlane.f32.xlu0 %v708
      %v710 = vpop.xlane.xlu0 %709
      %v711 = vsel %vm571, %v667, 0.0
      %712 = vadd.xlane.f32.xlu0 %v711
      %v713 = vpop.xlane.xlu0 %712
      %v714 = vsel %vm571, %v668, 0.0
      %715 = vadd.xlane.f32.xlu0 %v714
      %v716 = vpop.xlane.xlu0 %715
      %v717 = vmul.f32 %v671, %v620
      %v718 = vmul.f32 %v674, %v620
      %v719 = vmul.f32 %v677, %v620
      %v720 = vmul.f32 %v680, %v620
      %v721 = vmul.f32 %v683, %v620
      %v722 = vmul.f32 %v686, %v620
      %v723 = vmul.f32 %v689, %v620
      %v724 = vmul.f32 %v692, %v620
      %v725 = vmul.f32 %v695, %v620
      %v726 = vmul.f32 %v698, %v620
      %v727 = vmul.f32 %v701, %v620
      %v728 = vmul.f32 %v704, %v620
      %v729 = vmul.f32 %v707, %v620
      %v730 = vmul.f32 %v710, %v620
      %v731 = vmul.f32 %v713, %v620
      %v732 = vmul.f32 %v716, %v620
      %v733 = vadd.f32 %v717, 1e-05
      %v734 = vadd.f32 %v718, 1e-05
      %v735 = vadd.f32 %v719, 1e-05
      %v736 = vadd.f32 %v720, 1e-05
      %v737 = vadd.f32 %v721, 1e-05
      %v738 = vadd.f32 %v722, 1e-05
      %v739 = vadd.f32 %v723, 1e-05
      %v740 = vadd.f32 %v724, 1e-05
      %v741 = vadd.f32 %v725, 1e-05
      %v742 = vadd.f32 %v726, 1e-05
      %v743 = vadd.f32 %v727, 1e-05
      %v744 = vadd.f32 %v728, 1e-05
      %v745 = vadd.f32 %v729, 1e-05
      %v746 = vadd.f32 %v730, 1e-05
      %v747 = vadd.f32 %v731, 1e-05
      %v748 = vadd.f32 %v732, 1e-05
      %v749 = vrsqrt.pop %v733
      %v750 = vrsqrt.pop %v734
      %v751 = vrsqrt.pop %v735
      %v752 = vrsqrt.pop %v736
      %v753 = vrsqrt.pop %v737
      %v754 = vrsqrt.pop %v738
      %v755 = vrsqrt.pop %v739
      %v756 = vrsqrt.pop %v740
      %v757 = vrsqrt.pop %v741
      %v758 = vrsqrt.pop %v742
      %v759 = vrsqrt.pop %v743
      %v760 = vrsqrt.pop %v744
      %v761 = vrsqrt.pop %v745
      %v762 = vrsqrt.pop %v746
      %v763 = vrsqrt.pop %v747
      %v764 = vrsqrt.pop %v748
      %v765 = vmul.f32 %v637, %v749
      %v766 = vmul.f32 %v638, %v750
      %v767 = vmul.f32 %v639, %v751
      %v768 = vmul.f32 %v640, %v752
      %v769 = vmul.f32 %v641, %v753
      %v770 = vmul.f32 %v642, %v754
      %v771 = vmul.f32 %v643, %v755
      %v772 = vmul.f32 %v644, %v756
      %v773 = vmul.f32 %v645, %v757
      %v774 = vmul.f32 %v646, %v758
      %v775 = vmul.f32 %v647, %v759
      %v776 = vmul.f32 %v648, %v760
      %v777 = vmul.f32 %v649, %v761
      %v778 = vmul.f32 %v650, %v762
      %v779 = vmul.f32 %v651, %v763
      %v780 = vmul.f32 %v652, %v764
      %v782 = vlaneseq
      %v783 = vshrl.u32 %v782, 7
      %v784 = vsub.s32 0, %v783
      %v785 = vrot.slane %v569, %v784
      %v787 = vmul.f32 %v765, %v785
      %v788 = vmul.f32 %v766, %v785
      %v789 = vmul.f32 %v767, %v785
      %v790 = vmul.f32 %v768, %v785
      %v791 = vmul.f32 %v769, %v785
      %v792 = vmul.f32 %v770, %v785
      %v793 = vmul.f32 %v771, %v785
      %v794 = vmul.f32 %v772, %v785
      %v795 = vmul.f32 %v773, %v785
      %v796 = vmul.f32 %v774, %v785
      %v797 = vmul.f32 %v775, %v785
      %v798 = vmul.f32 %v776, %v785
      %v799 = vmul.f32 %v777, %v785
      %v800 = vmul.f32 %v778, %v785
      %v801 = vmul.f32 %v779, %v785
      %v802 = vmul.f32 %v780, %v785
      %v804 = vlaneseq
      %v805 = vshrl.u32 %v804, 7
      %v806 = vsub.s32 0, %v805
      %v807 = vrot.slane %v570, %v806
      %v809 = vadd.f32 %v787, %v807
      %v810 = vadd.f32 %v788, %v807
      %v811 = vadd.f32 %v789, %v807
      %v812 = vadd.f32 %v790, %v807
      %v813 = vadd.f32 %v791, %v807
      %v814 = vadd.f32 %v792, %v807
      %v815 = vadd.f32 %v793, %v807
      %v816 = vadd.f32 %v794, %v807
      %v817 = vadd.f32 %v795, %v807
      %v818 = vadd.f32 %v796, %v807
      %v819 = vadd.f32 %v797, %v807
      %v820 = vadd.f32 %v798, %v807
      %v821 = vadd.f32 %v799, %v807
      %v822 = vadd.f32 %v800, %v807
      %v823 = vadd.f32 %v801, %v807
      %v824 = vadd.f32 %v802, %v807
      %v825 = vpack.c.bf16 %v810, %v809
      %v826 = vpack.c.bf16 %v812, %v811
      %v827 = vpack.c.bf16 %v814, %v813
      %v828 = vpack.c.bf16 %v816, %v815
      %v829 = vpack.c.bf16 %v818, %v817
      %v830 = vpack.c.bf16 %v820, %v819
      %v831 = vpack.c.bf16 %v822, %v821
      %v832 = vpack.c.bf16 %v824, %v823
      %v833 = vld [vmem:[%s3] sm:$0xf]
      %v834 = vld [vmem:[%s3 + $0x4] sm:$0xf]
      %v835 = vld [vmem:[%s4] sm:$0x1]
      %v837 = vlaneseq
      %v838 = vshrl.u32 %v837, 7
      %v839 = vsub.s32 0, %v838
      %v840 = vrot.slane %v835, %v839
      %v844 = vunpack.c.l.b16 %v833
      %v845 = vunpack.c.l.b16 %v834
      %v846 = vpack.c.b16 %v845, %v844
      %v849 = vsel %vm571, %v825, 0
      %v852 = vsel %vm571, %v826, 0
      %v855 = vsel %vm571, %v827, 0
      %v858 = vsel %vm571, %v828, 0
      %v861 = vsel %vm571, %v829, 0
      %v864 = vsel %vm571, %v830, 0
      %v867 = vsel %vm571, %v831, 0
      %v870 = vsel %vm571, %v832, 0
      %872 = vmatprep.subr.bf16.mxu0 0
      %873 = vmatpush1.bf16.msra.mxu0 %v846
      %874 = vmatprep.subr.bf16.mxu0 0
      %875 = vmatpush1.bf16.msra.mxu0 0
      %876 = vmatprep.subr.bf16.mxu0 0
      %877 = vmatpush1.bf16.msra.mxu0 0
      %878 = vmatprep.subr.bf16.mxu0 0
      %879 = vmatpush1.bf16.msra.mxu0 0
      %880 = vmatprep.subr.bf16.mxu0 0
      %881 = vmatpush1.bf16.msra.mxu0 0
      %882 = vmatprep.subr.bf16.mxu0 0
      %883 = vmatpush1.bf16.msra.mxu0 0
      %884 = vmatprep.subr.bf16.mxu0 0
      %885 = vmatpush1.bf16.msra.mxu0 0
      %886 = vmatprep.subr.bf16.mxu0 0
      %887 = vmatpush1.bf16.msra.mxu0 0
      %888 = vmatprep.subr.bf16.mxu0 0
      %889 = vmatpush1.bf16.msra.mxu0 0
      %890 = vmatprep.subr.bf16.mxu0 0
      %891 = vmatpush1.bf16.msra.mxu0 0
      %892 = vmatprep.subr.bf16.mxu0 0
      %893 = vmatpush1.bf16.msra.mxu0 0
      %894 = vmatprep.subr.bf16.mxu0 0
      %895 = vmatpush1.bf16.msra.mxu0 0
      %896 = vmatprep.subr.bf16.mxu0 0
      %897 = vmatpush1.bf16.msra.mxu0 0
      %898 = vmatprep.subr.bf16.mxu0 0
      %899 = vmatpush1.bf16.msra.mxu0 0
      %900 = vmatprep.subr.bf16.mxu0 0
      %901 = vmatpush1.bf16.msra.mxu0 0
      %902 = vmatprep.subr.bf16.mxu0 0
      %903 = vmatpush1.bf16.msra.mxu0 0
      %904 = vmatprep.mubr.bf16.mxu0 0
      %905 = vmatmul.mubr.bf16.gmra.mrb[0].mxu0 %v849
      %v906 = vpop.f32.mrb[0].mxu0
      %v907 = vadd.f32 %v840, %v906
      %v908 = vpop.f32.mrb[0].mxu0
      %v909 = vpop.f32.mrb[0].mxu0
      %v910 = vadd.f32 %v840, %v909
      %v911 = vpop.f32.mrb[0].mxu0
      %912 = vmatprep.mubr.bf16.mxu0 0
      %913 = vmatmul.mubr.bf16.gmra.mrb[0].mxu0 %v852
      %v914 = vpop.f32.mrb[0].mxu0
      %v915 = vadd.f32 %v840, %v914
      %v916 = vpop.f32.mrb[0].mxu0
      %v917 = vpop.f32.mrb[0].mxu0
      %v918 = vadd.f32 %v840, %v917
      %v919 = vpop.f32.mrb[0].mxu0
      %920 = vmatprep.mubr.bf16.mxu0 0
      %921 = vmatmul.mubr.bf16.gmra.mrb[0].mxu0 %v855
      %v922 = vpop.f32.mrb[0].mxu0
      %v923 = vadd.f32 %v840, %v922
      %v924 = vpop.f32.mrb[0].mxu0
      %v925 = vpop.f32.mrb[0].mxu0
      %v926 = vadd.f32 %v840, %v925
      %v927 = vpop.f32.mrb[0].mxu0
      %928 = vmatprep.mubr.bf16.mxu0 0
      %929 = vmatmul.mubr.bf16.gmra.mrb[0].mxu0 %v858
      %v930 = vpop.f32.mrb[0].mxu0
      %v931 = vadd.f32 %v840, %v930
      %v932 = vpop.f32.mrb[0].mxu0
      %v933 = vpop.f32.mrb[0].mxu0
      %v934 = vadd.f32 %v840, %v933
      %v935 = vpop.f32.mrb[0].mxu0
      %936 = vmatprep.mubr.bf16.mxu0 0
      %937 = vmatmul.mubr.bf16.gmra.mrb[0].mxu0 %v861
      %v938 = vpop.f32.mrb[0].mxu0
      %v939 = vadd.f32 %v840, %v938
      %v940 = vpop.f32.mrb[0].mxu0
      %v941 = vpop.f32.mrb[0].mxu0
      %v942 = vadd.f32 %v840, %v941
      %v943 = vpop.f32.mrb[0].mxu0
      %944 = vmatprep.mubr.bf16.mxu0 0
      %945 = vmatmul.mubr.bf16.gmra.mrb[0].mxu0 %v864
      %v946 = vpop.f32.mrb[0].mxu0
      %v947 = vadd.f32 %v840, %v946
      %v948 = vpop.f32.mrb[0].mxu0
      %v949 = vpop.f32.mrb[0].mxu0
      %v950 = vadd.f32 %v840, %v949
      %v951 = vpop.f32.mrb[0].mxu0
      %952 = vmatprep.mubr.bf16.mxu0 0
      %953 = vmatmul.mubr.bf16.gmra.mrb[0].mxu0 %v867
      %v954 = vpop.f32.mrb[0].mxu0
      %v955 = vadd.f32 %v840, %v954
      %v956 = vpop.f32.mrb[0].mxu0
      %v957 = vpop.f32.mrb[0].mxu0
      %v958 = vadd.f32 %v840, %v957
      %v959 = vpop.f32.mrb[0].mxu0
      %960 = vmatprep.mubr.bf16.mxu0 0
      %961 = vmatmul.mubr.bf16.gmra.mrb[0].mxu0 %v870
      %v962 = vpop.f32.mrb[0].mxu0
      %v963 = vadd.f32 %v840, %v962
      %v964 = vpop.f32.mrb[0].mxu0
      %v965 = vpop.f32.mrb[0].mxu0
      %v966 = vadd.f32 %v840, %v965
      %v967 = vpop.f32.mrb[0].mxu0
      %968 = vdwg.mxu0
      %v969 = vmul.f32 %v907, 0.5
      %v970 = vmul.f32 %v910, 0.5
      %v971 = vmul.f32 %v915, 0.5
      %v972 = vmul.f32 %v918, 0.5
      %v973 = vmul.f32 %v923, 0.5
      %v974 = vmul.f32 %v926, 0.5
      %v975 = vmul.f32 %v931, 0.5
      %v976 = vmul.f32 %v934, 0.5
      %v977 = vmul.f32 %v939, 0.5
      %v978 = vmul.f32 %v942, 0.5
      %v979 = vmul.f32 %v947, 0.5
      %v980 = vmul.f32 %v950, 0.5
      %v981 = vmul.f32 %v955, 0.5
      %v982 = vmul.f32 %v958, 0.5
      %v983 = vmul.f32 %v963, 0.5
      %v984 = vmul.f32 %v966, 0.5
      %v985 = vmul.f32 %v907, 0.70710677
      %v986 = vmul.f32 %v910, 0.70710677
      %v987 = vmul.f32 %v915, 0.70710677
      %v988 = vmul.f32 %v918, 0.70710677
      %v989 = vmul.f32 %v923, 0.70710677
      %v990 = vmul.f32 %v926, 0.70710677
      %v991 = vmul.f32 %v931, 0.70710677
      %v992 = vmul.f32 %v934, 0.70710677
      %v993 = vmul.f32 %v939, 0.70710677
      %v994 = vmul.f32 %v942, 0.70710677
      %v995 = vmul.f32 %v947, 0.70710677
      %v996 = vmul.f32 %v950, 0.70710677
      %v997 = vmul.f32 %v955, 0.70710677
      %v998 = vmul.f32 %v958, 0.70710677
      %v999 = vmul.f32 %v963, 0.70710677
      %v1000 = vmul.f32 %v966, 0.70710677
      %v1001 = vand.u32 2147483647, %v985
      %v1002 = vand.u32 2147483647, %v986
      %v1003 = vand.u32 2147483647, %v987
      %v1004 = vand.u32 2147483647, %v988
      %v1005 = vand.u32 2147483647, %v989
      %v1006 = vand.u32 2147483647, %v990
      %v1007 = vand.u32 2147483647, %v991
      %v1008 = vand.u32 2147483647, %v992
      %v1009 = vand.u32 2147483647, %v993
      %v1010 = vand.u32 2147483647, %v994
      %v1011 = vand.u32 2147483647, %v995
      %v1012 = vand.u32 2147483647, %v996
      %v1013 = vand.u32 2147483647, %v997
      %v1014 = vand.u32 2147483647, %v998
      %v1015 = vand.u32 2147483647, %v999
      %v1016 = vand.u32 2147483647, %v1000
      %v1017 = vmul.f32 %v1001, 0.3275911
      %v1018 = vmul.f32 %v1002, 0.3275911
      %v1019 = vmul.f32 %v1003, 0.3275911
      %v1020 = vmul.f32 %v1004, 0.3275911
      %v1021 = vmul.f32 %v1005, 0.3275911
      %v1022 = vmul.f32 %v1006, 0.3275911
      %v1023 = vmul.f32 %v1007, 0.3275911
      %v1024 = vmul.f32 %v1008, 0.3275911
      %v1025 = vmul.f32 %v1009, 0.3275911
      %v1026 = vmul.f32 %v1010, 0.3275911
      %v1027 = vmul.f32 %v1011, 0.3275911
      %v1028 = vmul.f32 %v1012, 0.3275911
      %v1029 = vmul.f32 %v1013, 0.3275911
      %v1030 = vmul.f32 %v1014, 0.3275911
      %v1031 = vmul.f32 %v1015, 0.3275911
      %v1032 = vmul.f32 %v1016, 0.3275911
      %v1033 = vadd.f32 %v1017, 1.0
      %v1034 = vadd.f32 %v1018, 1.0
      %v1035 = vadd.f32 %v1019, 1.0
      %v1036 = vadd.f32 %v1020, 1.0
      %v1037 = vadd.f32 %v1021, 1.0
      %v1038 = vadd.f32 %v1022, 1.0
      %v1039 = vadd.f32 %v1023, 1.0
      %v1040 = vadd.f32 %v1024, 1.0
      %v1041 = vadd.f32 %v1025, 1.0
      %v1042 = vadd.f32 %v1026, 1.0
      %v1043 = vadd.f32 %v1027, 1.0
      %v1044 = vadd.f32 %v1028, 1.0
      %v1045 = vadd.f32 %v1029, 1.0
      %v1046 = vadd.f32 %v1030, 1.0
      %v1047 = vadd.f32 %v1031, 1.0
      %v1048 = vadd.f32 %v1032, 1.0
      %v1049 = vrcp.pop %v1033
      %v1050 = vmul.f32 1.0, %v1049
      %v1051 = vrcp.pop %v1034
      %v1052 = vmul.f32 1.0, %v1051
      %v1053 = vrcp.pop %v1035
      %v1054 = vmul.f32 1.0, %v1053
      %v1055 = vrcp.pop %v1036
      %v1056 = vmul.f32 1.0, %v1055
      %v1057 = vrcp.pop %v1037
      %v1058 = vmul.f32 1.0, %v1057
      %v1059 = vrcp.pop %v1038
      %v1060 = vmul.f32 1.0, %v1059
      %v1061 = vrcp.pop %v1039
      %v1062 = vmul.f32 1.0, %v1061
      %v1063 = vrcp.pop %v1040
      %v1064 = vmul.f32 1.0, %v1063
      %v1065 = vrcp.pop %v1041
      %v1066 = vmul.f32 1.0, %v1065
      %v1067 = vrcp.pop %v1042
      %v1068 = vmul.f32 1.0, %v1067
      %v1069 = vrcp.pop %v1043
      %v1070 = vmul.f32 1.0, %v1069
      %v1071 = vrcp.pop %v1044
      %v1072 = vmul.f32 1.0, %v1071
      %v1073 = vrcp.pop %v1045
      %v1074 = vmul.f32 1.0, %v1073
      %v1075 = vrcp.pop %v1046
      %v1076 = vmul.f32 1.0, %v1075
      %v1077 = vrcp.pop %v1047
      %v1078 = vmul.f32 1.0, %v1077
      %v1079 = vrcp.pop %v1048
      %v1080 = vmul.f32 1.0, %v1079
      %v1081 = vmul.f32 %v1050, 1.0614054
      %v1082 = vmul.f32 %v1052, 1.0614054
      %v1083 = vmul.f32 %v1054, 1.0614054
      %v1084 = vmul.f32 %v1056, 1.0614054
      %v1085 = vmul.f32 %v1058, 1.0614054
      %v1086 = vmul.f32 %v1060, 1.0614054
      %v1087 = vmul.f32 %v1062, 1.0614054
      %v1088 = vmul.f32 %v1064, 1.0614054
      %v1089 = vmul.f32 %v1066, 1.0614054
      %v1090 = vmul.f32 %v1068, 1.0614054
      %v1091 = vmul.f32 %v1070, 1.0614054
      %v1092 = vmul.f32 %v1072, 1.0614054
      %v1093 = vmul.f32 %v1074, 1.0614054
      %v1094 = vmul.f32 %v1076, 1.0614054
      %v1095 = vmul.f32 %v1078, 1.0614054
      %v1096 = vmul.f32 %v1080, 1.0614054
      %v1097 = vadd.f32 %v1081, -1.4531521
      %v1098 = vadd.f32 %v1082, -1.4531521
      %v1099 = vadd.f32 %v1083, -1.4531521
      %v1100 = vadd.f32 %v1084, -1.4531521
      %v1101 = vadd.f32 %v1085, -1.4531521
      %v1102 = vadd.f32 %v1086, -1.4531521
      %v1103 = vadd.f32 %v1087, -1.4531521
      %v1104 = vadd.f32 %v1088, -1.4531521
      %v1105 = vadd.f32 %v1089, -1.4531521
      %v1106 = vadd.f32 %v1090, -1.4531521
      %v1107 = vadd.f32 %v1091, -1.4531521
      %v1108 = vadd.f32 %v1092, -1.4531521
      %v1109 = vadd.f32 %v1093, -1.4531521
      %v1110 = vadd.f32 %v1094, -1.4531521
      %v1111 = vadd.f32 %v1095, -1.4531521
      %v1112 = vadd.f32 %v1096, -1.4531521
      %v1113 = vmul.f32 %v1097, %v1050
      %v1114 = vmul.f32 %v1098, %v1052
      %v1115 = vmul.f32 %v1099, %v1054
      %v1116 = vmul.f32 %v1100, %v1056
      %v1117 = vmul.f32 %v1101, %v1058
      %v1118 = vmul.f32 %v1102, %v1060
      %v1119 = vmul.f32 %v1103, %v1062
      %v1120 = vmul.f32 %v1104, %v1064
      %v1121 = vmul.f32 %v1105, %v1066
      %v1122 = vmul.f32 %v1106, %v1068
      %v1123 = vmul.f32 %v1107, %v1070
      %v1124 = vmul.f32 %v1108, %v1072
      %v1125 = vmul.f32 %v1109, %v1074
      %v1126 = vmul.f32 %v1110, %v1076
      %v1127 = vmul.f32 %v1111, %v1078
      %v1128 = vmul.f32 %v1112, %v1080
      %v1129 = vadd.f32 %v1113, 1.4214138
      %v1130 = vadd.f32 %v1114, 1.4214138
      %v1131 = vadd.f32 %v1115, 1.4214138
      %v1132 = vadd.f32 %v1116, 1.4214138
      %v1133 = vadd.f32 %v1117, 1.4214138
      %v1134 = vadd.f32 %v1118, 1.4214138
      %v1135 = vadd.f32 %v1119, 1.4214138
      %v1136 = vadd.f32 %v1120, 1.4214138
      %v1137 = vadd.f32 %v1121, 1.4214138
      %v1138 = vadd.f32 %v1122, 1.4214138
      %v1139 = vadd.f32 %v1123, 1.4214138
      %v1140 = vadd.f32 %v1124, 1.4214138
      %v1141 = vadd.f32 %v1125, 1.4214138
      %v1142 = vadd.f32 %v1126, 1.4214138
      %v1143 = vadd.f32 %v1127, 1.4214138
      %v1144 = vadd.f32 %v1128, 1.4214138
      %v1145 = vmul.f32 %v1129, %v1050
      %v1146 = vmul.f32 %v1130, %v1052
      %v1147 = vmul.f32 %v1131, %v1054
      %v1148 = vmul.f32 %v1132, %v1056
      %v1149 = vmul.f32 %v1133, %v1058
      %v1150 = vmul.f32 %v1134, %v1060
      %v1151 = vmul.f32 %v1135, %v1062
      %v1152 = vmul.f32 %v1136, %v1064
      %v1153 = vmul.f32 %v1137, %v1066
      %v1154 = vmul.f32 %v1138, %v1068
      %v1155 = vmul.f32 %v1139, %v1070
      %v1156 = vmul.f32 %v1140, %v1072
      %v1157 = vmul.f32 %v1141, %v1074
      %v1158 = vmul.f32 %v1142, %v1076
      %v1159 = vmul.f32 %v1143, %v1078
      %v1160 = vmul.f32 %v1144, %v1080
      %v1161 = vadd.f32 %v1145, -0.28449672
      %v1162 = vadd.f32 %v1146, -0.28449672
      %v1163 = vadd.f32 %v1147, -0.28449672
      %v1164 = vadd.f32 %v1148, -0.28449672
      %v1165 = vadd.f32 %v1149, -0.28449672
      %v1166 = vadd.f32 %v1150, -0.28449672
      %v1167 = vadd.f32 %v1151, -0.28449672
      %v1168 = vadd.f32 %v1152, -0.28449672
      %v1169 = vadd.f32 %v1153, -0.28449672
      %v1170 = vadd.f32 %v1154, -0.28449672
      %v1171 = vadd.f32 %v1155, -0.28449672
      %v1172 = vadd.f32 %v1156, -0.28449672
      %v1173 = vadd.f32 %v1157, -0.28449672
      %v1174 = vadd.f32 %v1158, -0.28449672
      %v1175 = vadd.f32 %v1159, -0.28449672
      %v1176 = vadd.f32 %v1160, -0.28449672
      %v1177 = vmul.f32 %v1161, %v1050
      %v1178 = vmul.f32 %v1162, %v1052
      %v1179 = vmul.f32 %v1163, %v1054
      %v1180 = vmul.f32 %v1164, %v1056
      %v1181 = vmul.f32 %v1165, %v1058
      %v1182 = vmul.f32 %v1166, %v1060
      %v1183 = vmul.f32 %v1167, %v1062
      %v1184 = vmul.f32 %v1168, %v1064
      %v1185 = vmul.f32 %v1169, %v1066
      %v1186 = vmul.f32 %v1170, %v1068
      %v1187 = vmul.f32 %v1171, %v1070
      %v1188 = vmul.f32 %v1172, %v1072
      %v1189 = vmul.f32 %v1173, %v1074
      %v1190 = vmul.f32 %v1174, %v1076
      %v1191 = vmul.f32 %v1175, %v1078
      %v1192 = vmul.f32 %v1176, %v1080
      %v1193 = vadd.f32 %v1177, 0.2548296
      %v1194 = vadd.f32 %v1178, 0.2548296
      %v1195 = vadd.f32 %v1179, 0.2548296
      %v1196 = vadd.f32 %v1180, 0.2548296
      %v1197 = vadd.f32 %v1181, 0.2548296
      %v1198 = vadd.f32 %v1182, 0.2548296
      %v1199 = vadd.f32 %v1183, 0.2548296
      %v1200 = vadd.f32 %v1184, 0.2548296
      %v1201 = vadd.f32 %v1185, 0.2548296
      %v1202 = vadd.f32 %v1186, 0.2548296
      %v1203 = vadd.f32 %v1187, 0.2548296
      %v1204 = vadd.f32 %v1188, 0.2548296
      %v1205 = vadd.f32 %v1189, 0.2548296
      %v1206 = vadd.f32 %v1190, 0.2548296
      %v1207 = vadd.f32 %v1191, 0.2548296
      %v1208 = vadd.f32 %v1192, 0.2548296
      %v1209 = vmul.f32 %v1193, %v1050
      %v1210 = vmul.f32 %v1194, %v1052
      %v1211 = vmul.f32 %v1195, %v1054
      %v1212 = vmul.f32 %v1196, %v1056
      %v1213 = vmul.f32 %v1197, %v1058
      %v1214 = vmul.f32 %v1198, %v1060
      %v1215 = vmul.f32 %v1199, %v1062
      %v1216 = vmul.f32 %v1200, %v1064
      %v1217 = vmul.f32 %v1201, %v1066
      %v1218 = vmul.f32 %v1202, %v1068
      %v1219 = vmul.f32 %v1203, %v1070
      %v1220 = vmul.f32 %v1204, %v1072
      %v1221 = vmul.f32 %v1205, %v1074
      %v1222 = vmul.f32 %v1206, %v1076
      %v1223 = vmul.f32 %v1207, %v1078
      %v1224 = vmul.f32 %v1208, %v1080
      %v1225 = vsub.f32 0.0, %v1001
      %v1226 = vsub.f32 0.0, %v1002
      %v1227 = vsub.f32 0.0, %v1003
      %v1228 = vsub.f32 0.0, %v1004
      %v1229 = vsub.f32 0.0, %v1005
      %v1230 = vsub.f32 0.0, %v1006
      %v1231 = vsub.f32 0.0, %v1007
      %v1232 = vsub.f32 0.0, %v1008
      %v1233 = vsub.f32 0.0, %v1009
      %v1234 = vsub.f32 0.0, %v1010
      %v1235 = vsub.f32 0.0, %v1011
      %v1236 = vsub.f32 0.0, %v1012
      %v1237 = vsub.f32 0.0, %v1013
      %v1238 = vsub.f32 0.0, %v1014
      %v1239 = vsub.f32 0.0, %v1015
      %v1240 = vsub.f32 0.0, %v1016
      %v1241 = vmul.f32 %v1225, %v1001
      %v1242 = vmul.f32 %v1226, %v1002
      %v1243 = vmul.f32 %v1227, %v1003
      %v1244 = vmul.f32 %v1228, %v1004
      %v1245 = vmul.f32 %v1229, %v1005
      %v1246 = vmul.f32 %v1230, %v1006
      %v1247 = vmul.f32 %v1231, %v1007
      %v1248 = vmul.f32 %v1232, %v1008
      %v1249 = vmul.f32 %v1233, %v1009
      %v1250 = vmul.f32 %v1234, %v1010
      %v1251 = vmul.f32 %v1235, %v1011
      %v1252 = vmul.f32 %v1236, %v1012
      %v1253 = vmul.f32 %v1237, %v1013
      %v1254 = vmul.f32 %v1238, %v1014
      %v1255 = vmul.f32 %v1239, %v1015
      %v1256 = vmul.f32 %v1240, %v1016
      %v1257 = vmul.f32 %v1241, 1.442695
      %v1258 = vpow.pop %v1257
      %v1259 = vmul.f32 %v1242, 1.442695
      %v1260 = vpow.pop %v1259
      %v1261 = vmul.f32 %v1243, 1.442695
      %v1262 = vpow.pop %v1261
      %v1263 = vmul.f32 %v1244, 1.442695
      %v1264 = vpow.pop %v1263
      %v1265 = vmul.f32 %v1245, 1.442695
      %v1266 = vpow.pop %v1265
      %v1267 = vmul.f32 %v1246, 1.442695
      %v1268 = vpow.pop %v1267
      %v1269 = vmul.f32 %v1247, 1.442695
      %v1270 = vpow.pop %v1269
      %v1271 = vmul.f32 %v1248, 1.442695
      %v1272 = vpow.pop %v1271
      %v1273 = vmul.f32 %v1249, 1.442695
      %v1274 = vpow.pop %v1273
      %v1275 = vmul.f32 %v1250, 1.442695
      %v1276 = vpow.pop %v1275
      %v1277 = vmul.f32 %v1251, 1.442695
      %v1278 = vpow.pop %v1277
      %v1279 = vmul.f32 %v1252, 1.442695
      %v1280 = vpow.pop %v1279
      %v1281 = vmul.f32 %v1253, 1.442695
      %v1282 = vpow.pop %v1281
      %v1283 = vmul.f32 %v1254, 1.442695
      %v1284 = vpow.pop %v1283
      %v1285 = vmul.f32 %v1255, 1.442695
      %v1286 = vpow.pop %v1285
      %v1287 = vmul.f32 %v1256, 1.442695
      %v1288 = vpow.pop %v1287
      %v1289 = vmul.f32 %v1209, %v1258
      %v1290 = vmul.f32 %v1210, %v1260
      %v1291 = vmul.f32 %v1211, %v1262
      %v1292 = vmul.f32 %v1212, %v1264
      %v1293 = vmul.f32 %v1213, %v1266
      %v1294 = vmul.f32 %v1214, %v1268
      %v1295 = vmul.f32 %v1215, %v1270
      %v1296 = vmul.f32 %v1216, %v1272
      %v1297 = vmul.f32 %v1217, %v1274
      %v1298 = vmul.f32 %v1218, %v1276
      %v1299 = vmul.f32 %v1219, %v1278
      %v1300 = vmul.f32 %v1220, %v1280
      %v1301 = vmul.f32 %v1221, %v1282
      %v1302 = vmul.f32 %v1222, %v1284
      %v1303 = vmul.f32 %v1223, %v1286
      %v1304 = vmul.f32 %v1224, %v1288
      %v1305 = vsub.f32 1.0, %v1289
      %v1306 = vsub.f32 1.0, %v1290
      %v1307 = vsub.f32 1.0, %v1291
      %v1308 = vsub.f32 1.0, %v1292
      %v1309 = vsub.f32 1.0, %v1293
      %v1310 = vsub.f32 1.0, %v1294
      %v1311 = vsub.f32 1.0, %v1295
      %v1312 = vsub.f32 1.0, %v1296
      %v1313 = vsub.f32 1.0, %v1297
      %v1314 = vsub.f32 1.0, %v1298
      %v1315 = vsub.f32 1.0, %v1299
      %v1316 = vsub.f32 1.0, %v1300
      %v1317 = vsub.f32 1.0, %v1301
      %v1318 = vsub.f32 1.0, %v1302
      %v1319 = vsub.f32 1.0, %v1303
      %v1320 = vsub.f32 1.0, %v1304
      %vm1321 = vcmp.ge.f32.partialorder %v985, 0.0
      %vm1322 = vcmp.ge.f32.partialorder %v986, 0.0
      %vm1323 = vcmp.ge.f32.partialorder %v987, 0.0
      %vm1324 = vcmp.ge.f32.partialorder %v988, 0.0
      %vm1325 = vcmp.ge.f32.partialorder %v989, 0.0
      %vm1326 = vcmp.ge.f32.partialorder %v990, 0.0
      %vm1327 = vcmp.ge.f32.partialorder %v991, 0.0
      %vm1328 = vcmp.ge.f32.partialorder %v992, 0.0
      %vm1329 = vcmp.ge.f32.partialorder %v993, 0.0
      %vm1330 = vcmp.ge.f32.partialorder %v994, 0.0
      %vm1331 = vcmp.ge.f32.partialorder %v995, 0.0
      %vm1332 = vcmp.ge.f32.partialorder %v996, 0.0
      %vm1333 = vcmp.ge.f32.partialorder %v997, 0.0
      %vm1334 = vcmp.ge.f32.partialorder %v998, 0.0
      %vm1335 = vcmp.ge.f32.partialorder %v999, 0.0
      %vm1336 = vcmp.ge.f32.partialorder %v1000, 0.0
      %v1337 = vsub.f32 0.0, %v1305
      %v1338 = vsub.f32 0.0, %v1306
      %v1339 = vsub.f32 0.0, %v1307
      %v1340 = vsub.f32 0.0, %v1308
      %v1341 = vsub.f32 0.0, %v1309
      %v1342 = vsub.f32 0.0, %v1310
      %v1343 = vsub.f32 0.0, %v1311
      %v1344 = vsub.f32 0.0, %v1312
      %v1345 = vsub.f32 0.0, %v1313
      %v1346 = vsub.f32 0.0, %v1314
      %v1347 = vsub.f32 0.0, %v1315
      %v1348 = vsub.f32 0.0, %v1316
      %v1349 = vsub.f32 0.0, %v1317
      %v1350 = vsub.f32 0.0, %v1318
      %v1351 = vsub.f32 0.0, %v1319
      %v1352 = vsub.f32 0.0, %v1320
      %v1353 = vsel %vm1321, %v1305, %v1337
      %v1354 = vsel %vm1322, %v1306, %v1338
      %v1355 = vsel %vm1323, %v1307, %v1339
      %v1356 = vsel %vm1324, %v1308, %v1340
      %v1357 = vsel %vm1325, %v1309, %v1341
      %v1358 = vsel %vm1326, %v1310, %v1342
      %v1359 = vsel %vm1327, %v1311, %v1343
      %v1360 = vsel %vm1328, %v1312, %v1344
      %v1361 = vsel %vm1329, %v1313, %v1345
      %v1362 = vsel %vm1330, %v1314, %v1346
      %v1363 = vsel %vm1331, %v1315, %v1347
      %v1364 = vsel %vm1332, %v1316, %v1348
      %v1365 = vsel %vm1333, %v1317, %v1349
      %v1366 = vsel %vm1334, %v1318, %v1350
      %v1367 = vsel %vm1335, %v1319, %v1351
      %v1368 = vsel %vm1336, %v1320, %v1352
      %v1369 = vadd.f32 %v1353, 1.0
      %v1370 = vadd.f32 %v1354, 1.0
      %v1371 = vadd.f32 %v1355, 1.0
      %v1372 = vadd.f32 %v1356, 1.0
      %v1373 = vadd.f32 %v1357, 1.0
      %v1374 = vadd.f32 %v1358, 1.0
      %v1375 = vadd.f32 %v1359, 1.0
      %v1376 = vadd.f32 %v1360, 1.0
      %v1377 = vadd.f32 %v1361, 1.0
      %v1378 = vadd.f32 %v1362, 1.0
      %v1379 = vadd.f32 %v1363, 1.0
      %v1380 = vadd.f32 %v1364, 1.0
      %v1381 = vadd.f32 %v1365, 1.0
      %v1382 = vadd.f32 %v1366, 1.0
      %v1383 = vadd.f32 %v1367, 1.0
      %v1384 = vadd.f32 %v1368, 1.0
      %v1385 = vmul.f32 %v969, %v1369
      %v1386 = vmul.f32 %v970, %v1370
      %v1387 = vmul.f32 %v971, %v1371
      %v1388 = vmul.f32 %v972, %v1372
      %v1389 = vmul.f32 %v973, %v1373
      %v1390 = vmul.f32 %v974, %v1374
      %v1391 = vmul.f32 %v975, %v1375
      %v1392 = vmul.f32 %v976, %v1376
      %v1393 = vmul.f32 %v977, %v1377
      %v1394 = vmul.f32 %v978, %v1378
      %v1395 = vmul.f32 %v979, %v1379
      %v1396 = vmul.f32 %v980, %v1380
      %v1397 = vmul.f32 %v981, %v1381
      %v1398 = vmul.f32 %v982, %v1382
      %v1399 = vmul.f32 %v983, %v1383
      %v1400 = vmul.f32 %v984, %v1384
      %v1401 = vld [vmem:[%s5] sm:$0xff]
      %v1402 = vld [vmem:[%s5 + $0x8] sm:$0xff]
      %v1403 = vld [vmem:[%s5 + $0x10] sm:$0xff]
      %v1404 = vld [vmem:[%s5 + $0x18] sm:$0xff]
      %v1405 = vld [vmem:[%s5 + $0x20] sm:$0xff]
      %v1406 = vld [vmem:[%s5 + $0x28] sm:$0xff]
      %v1407 = vld [vmem:[%s5 + $0x30] sm:$0xff]
      %v1408 = vld [vmem:[%s5 + $0x38] sm:$0xff]
      %v1409 = vld [vmem:[%s5 + $0x40] sm:$0xff]
      %v1410 = vld [vmem:[%s5 + $0x48] sm:$0xff]
      %v1411 = vld [vmem:[%s5 + $0x50] sm:$0xff]
      %v1412 = vld [vmem:[%s5 + $0x58] sm:$0xff]
      %v1413 = vld [vmem:[%s5 + $0x60] sm:$0xff]
      %v1414 = vld [vmem:[%s5 + $0x68] sm:$0xff]
      %v1415 = vld [vmem:[%s5 + $0x70] sm:$0xff]
      %v1416 = vld [vmem:[%s5 + $0x78] sm:$0xff]
      %v1417 = vmul.f32 %v1401, %v1385
      %v1418 = vmul.f32 %v1402, %v1386
      %v1419 = vmul.f32 %v1403, %v1387
      %v1420 = vmul.f32 %v1404, %v1388
      %v1421 = vmul.f32 %v1405, %v1389
      %v1422 = vmul.f32 %v1406, %v1390
      %v1423 = vmul.f32 %v1407, %v1391
      %v1424 = vmul.f32 %v1408, %v1392
      %v1425 = vmul.f32 %v1409, %v1393
      %v1426 = vmul.f32 %v1410, %v1394
      %v1427 = vmul.f32 %v1411, %v1395
      %v1428 = vmul.f32 %v1412, %v1396
      %v1429 = vmul.f32 %v1413, %v1397
      %v1430 = vmul.f32 %v1414, %v1398
      %v1431 = vmul.f32 %v1415, %v1399
      %v1432 = vmul.f32 %v1416, %v1400
      %s1433 = scalar_lea.vmem %s5, 128
      %v1434 = vld [vmem:[%s1433] sm:$0xff]
      %v1435 = vld [vmem:[%s1433 + $0x8] sm:$0xff]
      %v1436 = vld [vmem:[%s1433 + $0x10] sm:$0xff]
      %v1437 = vld [vmem:[%s1433 + $0x18] sm:$0xff]
      %v1438 = vld [vmem:[%s1433 + $0x20] sm:$0xff]
      %v1439 = vld [vmem:[%s1433 + $0x28] sm:$0xff]
      %v1440 = vld [vmem:[%s1433 + $0x30] sm:$0xff]
      %v1441 = vld [vmem:[%s1433 + $0x38] sm:$0xff]
      %v1442 = vld [vmem:[%s1433 + $0x40] sm:$0xff]
      %v1443 = vld [vmem:[%s1433 + $0x48] sm:$0xff]
      %v1444 = vld [vmem:[%s1433 + $0x50] sm:$0xff]
      %v1445 = vld [vmem:[%s1433 + $0x58] sm:$0xff]
      %v1446 = vld [vmem:[%s1433 + $0x60] sm:$0xff]
      %v1447 = vld [vmem:[%s1433 + $0x68] sm:$0xff]
      %v1448 = vld [vmem:[%s1433 + $0x70] sm:$0xff]
      %v1449 = vld [vmem:[%s1433 + $0x78] sm:$0xff]
      %v1450 = vmul.f32 %v1434, %v1393
      %v1451 = vmul.f32 %v1435, %v1394
      %v1452 = vmul.f32 %v1436, %v1395
      %v1453 = vmul.f32 %v1437, %v1396
      %v1454 = vmul.f32 %v1438, %v1397
      %v1455 = vmul.f32 %v1439, %v1398
      %v1456 = vmul.f32 %v1440, %v1399
      %v1457 = vmul.f32 %v1441, %v1400
      %v1458 = vmul.f32 %v1442, %v1385
      %v1459 = vmul.f32 %v1443, %v1386
      %v1460 = vmul.f32 %v1444, %v1387
      %v1461 = vmul.f32 %v1445, %v1388
      %v1462 = vmul.f32 %v1446, %v1389
      %v1463 = vmul.f32 %v1447, %v1390
      %v1464 = vmul.f32 %v1448, %v1391
      %v1465 = vmul.f32 %v1449, %v1392
      %v1466 = vadd.f32 %v1417, %v1450
      %v1467 = vadd.f32 %v1418, %v1451
      %v1468 = vadd.f32 %v1419, %v1452
      %v1469 = vadd.f32 %v1420, %v1453
      %v1470 = vadd.f32 %v1421, %v1454
      %v1471 = vadd.f32 %v1422, %v1455
      %v1472 = vadd.f32 %v1423, %v1456
      %v1473 = vadd.f32 %v1424, %v1457
      %v1474 = vadd.f32 %v1425, %v1458
      %v1475 = vadd.f32 %v1426, %v1459
      %v1476 = vadd.f32 %v1427, %v1460
      %v1477 = vadd.f32 %v1428, %v1461
      %v1478 = vadd.f32 %v1429, %v1462
      %v1479 = vadd.f32 %v1430, %v1463
      %v1480 = vadd.f32 %v1431, %v1464
      %v1481 = vadd.f32 %v1432, %v1465
      %v1482 = vld [vmem:[%s6] sm:$0xff]
      %v1483 = vld [vmem:[%s6 + $0x8] sm:$0xff]
      %v1484 = vld [vmem:[%s6 + $0x10] sm:$0xff]
      %v1485 = vld [vmem:[%s6 + $0x18] sm:$0xff]
      %v1486 = vld [vmem:[%s6 + $0x20] sm:$0xff]
      %v1487 = vld [vmem:[%s6 + $0x28] sm:$0xff]
      %v1488 = vld [vmem:[%s6 + $0x30] sm:$0xff]
      %v1489 = vld [vmem:[%s6 + $0x38] sm:$0xff]
      %v1490 = vld [vmem:[%s6 + $0x40] sm:$0xff]
      %v1491 = vld [vmem:[%s6 + $0x48] sm:$0xff]
      %v1492 = vld [vmem:[%s6 + $0x50] sm:$0xff]
      %v1493 = vld [vmem:[%s6 + $0x58] sm:$0xff]
      %v1494 = vld [vmem:[%s6 + $0x60] sm:$0xff]
      %v1495 = vld [vmem:[%s6 + $0x68] sm:$0xff]
      %v1496 = vld [vmem:[%s6 + $0x70] sm:$0xff]
      %v1497 = vld [vmem:[%s6 + $0x78] sm:$0xff]
      %v1498 = vadd.f32 %v1466, %v1482
      %v1499 = vadd.f32 %v1467, %v1483
      %v1500 = vadd.f32 %v1468, %v1484
      %v1501 = vadd.f32 %v1469, %v1485
      %v1502 = vadd.f32 %v1470, %v1486
      %v1503 = vadd.f32 %v1471, %v1487
      %v1504 = vadd.f32 %v1472, %v1488
      %v1505 = vadd.f32 %v1473, %v1489
      %v1506 = vadd.f32 %v1474, %v1490
      %v1507 = vadd.f32 %v1475, %v1491
      %v1508 = vadd.f32 %v1476, %v1492
      %v1509 = vadd.f32 %v1477, %v1493
      %v1510 = vadd.f32 %v1478, %v1494
      %v1511 = vadd.f32 %v1479, %v1495
      %v1512 = vadd.f32 %v1480, %v1496
      %v1513 = vadd.f32 %v1481, %v1497
      %1530 = vrot.lane.b32.xlu0 %v1385, 112
      %v1531 = vpop.permute.xlu0 %1530
      %1532 = vrot.lane.b32.xlu0 %v1386, 112
      %v1533 = vpop.permute.xlu0 %1532
      %1534 = vrot.lane.b32.xlu0 %v1387, 112
      %v1535 = vpop.permute.xlu0 %1534
      %1536 = vrot.lane.b32.xlu0 %v1388, 112
      %v1537 = vpop.permute.xlu0 %1536
      %1538 = vrot.lane.b32.xlu0 %v1389, 112
      %v1539 = vpop.permute.xlu0 %1538
      %1540 = vrot.lane.b32.xlu0 %v1390, 112
      %v1541 = vpop.permute.xlu0 %1540
      %1542 = vrot.lane.b32.xlu0 %v1391, 112
      %v1543 = vpop.permute.xlu0 %1542
      %1544 = vrot.lane.b32.xlu0 %v1392, 112
      %v1545 = vpop.permute.xlu0 %1544
      %1546 = vrot.lane.b32.xlu0 %v1393, 112
      %v1547 = vpop.permute.xlu0 %1546
      %1548 = vrot.lane.b32.xlu0 %v1394, 112
      %v1549 = vpop.permute.xlu0 %1548
      %1550 = vrot.lane.b32.xlu0 %v1395, 112
      %v1551 = vpop.permute.xlu0 %1550
      %1552 = vrot.lane.b32.xlu0 %v1396, 112
      %v1553 = vpop.permute.xlu0 %1552
      %1554 = vrot.lane.b32.xlu0 %v1397, 112
      %v1555 = vpop.permute.xlu0 %1554
      %1556 = vrot.lane.b32.xlu0 %v1398, 112
      %v1557 = vpop.permute.xlu0 %1556
      %1558 = vrot.lane.b32.xlu0 %v1399, 112
      %v1559 = vpop.permute.xlu0 %1558
      %1560 = vrot.lane.b32.xlu0 %v1400, 112
      %v1561 = vpop.permute.xlu0 %1560
      %v1578 = vmul.f32 %v1498, %v1531
      %v1579 = vmul.f32 %v1499, %v1533
      %v1580 = vmul.f32 %v1500, %v1535
      %v1581 = vmul.f32 %v1501, %v1537
      %v1582 = vmul.f32 %v1502, %v1539
      %v1583 = vmul.f32 %v1503, %v1541
      %v1584 = vmul.f32 %v1504, %v1543
      %v1585 = vmul.f32 %v1505, %v1545
      %v1586 = vmul.f32 %v1506, %v1547
      %v1587 = vmul.f32 %v1507, %v1549
      %v1588 = vmul.f32 %v1508, %v1551
      %v1589 = vmul.f32 %v1509, %v1553
      %v1590 = vmul.f32 %v1510, %v1555
      %v1591 = vmul.f32 %v1511, %v1557
      %v1592 = vmul.f32 %v1512, %v1559
      %v1593 = vmul.f32 %v1513, %v1561
      %v1594 = vpack.c.bf16 %v1579, %v1578
      %v1595 = vpack.c.bf16 %v1581, %v1580
      %v1596 = vpack.c.bf16 %v1583, %v1582
      %v1597 = vpack.c.bf16 %v1585, %v1584
      %v1598 = vpack.c.bf16 %v1587, %v1586
      %v1599 = vpack.c.bf16 %v1589, %v1588
      %v1600 = vpack.c.bf16 %v1591, %v1590
      %v1601 = vpack.c.bf16 %v1593, %v1592
      %v1602 = vld [vmem:[%s7] sm:$0xf]
      %v1603 = vld [vmem:[%s7 + $0x4] sm:$0xf]
      %v1604 = vld [vmem:[%s8] sm:$0x1]
      %v1606 = vlaneseq
      %v1607 = vshrl.u32 %v1606, 7
      %v1608 = vsub.s32 0, %v1607
      %v1609 = vrot.slane %v1604, %v1608
      %v1613 = vunpack.c.l.b16 %v1602
      %v1614 = vunpack.c.l.b16 %v1603
      %v1615 = vpack.c.b16 %v1614, %v1613
      %v1618 = vsel %vm571, %v1594, 0
      %v1621 = vsel %vm571, %v1595, 0
      %v1624 = vsel %vm571, %v1596, 0
      %v1627 = vsel %vm571, %v1597, 0
      %v1630 = vsel %vm571, %v1598, 0
      %v1633 = vsel %vm571, %v1599, 0
      %v1636 = vsel %vm571, %v1600, 0
      %v1639 = vsel %vm571, %v1601, 0
      %1641 = vmatprep.subr.bf16.mxu0 0
      %1642 = vmatpush1.bf16.msra.mxu0 %v1615
      %1643 = vmatprep.subr.bf16.mxu0 0
      %1644 = vmatpush1.bf16.msra.mxu0 0
      %1645 = vmatprep.subr.bf16.mxu0 0
      %1646 = vmatpush1.bf16.msra.mxu0 0
      %1647 = vmatprep.subr.bf16.mxu0 0
      %1648 = vmatpush1.bf16.msra.mxu0 0
      %1649 = vmatprep.subr.bf16.mxu0 0
      %1650 = vmatpush1.bf16.msra.mxu0 0
      %1651 = vmatprep.subr.bf16.mxu0 0
      %1652 = vmatpush1.bf16.msra.mxu0 0
      %1653 = vmatprep.subr.bf16.mxu0 0
      %1654 = vmatpush1.bf16.msra.mxu0 0
      %1655 = vmatprep.subr.bf16.mxu0 0
      %1656 = vmatpush1.bf16.msra.mxu0 0
      %1657 = vmatprep.subr.bf16.mxu0 0
      %1658 = vmatpush1.bf16.msra.mxu0 0
      %1659 = vmatprep.subr.bf16.mxu0 0
      %1660 = vmatpush1.bf16.msra.mxu0 0
      %1661 = vmatprep.subr.bf16.mxu0 0
      %1662 = vmatpush1.bf16.msra.mxu0 0
      %1663 = vmatprep.subr.bf16.mxu0 0
      %1664 = vmatpush1.bf16.msra.mxu0 0
      %1665 = vmatprep.subr.bf16.mxu0 0
      %1666 = vmatpush1.bf16.msra.mxu0 0
      %1667 = vmatprep.subr.bf16.mxu0 0
      %1668 = vmatpush1.bf16.msra.mxu0 0
      %1669 = vmatprep.subr.bf16.mxu0 0
      %1670 = vmatpush1.bf16.msra.mxu0 0
      %1671 = vmatprep.subr.bf16.mxu0 0
      %1672 = vmatpush1.bf16.msra.mxu0 0
      %1673 = vmatprep.mubr.bf16.mxu0 0
      %1674 = vmatmul.mubr.bf16.gmra.mrb[0].mxu0 %v1618
      %v1675 = vpop.f32.mrb[0].mxu0
      %v1676 = vadd.f32 %v1609, %v1675
      %v1677 = vpop.f32.mrb[0].mxu0
      %v1678 = vpop.f32.mrb[0].mxu0
      %v1679 = vadd.f32 %v1609, %v1678
      %v1680 = vpop.f32.mrb[0].mxu0
      %1681 = vmatprep.mubr.bf16.mxu0 0
      %1682 = vmatmul.mubr.bf16.gmra.mrb[0].mxu0 %v1621
      %v1683 = vpop.f32.mrb[0].mxu0
      %v1684 = vadd.f32 %v1609, %v1683
      %v1685 = vpop.f32.mrb[0].mxu0
      %v1686 = vpop.f32.mrb[0].mxu0
      %v1687 = vadd.f32 %v1609, %v1686
      %v1688 = vpop.f32.mrb[0].mxu0
      %1689 = vmatprep.mubr.bf16.mxu0 0
      %1690 = vmatmul.mubr.bf16.gmra.mrb[0].mxu0 %v1624
      %v1691 = vpop.f32.mrb[0].mxu0
      %v1692 = vadd.f32 %v1609, %v1691
      %v1693 = vpop.f32.mrb[0].mxu0
      %v1694 = vpop.f32.mrb[0].mxu0
      %v1695 = vadd.f32 %v1609, %v1694
      %v1696 = vpop.f32.mrb[0].mxu0
      %1697 = vmatprep.mubr.bf16.mxu0 0
      %1698 = vmatmul.mubr.bf16.gmra.mrb[0].mxu0 %v1627
      %v1699 = vpop.f32.mrb[0].mxu0
      %v1700 = vadd.f32 %v1609, %v1699
      %v1701 = vpop.f32.mrb[0].mxu0
      %v1702 = vpop.f32.mrb[0].mxu0
      %v1703 = vadd.f32 %v1609, %v1702
      %v1704 = vpop.f32.mrb[0].mxu0
      %1705 = vmatprep.mubr.bf16.mxu0 0
      %1706 = vmatmul.mubr.bf16.gmra.mrb[0].mxu0 %v1630
      %v1707 = vpop.f32.mrb[0].mxu0
      %v1708 = vadd.f32 %v1609, %v1707
      %v1709 = vpop.f32.mrb[0].mxu0
      %v1710 = vpop.f32.mrb[0].mxu0
      %v1711 = vadd.f32 %v1609, %v1710
      %v1712 = vpop.f32.mrb[0].mxu0
      %1713 = vmatprep.mubr.bf16.mxu0 0
      %1714 = vmatmul.mubr.bf16.gmra.mrb[0].mxu0 %v1633
      %v1715 = vpop.f32.mrb[0].mxu0
      %v1716 = vadd.f32 %v1609, %v1715
      %v1717 = vpop.f32.mrb[0].mxu0
      %v1718 = vpop.f32.mrb[0].mxu0
      %v1719 = vadd.f32 %v1609, %v1718
      %v1720 = vpop.f32.mrb[0].mxu0
      %1721 = vmatprep.mubr.bf16.mxu0 0
      %1722 = vmatmul.mubr.bf16.gmra.mrb[0].mxu0 %v1636
      %v1723 = vpop.f32.mrb[0].mxu0
      %v1724 = vadd.f32 %v1609, %v1723
      %v1725 = vpop.f32.mrb[0].mxu0
      %v1726 = vpop.f32.mrb[0].mxu0
      %v1727 = vadd.f32 %v1609, %v1726
      %v1728 = vpop.f32.mrb[0].mxu0
      %1729 = vmatprep.mubr.bf16.mxu0 0
      %1730 = vmatmul.mubr.bf16.gmra.mrb[0].mxu0 %v1639
      %v1731 = vpop.f32.mrb[0].mxu0
      %v1732 = vadd.f32 %v1609, %v1731
      %v1733 = vpop.f32.mrb[0].mxu0
      %v1734 = vpop.f32.mrb[0].mxu0
      %v1735 = vadd.f32 %v1609, %v1734
      %v1736 = vpop.f32.mrb[0].mxu0
      %1737 = vdwg.mxu0
      %v1738 = vld [vmem:[%s9] sm:$0x1]
      %v1739 = vld [vmem:[%s10] sm:$0x1]
      %v1741 = vlaneseq
      %v1742 = vshrl.u32 %v1741, 7
      %v1743 = vsub.s32 0, %v1742
      %v1744 = vrot.slane %v1738, %v1743
      %v1746 = vmul.f32 %v765, %v1744
      %v1747 = vmul.f32 %v766, %v1744
      %v1748 = vmul.f32 %v767, %v1744
      %v1749 = vmul.f32 %v768, %v1744
      %v1750 = vmul.f32 %v769, %v1744
      %v1751 = vmul.f32 %v770, %v1744
      %v1752 = vmul.f32 %v771, %v1744
      %v1753 = vmul.f32 %v772, %v1744
      %v1754 = vmul.f32 %v773, %v1744
      %v1755 = vmul.f32 %v774, %v1744
      %v1756 = vmul.f32 %v775, %v1744
      %v1757 = vmul.f32 %v776, %v1744
      %v1758 = vmul.f32 %v777, %v1744
      %v1759 = vmul.f32 %v778, %v1744
      %v1760 = vmul.f32 %v779, %v1744
      %v1761 = vmul.f32 %v780, %v1744
      %v1763 = vlaneseq
      %v1764 = vshrl.u32 %v1763, 7
      %v1765 = vsub.s32 0, %v1764
      %v1766 = vrot.slane %v1739, %v1765
      %v1768 = vadd.f32 %v1746, %v1766
      %v1769 = vadd.f32 %v1747, %v1766
      %v1770 = vadd.f32 %v1748, %v1766
      %v1771 = vadd.f32 %v1749, %v1766
      %v1772 = vadd.f32 %v1750, %v1766
      %v1773 = vadd.f32 %v1751, %v1766
      %v1774 = vadd.f32 %v1752, %v1766
      %v1775 = vadd.f32 %v1753, %v1766
      %v1776 = vadd.f32 %v1754, %v1766
      %v1777 = vadd.f32 %v1755, %v1766
      %v1778 = vadd.f32 %v1756, %v1766
      %v1779 = vadd.f32 %v1757, %v1766
      %v1780 = vadd.f32 %v1758, %v1766
      %v1781 = vadd.f32 %v1759, %v1766
      %v1782 = vadd.f32 %v1760, %v1766
      %v1783 = vadd.f32 %v1761, %v1766
      %v1784 = vpack.c.bf16 %v1769, %v1768
      %v1785 = vpack.c.bf16 %v1771, %v1770
      %v1786 = vpack.c.bf16 %v1773, %v1772
      %v1787 = vpack.c.bf16 %v1775, %v1774
      %v1788 = vpack.c.bf16 %v1777, %v1776
      %v1789 = vpack.c.bf16 %v1779, %v1778
      %v1790 = vpack.c.bf16 %v1781, %v1780
      %v1791 = vpack.c.bf16 %v1783, %v1782
      %v1792 = vld [vmem:[%s11] sm:$0xf]
      %v1793 = vld [vmem:[%s11 + $0x4] sm:$0xf]
      %v1794 = vld [vmem:[%s12] sm:$0x1]
      %v1796 = vlaneseq
      %v1797 = vshrl.u32 %v1796, 7
      %v1798 = vsub.s32 0, %v1797
      %v1799 = vrot.slane %v1794, %v1798
      %v1803 = vunpack.c.l.b16 %v1792
      %v1804 = vunpack.c.l.b16 %v1793
      %v1805 = vpack.c.b16 %v1804, %v1803
      %v1808 = vsel %vm571, %v1784, 0
      %v1811 = vsel %vm571, %v1785, 0
      %v1814 = vsel %vm571, %v1786, 0
      %v1817 = vsel %vm571, %v1787, 0
      %v1820 = vsel %vm571, %v1788, 0
      %v1823 = vsel %vm571, %v1789, 0
      %v1826 = vsel %vm571, %v1790, 0
      %v1829 = vsel %vm571, %v1791, 0
      %1831 = vmatprep.subr.bf16.mxu0 0
      %1832 = vmatpush1.bf16.msra.mxu0 %v1805
      %1833 = vmatprep.subr.bf16.mxu0 0
      %1834 = vmatpush1.bf16.msra.mxu0 0
      %1835 = vmatprep.subr.bf16.mxu0 0
      %1836 = vmatpush1.bf16.msra.mxu0 0
      %1837 = vmatprep.subr.bf16.mxu0 0
      %1838 = vmatpush1.bf16.msra.mxu0 0
      %1839 = vmatprep.subr.bf16.mxu0 0
      %1840 = vmatpush1.bf16.msra.mxu0 0
      %1841 = vmatprep.subr.bf16.mxu0 0
      %1842 = vmatpush1.bf16.msra.mxu0 0
      %1843 = vmatprep.subr.bf16.mxu0 0
      %1844 = vmatpush1.bf16.msra.mxu0 0
      %1845 = vmatprep.subr.bf16.mxu0 0
      %1846 = vmatpush1.bf16.msra.mxu0 0
      %1847 = vmatprep.subr.bf16.mxu0 0
      %1848 = vmatpush1.bf16.msra.mxu0 0
      %1849 = vmatprep.subr.bf16.mxu0 0
      %1850 = vmatpush1.bf16.msra.mxu0 0
      %1851 = vmatprep.subr.bf16.mxu0 0
      %1852 = vmatpush1.bf16.msra.mxu0 0
      %1853 = vmatprep.subr.bf16.mxu0 0
      %1854 = vmatpush1.bf16.msra.mxu0 0
      %1855 = vmatprep.subr.bf16.mxu0 0
      %1856 = vmatpush1.bf16.msra.mxu0 0
      %1857 = vmatprep.subr.bf16.mxu0 0
      %1858 = vmatpush1.bf16.msra.mxu0 0
      %1859 = vmatprep.subr.bf16.mxu0 0
      %1860 = vmatpush1.bf16.msra.mxu0 0
      %1861 = vmatprep.subr.bf16.mxu0 0
      %1862 = vmatpush1.bf16.msra.mxu0 0
      %1863 = vmatprep.mubr.bf16.mxu0 0
      %1864 = vmatmul.mubr.bf16.gmra.mrb[0].mxu0 %v1808
      %v1865 = vpop.f32.mrb[0].mxu0
      %v1866 = vadd.f32 %v1799, %v1865
      %v1867 = vpop.f32.mrb[0].mxu0
      %v1868 = vpop.f32.mrb[0].mxu0
      %v1869 = vadd.f32 %v1799, %v1868
      %v1870 = vpop.f32.mrb[0].mxu0
      %1871 = vmatprep.mubr.bf16.mxu0 0
      %1872 = vmatmul.mubr.bf16.gmra.mrb[0].mxu0 %v1811
      %v1873 = vpop.f32.mrb[0].mxu0
      %v1874 = vadd.f32 %v1799, %v1873
      %v1875 = vpop.f32.mrb[0].mxu0
      %v1876 = vpop.f32.mrb[0].mxu0
      %v1877 = vadd.f32 %v1799, %v1876
      %v1878 = vpop.f32.mrb[0].mxu0
      %1879 = vmatprep.mubr.bf16.mxu0 0
      %1880 = vmatmul.mubr.bf16.gmra.mrb[0].mxu0 %v1814
      %v1881 = vpop.f32.mrb[0].mxu0
      %v1882 = vadd.f32 %v1799, %v1881
      %v1883 = vpop.f32.mrb[0].mxu0
      %v1884 = vpop.f32.mrb[0].mxu0
      %v1885 = vadd.f32 %v1799, %v1884
      %v1886 = vpop.f32.mrb[0].mxu0
      %1887 = vmatprep.mubr.bf16.mxu0 0
      %1888 = vmatmul.mubr.bf16.gmra.mrb[0].mxu0 %v1817
      %v1889 = vpop.f32.mrb[0].mxu0
      %v1890 = vadd.f32 %v1799, %v1889
      %v1891 = vpop.f32.mrb[0].mxu0
      %v1892 = vpop.f32.mrb[0].mxu0
      %v1893 = vadd.f32 %v1799, %v1892
      %v1894 = vpop.f32.mrb[0].mxu0
      %1895 = vmatprep.mubr.bf16.mxu0 0
      %1896 = vmatmul.mubr.bf16.gmra.mrb[0].mxu0 %v1820
      %v1897 = vpop.f32.mrb[0].mxu0
      %v1898 = vadd.f32 %v1799, %v1897
      %v1899 = vpop.f32.mrb[0].mxu0
      %v1900 = vpop.f32.mrb[0].mxu0
      %v1901 = vadd.f32 %v1799, %v1900
      %v1902 = vpop.f32.mrb[0].mxu0
      %1903 = vmatprep.mubr.bf16.mxu0 0
      %1904 = vmatmul.mubr.bf16.gmra.mrb[0].mxu0 %v1823
      %v1905 = vpop.f32.mrb[0].mxu0
      %v1906 = vadd.f32 %v1799, %v1905
      %v1907 = vpop.f32.mrb[0].mxu0
      %v1908 = vpop.f32.mrb[0].mxu0
      %v1909 = vadd.f32 %v1799, %v1908
      %v1910 = vpop.f32.mrb[0].mxu0
      %1911 = vmatprep.mubr.bf16.mxu0 0
      %1912 = vmatmul.mubr.bf16.gmra.mrb[0].mxu0 %v1826
      %v1913 = vpop.f32.mrb[0].mxu0
      %v1914 = vadd.f32 %v1799, %v1913
      %v1915 = vpop.f32.mrb[0].mxu0
      %v1916 = vpop.f32.mrb[0].mxu0
      %v1917 = vadd.f32 %v1799, %v1916
      %v1918 = vpop.f32.mrb[0].mxu0
      %1919 = vmatprep.mubr.bf16.mxu0 0
      %1920 = vmatmul.mubr.bf16.gmra.mrb[0].mxu0 %v1829
      %v1921 = vpop.f32.mrb[0].mxu0
      %v1922 = vadd.f32 %v1799, %v1921
      %v1923 = vpop.f32.mrb[0].mxu0
      %v1924 = vpop.f32.mrb[0].mxu0
      %v1925 = vadd.f32 %v1799, %v1924
      %v1926 = vpop.f32.mrb[0].mxu0
      %1927 = vdwg.mxu0
      %v1928 = vmul.f32 %v1866, 0.5
      %v1929 = vmul.f32 %v1869, 0.5
      %v1930 = vmul.f32 %v1874, 0.5
      %v1931 = vmul.f32 %v1877, 0.5
      %v1932 = vmul.f32 %v1882, 0.5
      %v1933 = vmul.f32 %v1885, 0.5
      %v1934 = vmul.f32 %v1890, 0.5
      %v1935 = vmul.f32 %v1893, 0.5
      %v1936 = vmul.f32 %v1898, 0.5
      %v1937 = vmul.f32 %v1901, 0.5
      %v1938 = vmul.f32 %v1906, 0.5
      %v1939 = vmul.f32 %v1909, 0.5
      %v1940 = vmul.f32 %v1914, 0.5
      %v1941 = vmul.f32 %v1917, 0.5
      %v1942 = vmul.f32 %v1922, 0.5
      %v1943 = vmul.f32 %v1925, 0.5
      %v1944 = vmul.f32 %v1866, 0.70710677
      %v1945 = vmul.f32 %v1869, 0.70710677
      %v1946 = vmul.f32 %v1874, 0.70710677
      %v1947 = vmul.f32 %v1877, 0.70710677
      %v1948 = vmul.f32 %v1882, 0.70710677
      %v1949 = vmul.f32 %v1885, 0.70710677
      %v1950 = vmul.f32 %v1890, 0.70710677
      %v1951 = vmul.f32 %v1893, 0.70710677
      %v1952 = vmul.f32 %v1898, 0.70710677
      %v1953 = vmul.f32 %v1901, 0.70710677
      %v1954 = vmul.f32 %v1906, 0.70710677
      %v1955 = vmul.f32 %v1909, 0.70710677
      %v1956 = vmul.f32 %v1914, 0.70710677
      %v1957 = vmul.f32 %v1917, 0.70710677
      %v1958 = vmul.f32 %v1922, 0.70710677
      %v1959 = vmul.f32 %v1925, 0.70710677
      %v1960 = vand.u32 2147483647, %v1944
      %v1961 = vand.u32 2147483647, %v1945
      %v1962 = vand.u32 2147483647, %v1946
      %v1963 = vand.u32 2147483647, %v1947
      %v1964 = vand.u32 2147483647, %v1948
      %v1965 = vand.u32 2147483647, %v1949
      %v1966 = vand.u32 2147483647, %v1950
      %v1967 = vand.u32 2147483647, %v1951
      %v1968 = vand.u32 2147483647, %v1952
      %v1969 = vand.u32 2147483647, %v1953
      %v1970 = vand.u32 2147483647, %v1954
      %v1971 = vand.u32 2147483647, %v1955
      %v1972 = vand.u32 2147483647, %v1956
      %v1973 = vand.u32 2147483647, %v1957
      %v1974 = vand.u32 2147483647, %v1958
      %v1975 = vand.u32 2147483647, %v1959
      %v1976 = vmul.f32 %v1960, 0.3275911
      %v1977 = vmul.f32 %v1961, 0.3275911
      %v1978 = vmul.f32 %v1962, 0.3275911
      %v1979 = vmul.f32 %v1963, 0.3275911
      %v1980 = vmul.f32 %v1964, 0.3275911
      %v1981 = vmul.f32 %v1965, 0.3275911
      %v1982 = vmul.f32 %v1966, 0.3275911
      %v1983 = vmul.f32 %v1967, 0.3275911
      %v1984 = vmul.f32 %v1968, 0.3275911
      %v1985 = vmul.f32 %v1969, 0.3275911
      %v1986 = vmul.f32 %v1970, 0.3275911
      %v1987 = vmul.f32 %v1971, 0.3275911
      %v1988 = vmul.f32 %v1972, 0.3275911
      %v1989 = vmul.f32 %v1973, 0.3275911
      %v1990 = vmul.f32 %v1974, 0.3275911
      %v1991 = vmul.f32 %v1975, 0.3275911
      %v1992 = vadd.f32 %v1976, 1.0
      %v1993 = vadd.f32 %v1977, 1.0
      %v1994 = vadd.f32 %v1978, 1.0
      %v1995 = vadd.f32 %v1979, 1.0
      %v1996 = vadd.f32 %v1980, 1.0
      %v1997 = vadd.f32 %v1981, 1.0
      %v1998 = vadd.f32 %v1982, 1.0
      %v1999 = vadd.f32 %v1983, 1.0
      %v2000 = vadd.f32 %v1984, 1.0
      %v2001 = vadd.f32 %v1985, 1.0
      %v2002 = vadd.f32 %v1986, 1.0
      %v2003 = vadd.f32 %v1987, 1.0
      %v2004 = vadd.f32 %v1988, 1.0
      %v2005 = vadd.f32 %v1989, 1.0
      %v2006 = vadd.f32 %v1990, 1.0
      %v2007 = vadd.f32 %v1991, 1.0
      %v2008 = vrcp.pop %v1992
      %v2009 = vmul.f32 1.0, %v2008
      %v2010 = vrcp.pop %v1993
      %v2011 = vmul.f32 1.0, %v2010
      %v2012 = vrcp.pop %v1994
      %v2013 = vmul.f32 1.0, %v2012
      %v2014 = vrcp.pop %v1995
      %v2015 = vmul.f32 1.0, %v2014
      %v2016 = vrcp.pop %v1996
      %v2017 = vmul.f32 1.0, %v2016
      %v2018 = vrcp.pop %v1997
      %v2019 = vmul.f32 1.0, %v2018
      %v2020 = vrcp.pop %v1998
      %v2021 = vmul.f32 1.0, %v2020
      %v2022 = vrcp.pop %v1999
      %v2023 = vmul.f32 1.0, %v2022
      %v2024 = vrcp.pop %v2000
      %v2025 = vmul.f32 1.0, %v2024
      %v2026 = vrcp.pop %v2001
      %v2027 = vmul.f32 1.0, %v2026
      %v2028 = vrcp.pop %v2002
      %v2029 = vmul.f32 1.0, %v2028
      %v2030 = vrcp.pop %v2003
      %v2031 = vmul.f32 1.0, %v2030
      %v2032 = vrcp.pop %v2004
      %v2033 = vmul.f32 1.0, %v2032
      %v2034 = vrcp.pop %v2005
      %v2035 = vmul.f32 1.0, %v2034
      %v2036 = vrcp.pop %v2006
      %v2037 = vmul.f32 1.0, %v2036
      %v2038 = vrcp.pop %v2007
      %v2039 = vmul.f32 1.0, %v2038
      %v2040 = vmul.f32 %v2009, 1.0614054
      %v2041 = vmul.f32 %v2011, 1.0614054
      %v2042 = vmul.f32 %v2013, 1.0614054
      %v2043 = vmul.f32 %v2015, 1.0614054
      %v2044 = vmul.f32 %v2017, 1.0614054
      %v2045 = vmul.f32 %v2019, 1.0614054
      %v2046 = vmul.f32 %v2021, 1.0614054
      %v2047 = vmul.f32 %v2023, 1.0614054
      %v2048 = vmul.f32 %v2025, 1.0614054
      %v2049 = vmul.f32 %v2027, 1.0614054
      %v2050 = vmul.f32 %v2029, 1.0614054
      %v2051 = vmul.f32 %v2031, 1.0614054
      %v2052 = vmul.f32 %v2033, 1.0614054
      %v2053 = vmul.f32 %v2035, 1.0614054
      %v2054 = vmul.f32 %v2037, 1.0614054
      %v2055 = vmul.f32 %v2039, 1.0614054
      %v2056 = vadd.f32 %v2040, -1.4531521
      %v2057 = vadd.f32 %v2041, -1.4531521
      %v2058 = vadd.f32 %v2042, -1.4531521
      %v2059 = vadd.f32 %v2043, -1.4531521
      %v2060 = vadd.f32 %v2044, -1.4531521
      %v2061 = vadd.f32 %v2045, -1.4531521
      %v2062 = vadd.f32 %v2046, -1.4531521
      %v2063 = vadd.f32 %v2047, -1.4531521
      %v2064 = vadd.f32 %v2048, -1.4531521
      %v2065 = vadd.f32 %v2049, -1.4531521
      %v2066 = vadd.f32 %v2050, -1.4531521
      %v2067 = vadd.f32 %v2051, -1.4531521
      %v2068 = vadd.f32 %v2052, -1.4531521
      %v2069 = vadd.f32 %v2053, -1.4531521
      %v2070 = vadd.f32 %v2054, -1.4531521
      %v2071 = vadd.f32 %v2055, -1.4531521
      %v2072 = vmul.f32 %v2056, %v2009
      %v2073 = vmul.f32 %v2057, %v2011
      %v2074 = vmul.f32 %v2058, %v2013
      %v2075 = vmul.f32 %v2059, %v2015
      %v2076 = vmul.f32 %v2060, %v2017
      %v2077 = vmul.f32 %v2061, %v2019
      %v2078 = vmul.f32 %v2062, %v2021
      %v2079 = vmul.f32 %v2063, %v2023
      %v2080 = vmul.f32 %v2064, %v2025
      %v2081 = vmul.f32 %v2065, %v2027
      %v2082 = vmul.f32 %v2066, %v2029
      %v2083 = vmul.f32 %v2067, %v2031
      %v2084 = vmul.f32 %v2068, %v2033
      %v2085 = vmul.f32 %v2069, %v2035
      %v2086 = vmul.f32 %v2070, %v2037
      %v2087 = vmul.f32 %v2071, %v2039
      %v2088 = vadd.f32 %v2072, 1.4214138
      %v2089 = vadd.f32 %v2073, 1.4214138
      %v2090 = vadd.f32 %v2074, 1.4214138
      %v2091 = vadd.f32 %v2075, 1.4214138
      %v2092 = vadd.f32 %v2076, 1.4214138
      %v2093 = vadd.f32 %v2077, 1.4214138
      %v2094 = vadd.f32 %v2078, 1.4214138
      %v2095 = vadd.f32 %v2079, 1.4214138
      %v2096 = vadd.f32 %v2080, 1.4214138
      %v2097 = vadd.f32 %v2081, 1.4214138
      %v2098 = vadd.f32 %v2082, 1.4214138
      %v2099 = vadd.f32 %v2083, 1.4214138
      %v2100 = vadd.f32 %v2084, 1.4214138
      %v2101 = vadd.f32 %v2085, 1.4214138
      %v2102 = vadd.f32 %v2086, 1.4214138
      %v2103 = vadd.f32 %v2087, 1.4214138
      %v2104 = vmul.f32 %v2088, %v2009
      %v2105 = vmul.f32 %v2089, %v2011
      %v2106 = vmul.f32 %v2090, %v2013
      %v2107 = vmul.f32 %v2091, %v2015
      %v2108 = vmul.f32 %v2092, %v2017
      %v2109 = vmul.f32 %v2093, %v2019
      %v2110 = vmul.f32 %v2094, %v2021
      %v2111 = vmul.f32 %v2095, %v2023
      %v2112 = vmul.f32 %v2096, %v2025
      %v2113 = vmul.f32 %v2097, %v2027
      %v2114 = vmul.f32 %v2098, %v2029
      %v2115 = vmul.f32 %v2099, %v2031
      %v2116 = vmul.f32 %v2100, %v2033
      %v2117 = vmul.f32 %v2101, %v2035
      %v2118 = vmul.f32 %v2102, %v2037
      %v2119 = vmul.f32 %v2103, %v2039
      %v2120 = vadd.f32 %v2104, -0.28449672
      %v2121 = vadd.f32 %v2105, -0.28449672
      %v2122 = vadd.f32 %v2106, -0.28449672
      %v2123 = vadd.f32 %v2107, -0.28449672
      %v2124 = vadd.f32 %v2108, -0.28449672
      %v2125 = vadd.f32 %v2109, -0.28449672
      %v2126 = vadd.f32 %v2110, -0.28449672
      %v2127 = vadd.f32 %v2111, -0.28449672
      %v2128 = vadd.f32 %v2112, -0.28449672
      %v2129 = vadd.f32 %v2113, -0.28449672
      %v2130 = vadd.f32 %v2114, -0.28449672
      %v2131 = vadd.f32 %v2115, -0.28449672
      %v2132 = vadd.f32 %v2116, -0.28449672
      %v2133 = vadd.f32 %v2117, -0.28449672
      %v2134 = vadd.f32 %v2118, -0.28449672
      %v2135 = vadd.f32 %v2119, -0.28449672
      %v2136 = vmul.f32 %v2120, %v2009
      %v2137 = vmul.f32 %v2121, %v2011
      %v2138 = vmul.f32 %v2122, %v2013
      %v2139 = vmul.f32 %v2123, %v2015
      %v2140 = vmul.f32 %v2124, %v2017
      %v2141 = vmul.f32 %v2125, %v2019
      %v2142 = vmul.f32 %v2126, %v2021
      %v2143 = vmul.f32 %v2127, %v2023
      %v2144 = vmul.f32 %v2128, %v2025
      %v2145 = vmul.f32 %v2129, %v2027
      %v2146 = vmul.f32 %v2130, %v2029
      %v2147 = vmul.f32 %v2131, %v2031
      %v2148 = vmul.f32 %v2132, %v2033
      %v2149 = vmul.f32 %v2133, %v2035
      %v2150 = vmul.f32 %v2134, %v2037
      %v2151 = vmul.f32 %v2135, %v2039
      %v2152 = vadd.f32 %v2136, 0.2548296
      %v2153 = vadd.f32 %v2137, 0.2548296
      %v2154 = vadd.f32 %v2138, 0.2548296
      %v2155 = vadd.f32 %v2139, 0.2548296
      %v2156 = vadd.f32 %v2140, 0.2548296
      %v2157 = vadd.f32 %v2141, 0.2548296
      %v2158 = vadd.f32 %v2142, 0.2548296
      %v2159 = vadd.f32 %v2143, 0.2548296
      %v2160 = vadd.f32 %v2144, 0.2548296
      %v2161 = vadd.f32 %v2145, 0.2548296
      %v2162 = vadd.f32 %v2146, 0.2548296
      %v2163 = vadd.f32 %v2147, 0.2548296
      %v2164 = vadd.f32 %v2148, 0.2548296
      %v2165 = vadd.f32 %v2149, 0.2548296
      %v2166 = vadd.f32 %v2150, 0.2548296
      %v2167 = vadd.f32 %v2151, 0.2548296
      %v2168 = vmul.f32 %v2152, %v2009
      %v2169 = vmul.f32 %v2153, %v2011
      %v2170 = vmul.f32 %v2154, %v2013
      %v2171 = vmul.f32 %v2155, %v2015
      %v2172 = vmul.f32 %v2156, %v2017
      %v2173 = vmul.f32 %v2157, %v2019
      %v2174 = vmul.f32 %v2158, %v2021
      %v2175 = vmul.f32 %v2159, %v2023
      %v2176 = vmul.f32 %v2160, %v2025
      %v2177 = vmul.f32 %v2161, %v2027
      %v2178 = vmul.f32 %v2162, %v2029
      %v2179 = vmul.f32 %v2163, %v2031
      %v2180 = vmul.f32 %v2164, %v2033
      %v2181 = vmul.f32 %v2165, %v2035
      %v2182 = vmul.f32 %v2166, %v2037
      %v2183 = vmul.f32 %v2167, %v2039
      %v2184 = vsub.f32 0.0, %v1960
      %v2185 = vsub.f32 0.0, %v1961
      %v2186 = vsub.f32 0.0, %v1962
      %v2187 = vsub.f32 0.0, %v1963
      %v2188 = vsub.f32 0.0, %v1964
      %v2189 = vsub.f32 0.0, %v1965
      %v2190 = vsub.f32 0.0, %v1966
      %v2191 = vsub.f32 0.0, %v1967
      %v2192 = vsub.f32 0.0, %v1968
      %v2193 = vsub.f32 0.0, %v1969
      %v2194 = vsub.f32 0.0, %v1970
      %v2195 = vsub.f32 0.0, %v1971
      %v2196 = vsub.f32 0.0, %v1972
      %v2197 = vsub.f32 0.0, %v1973
      %v2198 = vsub.f32 0.0, %v1974
      %v2199 = vsub.f32 0.0, %v1975
      %v2200 = vmul.f32 %v2184, %v1960
      %v2201 = vmul.f32 %v2185, %v1961
      %v2202 = vmul.f32 %v2186, %v1962
      %v2203 = vmul.f32 %v2187, %v1963
      %v2204 = vmul.f32 %v2188, %v1964
      %v2205 = vmul.f32 %v2189, %v1965
      %v2206 = vmul.f32 %v2190, %v1966
      %v2207 = vmul.f32 %v2191, %v1967
      %v2208 = vmul.f32 %v2192, %v1968
      %v2209 = vmul.f32 %v2193, %v1969
      %v2210 = vmul.f32 %v2194, %v1970
      %v2211 = vmul.f32 %v2195, %v1971
      %v2212 = vmul.f32 %v2196, %v1972
      %v2213 = vmul.f32 %v2197, %v1973
      %v2214 = vmul.f32 %v2198, %v1974
      %v2215 = vmul.f32 %v2199, %v1975
      %v2216 = vmul.f32 %v2200, 1.442695
      %v2217 = vpow.pop %v2216
      %v2218 = vmul.f32 %v2201, 1.442695
      %v2219 = vpow.pop %v2218
      %v2220 = vmul.f32 %v2202, 1.442695
      %v2221 = vpow.pop %v2220
      %v2222 = vmul.f32 %v2203, 1.442695
      %v2223 = vpow.pop %v2222
      %v2224 = vmul.f32 %v2204, 1.442695
      %v2225 = vpow.pop %v2224
      %v2226 = vmul.f32 %v2205, 1.442695
      %v2227 = vpow.pop %v2226
      %v2228 = vmul.f32 %v2206, 1.442695
      %v2229 = vpow.pop %v2228
      %v2230 = vmul.f32 %v2207, 1.442695
      %v2231 = vpow.pop %v2230
      %v2232 = vmul.f32 %v2208, 1.442695
      %v2233 = vpow.pop %v2232
      %v2234 = vmul.f32 %v2209, 1.442695
      %v2235 = vpow.pop %v2234
      %v2236 = vmul.f32 %v2210, 1.442695
      %v2237 = vpow.pop %v2236
      %v2238 = vmul.f32 %v2211, 1.442695
      %v2239 = vpow.pop %v2238
      %v2240 = vmul.f32 %v2212, 1.442695
      %v2241 = vpow.pop %v2240
      %v2242 = vmul.f32 %v2213, 1.442695
      %v2243 = vpow.pop %v2242
      %v2244 = vmul.f32 %v2214, 1.442695
      %v2245 = vpow.pop %v2244
      %v2246 = vmul.f32 %v2215, 1.442695
      %v2247 = vpow.pop %v2246
      %v2248 = vmul.f32 %v2168, %v2217
      %v2249 = vmul.f32 %v2169, %v2219
      %v2250 = vmul.f32 %v2170, %v2221
      %v2251 = vmul.f32 %v2171, %v2223
      %v2252 = vmul.f32 %v2172, %v2225
      %v2253 = vmul.f32 %v2173, %v2227
      %v2254 = vmul.f32 %v2174, %v2229
      %v2255 = vmul.f32 %v2175, %v2231
      %v2256 = vmul.f32 %v2176, %v2233
      %v2257 = vmul.f32 %v2177, %v2235
      %v2258 = vmul.f32 %v2178, %v2237
      %v2259 = vmul.f32 %v2179, %v2239
      %v2260 = vmul.f32 %v2180, %v2241
      %v2261 = vmul.f32 %v2181, %v2243
      %v2262 = vmul.f32 %v2182, %v2245
      %v2263 = vmul.f32 %v2183, %v2247
      %v2264 = vsub.f32 1.0, %v2248
      %v2265 = vsub.f32 1.0, %v2249
      %v2266 = vsub.f32 1.0, %v2250
      %v2267 = vsub.f32 1.0, %v2251
      %v2268 = vsub.f32 1.0, %v2252
      %v2269 = vsub.f32 1.0, %v2253
      %v2270 = vsub.f32 1.0, %v2254
      %v2271 = vsub.f32 1.0, %v2255
      %v2272 = vsub.f32 1.0, %v2256
      %v2273 = vsub.f32 1.0, %v2257
      %v2274 = vsub.f32 1.0, %v2258
      %v2275 = vsub.f32 1.0, %v2259
      %v2276 = vsub.f32 1.0, %v2260
      %v2277 = vsub.f32 1.0, %v2261
      %v2278 = vsub.f32 1.0, %v2262
      %v2279 = vsub.f32 1.0, %v2263
      %vm2280 = vcmp.ge.f32.partialorder %v1944, 0.0
      %vm2281 = vcmp.ge.f32.partialorder %v1945, 0.0
      %vm2282 = vcmp.ge.f32.partialorder %v1946, 0.0
      %vm2283 = vcmp.ge.f32.partialorder %v1947, 0.0
      %vm2284 = vcmp.ge.f32.partialorder %v1948, 0.0
      %vm2285 = vcmp.ge.f32.partialorder %v1949, 0.0
      %vm2286 = vcmp.ge.f32.partialorder %v1950, 0.0
      %vm2287 = vcmp.ge.f32.partialorder %v1951, 0.0
      %vm2288 = vcmp.ge.f32.partialorder %v1952, 0.0
      %vm2289 = vcmp.ge.f32.partialorder %v1953, 0.0
      %vm2290 = vcmp.ge.f32.partialorder %v1954, 0.0
      %vm2291 = vcmp.ge.f32.partialorder %v1955, 0.0
      %vm2292 = vcmp.ge.f32.partialorder %v1956, 0.0
      %vm2293 = vcmp.ge.f32.partialorder %v1957, 0.0
      %vm2294 = vcmp.ge.f32.partialorder %v1958, 0.0
      %vm2295 = vcmp.ge.f32.partialorder %v1959, 0.0
      %v2296 = vsub.f32 0.0, %v2264
      %v2297 = vsub.f32 0.0, %v2265
      %v2298 = vsub.f32 0.0, %v2266
      %v2299 = vsub.f32 0.0, %v2267
      %v2300 = vsub.f32 0.0, %v2268
      %v2301 = vsub.f32 0.0, %v2269
      %v2302 = vsub.f32 0.0, %v2270
      %v2303 = vsub.f32 0.0, %v2271
      %v2304 = vsub.f32 0.0, %v2272
      %v2305 = vsub.f32 0.0, %v2273
      %v2306 = vsub.f32 0.0, %v2274
      %v2307 = vsub.f32 0.0, %v2275
      %v2308 = vsub.f32 0.0, %v2276
      %v2309 = vsub.f32 0.0, %v2277
      %v2310 = vsub.f32 0.0, %v2278
      %v2311 = vsub.f32 0.0, %v2279
      %v2312 = vsel %vm2280, %v2264, %v2296
      %v2313 = vsel %vm2281, %v2265, %v2297
      %v2314 = vsel %vm2282, %v2266, %v2298
      %v2315 = vsel %vm2283, %v2267, %v2299
      %v2316 = vsel %vm2284, %v2268, %v2300
      %v2317 = vsel %vm2285, %v2269, %v2301
      %v2318 = vsel %vm2286, %v2270, %v2302
      %v2319 = vsel %vm2287, %v2271, %v2303
      %v2320 = vsel %vm2288, %v2272, %v2304
      %v2321 = vsel %vm2289, %v2273, %v2305
      %v2322 = vsel %vm2290, %v2274, %v2306
      %v2323 = vsel %vm2291, %v2275, %v2307
      %v2324 = vsel %vm2292, %v2276, %v2308
      %v2325 = vsel %vm2293, %v2277, %v2309
      %v2326 = vsel %vm2294, %v2278, %v2310
      %v2327 = vsel %vm2295, %v2279, %v2311
      %v2328 = vadd.f32 %v2312, 1.0
      %v2329 = vadd.f32 %v2313, 1.0
      %v2330 = vadd.f32 %v2314, 1.0
      %v2331 = vadd.f32 %v2315, 1.0
      %v2332 = vadd.f32 %v2316, 1.0
      %v2333 = vadd.f32 %v2317, 1.0
      %v2334 = vadd.f32 %v2318, 1.0
      %v2335 = vadd.f32 %v2319, 1.0
      %v2336 = vadd.f32 %v2320, 1.0
      %v2337 = vadd.f32 %v2321, 1.0
      %v2338 = vadd.f32 %v2322, 1.0
      %v2339 = vadd.f32 %v2323, 1.0
      %v2340 = vadd.f32 %v2324, 1.0
      %v2341 = vadd.f32 %v2325, 1.0
      %v2342 = vadd.f32 %v2326, 1.0
      %v2343 = vadd.f32 %v2327, 1.0
      %v2344 = vmul.f32 %v1928, %v2328
      %v2345 = vmul.f32 %v1929, %v2329
      %v2346 = vmul.f32 %v1930, %v2330
      %v2347 = vmul.f32 %v1931, %v2331
      %v2348 = vmul.f32 %v1932, %v2332
      %v2349 = vmul.f32 %v1933, %v2333
      %v2350 = vmul.f32 %v1934, %v2334
      %v2351 = vmul.f32 %v1935, %v2335
      %v2352 = vmul.f32 %v1936, %v2336
      %v2353 = vmul.f32 %v1937, %v2337
      %v2354 = vmul.f32 %v1938, %v2338
      %v2355 = vmul.f32 %v1939, %v2339
      %v2356 = vmul.f32 %v1940, %v2340
      %v2357 = vmul.f32 %v1941, %v2341
      %v2358 = vmul.f32 %v1942, %v2342
      %v2359 = vmul.f32 %v1943, %v2343
      %v2360 = vld [vmem:[%s13] sm:$0xf]
      %v2361 = vld [vmem:[%s13 + $0x4] sm:$0xf]
      %v2362 = vld [vmem:[%s13 + $0x8] sm:$0xf]
      %v2363 = vld [vmem:[%s13 + $0xc] sm:$0xf]
      %v2364 = vld [vmem:[%s13 + $0x10] sm:$0xf]
      %v2365 = vld [vmem:[%s13 + $0x14] sm:$0xf]
      %v2366 = vld [vmem:[%s13 + $0x18] sm:$0xf]
      %v2367 = vld [vmem:[%s13 + $0x1c] sm:$0xf]
      %v2368 = vld [vmem:[%s13 + $0x20] sm:$0xf]
      %v2369 = vld [vmem:[%s13 + $0x24] sm:$0xf]
      %v2370 = vld [vmem:[%s13 + $0x28] sm:$0xf]
      %v2371 = vld [vmem:[%s13 + $0x2c] sm:$0xf]
      %v2372 = vld [vmem:[%s13 + $0x30] sm:$0xf]
      %v2373 = vld [vmem:[%s13 + $0x34] sm:$0xf]
      %v2374 = vld [vmem:[%s13 + $0x38] sm:$0xf]
      %v2375 = vld [vmem:[%s13 + $0x3c] sm:$0xf]
      %v2376 = vpack.c.bf16 %v2345, %v2344
      %v2377 = vpack.c.bf16 %v2347, %v2346
      %v2378 = vpack.c.bf16 %v2349, %v2348
      %v2379 = vpack.c.bf16 %v2351, %v2350
      %v2380 = vpack.c.bf16 %v2353, %v2352
      %v2381 = vpack.c.bf16 %v2355, %v2354
      %v2382 = vpack.c.bf16 %v2357, %v2356
      %v2383 = vpack.c.bf16 %v2359, %v2358
      %v2400 = vunpack.c.l.b16 %v2360
      %v2401 = vunpack.c.l.b16 %v2361
      %v2402 = vunpack.c.l.b16 %v2362
      %v2403 = vunpack.c.l.b16 %v2363
      %v2404 = vunpack.c.l.b16 %v2364
      %v2405 = vunpack.c.l.b16 %v2365
      %v2406 = vunpack.c.l.b16 %v2366
      %v2407 = vunpack.c.l.b16 %v2367
      %v2408 = vunpack.c.l.b16 %v2368
      %v2409 = vunpack.c.l.b16 %v2369
      %v2410 = vunpack.c.l.b16 %v2370
      %v2411 = vunpack.c.l.b16 %v2371
      %v2412 = vunpack.c.l.b16 %v2372
      %v2413 = vunpack.c.l.b16 %v2373
      %v2414 = vunpack.c.l.b16 %v2374
      %v2415 = vunpack.c.l.b16 %v2375
      %v2416 = vpack.c.b16 %v2401, %v2400
      %v2417 = vpack.c.b16 %v2403, %v2402
      %v2418 = vpack.c.b16 %v2405, %v2404
      %v2419 = vpack.c.b16 %v2407, %v2406
      %v2420 = vpack.c.b16 %v2409, %v2408
      %v2421 = vpack.c.b16 %v2411, %v2410
      %v2422 = vpack.c.b16 %v2413, %v2412
      %v2423 = vpack.c.b16 %v2415, %v2414
      %2432 = vmatprep.subr.bf16.mxu0 0
      %2433 = vmatpush1.bf16.msra.mxu0 %v2376
      %2434 = vmatprep.subr.bf16.mxu0 0
      %2435 = vmatpush1.bf16.msra.mxu0 %v2377
      %2436 = vmatprep.subr.bf16.mxu0 0
      %2437 = vmatpush1.bf16.msra.mxu0 %v2378
      %2438 = vmatprep.subr.bf16.mxu0 0
      %2439 = vmatpush1.bf16.msra.mxu0 %v2379
      %2440 = vmatprep.subr.bf16.mxu0 0
      %2441 = vmatpush1.bf16.msra.mxu0 %v2380
      %2442 = vmatprep.subr.bf16.mxu0 0
      %2443 = vmatpush1.bf16.msra.mxu0 %v2381
      %2444 = vmatprep.subr.bf16.mxu0 0
      %2445 = vmatpush1.bf16.msra.mxu0 %v2382
      %2446 = vmatprep.subr.bf16.mxu0 0
      %2447 = vmatpush1.bf16.msra.mxu0 %v2383
      %2448 = vmatprep.subr.bf16.mxu0 0
      %2449 = vmatpush1.bf16.msra.mxu0 0
      %2450 = vmatprep.subr.bf16.mxu0 0
      %2451 = vmatpush1.bf16.msra.mxu0 0
      %2452 = vmatprep.subr.bf16.mxu0 0
      %2453 = vmatpush1.bf16.msra.mxu0 0
      %2454 = vmatprep.subr.bf16.mxu0 0
      %2455 = vmatpush1.bf16.msra.mxu0 0
      %2456 = vmatprep.subr.bf16.mxu0 0
      %2457 = vmatpush1.bf16.msra.mxu0 0
      %2458 = vmatprep.subr.bf16.mxu0 0
      %2459 = vmatpush1.bf16.msra.mxu0 0
      %2460 = vmatprep.subr.bf16.mxu0 0
      %2461 = vmatpush1.bf16.msra.mxu0 0
      %2462 = vmatprep.subr.bf16.mxu0 0
      %2463 = vmatpush1.bf16.msra.mxu0 0
      %2464 = vmatprep.mubr.bf16.mxu0 0
      %2465 = vmatmul.mubr.bf16.gmra.mrb[0].mxu0 %v2416
      %v2466 = vpop.f32.mrb[0].mxu0
      %v2467 = vadd.f32 0.0, %v2466
      %v2468 = vpop.f32.mrb[0].mxu0
      %v2469 = vpop.f32.mrb[0].mxu0
      %v2470 = vadd.f32 0.0, %v2469
      %v2471 = vpop.f32.mrb[0].mxu0
      %2472 = vmatprep.mubr.bf16.mxu0 0
      %2473 = vmatmul.mubr.bf16.gmra.mrb[0].mxu0 %v2417
      %v2474 = vpop.f32.mrb[0].mxu0
      %v2475 = vadd.f32 0.0, %v2474
      %v2476 = vpop.f32.mrb[0].mxu0
      %v2477 = vpop.f32.mrb[0].mxu0
      %v2478 = vadd.f32 0.0, %v2477
      %v2479 = vpop.f32.mrb[0].mxu0
      %2480 = vmatprep.mubr.bf16.mxu0 0
      %2481 = vmatmul.mubr.bf16.gmra.mrb[0].mxu0 %v2418
      %v2482 = vpop.f32.mrb[0].mxu0
      %v2483 = vadd.f32 0.0, %v2482
      %v2484 = vpop.f32.mrb[0].mxu0
      %v2485 = vpop.f32.mrb[0].mxu0
      %v2486 = vadd.f32 0.0, %v2485
      %v2487 = vpop.f32.mrb[0].mxu0
      %2488 = vmatprep.mubr.bf16.mxu0 0
      %2489 = vmatmul.mubr.bf16.gmra.mrb[0].mxu0 %v2419
      %v2490 = vpop.f32.mrb[0].mxu0
      %v2491 = vadd.f32 0.0, %v2490
      %v2492 = vpop.f32.mrb[0].mxu0
      %v2493 = vpop.f32.mrb[0].mxu0
      %v2494 = vadd.f32 0.0, %v2493
      %v2495 = vpop.f32.mrb[0].mxu0
      %2496 = vmatprep.mubr.bf16.mxu0 0
      %2497 = vmatmul.mubr.bf16.gmra.mrb[0].mxu0 %v2420
      %v2498 = vpop.f32.mrb[0].mxu0
      %v2499 = vadd.f32 0.0, %v2498
      %v2500 = vpop.f32.mrb[0].mxu0
      %v2501 = vpop.f32.mrb[0].mxu0
      %v2502 = vadd.f32 0.0, %v2501
      %v2503 = vpop.f32.mrb[0].mxu0
      %2504 = vmatprep.mubr.bf16.mxu0 0
      %2505 = vmatmul.mubr.bf16.gmra.mrb[0].mxu0 %v2421
      %v2506 = vpop.f32.mrb[0].mxu0
      %v2507 = vadd.f32 0.0, %v2506
      %v2508 = vpop.f32.mrb[0].mxu0
      %v2509 = vpop.f32.mrb[0].mxu0
      %v2510 = vadd.f32 0.0, %v2509
      %v2511 = vpop.f32.mrb[0].mxu0
      %2512 = vmatprep.mubr.bf16.mxu0 0
      %2513 = vmatmul.mubr.bf16.gmra.mrb[0].mxu0 %v2422
      %v2514 = vpop.f32.mrb[0].mxu0
      %v2515 = vadd.f32 0.0, %v2514
      %v2516 = vpop.f32.mrb[0].mxu0
      %v2517 = vpop.f32.mrb[0].mxu0
      %v2518 = vadd.f32 0.0, %v2517
      %v2519 = vpop.f32.mrb[0].mxu0
      %2520 = vmatprep.mubr.bf16.mxu0 0
      %2521 = vmatmul.mubr.bf16.gmra.mrb[0].mxu0 %v2423
      %v2522 = vpop.f32.mrb[0].mxu0
      %v2523 = vadd.f32 0.0, %v2522
      %v2524 = vpop.f32.mrb[0].mxu0
      %v2525 = vpop.f32.mrb[0].mxu0
      %v2526 = vadd.f32 0.0, %v2525
      %v2527 = vpop.f32.mrb[0].mxu0
      %2528 = vdwg.mxu0
      %vm2529 = vcmask 64512
      %2530 = vst.msk [vmem:[#allocation2] sm:$0xff] %vm2529, %v2467
      %2531 = vst.msk [vmem:[#allocation2 + $0x8] sm:$0xff] %vm2529, %v2470
      %2532 = vst.msk [vmem:[#allocation2 + $0x10] sm:$0xff] %vm2529, %v2475
      %2533 = vst.msk [vmem:[#allocation2 + $0x18] sm:$0xff] %vm2529, %v2478
      %2534 = vst.msk [vmem:[#allocation2 + $0x20] sm:$0xff] %vm2529, %v2483
      %2535 = vst.msk [vmem:[#allocation2 + $0x28] sm:$0xff] %vm2529, %v2486
      %2536 = vst.msk [vmem:[#allocation2 + $0x30] sm:$0xff] %vm2529, %v2491
      %2537 = vst.msk [vmem:[#allocation2 + $0x38] sm:$0xff] %vm2529, %v2494
      %2538 = vst.msk [vmem:[#allocation2 + $0x40] sm:$0xff] %vm2529, %v2499
      %2539 = vst.msk [vmem:[#allocation2 + $0x48] sm:$0xff] %vm2529, %v2502
      %2540 = vst.msk [vmem:[#allocation2 + $0x50] sm:$0xff] %vm2529, %v2507
      %2541 = vst.msk [vmem:[#allocation2 + $0x58] sm:$0xff] %vm2529, %v2510
      %2542 = vst.msk [vmem:[#allocation2 + $0x60] sm:$0xff] %vm2529, %v2515
      %2543 = vst.msk [vmem:[#allocation2 + $0x68] sm:$0xff] %vm2529, %v2518
      %2544 = vst.msk [vmem:[#allocation2 + $0x70] sm:$0xff] %vm2529, %v2523
      %2545 = vst.msk [vmem:[#allocation2 + $0x78] sm:$0xff] %vm2529, %v2526
      %s2546 = scalar_lea.vmem %s13, 64
      %v2547 = vld [vmem:[%s2546] sm:$0xf]
      %v2548 = vld [vmem:[%s2546 + $0x4] sm:$0xf]
      %v2549 = vld [vmem:[%s2546 + $0x8] sm:$0xf]
      %v2550 = vld [vmem:[%s2546 + $0xc] sm:$0xf]
      %v2551 = vld [vmem:[%s2546 + $0x10] sm:$0xf]
      %v2552 = vld [vmem:[%s2546 + $0x14] sm:$0xf]
      %v2553 = vld [vmem:[%s2546 + $0x18] sm:$0xf]
      %v2554 = vld [vmem:[%s2546 + $0x1c] sm:$0xf]
      %v2555 = vld [vmem:[%s2546 + $0x20] sm:$0xf]
      %v2556 = vld [vmem:[%s2546 + $0x24] sm:$0xf]
      %v2557 = vld [vmem:[%s2546 + $0x28] sm:$0xf]
      %v2558 = vld [vmem:[%s2546 + $0x2c] sm:$0xf]
      %v2559 = vld [vmem:[%s2546 + $0x30] sm:$0xf]
      %v2560 = vld [vmem:[%s2546 + $0x34] sm:$0xf]
      %v2561 = vld [vmem:[%s2546 + $0x38] sm:$0xf]
      %v2562 = vld [vmem:[%s2546 + $0x3c] sm:$0xf]
      %v2579 = vunpack.c.l.b16 %v2547
      %v2580 = vunpack.c.l.b16 %v2548
      %v2581 = vunpack.c.l.b16 %v2549
      %v2582 = vunpack.c.l.b16 %v2550
      %v2583 = vunpack.c.l.b16 %v2551
      %v2584 = vunpack.c.l.b16 %v2552
      %v2585 = vunpack.c.l.b16 %v2553
      %v2586 = vunpack.c.l.b16 %v2554
      %v2587 = vunpack.c.l.b16 %v2555
      %v2588 = vunpack.c.l.b16 %v2556
      %v2589 = vunpack.c.l.b16 %v2557
      %v2590 = vunpack.c.l.b16 %v2558
      %v2591 = vunpack.c.l.b16 %v2559
      %v2592 = vunpack.c.l.b16 %v2560
      %v2593 = vunpack.c.l.b16 %v2561
      %v2594 = vunpack.c.l.b16 %v2562
      %v2595 = vpack.c.b16 %v2580, %v2579
      %v2596 = vpack.c.b16 %v2582, %v2581
      %v2597 = vpack.c.b16 %v2584, %v2583
      %v2598 = vpack.c.b16 %v2586, %v2585
      %v2599 = vpack.c.b16 %v2588, %v2587
      %v2600 = vpack.c.b16 %v2590, %v2589
      %v2601 = vpack.c.b16 %v2592, %v2591
      %v2602 = vpack.c.b16 %v2594, %v2593
      %2619 = vrot.lane.b32.xlu0 %v2376, 120
      %v2620 = vpop.permute.xlu0 %2619
      %2621 = vrot.lane.b32.xlu0 %v2377, 120
      %v2622 = vpop.permute.xlu0 %2621
      %2623 = vrot.lane.b32.xlu0 %v2378, 120
      %v2624 = vpop.permute.xlu0 %2623
      %2625 = vrot.lane.b32.xlu0 %v2379, 120
      %v2626 = vpop.permute.xlu0 %2625
      %2627 = vrot.lane.b32.xlu0 %v2380, 120
      %v2628 = vpop.permute.xlu0 %2627
      %2629 = vrot.lane.b32.xlu0 %v2381, 120
      %v2630 = vpop.permute.xlu0 %2629
      %2631 = vrot.lane.b32.xlu0 %v2382, 120
      %v2632 = vpop.permute.xlu0 %2631
      %2633 = vrot.lane.b32.xlu0 %v2383, 120
      %v2634 = vpop.permute.xlu0 %2633
      %2643 = vmatprep.subr.bf16.mxu0 0
      %2644 = vmatpush1.bf16.msra.mxu0 %v2620
      %2645 = vmatprep.subr.bf16.mxu0 0
      %2646 = vmatpush1.bf16.msra.mxu0 %v2622
      %2647 = vmatprep.subr.bf16.mxu0 0
      %2648 = vmatpush1.bf16.msra.mxu0 %v2624
      %2649 = vmatprep.subr.bf16.mxu0 0
      %2650 = vmatpush1.bf16.msra.mxu0 %v2626
      %2651 = vmatprep.subr.bf16.mxu0 0
      %2652 = vmatpush1.bf16.msra.mxu0 %v2628
      %2653 = vmatprep.subr.bf16.mxu0 0
      %2654 = vmatpush1.bf16.msra.mxu0 %v2630
      %2655 = vmatprep.subr.bf16.mxu0 0
      %2656 = vmatpush1.bf16.msra.mxu0 %v2632
      %2657 = vmatprep.subr.bf16.mxu0 0
      %2658 = vmatpush1.bf16.msra.mxu0 %v2634
      %2659 = vmatprep.subr.bf16.mxu0 0
      %2660 = vmatpush1.bf16.msra.mxu0 0
      %2661 = vmatprep.subr.bf16.mxu0 0
      %2662 = vmatpush1.bf16.msra.mxu0 0
      %2663 = vmatprep.subr.bf16.mxu0 0
      %2664 = vmatpush1.bf16.msra.mxu0 0
      %2665 = vmatprep.subr.bf16.mxu0 0
      %2666 = vmatpush1.bf16.msra.mxu0 0
      %2667 = vmatprep.subr.bf16.mxu0 0
      %2668 = vmatpush1.bf16.msra.mxu0 0
      %2669 = vmatprep.subr.bf16.mxu0 0
      %2670 = vmatpush1.bf16.msra.mxu0 0
      %2671 = vmatprep.subr.bf16.mxu0 0
      %2672 = vmatpush1.bf16.msra.mxu0 0
      %2673 = vmatprep.subr.bf16.mxu0 0
      %2674 = vmatpush1.bf16.msra.mxu0 0
      %2675 = vmatprep.mubr.bf16.mxu0 0
      %2676 = vmatmul.mubr.bf16.gmra.mrb[0].mxu0 %v2595
      %v2677 = vpop.f32.mrb[0].mxu0
      %v2678 = vadd.f32 0.0, %v2677
      %v2679 = vpop.f32.mrb[0].mxu0
      %v2680 = vpop.f32.mrb[0].mxu0
      %v2681 = vadd.f32 0.0, %v2680
      %v2682 = vpop.f32.mrb[0].mxu0
      %2683 = vmatprep.mubr.bf16.mxu0 0
      %2684 = vmatmul.mubr.bf16.gmra.mrb[0].mxu0 %v2596
      %v2685 = vpop.f32.mrb[0].mxu0
      %v2686 = vadd.f32 0.0, %v2685
      %v2687 = vpop.f32.mrb[0].mxu0
      %v2688 = vpop.f32.mrb[0].mxu0
      %v2689 = vadd.f32 0.0, %v2688
      %v2690 = vpop.f32.mrb[0].mxu0
      %2691 = vmatprep.mubr.bf16.mxu0 0
      %2692 = vmatmul.mubr.bf16.gmra.mrb[0].mxu0 %v2597
      %v2693 = vpop.f32.mrb[0].mxu0
      %v2694 = vadd.f32 0.0, %v2693
      %v2695 = vpop.f32.mrb[0].mxu0
      %v2696 = vpop.f32.mrb[0].mxu0
      %v2697 = vadd.f32 0.0, %v2696
      %v2698 = vpop.f32.mrb[0].mxu0
      %2699 = vmatprep.mubr.bf16.mxu0 0
      %2700 = vmatmul.mubr.bf16.gmra.mrb[0].mxu0 %v2598
      %v2701 = vpop.f32.mrb[0].mxu0
      %v2702 = vadd.f32 0.0, %v2701
      %v2703 = vpop.f32.mrb[0].mxu0
      %v2704 = vpop.f32.mrb[0].mxu0
      %v2705 = vadd.f32 0.0, %v2704
      %v2706 = vpop.f32.mrb[0].mxu0
      %2707 = vmatprep.mubr.bf16.mxu0 0
      %2708 = vmatmul.mubr.bf16.gmra.mrb[0].mxu0 %v2599
      %v2709 = vpop.f32.mrb[0].mxu0
      %v2710 = vadd.f32 0.0, %v2709
      %v2711 = vpop.f32.mrb[0].mxu0
      %v2712 = vpop.f32.mrb[0].mxu0
      %v2713 = vadd.f32 0.0, %v2712
      %v2714 = vpop.f32.mrb[0].mxu0
      %2715 = vmatprep.mubr.bf16.mxu0 0
      %2716 = vmatmul.mubr.bf16.gmra.mrb[0].mxu0 %v2600
      %v2717 = vpop.f32.mrb[0].mxu0
      %v2718 = vadd.f32 0.0, %v2717
      %v2719 = vpop.f32.mrb[0].mxu0
      %v2720 = vpop.f32.mrb[0].mxu0
      %v2721 = vadd.f32 0.0, %v2720
      %v2722 = vpop.f32.mrb[0].mxu0
      %2723 = vmatprep.mubr.bf16.mxu0 0
      %2724 = vmatmul.mubr.bf16.gmra.mrb[0].mxu0 %v2601
      %v2725 = vpop.f32.mrb[0].mxu0
      %v2726 = vadd.f32 0.0, %v2725
      %v2727 = vpop.f32.mrb[0].mxu0
      %v2728 = vpop.f32.mrb[0].mxu0
      %v2729 = vadd.f32 0.0, %v2728
      %v2730 = vpop.f32.mrb[0].mxu0
      %2731 = vmatprep.mubr.bf16.mxu0 0
      %2732 = vmatmul.mubr.bf16.gmra.mrb[0].mxu0 %v2602
      %v2733 = vpop.f32.mrb[0].mxu0
      %v2734 = vadd.f32 0.0, %v2733
      %v2735 = vpop.f32.mrb[0].mxu0
      %v2736 = vpop.f32.mrb[0].mxu0
      %v2737 = vadd.f32 0.0, %v2736
      %v2738 = vpop.f32.mrb[0].mxu0
      %2739 = vdwg.mxu0
      %2756 = vrot.lane.b32.xlu0 %v2678, 8
      %v2757 = vpop.permute.xlu0 %2756
      %2758 = vrot.lane.b32.xlu0 %v2681, 8
      %v2759 = vpop.permute.xlu0 %2758
      %2760 = vrot.lane.b32.xlu0 %v2686, 8
      %v2761 = vpop.permute.xlu0 %2760
      %2762 = vrot.lane.b32.xlu0 %v2689, 8
      %v2763 = vpop.permute.xlu0 %2762
      %2764 = vrot.lane.b32.xlu0 %v2694, 8
      %v2765 = vpop.permute.xlu0 %2764
      %2766 = vrot.lane.b32.xlu0 %v2697, 8
      %v2767 = vpop.permute.xlu0 %2766
      %2768 = vrot.lane.b32.xlu0 %v2702, 8
      %v2769 = vpop.permute.xlu0 %2768
      %2770 = vrot.lane.b32.xlu0 %v2705, 8
      %v2771 = vpop.permute.xlu0 %2770
      %2772 = vrot.lane.b32.xlu0 %v2710, 8
      %v2773 = vpop.permute.xlu0 %2772
      %2774 = vrot.lane.b32.xlu0 %v2713, 8
      %v2775 = vpop.permute.xlu0 %2774
      %2776 = vrot.lane.b32.xlu0 %v2718, 8
      %v2777 = vpop.permute.xlu0 %2776
      %2778 = vrot.lane.b32.xlu0 %v2721, 8
      %v2779 = vpop.permute.xlu0 %2778
      %2780 = vrot.lane.b32.xlu0 %v2726, 8
      %v2781 = vpop.permute.xlu0 %2780
      %2782 = vrot.lane.b32.xlu0 %v2729, 8
      %v2783 = vpop.permute.xlu0 %2782
      %2784 = vrot.lane.b32.xlu0 %v2734, 8
      %v2785 = vpop.permute.xlu0 %2784
      %2786 = vrot.lane.b32.xlu0 %v2737, 8
      %v2787 = vpop.permute.xlu0 %2786
      %vm2804 = vcmask 130112
      %2805 = vst.msk [vmem:[#allocation2] sm:$0xff] %vm2804, %v2757
      %2806 = vst.msk [vmem:[#allocation2 + $0x8] sm:$0xff] %vm2804, %v2759
      %2807 = vst.msk [vmem:[#allocation2 + $0x10] sm:$0xff] %vm2804, %v2761
      %2808 = vst.msk [vmem:[#allocation2 + $0x18] sm:$0xff] %vm2804, %v2763
      %2809 = vst.msk [vmem:[#allocation2 + $0x20] sm:$0xff] %vm2804, %v2765
      %2810 = vst.msk [vmem:[#allocation2 + $0x28] sm:$0xff] %vm2804, %v2767
      %2811 = vst.msk [vmem:[#allocation2 + $0x30] sm:$0xff] %vm2804, %v2769
      %2812 = vst.msk [vmem:[#allocation2 + $0x38] sm:$0xff] %vm2804, %v2771
      %2813 = vst.msk [vmem:[#allocation2 + $0x40] sm:$0xff] %vm2804, %v2773
      %2814 = vst.msk [vmem:[#allocation2 + $0x48] sm:$0xff] %vm2804, %v2775
      %2815 = vst.msk [vmem:[#allocation2 + $0x50] sm:$0xff] %vm2804, %v2777
      %2816 = vst.msk [vmem:[#allocation2 + $0x58] sm:$0xff] %vm2804, %v2779
      %2817 = vst.msk [vmem:[#allocation2 + $0x60] sm:$0xff] %vm2804, %v2781
      %2818 = vst.msk [vmem:[#allocation2 + $0x68] sm:$0xff] %vm2804, %v2783
      %2819 = vst.msk [vmem:[#allocation2 + $0x70] sm:$0xff] %vm2804, %v2785
      %2820 = vst.msk [vmem:[#allocation2 + $0x78] sm:$0xff] %vm2804, %v2787
      %v2821 = vld [vmem:[#allocation2] sm:$0xff]
      %v2822 = vld [vmem:[#allocation2 + $0x8] sm:$0xff]
      %v2823 = vld [vmem:[#allocation2 + $0x10] sm:$0xff]
      %v2824 = vld [vmem:[#allocation2 + $0x18] sm:$0xff]
      %v2825 = vld [vmem:[#allocation2 + $0x20] sm:$0xff]
      %v2826 = vld [vmem:[#allocation2 + $0x28] sm:$0xff]
      %v2827 = vld [vmem:[#allocation2 + $0x30] sm:$0xff]
      %v2828 = vld [vmem:[#allocation2 + $0x38] sm:$0xff]
      %v2829 = vld [vmem:[#allocation2 + $0x40] sm:$0xff]
      %v2830 = vld [vmem:[#allocation2 + $0x48] sm:$0xff]
      %v2831 = vld [vmem:[#allocation2 + $0x50] sm:$0xff]
      %v2832 = vld [vmem:[#allocation2 + $0x58] sm:$0xff]
      %v2833 = vld [vmem:[#allocation2 + $0x60] sm:$0xff]
      %v2834 = vld [vmem:[#allocation2 + $0x68] sm:$0xff]
      %v2835 = vld [vmem:[#allocation2 + $0x70] sm:$0xff]
      %v2836 = vld [vmem:[#allocation2 + $0x78] sm:$0xff]
      %v2837 = vld [vmem:[%s14] sm:$0xff]
      %v2838 = vld [vmem:[%s14 + $0x8] sm:$0xff]
      %v2839 = vld [vmem:[%s14 + $0x10] sm:$0xff]
      %v2840 = vld [vmem:[%s14 + $0x18] sm:$0xff]
      %v2841 = vld [vmem:[%s14 + $0x20] sm:$0xff]
      %v2842 = vld [vmem:[%s14 + $0x28] sm:$0xff]
      %v2843 = vld [vmem:[%s14 + $0x30] sm:$0xff]
      %v2844 = vld [vmem:[%s14 + $0x38] sm:$0xff]
      %v2845 = vld [vmem:[%s14 + $0x40] sm:$0xff]
      %v2846 = vld [vmem:[%s14 + $0x48] sm:$0xff]
      %v2847 = vld [vmem:[%s14 + $0x50] sm:$0xff]
      %v2848 = vld [vmem:[%s14 + $0x58] sm:$0xff]
      %v2849 = vld [vmem:[%s14 + $0x60] sm:$0xff]
      %v2850 = vld [vmem:[%s14 + $0x68] sm:$0xff]
      %v2851 = vld [vmem:[%s14 + $0x70] sm:$0xff]
      %v2852 = vld [vmem:[%s14 + $0x78] sm:$0xff]
      %v2853 = vadd.f32 %v2821, %v2837
      %v2854 = vadd.f32 %v2822, %v2838
      %v2855 = vadd.f32 %v2823, %v2839
      %v2856 = vadd.f32 %v2824, %v2840
      %v2857 = vadd.f32 %v2825, %v2841
      %v2858 = vadd.f32 %v2826, %v2842
      %v2859 = vadd.f32 %v2827, %v2843
      %v2860 = vadd.f32 %v2828, %v2844
      %v2861 = vadd.f32 %v2829, %v2845
      %v2862 = vadd.f32 %v2830, %v2846
      %v2863 = vadd.f32 %v2831, %v2847
      %v2864 = vadd.f32 %v2832, %v2848
      %v2865 = vadd.f32 %v2833, %v2849
      %v2866 = vadd.f32 %v2834, %v2850
      %v2867 = vadd.f32 %v2835, %v2851
      %v2868 = vadd.f32 %v2836, %v2852
      %2885 = vrot.lane.b32.xlu0 %v2344, 112
      %v2886 = vpop.permute.xlu0 %2885
      %2887 = vrot.lane.b32.xlu0 %v2345, 112
      %v2888 = vpop.permute.xlu0 %2887
      %2889 = vrot.lane.b32.xlu0 %v2346, 112
      %v2890 = vpop.permute.xlu0 %2889
      %2891 = vrot.lane.b32.xlu0 %v2347, 112
      %v2892 = vpop.permute.xlu0 %2891
      %2893 = vrot.lane.b32.xlu0 %v2348, 112
      %v2894 = vpop.permute.xlu0 %2893
      %2895 = vrot.lane.b32.xlu0 %v2349, 112
      %v2896 = vpop.permute.xlu0 %2895
      %2897 = vrot.lane.b32.xlu0 %v2350, 112
      %v2898 = vpop.permute.xlu0 %2897
      %2899 = vrot.lane.b32.xlu0 %v2351, 112
      %v2900 = vpop.permute.xlu0 %2899
      %2901 = vrot.lane.b32.xlu0 %v2352, 112
      %v2902 = vpop.permute.xlu0 %2901
      %2903 = vrot.lane.b32.xlu0 %v2353, 112
      %v2904 = vpop.permute.xlu0 %2903
      %2905 = vrot.lane.b32.xlu0 %v2354, 112
      %v2906 = vpop.permute.xlu0 %2905
      %2907 = vrot.lane.b32.xlu0 %v2355, 112
      %v2908 = vpop.permute.xlu0 %2907
      %2909 = vrot.lane.b32.xlu0 %v2356, 112
      %v2910 = vpop.permute.xlu0 %2909
      %2911 = vrot.lane.b32.xlu0 %v2357, 112
      %v2912 = vpop.permute.xlu0 %2911
      %2913 = vrot.lane.b32.xlu0 %v2358, 112
      %v2914 = vpop.permute.xlu0 %2913
      %2915 = vrot.lane.b32.xlu0 %v2359, 112
      %v2916 = vpop.permute.xlu0 %2915
      %v2933 = vmul.f32 %v2853, %v2886
      %v2934 = vmul.f32 %v2854, %v2888
      %v2935 = vmul.f32 %v2855, %v2890
      %v2936 = vmul.f32 %v2856, %v2892
      %v2937 = vmul.f32 %v2857, %v2894
      %v2938 = vmul.f32 %v2858, %v2896
      %v2939 = vmul.f32 %v2859, %v2898
      %v2940 = vmul.f32 %v2860, %v2900
      %v2941 = vmul.f32 %v2861, %v2902
      %v2942 = vmul.f32 %v2862, %v2904
      %v2943 = vmul.f32 %v2863, %v2906
      %v2944 = vmul.f32 %v2864, %v2908
      %v2945 = vmul.f32 %v2865, %v2910
      %v2946 = vmul.f32 %v2866, %v2912
      %v2947 = vmul.f32 %v2867, %v2914
      %v2948 = vmul.f32 %v2868, %v2916
      %v2949 = vpack.c.bf16 %v2934, %v2933
      %v2950 = vpack.c.bf16 %v2936, %v2935
      %v2951 = vpack.c.bf16 %v2938, %v2937
      %v2952 = vpack.c.bf16 %v2940, %v2939
      %v2953 = vpack.c.bf16 %v2942, %v2941
      %v2954 = vpack.c.bf16 %v2944, %v2943
      %v2955 = vpack.c.bf16 %v2946, %v2945
      %v2956 = vpack.c.bf16 %v2948, %v2947
      %v2957 = vld [vmem:[%s15] sm:$0xf]
      %v2958 = vld [vmem:[%s15 + $0x4] sm:$0xf]
      %v2959 = vld [vmem:[%s16] sm:$0x1]
      %v2961 = vlaneseq
      %v2962 = vshrl.u32 %v2961, 7
      %v2963 = vsub.s32 0, %v2962
      %v2964 = vrot.slane %v2959, %v2963
      %v2968 = vunpack.c.l.b16 %v2957
      %v2969 = vunpack.c.l.b16 %v2958
      %v2970 = vpack.c.b16 %v2969, %v2968
      %v2973 = vsel %vm571, %v2949, 0
      %v2976 = vsel %vm571, %v2950, 0
      %v2979 = vsel %vm571, %v2951, 0
      %v2982 = vsel %vm571, %v2952, 0
      %v2985 = vsel %vm571, %v2953, 0
      %v2988 = vsel %vm571, %v2954, 0
      %v2991 = vsel %vm571, %v2955, 0
      %v2994 = vsel %vm571, %v2956, 0
      %2996 = vmatprep.subr.bf16.mxu0 0
      %2997 = vmatpush1.bf16.msra.mxu0 %v2970
      %2998 = vmatprep.subr.bf16.mxu0 0
      %2999 = vmatpush1.bf16.msra.mxu0 0
      %3000 = vmatprep.subr.bf16.mxu0 0
      %3001 = vmatpush1.bf16.msra.mxu0 0
      %3002 = vmatprep.subr.bf16.mxu0 0
      %3003 = vmatpush1.bf16.msra.mxu0 0
      %3004 = vmatprep.subr.bf16.mxu0 0
      %3005 = vmatpush1.bf16.msra.mxu0 0
      %3006 = vmatprep.subr.bf16.mxu0 0
      %3007 = vmatpush1.bf16.msra.mxu0 0
      %3008 = vmatprep.subr.bf16.mxu0 0
      %3009 = vmatpush1.bf16.msra.mxu0 0
      %3010 = vmatprep.subr.bf16.mxu0 0
      %3011 = vmatpush1.bf16.msra.mxu0 0
      %3012 = vmatprep.subr.bf16.mxu0 0
      %3013 = vmatpush1.bf16.msra.mxu0 0
      %3014 = vmatprep.subr.bf16.mxu0 0
      %3015 = vmatpush1.bf16.msra.mxu0 0
      %3016 = vmatprep.subr.bf16.mxu0 0
      %3017 = vmatpush1.bf16.msra.mxu0 0
      %3018 = vmatprep.subr.bf16.mxu0 0
      %3019 = vmatpush1.bf16.msra.mxu0 0
      %3020 = vmatprep.subr.bf16.mxu0 0
      %3021 = vmatpush1.bf16.msra.mxu0 0
      %3022 = vmatprep.subr.bf16.mxu0 0
      %3023 = vmatpush1.bf16.msra.mxu0 0
      %3024 = vmatprep.subr.bf16.mxu0 0
      %3025 = vmatpush1.bf16.msra.mxu0 0
      %3026 = vmatprep.subr.bf16.mxu0 0
      %3027 = vmatpush1.bf16.msra.mxu0 0
      %3028 = vmatprep.mubr.bf16.mxu0 0
      %3029 = vmatmul.mubr.bf16.gmra.mrb[0].mxu0 %v2973
      %v3030 = vpop.f32.mrb[0].mxu0
      %v3031 = vadd.f32 %v2964, %v3030
      %v3032 = vpop.f32.mrb[0].mxu0
      %v3033 = vpop.f32.mrb[0].mxu0
      %v3034 = vadd.f32 %v2964, %v3033
      %v3035 = vpop.f32.mrb[0].mxu0
      %3036 = vmatprep.mubr.bf16.mxu0 0
      %3037 = vmatmul.mubr.bf16.gmra.mrb[0].mxu0 %v2976
      %v3038 = vpop.f32.mrb[0].mxu0
      %v3039 = vadd.f32 %v2964, %v3038
      %v3040 = vpop.f32.mrb[0].mxu0
      %v3041 = vpop.f32.mrb[0].mxu0
      %v3042 = vadd.f32 %v2964, %v3041
      %v3043 = vpop.f32.mrb[0].mxu0
      %3044 = vmatprep.mubr.bf16.mxu0 0
      %3045 = vmatmul.mubr.bf16.gmra.mrb[0].mxu0 %v2979
      %v3046 = vpop.f32.mrb[0].mxu0
      %v3047 = vadd.f32 %v2964, %v3046
      %v3048 = vpop.f32.mrb[0].mxu0
      %v3049 = vpop.f32.mrb[0].mxu0
      %v3050 = vadd.f32 %v2964, %v3049
      %v3051 = vpop.f32.mrb[0].mxu0
      %3052 = vmatprep.mubr.bf16.mxu0 0
      %3053 = vmatmul.mubr.bf16.gmra.mrb[0].mxu0 %v2982
      %v3054 = vpop.f32.mrb[0].mxu0
      %v3055 = vadd.f32 %v2964, %v3054
      %v3056 = vpop.f32.mrb[0].mxu0
      %v3057 = vpop.f32.mrb[0].mxu0
      %v3058 = vadd.f32 %v2964, %v3057
      %v3059 = vpop.f32.mrb[0].mxu0
      %3060 = vmatprep.mubr.bf16.mxu0 0
      %3061 = vmatmul.mubr.bf16.gmra.mrb[0].mxu0 %v2985
      %v3062 = vpop.f32.mrb[0].mxu0
      %v3063 = vadd.f32 %v2964, %v3062
      %v3064 = vpop.f32.mrb[0].mxu0
      %v3065 = vpop.f32.mrb[0].mxu0
      %v3066 = vadd.f32 %v2964, %v3065
      %v3067 = vpop.f32.mrb[0].mxu0
      %3068 = vmatprep.mubr.bf16.mxu0 0
      %3069 = vmatmul.mubr.bf16.gmra.mrb[0].mxu0 %v2988
      %v3070 = vpop.f32.mrb[0].mxu0
      %v3071 = vadd.f32 %v2964, %v3070
      %v3072 = vpop.f32.mrb[0].mxu0
      %v3073 = vpop.f32.mrb[0].mxu0
      %v3074 = vadd.f32 %v2964, %v3073
      %v3075 = vpop.f32.mrb[0].mxu0
      %3076 = vmatprep.mubr.bf16.mxu0 0
      %3077 = vmatmul.mubr.bf16.gmra.mrb[0].mxu0 %v2991
      %v3078 = vpop.f32.mrb[0].mxu0
      %v3079 = vadd.f32 %v2964, %v3078
      %v3080 = vpop.f32.mrb[0].mxu0
      %v3081 = vpop.f32.mrb[0].mxu0
      %v3082 = vadd.f32 %v2964, %v3081
      %v3083 = vpop.f32.mrb[0].mxu0
      %3084 = vmatprep.mubr.bf16.mxu0 0
      %3085 = vmatmul.mubr.bf16.gmra.mrb[0].mxu0 %v2994
      %v3086 = vpop.f32.mrb[0].mxu0
      %v3087 = vadd.f32 %v2964, %v3086
      %v3088 = vpop.f32.mrb[0].mxu0
      %v3089 = vpop.f32.mrb[0].mxu0
      %v3090 = vadd.f32 %v2964, %v3089
      %v3091 = vpop.f32.mrb[0].mxu0
      %3092 = vdwg.mxu0
      %v3093 = vadd.f32 %v553, %v1676
      %v3094 = vadd.f32 %v554, %v1679
      %v3095 = vadd.f32 %v555, %v1684
      %v3096 = vadd.f32 %v556, %v1687
      %v3097 = vadd.f32 %v557, %v1692
      %v3098 = vadd.f32 %v558, %v1695
      %v3099 = vadd.f32 %v559, %v1700
      %v3100 = vadd.f32 %v560, %v1703
      %v3101 = vadd.f32 %v561, %v1708
      %v3102 = vadd.f32 %v562, %v1711
      %v3103 = vadd.f32 %v563, %v1716
      %v3104 = vadd.f32 %v564, %v1719
      %v3105 = vadd.f32 %v565, %v1724
      %v3106 = vadd.f32 %v566, %v1727
      %v3107 = vadd.f32 %v567, %v1732
      %v3108 = vadd.f32 %v568, %v1735
      %v3109 = vadd.f32 %v3093, %v3031
      %v3110 = vadd.f32 %v3094, %v3034
      %v3111 = vadd.f32 %v3095, %v3039
      %v3112 = vadd.f32 %v3096, %v3042
      %v3113 = vadd.f32 %v3097, %v3047
      %v3114 = vadd.f32 %v3098, %v3050
      %v3115 = vadd.f32 %v3099, %v3055
      %v3116 = vadd.f32 %v3100, %v3058
      %v3117 = vadd.f32 %v3101, %v3063
      %v3118 = vadd.f32 %v3102, %v3066
      %v3119 = vadd.f32 %v3103, %v3071
      %v3120 = vadd.f32 %v3104, %v3074
      %v3121 = vadd.f32 %v3105, %v3079
      %v3122 = vadd.f32 %v3106, %v3082
      %v3123 = vadd.f32 %v3107, %v3087
      %v3124 = vadd.f32 %v3108, %v3090
      %3125 = vst.msk [vmem:[%s550] sm:$0xff] %vm571, %v3109
      %3126 = vst.msk [vmem:[%s550 + $0x8] sm:$0xff] %vm571, %v3110
      %3127 = vst.msk [vmem:[%s550 + $0x10] sm:$0xff] %vm571, %v3111
      %3128 = vst.msk [vmem:[%s550 + $0x18] sm:$0xff] %vm571, %v3112
      %3129 = vst.msk [vmem:[%s550 + $0x20] sm:$0xff] %vm571, %v3113
      %3130 = vst.msk [vmem:[%s550 + $0x28] sm:$0xff] %vm571, %v3114
      %3131 = vst.msk [vmem:[%s550 + $0x30] sm:$0xff] %vm571, %v3115
      %3132 = vst.msk [vmem:[%s550 + $0x38] sm:$0xff] %vm571, %v3116
      %3133 = vst.msk [vmem:[%s550 + $0x40] sm:$0xff] %vm571, %v3117
      %3134 = vst.msk [vmem:[%s550 + $0x48] sm:$0xff] %vm571, %v3118
      %3135 = vst.msk [vmem:[%s550 + $0x50] sm:$0xff] %vm571, %v3119
      %3136 = vst.msk [vmem:[%s550 + $0x58] sm:$0xff] %vm571, %v3120
      %3137 = vst.msk [vmem:[%s550 + $0x60] sm:$0xff] %vm571, %v3121
      %3138 = vst.msk [vmem:[%s550 + $0x68] sm:$0xff] %vm571, %v3122
      %3139 = vst.msk [vmem:[%s550 + $0x70] sm:$0xff] %vm571, %v3123
      %3140 = vst.msk [vmem:[%s550 + $0x78] sm:$0xff] %vm571, %v3124
      %s3141 = smul.u32 16, %s28
      %p3142 = scmp.lt.s32.totalorder %s3141, 31
      %s3143 = scalar_select %p3142, %s3141, 31
      %s3144 = smul.addr %s3143, 8
      %s3145 = scalar_lea.vmem %s17, %s3144
      // Predicated region
      $region89: #{forward.10} parent=87 // pred_check
        %p3146 = pneg %p408
      $region90: #{forward.10} parent=87 // pred_check_branch
        %3148 = sbr.rel (%p3146) target = $region92
      $region91: #{forward.10} parent=87 // pred_region
        %s3149 = smul.u32 16, %s28
      $region92: #{forward.10} parent=87 // pred_fallthru
        _
    $region88: #{forward.10} parent=5 // pred_fallthru
      _
    %p3150 = scmp.le.s32.totalorder 2, %s23
    // Predicated region
    $region93: #{forward.10} parent=5 // pred_check
      %p3151 = pneg %p3150
    $region94: #{forward.10} parent=5 // pred_check_branch
      %3153 = sbr.rel (%p3151) target = $region96
    $region95: #{forward.10} parent=5 // pred_region
      %s3154 = ssub.s32 %s23, 2
      // Predicated region
      $region97: #{forward.10} parent=95 // pred_check
        %p3155 = pneg %p414
      $region98: #{forward.10} parent=95 // pred_check_branch
        %3157 = sbr.rel (%p3155) target = $region100
      $region99: #{forward.10} parent=95 // pred_region
        %s3158 = smul.u32 16, %s29
        %p3159 = scmp.lt.s32.totalorder %s3158, 31
        %s3160 = scalar_select %p3159, %s3158, 31
        %s3161 = smul.addr %s3160, 8
        %s3162 = scalar_lea.vmem %s17, %s3161
      $region100: #{forward.10} parent=95 // pred_fallthru
        _
    $region96: #{forward.10} parent=5 // pred_fallthru
      _
  $region6: #{forward.10} parent=0 // loop_footer
    %s27 = sadd.s32 1, %s23
  $region7: #{forward.10} parent=0 // loop_footer_branch
    %22 = sbr.rel target = $region3
  $region8: #{forward.10} parent=0 // loop_exit
    _

// kernel: forward.12
$region0: #{forward.12}
  #allocation0 [shape = 'u32[]', space=smem, size = 0x4, offset = 0x4, fixed_abs, tag = 'smem constant byte address 0x4 - core index']
  #allocation1 [shape = 'u32[144,128]{1,0:T(1,128)}', space=vmem, size = 0x12000, scoped, tag = 'internal scratch']
  %s0 = inlined_call_operand.vmem [shape: f32[64,144], index: 0, kind: input, shape index: {}]
  %s1 = inlined_call_operand.vmem [shape: bf16[144,32], index: 1, kind: input, shape index: {}]
  %s2 = inlined_call_operand.vmem [shape: f32[1,32], index: 2, kind: input, shape index: {}]
  %s3 = inlined_call_operand.vmem [shape: f32[1,32], index: 3, kind: input, shape index: {}]
  %s4 = inlined_call_operand.vmem [shape: f32[1,32], index: 4, kind: input, shape index: {}]
  %s5 = inlined_call_operand.vmem [shape: f32[64,32], index: 5, kind: output, shape index: {}]
  %s6 = sld [smem:[#allocation0]]
  $region30: #{forward.12} parent=0
    _
  %s8 = ssub.s32 1, %s6
  %s9 = scalar_select 0, %s8, %s6
  // Predicated region
  $region2: #{forward.12} parent=0 // pred_check
    _
  $region3: #{forward.12} parent=0 // pred_check_branch
    %11 = sbr.rel (0) target = $region5
  $region4: #{forward.12} parent=0 // pred_region
    _
  $region5: #{forward.12} parent=0 // pred_fallthru
    _
  // Predicated region
  $region6: #{forward.12} parent=0 // pred_check
    _
  $region7: #{forward.12} parent=0 // pred_check_branch
    %13 = sbr.rel (0) target = $region9
  $region8: #{forward.12} parent=0 // pred_region
    _
  $region9: #{forward.12} parent=0 // pred_fallthru
    _
  // Predicated region
  $region10: #{forward.12} parent=0 // pred_check
    _
  $region11: #{forward.12} parent=0 // pred_check_branch
    %15 = sbr.rel (0) target = $region13
  $region12: #{forward.12} parent=0 // pred_region
    _
  $region13: #{forward.12} parent=0 // pred_fallthru
    _
  // Predicated region
  $region14: #{forward.12} parent=0 // pred_check
    _
  $region15: #{forward.12} parent=0 // pred_check_branch
    %17 = sbr.rel (0) target = $region17
  $region16: #{forward.12} parent=0 // pred_region
    _
  $region17: #{forward.12} parent=0 // pred_fallthru
    _
  // Predicated region
  $region18: #{forward.12} parent=0 // pred_check
    _
  $region19: #{forward.12} parent=0 // pred_check_branch
    %19 = sbr.rel (0) target = $region21
  $region20: #{forward.12} parent=0 // pred_region
    _
  $region21: #{forward.12} parent=0 // pred_fallthru
    _
  %v21 = vld [vmem:[%s0] sm:$0xff]
  %v22 = vld [vmem:[%s0 + $0x8] sm:$0xff]
  %v23 = vld [vmem:[%s0 + $0x10] sm:$0xff]
  %v24 = vld [vmem:[%s0 + $0x18] sm:$0xff]
  %v25 = vld [vmem:[%s0 + $0x20] sm:$0xff]
  %v26 = vld [vmem:[%s0 + $0x28] sm:$0xff]
  %v27 = vld [vmem:[%s0 + $0x30] sm:$0xff]
  %v28 = vld [vmem:[%s0 + $0x38] sm:$0xff]
  %v29 = vld [vmem:[%s0 + $0x40] sm:$0xff]
  %v30 = vld [vmem:[%s0 + $0x48] sm:$0xff]
  %v31 = vld [vmem:[%s0 + $0x50] sm:$0xff]
  %v32 = vld [vmem:[%s0 + $0x58] sm:$0xff]
  %v33 = vld [vmem:[%s0 + $0x60] sm:$0xff]
  %v34 = vld [vmem:[%s0 + $0x68] sm:$0xff]
  %v35 = vld [vmem:[%s0 + $0x70] sm:$0xff]
  %v36 = vld [vmem:[%s0 + $0x78] sm:$0xff]
  %v37 = vpack.c.bf16 %v23, %v21
  %v38 = vpack.c.bf16 %v24, %v22
  %v39 = vpack.c.bf16 %v27, %v25
  %v40 = vpack.c.bf16 %v28, %v26
  %v41 = vpack.c.bf16 %v31, %v29
  %v42 = vpack.c.bf16 %v32, %v30
  %v43 = vpack.c.bf16 %v35, %v33
  %v44 = vpack.c.bf16 %v36, %v34
  %v45 = vld [vmem:[%s1] sm:$0xf]
  %v46 = vld [vmem:[%s1 + $0x4] sm:$0xf]
  %v47 = vld [vmem:[%s1 + $0x8] sm:$0xf]
  %v48 = vld [vmem:[%s1 + $0xc] sm:$0xf]
  %v49 = vld [vmem:[%s1 + $0x10] sm:$0xf]
  %v50 = vld [vmem:[%s1 + $0x14] sm:$0xf]
  %v51 = vld [vmem:[%s1 + $0x18] sm:$0xf]
  %v52 = vld [vmem:[%s1 + $0x1c] sm:$0xf]
  %v53 = vld [vmem:[%s1 + $0x20] sm:$0xf]
  %v54 = vld [vmem:[%s1 + $0x24] sm:$0xf]
  %v55 = vld [vmem:[%s1 + $0x28] sm:$0xf]
  %v56 = vld [vmem:[%s1 + $0x2c] sm:$0xf]
  %v57 = vld [vmem:[%s1 + $0x30] sm:$0xf]
  %v58 = vld [vmem:[%s1 + $0x34] sm:$0xf]
  %v59 = vld [vmem:[%s1 + $0x38] sm:$0xf]
  %v60 = vld [vmem:[%s1 + $0x3c] sm:$0xf]
  %v61 = vld [vmem:[%s1 + $0x40] sm:$0xf]
  %v62 = vld [vmem:[%s1 + $0x44] sm:$0xf]
  %v63 = vld [vmem:[%s2] sm:$0x1]
  %v65 = vlaneseq
  %v66 = vshrl.u32 %v65, 7
  %v67 = vsub.s32 0, %v66
  %v68 = vrot.slane %v63, %v67
  %v88 = vunpack.c.l.b16 %v45
  %v89 = vunpack.c.l.b16 %v46
  %v90 = vunpack.c.l.b16 %v47
  %v91 = vunpack.c.l.b16 %v48
  %v92 = vunpack.c.l.b16 %v49
  %v93 = vunpack.c.l.b16 %v50
  %v94 = vunpack.c.l.b16 %v51
  %v95 = vunpack.c.l.b16 %v52
  %v96 = vunpack.c.l.b16 %v53
  %v97 = vunpack.c.l.b16 %v54
  %v98 = vunpack.c.l.b16 %v55
  %v99 = vunpack.c.l.b16 %v56
  %v100 = vunpack.c.l.b16 %v57
  %v101 = vunpack.c.l.b16 %v58
  %v102 = vunpack.c.l.b16 %v59
  %v103 = vunpack.c.l.b16 %v60
  %v104 = vunpack.c.l.b16 %v61
  %v105 = vunpack.c.l.b16 %v62
  %v106 = vpack.c.b16 %v89, %v88
  %v107 = vpack.c.b16 %v91, %v90
  %v108 = vpack.c.b16 %v93, %v92
  %v109 = vpack.c.b16 %v95, %v94
  %v110 = vpack.c.b16 %v97, %v96
  %v111 = vpack.c.b16 %v99, %v98
  %v112 = vpack.c.b16 %v101, %v100
  %v113 = vpack.c.b16 %v103, %v102
  %v114 = vpack.c.b16 %v105, %v104
  %vm124 = vcmask 130048
  %v126 = vsel %vm124, %v38, 0
  %v129 = vsel %vm124, %v40, 0
  %v132 = vsel %vm124, %v42, 0
  %v135 = vsel %vm124, %v44, 0
  %137 = vmatprep.subr.bf16.mxu0 0
  %138 = vmatpush1.bf16.msra.mxu0 %v106
  %139 = vmatprep.subr.bf16.mxu0 0
  %140 = vmatpush1.bf16.msra.mxu0 %v107
  %141 = vmatprep.subr.bf16.mxu0 0
  %142 = vmatpush1.bf16.msra.mxu0 %v108
  %143 = vmatprep.subr.bf16.mxu0 0
  %144 = vmatpush1.bf16.msra.mxu0 %v109
  %145 = vmatprep.subr.bf16.mxu0 0
  %146 = vmatpush1.bf16.msra.mxu0 %v110
  %147 = vmatprep.subr.bf16.mxu0 0
  %148 = vmatpush1.bf16.msra.mxu0 %v111
  %149 = vmatprep.subr.bf16.mxu0 0
  %150 = vmatpush1.bf16.msra.mxu0 %v112
  %151 = vmatprep.subr.bf16.mxu0 0
  %152 = vmatpush1.bf16.msra.mxu0 %v113
  %153 = vmatprep.subr.bf16.mxu0 0
  %154 = vmatpush1.bf16.msra.mxu0 %v114
  %155 = vmatprep.subr.bf16.mxu0 0
  %156 = vmatpush1.bf16.msra.mxu0 0
  %157 = vmatprep.subr.bf16.mxu0 0
  %158 = vmatpush1.bf16.msra.mxu0 0
  %159 = vmatprep.subr.bf16.mxu0 0
  %160 = vmatpush1.bf16.msra.mxu0 0
  %161 = vmatprep.subr.bf16.mxu0 0
  %162 = vmatpush1.bf16.msra.mxu0 0
  %163 = vmatprep.subr.bf16.mxu0 0
  %164 = vmatpush1.bf16.msra.mxu0 0
  %165 = vmatprep.subr.bf16.mxu0 0
  %166 = vmatpush1.bf16.msra.mxu0 0
  %167 = vmatprep.subr.bf16.mxu0 0
  %168 = vmatpush1.bf16.msra.mxu0 0
  %169 = vmatprep.mubr.bf16.mxu0 %v126
  %170 = vmatmul.mubr.bf16.gmra.mrb[0].mxu0 %v37
  %v171 = vpop.f32.mrb[0].mxu0
  %v172 = vadd.f32 %v68, %v171
  %v173 = vpop.f32.mrb[0].mxu0
  %v174 = vpop.f32.mrb[0].mxu0
  %v175 = vadd.f32 %v68, %v174
  %v176 = vpop.f32.mrb[0].mxu0
  %177 = vmatprep.mubr.bf16.mxu0 %v129
  %178 = vmatmul.mubr.bf16.gmra.mrb[0].mxu0 %v39
  %v179 = vpop.f32.mrb[0].mxu0
  %v180 = vadd.f32 %v68, %v179
  %v181 = vpop.f32.mrb[0].mxu0
  %v182 = vpop.f32.mrb[0].mxu0
  %v183 = vadd.f32 %v68, %v182
  %v184 = vpop.f32.mrb[0].mxu0
  %185 = vmatprep.mubr.bf16.mxu0 %v132
  %186 = vmatmul.mubr.bf16.gmra.mrb[0].mxu0 %v41
  %v187 = vpop.f32.mrb[0].mxu0
  %v188 = vadd.f32 %v68, %v187
  %v189 = vpop.f32.mrb[0].mxu0
  %v190 = vpop.f32.mrb[0].mxu0
  %v191 = vadd.f32 %v68, %v190
  %v192 = vpop.f32.mrb[0].mxu0
  %193 = vmatprep.mubr.bf16.mxu0 %v135
  %194 = vmatmul.mubr.bf16.gmra.mrb[0].mxu0 %v43
  %v195 = vpop.f32.mrb[0].mxu0
  %v196 = vadd.f32 %v68, %v195
  %v197 = vpop.f32.mrb[0].mxu0
  %v198 = vpop.f32.mrb[0].mxu0
  %v199 = vadd.f32 %v68, %v198
  %v200 = vpop.f32.mrb[0].mxu0
  %201 = vdwg.mxu0
  %v202 = vld [vmem:[%s3] sm:$0x1]
  %v203 = vld [vmem:[%s4] sm:$0x1]
  %vm204 = vcmask 261120
  %v205 = vsel %vm204, %v172, 0.0
  %206 = vadd.xlane.f32.xlu0 %v205
  %v207 = vpop.xlane.xlu0 %206
  %v208 = vsel %vm204, %v175, 0.0
  %209 = vadd.xlane.f32.xlu0 %v208
  %v210 = vpop.xlane.xlu0 %209
  %v211 = vsel %vm204, %v180, 0.0
  %212 = vadd.xlane.f32.xlu0 %v211
  %v213 = vpop.xlane.xlu0 %212
  %v214 = vsel %vm204, %v183, 0.0
  %215 = vadd.xlane.f32.xlu0 %v214
  %v216 = vpop.xlane.xlu0 %215
  %v217 = vsel %vm204, %v188, 0.0
  %218 = vadd.xlane.f32.xlu0 %v217
  %v219 = vpop.xlane.xlu0 %218
  %v220 = vsel %vm204, %v191, 0.0
  %221 = vadd.xlane.f32.xlu0 %v220
  %v222 = vpop.xlane.xlu0 %221
  %v223 = vsel %vm204, %v196, 0.0
  %224 = vadd.xlane.f32.xlu0 %v223
  %v225 = vpop.xlane.xlu0 %224
  %v226 = vsel %vm204, %v199, 0.0
  %227 = vadd.xlane.f32.xlu0 %v226
  %v228 = vpop.xlane.xlu0 %227
  %v229 = vrcp.pop 32.0
  %v230 = vmul.f32 %v207, %v229
  %v231 = vmul.f32 %v210, %v229
  %v232 = vmul.f32 %v213, %v229
  %v233 = vmul.f32 %v216, %v229
  %v234 = vmul.f32 %v219, %v229
  %v235 = vmul.f32 %v222, %v229
  %v236 = vmul.f32 %v225, %v229
  %v237 = vmul.f32 %v228, %v229
  %v238 = vsub.f32 %v172, %v230
  %v239 = vsub.f32 %v175, %v231
  %v240 = vsub.f32 %v180, %v232
  %v241 = vsub.f32 %v183, %v233
  %v242 = vsub.f32 %v188, %v234
  %v243 = vsub.f32 %v191, %v235
  %v244 = vsub.f32 %v196, %v236
  %v245 = vsub.f32 %v199, %v237
  %v246 = vmul.f32 %v238, %v238
  %v247 = vmul.f32 %v239, %v239
  %v248 = vmul.f32 %v240, %v240
  %v249 = vmul.f32 %v241, %v241
  %v250 = vmul.f32 %v242, %v242
  %v251 = vmul.f32 %v243, %v243
  %v252 = vmul.f32 %v244, %v244
  %v253 = vmul.f32 %v245, %v245
  %v254 = vsel %vm204, %v246, 0.0
  %255 = vadd.xlane.f32.xlu0 %v254
  %v256 = vpop.xlane.xlu0 %255
  %v257 = vsel %vm204, %v247, 0.0
  %258 = vadd.xlane.f32.xlu0 %v257
  %v259 = vpop.xlane.xlu0 %258
  %v260 = vsel %vm204, %v248, 0.0
  %261 = vadd.xlane.f32.xlu0 %v260
  %v262 = vpop.xlane.xlu0 %261
  %v263 = vsel %vm204, %v249, 0.0
  %264 = vadd.xlane.f32.xlu0 %v263
  %v265 = vpop.xlane.xlu0 %264
  %v266 = vsel %vm204, %v250, 0.0
  %267 = vadd.xlane.f32.xlu0 %v266
  %v268 = vpop.xlane.xlu0 %267
  %v269 = vsel %vm204, %v251, 0.0
  %270 = vadd.xlane.f32.xlu0 %v269
  %v271 = vpop.xlane.xlu0 %270
  %v272 = vsel %vm204, %v252, 0.0
  %273 = vadd.xlane.f32.xlu0 %v272
  %v274 = vpop.xlane.xlu0 %273
  %v275 = vsel %vm204, %v253, 0.0
  %276 = vadd.xlane.f32.xlu0 %v275
  %v277 = vpop.xlane.xlu0 %276
  %v278 = vmul.f32 %v256, %v229
  %v279 = vmul.f32 %v259, %v229
  %v280 = vmul.f32 %v262, %v229
  %v281 = vmul.f32 %v265, %v229
  %v282 = vmul.f32 %v268, %v229
  %v283 = vmul.f32 %v271, %v229
  %v284 = vmul.f32 %v274, %v229
  %v285 = vmul.f32 %v277, %v229
  %v286 = vadd.f32 %v278, 1e-05
  %v287 = vadd.f32 %v279, 1e-05
  %v288 = vadd.f32 %v280, 1e-05
  %v289 = vadd.f32 %v281, 1e-05
  %v290 = vadd.f32 %v282, 1e-05
  %v291 = vadd.f32 %v283, 1e-05
  %v292 = vadd.f32 %v284, 1e-05
  %v293 = vadd.f32 %v285, 1e-05
  %v294 = vrsqrt.pop %v286
  %v295 = vrsqrt.pop %v287
  %v296 = vrsqrt.pop %v288
  %v297 = vrsqrt.pop %v289
  %v298 = vrsqrt.pop %v290
  %v299 = vrsqrt.pop %v291
  %v300 = vrsqrt.pop %v292
  %v301 = vrsqrt.pop %v293
  %v302 = vmul.f32 %v238, %v294
  %v303 = vmul.f32 %v239, %v295
  %v304 = vmul.f32 %v240, %v296
  %v305 = vmul.f32 %v241, %v297
  %v306 = vmul.f32 %v242, %v298
  %v307 = vmul.f32 %v243, %v299
  %v308 = vmul.f32 %v244, %v300
  %v309 = vmul.f32 %v245, %v301
  %v311 = vlaneseq
  %v312 = vshrl.u32 %v311, 7
  %v313 = vsub.s32 0, %v312
  %v314 = vrot.slane %v202, %v313
  %v316 = vmul.f32 %v302, %v314
  %v317 = vmul.f32 %v303, %v314
  %v318 = vmul.f32 %v304, %v314
  %v319 = vmul.f32 %v305, %v314
  %v320 = vmul.f32 %v306, %v314
  %v321 = vmul.f32 %v307, %v314
  %v322 = vmul.f32 %v308, %v314
  %v323 = vmul.f32 %v309, %v314
  %v325 = vlaneseq
  %v326 = vshrl.u32 %v325, 7
  %v327 = vsub.s32 0, %v326
  %v328 = vrot.slane %v203, %v327
  %v330 = vadd.f32 %v316, %v328
  %v331 = vadd.f32 %v317, %v328
  %v332 = vadd.f32 %v318, %v328
  %v333 = vadd.f32 %v319, %v328
  %v334 = vadd.f32 %v320, %v328
  %v335 = vadd.f32 %v321, %v328
  %v336 = vadd.f32 %v322, %v328
  %v337 = vadd.f32 %v323, %v328
  %338 = vst.msk [vmem:[%s5] sm:$0xff] %vm204, %v330
  %339 = vst.msk [vmem:[%s5 + $0x8] sm:$0xff] %vm204, %v331
  %340 = vst.msk [vmem:[%s5 + $0x10] sm:$0xff] %vm204, %v332
  %341 = vst.msk [vmem:[%s5 + $0x18] sm:$0xff] %vm204, %v333
  %342 = vst.msk [vmem:[%s5 + $0x20] sm:$0xff] %vm204, %v334
  %343 = vst.msk [vmem:[%s5 + $0x28] sm:$0xff] %vm204, %v335
  %344 = vst.msk [vmem:[%s5 + $0x30] sm:$0xff] %vm204, %v336
  %345 = vst.msk [vmem:[%s5 + $0x38] sm:$0xff] %vm204, %v337
  // Predicated region
  $region22: #{forward.12} parent=0 // pred_check
    _
  $region23: #{forward.12} parent=0 // pred_check_branch
    %347 = sbr.rel (0) target = $region25
  $region24: #{forward.12} parent=0 // pred_region
    _
  $region25: #{forward.12} parent=0 // pred_fallthru
    _
  // Predicated region
  $region26: #{forward.12} parent=0 // pred_check
    _
  $region27: #{forward.12} parent=0 // pred_check_branch
    %349 = sbr.rel (0) target = $region29
  $region28: #{forward.12} parent=0 // pred_region
    _
  $region29: #{forward.12} parent=0 // pred_fallthru
    _

// kernel: forward.13
$region0: #{forward.13}
  #allocation0 [shape = 'u32[]', space=smem, size = 0x4, offset = 0x4, fixed_abs, tag = 'smem constant byte address 0x4 - core index']
  #allocation1 [shape = 'u32[144,128]{1,0:T(1,128)}', space=vmem, size = 0x12000, scoped, tag = 'internal scratch']
  #allocation2 [shape = 'f32[32,32]{1,0:T(8,128)}', space=vmem, size = 0x4000, scoped, tag = 'scratch operand']
  %s0 = inlined_call_operand.vmem [shape: f32[64,32], index: 0, kind: input, shape index: {}]
  %s1 = inlined_call_operand.vmem [shape: f32[1,32], index: 1, kind: input, shape index: {}]
  %s2 = inlined_call_operand.vmem [shape: f32[1,32], index: 2, kind: input, shape index: {}]
  %s3 = inlined_call_operand.vmem [shape: bf16[32,64], index: 3, kind: input, shape index: {}]
  %s4 = inlined_call_operand.vmem [shape: f32[1,64], index: 4, kind: input, shape index: {}]
  %s5 = inlined_call_operand.vmem [shape: f32[2,32,32], index: 5, kind: input, shape index: {}]
  %s6 = inlined_call_operand.vmem [shape: f32[32,32], index: 6, kind: input, shape index: {}]
  %s7 = inlined_call_operand.vmem [shape: bf16[32,32], index: 7, kind: input, shape index: {}]
  %s8 = inlined_call_operand.vmem [shape: f32[1,32], index: 8, kind: input, shape index: {}]
  %s9 = inlined_call_operand.vmem [shape: f32[1,32], index: 9, kind: input, shape index: {}]
  %s10 = inlined_call_operand.vmem [shape: f32[1,32], index: 10, kind: input, shape index: {}]
  %s11 = inlined_call_operand.vmem [shape: bf16[32,64], index: 11, kind: input, shape index: {}]
  %s12 = inlined_call_operand.vmem [shape: f32[1,64], index: 12, kind: input, shape index: {}]
  %s13 = inlined_call_operand.vmem [shape: bf16[4,32,32], index: 13, kind: input, shape index: {}]
  %s14 = inlined_call_operand.vmem [shape: f32[32,32], index: 14, kind: input, shape index: {}]
  %s15 = inlined_call_operand.vmem [shape: bf16[32,32], index: 15, kind: input, shape index: {}]
  %s16 = inlined_call_operand.vmem [shape: f32[1,32], index: 16, kind: input, shape index: {}]
  %s17 = inlined_call_operand.vmem [shape: f32[64,32], index: 17, kind: output, shape index: {}]
  %s18 = sld [smem:[#allocation0]]
  $region101: #{forward.13} parent=0
    _
  %s20 = ssub.s32 1, %s18
  %s21 = scalar_select 0, %s20, %s18
  loop: start=0, step=1, limit=4
  $region2: #{forward.13} parent=0 // loop_pre_header
    _
  $region3: #{forward.13} parent=0 // loop_header
    %s23 = sphi 0, %s27
    %p24 = scmp.ge.s32.totalorder %s23, 4
    %s33 = sphi 0, %s35
    %s36 = sphi 0, %s33
    %s37 = sphi 0, %s36
    %s53 = sphi 0, %s37
    %s57 = sphi 0, %s57
    %s59 = sphi 0, %s57
    %s60 = sphi 0, %s59
    %s74 = sphi 0, %s60
    %s78 = sphi 0, %s78
    %s80 = sphi 0, %s78
    %s81 = sphi 0, %s80
    %s95 = sphi 0, %s81
    %s99 = sphi 0, %s99
    %s101 = sphi 0, %s99
    %s102 = sphi 0, %s101
    %s116 = sphi 0, %s102
    %s120 = sphi 0, %s120
    %s122 = sphi 0, %s120
    %s123 = sphi 0, %s122
    %s137 = sphi 0, %s123
    %s141 = sphi 0, %s141
    %s143 = sphi 0, %s141
    %s144 = sphi 0, %s143
    %s158 = sphi 0, %s144
    %s162 = sphi 0, %s162
    %s164 = sphi 0, %s162
    %s165 = sphi 0, %s164
    %s179 = sphi 0, %s165
    %s183 = sphi 0, %s183
    %s185 = sphi 0, %s183
    %s186 = sphi 0, %s185
    %s200 = sphi 0, %s186
    %s204 = sphi 0, %s204
    %s206 = sphi 0, %s204
    %s207 = sphi 0, %s206
    %s221 = sphi 0, %s207
    %s225 = sphi 0, %s225
    %s227 = sphi 0, %s225
    %s228 = sphi 0, %s227
    %s242 = sphi 0, %s228
    %s246 = sphi 0, %s246
    %s248 = sphi 0, %s246
    %s249 = sphi 0, %s248
    %s263 = sphi 0, %s249
    %s267 = sphi 0, %s267
    %s269 = sphi 0, %s267
    %s270 = sphi 0, %s269
    %s284 = sphi 0, %s270
    %s288 = sphi 0, %s288
    %s290 = sphi 0, %s288
    %s291 = sphi 0, %s290
    %s305 = sphi 0, %s291
    %s309 = sphi 0, %s309
    %s311 = sphi 0, %s309
    %s312 = sphi 0, %s311
    %s326 = sphi 0, %s312
    %s330 = sphi 0, %s330
    %s332 = sphi 0, %s330
    %s333 = sphi 0, %s332
    %s347 = sphi 0, %s333
    %s351 = sphi 0, %s351
    %s353 = sphi 0, %s351
    %s354 = sphi 0, %s353
    %s368 = sphi 0, %s354
    %s372 = sphi 0, %s372
    %s374 = sphi 0, %s372
    %s375 = sphi 0, %s374
    %s389 = sphi 0, %s375
    %s395 = sphi 0, %s397
    %s398 = sphi 0, %s395
    %s399 = sphi 0, %s398
    %s415 = sphi 0, %s399
  $region4: #{forward.13} parent=0 // loop_header_branch
    %26 = sbr.rel (%p24) target = $region8
  $region5: #{forward.13} parent=0 // loop_body
    %s28 = ssub.s32 %s23, 1
    %s29 = ssub.s32 %s23, 2
    %s30 = sadd.s32 %s23, 1
    %s31 = ssub.s32 %s23, %s30
    %p32 = scmp.eq.s32.totalorder %s31, 0
    %s34 = sadd.s32 %s33, 1
    %s35 = scalar_select %p32, %s33, %s34
    %p38 = pneg %p32
    %p39 = scmp.eq.s32.totalorder %s23, 1
    %p40 = por %p38, %p39
    %p41 = scmp.ne.s32.totalorder %s33, %s36
    %p42 = scmp.eq.s32.totalorder %s23, 0
    %p43 = por %p41, %p42
    %p44 = scmp.ne.s32.totalorder %s33, %s36
    %p45 = scmp.eq.s32.totalorder %s28, 1
    %p46 = por %p44, %p45
    %p47 = scmp.ne.s32.totalorder %s36, %s37
    %p48 = scmp.eq.s32.totalorder %s28, 0
    %p49 = por %p47, %p48
    %p50 = scmp.ne.s32.totalorder %s36, %s37
    %p51 = scmp.eq.s32.totalorder %s29, 1
    %p52 = por %p50, %p51
    %p54 = scmp.ne.s32.totalorder %s37, %s53
    %p55 = scmp.eq.s32.totalorder %s29, 0
    %p56 = por %p54, %p55
    %s58 = sadd.s32 %s57, 1
    %p61 = scmp.eq.s32.totalorder %s23, 1
    %p62 = scmp.ne.s32.totalorder %s57, %s59
    %p63 = scmp.eq.s32.totalorder %s23, 0
    %p64 = por %p62, %p63
    %p65 = scmp.ne.s32.totalorder %s57, %s59
    %p66 = scmp.eq.s32.totalorder %s28, 1
    %p67 = por %p65, %p66
    %p68 = scmp.ne.s32.totalorder %s59, %s60
    %p69 = scmp.eq.s32.totalorder %s28, 0
    %p70 = por %p68, %p69
    %p71 = scmp.ne.s32.totalorder %s59, %s60
    %p72 = scmp.eq.s32.totalorder %s29, 1
    %p73 = por %p71, %p72
    %p75 = scmp.ne.s32.totalorder %s60, %s74
    %p76 = scmp.eq.s32.totalorder %s29, 0
    %p77 = por %p75, %p76
    %s79 = sadd.s32 %s78, 1
    %p82 = scmp.eq.s32.totalorder %s23, 1
    %p83 = scmp.ne.s32.totalorder %s78, %s80
    %p84 = scmp.eq.s32.totalorder %s23, 0
    %p85 = por %p83, %p84
    %p86 = scmp.ne.s32.totalorder %s78, %s80
    %p87 = scmp.eq.s32.totalorder %s28, 1
    %p88 = por %p86, %p87
    %p89 = scmp.ne.s32.totalorder %s80, %s81
    %p90 = scmp.eq.s32.totalorder %s28, 0
    %p91 = por %p89, %p90
    %p92 = scmp.ne.s32.totalorder %s80, %s81
    %p93 = scmp.eq.s32.totalorder %s29, 1
    %p94 = por %p92, %p93
    %p96 = scmp.ne.s32.totalorder %s81, %s95
    %p97 = scmp.eq.s32.totalorder %s29, 0
    %p98 = por %p96, %p97
    %s100 = sadd.s32 %s99, 1
    %p103 = scmp.eq.s32.totalorder %s23, 1
    %p104 = scmp.ne.s32.totalorder %s99, %s101
    %p105 = scmp.eq.s32.totalorder %s23, 0
    %p106 = por %p104, %p105
    %p107 = scmp.ne.s32.totalorder %s99, %s101
    %p108 = scmp.eq.s32.totalorder %s28, 1
    %p109 = por %p107, %p108
    %p110 = scmp.ne.s32.totalorder %s101, %s102
    %p111 = scmp.eq.s32.totalorder %s28, 0
    %p112 = por %p110, %p111
    %p113 = scmp.ne.s32.totalorder %s101, %s102
    %p114 = scmp.eq.s32.totalorder %s29, 1
    %p115 = por %p113, %p114
    %p117 = scmp.ne.s32.totalorder %s102, %s116
    %p118 = scmp.eq.s32.totalorder %s29, 0
    %p119 = por %p117, %p118
    %s121 = sadd.s32 %s120, 1
    %p124 = scmp.eq.s32.totalorder %s23, 1
    %p125 = scmp.ne.s32.totalorder %s120, %s122
    %p126 = scmp.eq.s32.totalorder %s23, 0
    %p127 = por %p125, %p126
    %p128 = scmp.ne.s32.totalorder %s120, %s122
    %p129 = scmp.eq.s32.totalorder %s28, 1
    %p130 = por %p128, %p129
    %p131 = scmp.ne.s32.totalorder %s122, %s123
    %p132 = scmp.eq.s32.totalorder %s28, 0
    %p133 = por %p131, %p132
    %p134 = scmp.ne.s32.totalorder %s122, %s123
    %p135 = scmp.eq.s32.totalorder %s29, 1
    %p136 = por %p134, %p135
    %p138 = scmp.ne.s32.totalorder %s123, %s137
    %p139 = scmp.eq.s32.totalorder %s29, 0
    %p140 = por %p138, %p139
    %s142 = sadd.s32 %s141, 1
    %p145 = scmp.eq.s32.totalorder %s23, 1
    %p146 = scmp.ne.s32.totalorder %s141, %s143
    %p147 = scmp.eq.s32.totalorder %s23, 0
    %p148 = por %p146, %p147
    %p149 = scmp.ne.s32.totalorder %s141, %s143
    %p150 = scmp.eq.s32.totalorder %s28, 1
    %p151 = por %p149, %p150
    %p152 = scmp.ne.s32.totalorder %s143, %s144
    %p153 = scmp.eq.s32.totalorder %s28, 0
    %p154 = por %p152, %p153
    %p155 = scmp.ne.s32.totalorder %s143, %s144
    %p156 = scmp.eq.s32.totalorder %s29, 1
    %p157 = por %p155, %p156
    %p159 = scmp.ne.s32.totalorder %s144, %s158
    %p160 = scmp.eq.s32.totalorder %s29, 0
    %p161 = por %p159, %p160
    %s163 = sadd.s32 %s162, 1
    %p166 = scmp.eq.s32.totalorder %s23, 1
    %p167 = scmp.ne.s32.totalorder %s162, %s164
    %p168 = scmp.eq.s32.totalorder %s23, 0
    %p169 = por %p167, %p168
    %p170 = scmp.ne.s32.totalorder %s162, %s164
    %p171 = scmp.eq.s32.totalorder %s28, 1
    %p172 = por %p170, %p171
    %p173 = scmp.ne.s32.totalorder %s164, %s165
    %p174 = scmp.eq.s32.totalorder %s28, 0
    %p175 = por %p173, %p174
    %p176 = scmp.ne.s32.totalorder %s164, %s165
    %p177 = scmp.eq.s32.totalorder %s29, 1
    %p178 = por %p176, %p177
    %p180 = scmp.ne.s32.totalorder %s165, %s179
    %p181 = scmp.eq.s32.totalorder %s29, 0
    %p182 = por %p180, %p181
    %s184 = sadd.s32 %s183, 1
    %p187 = scmp.eq.s32.totalorder %s23, 1
    %p188 = scmp.ne.s32.totalorder %s183, %s185
    %p189 = scmp.eq.s32.totalorder %s23, 0
    %p190 = por %p188, %p189
    %p191 = scmp.ne.s32.totalorder %s183, %s185
    %p192 = scmp.eq.s32.totalorder %s28, 1
    %p193 = por %p191, %p192
    %p194 = scmp.ne.s32.totalorder %s185, %s186
    %p195 = scmp.eq.s32.totalorder %s28, 0
    %p196 = por %p194, %p195
    %p197 = scmp.ne.s32.totalorder %s185, %s186
    %p198 = scmp.eq.s32.totalorder %s29, 1
    %p199 = por %p197, %p198
    %p201 = scmp.ne.s32.totalorder %s186, %s200
    %p202 = scmp.eq.s32.totalorder %s29, 0
    %p203 = por %p201, %p202
    %s205 = sadd.s32 %s204, 1
    %p208 = scmp.eq.s32.totalorder %s23, 1
    %p209 = scmp.ne.s32.totalorder %s204, %s206
    %p210 = scmp.eq.s32.totalorder %s23, 0
    %p211 = por %p209, %p210
    %p212 = scmp.ne.s32.totalorder %s204, %s206
    %p213 = scmp.eq.s32.totalorder %s28, 1
    %p214 = por %p212, %p213
    %p215 = scmp.ne.s32.totalorder %s206, %s207
    %p216 = scmp.eq.s32.totalorder %s28, 0
    %p217 = por %p215, %p216
    %p218 = scmp.ne.s32.totalorder %s206, %s207
    %p219 = scmp.eq.s32.totalorder %s29, 1
    %p220 = por %p218, %p219
    %p222 = scmp.ne.s32.totalorder %s207, %s221
    %p223 = scmp.eq.s32.totalorder %s29, 0
    %p224 = por %p222, %p223
    %s226 = sadd.s32 %s225, 1
    %p229 = scmp.eq.s32.totalorder %s23, 1
    %p230 = scmp.ne.s32.totalorder %s225, %s227
    %p231 = scmp.eq.s32.totalorder %s23, 0
    %p232 = por %p230, %p231
    %p233 = scmp.ne.s32.totalorder %s225, %s227
    %p234 = scmp.eq.s32.totalorder %s28, 1
    %p235 = por %p233, %p234
    %p236 = scmp.ne.s32.totalorder %s227, %s228
    %p237 = scmp.eq.s32.totalorder %s28, 0
    %p238 = por %p236, %p237
    %p239 = scmp.ne.s32.totalorder %s227, %s228
    %p240 = scmp.eq.s32.totalorder %s29, 1
    %p241 = por %p239, %p240
    %p243 = scmp.ne.s32.totalorder %s228, %s242
    %p244 = scmp.eq.s32.totalorder %s29, 0
    %p245 = por %p243, %p244
    %s247 = sadd.s32 %s246, 1
    %p250 = scmp.eq.s32.totalorder %s23, 1
    %p251 = scmp.ne.s32.totalorder %s246, %s248
    %p252 = scmp.eq.s32.totalorder %s23, 0
    %p253 = por %p251, %p252
    %p254 = scmp.ne.s32.totalorder %s246, %s248
    %p255 = scmp.eq.s32.totalorder %s28, 1
    %p256 = por %p254, %p255
    %p257 = scmp.ne.s32.totalorder %s248, %s249
    %p258 = scmp.eq.s32.totalorder %s28, 0
    %p259 = por %p257, %p258
    %p260 = scmp.ne.s32.totalorder %s248, %s249
    %p261 = scmp.eq.s32.totalorder %s29, 1
    %p262 = por %p260, %p261
    %p264 = scmp.ne.s32.totalorder %s249, %s263
    %p265 = scmp.eq.s32.totalorder %s29, 0
    %p266 = por %p264, %p265
    %s268 = sadd.s32 %s267, 1
    %p271 = scmp.eq.s32.totalorder %s23, 1
    %p272 = scmp.ne.s32.totalorder %s267, %s269
    %p273 = scmp.eq.s32.totalorder %s23, 0
    %p274 = por %p272, %p273
    %p275 = scmp.ne.s32.totalorder %s267, %s269
    %p276 = scmp.eq.s32.totalorder %s28, 1
    %p277 = por %p275, %p276
    %p278 = scmp.ne.s32.totalorder %s269, %s270
    %p279 = scmp.eq.s32.totalorder %s28, 0
    %p280 = por %p278, %p279
    %p281 = scmp.ne.s32.totalorder %s269, %s270
    %p282 = scmp.eq.s32.totalorder %s29, 1
    %p283 = por %p281, %p282
    %p285 = scmp.ne.s32.totalorder %s270, %s284
    %p286 = scmp.eq.s32.totalorder %s29, 0
    %p287 = por %p285, %p286
    %s289 = sadd.s32 %s288, 1
    %p292 = scmp.eq.s32.totalorder %s23, 1
    %p293 = scmp.ne.s32.totalorder %s288, %s290
    %p294 = scmp.eq.s32.totalorder %s23, 0
    %p295 = por %p293, %p294
    %p296 = scmp.ne.s32.totalorder %s288, %s290
    %p297 = scmp.eq.s32.totalorder %s28, 1
    %p298 = por %p296, %p297
    %p299 = scmp.ne.s32.totalorder %s290, %s291
    %p300 = scmp.eq.s32.totalorder %s28, 0
    %p301 = por %p299, %p300
    %p302 = scmp.ne.s32.totalorder %s290, %s291
    %p303 = scmp.eq.s32.totalorder %s29, 1
    %p304 = por %p302, %p303
    %p306 = scmp.ne.s32.totalorder %s291, %s305
    %p307 = scmp.eq.s32.totalorder %s29, 0
    %p308 = por %p306, %p307
    %s310 = sadd.s32 %s309, 1
    %p313 = scmp.eq.s32.totalorder %s23, 1
    %p314 = scmp.ne.s32.totalorder %s309, %s311
    %p315 = scmp.eq.s32.totalorder %s23, 0
    %p316 = por %p314, %p315
    %p317 = scmp.ne.s32.totalorder %s309, %s311
    %p318 = scmp.eq.s32.totalorder %s28, 1
    %p319 = por %p317, %p318
    %p320 = scmp.ne.s32.totalorder %s311, %s312
    %p321 = scmp.eq.s32.totalorder %s28, 0
    %p322 = por %p320, %p321
    %p323 = scmp.ne.s32.totalorder %s311, %s312
    %p324 = scmp.eq.s32.totalorder %s29, 1
    %p325 = por %p323, %p324
    %p327 = scmp.ne.s32.totalorder %s312, %s326
    %p328 = scmp.eq.s32.totalorder %s29, 0
    %p329 = por %p327, %p328
    %s331 = sadd.s32 %s330, 1
    %p334 = scmp.eq.s32.totalorder %s23, 1
    %p335 = scmp.ne.s32.totalorder %s330, %s332
    %p336 = scmp.eq.s32.totalorder %s23, 0
    %p337 = por %p335, %p336
    %p338 = scmp.ne.s32.totalorder %s330, %s332
    %p339 = scmp.eq.s32.totalorder %s28, 1
    %p340 = por %p338, %p339
    %p341 = scmp.ne.s32.totalorder %s332, %s333
    %p342 = scmp.eq.s32.totalorder %s28, 0
    %p343 = por %p341, %p342
    %p344 = scmp.ne.s32.totalorder %s332, %s333
    %p345 = scmp.eq.s32.totalorder %s29, 1
    %p346 = por %p344, %p345
    %p348 = scmp.ne.s32.totalorder %s333, %s347
    %p349 = scmp.eq.s32.totalorder %s29, 0
    %p350 = por %p348, %p349
    %s352 = sadd.s32 %s351, 1
    %p355 = scmp.eq.s32.totalorder %s23, 1
    %p356 = scmp.ne.s32.totalorder %s351, %s353
    %p357 = scmp.eq.s32.totalorder %s23, 0
    %p358 = por %p356, %p357
    %p359 = scmp.ne.s32.totalorder %s351, %s353
    %p360 = scmp.eq.s32.totalorder %s28, 1
    %p361 = por %p359, %p360
    %p362 = scmp.ne.s32.totalorder %s353, %s354
    %p363 = scmp.eq.s32.totalorder %s28, 0
    %p364 = por %p362, %p363
    %p365 = scmp.ne.s32.totalorder %s353, %s354
    %p366 = scmp.eq.s32.totalorder %s29, 1
    %p367 = por %p365, %p366
    %p369 = scmp.ne.s32.totalorder %s354, %s368
    %p370 = scmp.eq.s32.totalorder %s29, 0
    %p371 = por %p369, %p370
    %s373 = sadd.s32 %s372, 1
    %p376 = scmp.eq.s32.totalorder %s23, 1
    %p377 = scmp.ne.s32.totalorder %s372, %s374
    %p378 = scmp.eq.s32.totalorder %s23, 0
    %p379 = por %p377, %p378
    %p380 = scmp.ne.s32.totalorder %s372, %s374
    %p381 = scmp.eq.s32.totalorder %s28, 1
    %p382 = por %p380, %p381
    %p383 = scmp.ne.s32.totalorder %s374, %s375
    %p384 = scmp.eq.s32.totalorder %s28, 0
    %p385 = por %p383, %p384
    %p386 = scmp.ne.s32.totalorder %s374, %s375
    %p387 = scmp.eq.s32.totalorder %s29, 1
    %p388 = por %p386, %p387
    %p390 = scmp.ne.s32.totalorder %s375, %s389
    %p391 = scmp.eq.s32.totalorder %s29, 0
    %p392 = por %p390, %p391
    %s393 = ssub.s32 %s23, %s30
    %p394 = scmp.eq.s32.totalorder %s393, 0
    %s396 = sadd.s32 %s395, 1
    %s397 = scalar_select %p394, %s395, %s396
    %p400 = pneg %p394
    %p401 = scmp.eq.s32.totalorder %s23, 1
    %p402 = por %p400, %p401
    %p403 = scmp.ne.s32.totalorder %s395, %s398
    %p404 = scmp.eq.s32.totalorder %s23, 0
    %p405 = por %p403, %p404
    %p406 = scmp.ne.s32.totalorder %s395, %s398
    %p407 = scmp.eq.s32.totalorder %s28, 1
    %p408 = por %p406, %p407
    %p409 = scmp.ne.s32.totalorder %s398, %s399
    %p410 = scmp.eq.s32.totalorder %s28, 0
    %p411 = por %p409, %p410
    %p412 = scmp.ne.s32.totalorder %s398, %s399
    %p413 = scmp.eq.s32.totalorder %s29, 1
    %p414 = por %p412, %p413
    %p416 = scmp.ne.s32.totalorder %s399, %s415
    %p417 = scmp.eq.s32.totalorder %s29, 0
    %p418 = por %p416, %p417
    %p419 = scmp.le.s32.totalorder 1, %s23
    %p420 = scmp.lt.s32.totalorder %s23, 3
    %p421 = pnand %p419, %p420
    %p422 = pneg %p421
    // Predicated region
    $region9: #{forward.13} parent=5 // pred_check
      _
    $region10: #{forward.13} parent=5 // pred_check_branch
      %424 = sbr.rel (%p421) target = $region12
    $region11: #{forward.13} parent=5 // pred_region
      %s425 = ssub.s32 %s23, 1
      // Predicated region
      $region13: #{forward.13} parent=11 // pred_check
        %p426 = pneg %p70
      $region14: #{forward.13} parent=11 // pred_check_branch
        %428 = sbr.rel (%p426) target = $region16
      $region15: #{forward.13} parent=11 // pred_region
        _
      $region16: #{forward.13} parent=11 // pred_fallthru
        _
      // Predicated region
      $region17: #{forward.13} parent=11 // pred_check
        %p429 = pneg %p91
      $region18: #{forward.13} parent=11 // pred_check_branch
        %431 = sbr.rel (%p429) target = $region20
      $region19: #{forward.13} parent=11 // pred_region
        _
      $region20: #{forward.13} parent=11 // pred_fallthru
        _
      // Predicated region
      $region21: #{forward.13} parent=11 // pred_check
        %p432 = pneg %p112
      $region22: #{forward.13} parent=11 // pred_check_branch
        %434 = sbr.rel (%p432) target = $region24
      $region23: #{forward.13} parent=11 // pred_region
        _
      $region24: #{forward.13} parent=11 // pred_fallthru
        _
      // Predicated region
      $region25: #{forward.13} parent=11 // pred_check
        %p435 = pneg %p133
      $region26: #{forward.13} parent=11 // pred_check_branch
        %437 = sbr.rel (%p435) target = $region28
      $region27: #{forward.13} parent=11 // pred_region
        _
      $region28: #{forward.13} parent=11 // pred_fallthru
        _
      // Predicated region
      $region29: #{forward.13} parent=11 // pred_check
        %p438 = pneg %p154
      $region30: #{forward.13} parent=11 // pred_check_branch
        %440 = sbr.rel (%p438) target = $region32
      $region31: #{forward.13} parent=11 // pred_region
        _
      $region32: #{forward.13} parent=11 // pred_fallthru
        _
      // Predicated region
      $region33: #{forward.13} parent=11 // pred_check
        %p441 = pneg %p175
      $region34: #{forward.13} parent=11 // pred_check_branch
        %443 = sbr.rel (%p441) target = $region36
      $region35: #{forward.13} parent=11 // pred_region
        _
      $region36: #{forward.13} parent=11 // pred_fallthru
        _
      // Predicated region
      $region37: #{forward.13} parent=11 // pred_check
        %p444 = pneg %p196
      $region38: #{forward.13} parent=11 // pred_check_branch
        %446 = sbr.rel (%p444) target = $region40
      $region39: #{forward.13} parent=11 // pred_region
        _
      $region40: #{forward.13} parent=11 // pred_fallthru
        _
      // Predicated region
      $region41: #{forward.13} parent=11 // pred_check
        %p447 = pneg %p217
      $region42: #{forward.13} parent=11 // pred_check_branch
        %449 = sbr.rel (%p447) target = $region44
      $region43: #{forward.13} parent=11 // pred_region
        _
      $region44: #{forward.13} parent=11 // pred_fallthru
        _
      // Predicated region
      $region45: #{forward.13} parent=11 // pred_check
        %p450 = pneg %p238
      $region46: #{forward.13} parent=11 // pred_check_branch
        %452 = sbr.rel (%p450) target = $region48
      $region47: #{forward.13} parent=11 // pred_region
        _
      $region48: #{forward.13} parent=11 // pred_fallthru
        _
      // Predicated region
      $region49: #{forward.13} parent=11 // pred_check
        %p453 = pneg %p259
      $region50: #{forward.13} parent=11 // pred_check_branch
        %455 = sbr.rel (%p453) target = $region52
      $region51: #{forward.13} parent=11 // pred_region
        _
      $region52: #{forward.13} parent=11 // pred_fallthru
        _
      // Predicated region
      $region53: #{forward.13} parent=11 // pred_check
        %p456 = pneg %p280
      $region54: #{forward.13} parent=11 // pred_check_branch
        %458 = sbr.rel (%p456) target = $region56
      $region55: #{forward.13} parent=11 // pred_region
        _
      $region56: #{forward.13} parent=11 // pred_fallthru
        _
      // Predicated region
      $region57: #{forward.13} parent=11 // pred_check
        %p459 = pneg %p301
      $region58: #{forward.13} parent=11 // pred_check_branch
        %461 = sbr.rel (%p459) target = $region60
      $region59: #{forward.13} parent=11 // pred_region
        _
      $region60: #{forward.13} parent=11 // pred_fallthru
        _
      // Predicated region
      $region61: #{forward.13} parent=11 // pred_check
        %p462 = pneg %p322
      $region62: #{forward.13} parent=11 // pred_check_branch
        %464 = sbr.rel (%p462) target = $region64
      $region63: #{forward.13} parent=11 // pred_region
        _
      $region64: #{forward.13} parent=11 // pred_fallthru
        _
      // Predicated region
      $region65: #{forward.13} parent=11 // pred_check
        %p465 = pneg %p343
      $region66: #{forward.13} parent=11 // pred_check_branch
        %467 = sbr.rel (%p465) target = $region68
      $region67: #{forward.13} parent=11 // pred_region
        _
      $region68: #{forward.13} parent=11 // pred_fallthru
        _
      // Predicated region
      $region69: #{forward.13} parent=11 // pred_check
        %p468 = pneg %p364
      $region70: #{forward.13} parent=11 // pred_check_branch
        %470 = sbr.rel (%p468) target = $region72
      $region71: #{forward.13} parent=11 // pred_region
        _
      $region72: #{forward.13} parent=11 // pred_fallthru
        _
      // Predicated region
      $region73: #{forward.13} parent=11 // pred_check
        %p471 = pneg %p385
      $region74: #{forward.13} parent=11 // pred_check_branch
        %473 = sbr.rel (%p471) target = $region76
      $region75: #{forward.13} parent=11 // pred_region
        _
      $region76: #{forward.13} parent=11 // pred_fallthru
        _
    $region12: #{forward.13} parent=5 // pred_fallthru
      _
    %p474 = scmp.lt.s32.totalorder %s23, 2
    // Predicated region
    $region77: #{forward.13} parent=5 // pred_check
      %p475 = pneg %p474
    $region78: #{forward.13} parent=5 // pred_check_branch
      %477 = sbr.rel (%p475) target = $region80
    $region79: #{forward.13} parent=5 // pred_region
      // Predicated region
      $region81: #{forward.13} parent=79 // pred_check
        %p478 = pneg %p43
      $region82: #{forward.13} parent=79 // pred_check_branch
        %480 = sbr.rel (%p478) target = $region84
      $region83: #{forward.13} parent=79 // pred_region
        %s481 = smul.u32 4, %s23
        %p482 = scmp.lt.s32.totalorder %s481, 7
        %s483 = scalar_select %p482, %s481, 7
        %s484 = smul.addr %s483, 8
        %s485 = scalar_lea.vmem %s0, %s484
        %s486 = smul.u32 4, %s23
      $region84: #{forward.13} parent=79 // pred_fallthru
        _
    $region80: #{forward.13} parent=5 // pred_fallthru
      _
    %p487 = scmp.le.s32.totalorder 1, %s23
    %p488 = scmp.lt.s32.totalorder %s23, 3
    %p489 = pnand %p487, %p488
    %p490 = pneg %p489
    // Predicated region
    $region85: #{forward.13} parent=5 // pred_check
      _
    $region86: #{forward.13} parent=5 // pred_check_branch
      %492 = sbr.rel (%p489) target = $region88
    $region87: #{forward.13} parent=5 // pred_region
      %s493 = ssub.s32 %s23, 1
      %s494 = smul.u32 4, %s28
      %p495 = scmp.lt.s32.totalorder %s494, 7
      %s496 = scalar_select %p495, %s494, 7
      %s497 = smul.addr %s496, 8
      %s498 = scalar_lea.vmem %s0, %s497
      %p499 = pneg %p49
      %p500 = pneg %p46
      %p501 = pneg %p70
      %p502 = pneg %p67
      %p503 = pneg %p91
      %p504 = pneg %p88
      %p505 = pneg %p112
      %p506 = pneg %p109
      %p507 = pneg %p133
      %p508 = pneg %p130
      %p509 = pneg %p154
      %p510 = pneg %p151
      %p511 = pneg %p175
      %p512 = pneg %p172
      %p513 = pneg %p196
      %p514 = pneg %p193
      %p515 = pneg %p217
      %p516 = pneg %p214
      %p517 = pneg %p238
      %p518 = pneg %p235
      %p519 = pneg %p259
      %p520 = pneg %p256
      %p521 = pneg %p280
      %p522 = pneg %p277
      %p523 = pneg %p301
      %p524 = pneg %p298
      %p525 = pneg %p322
      %p526 = pneg %p319
      %p527 = pneg %p343
      %p528 = pneg %p340
      %p529 = pneg %p364
      %p530 = pneg %p361
      %p531 = pneg %p385
      %p532 = pneg %p382
      %p533 = pneg %p411
      %p534 = pneg %p408
      %s535 = smul.u32 4, %s28
      %p536 = scmp.lt.s32.totalorder %s535, 7
      %s537 = scalar_select %p536, %s535, 7
      %s538 = smul.addr %s537, 8
      %s539 = scalar_lea.vmem %s17, %s538
      %s540 = smul.u32 4, %s28
      %p541 = scmp.lt.s32.totalorder %s540, 7
      %s542 = scalar_select %p541, %s540, 7
      %s543 = smul.addr %s542, 8
      %s544 = scalar_lea.vmem %s0, %s543
      %s545 = smul.u32 4, %s28
      %s546 = smul.u32 4, %s28
      %p547 = scmp.lt.s32.totalorder %s546, 7
      %s548 = scalar_select %p547, %s546, 7
      %s549 = smul.addr %s548, 8
      %s550 = scalar_lea.vmem %s17, %s549
      %s551 = smul.u32 4, %s28
      %v553 = vld [vmem:[%s544] sm:$0xff]
      %v554 = vld [vmem:[%s544 + $0x8] sm:$0xff]
      %v555 = vld [vmem:[%s544 + $0x10] sm:$0xff]
      %v556 = vld [vmem:[%s544 + $0x18] sm:$0xff]
      %v557 = vld [vmem:[%s1] sm:$0x1]
      %v558 = vld [vmem:[%s2] sm:$0x1]
      %vm559 = vcmask 261120
      %v560 = vsel %vm559, %v553, 0.0
      %561 = vadd.xlane.f32.xlu0 %v560
      %v562 = vpop.xlane.xlu0 %561
      %v563 = vsel %vm559, %v554, 0.0
      %564 = vadd.xlane.f32.xlu0 %v563
      %v565 = vpop.xlane.xlu0 %564
      %v566 = vsel %vm559, %v555, 0.0
      %567 = vadd.xlane.f32.xlu0 %v566
      %v568 = vpop.xlane.xlu0 %567
      %v569 = vsel %vm559, %v556, 0.0
      %570 = vadd.xlane.f32.xlu0 %v569
      %v571 = vpop.xlane.xlu0 %570
      %v572 = vrcp.pop 32.0
      %v573 = vmul.f32 %v562, %v572
      %v574 = vmul.f32 %v565, %v572
      %v575 = vmul.f32 %v568, %v572
      %v576 = vmul.f32 %v571, %v572
      %v577 = vsub.f32 %v553, %v573
      %v578 = vsub.f32 %v554, %v574
      %v579 = vsub.f32 %v555, %v575
      %v580 = vsub.f32 %v556, %v576
      %v581 = vmul.f32 %v577, %v577
      %v582 = vmul.f32 %v578, %v578
      %v583 = vmul.f32 %v579, %v579
      %v584 = vmul.f32 %v580, %v580
      %v585 = vsel %vm559, %v581, 0.0
      %586 = vadd.xlane.f32.xlu0 %v585
      %v587 = vpop.xlane.xlu0 %586
      %v588 = vsel %vm559, %v582, 0.0
      %589 = vadd.xlane.f32.xlu0 %v588
      %v590 = vpop.xlane.xlu0 %589
      %v591 = vsel %vm559, %v583, 0.0
      %592 = vadd.xlane.f32.xlu0 %v591
      %v593 = vpop.xlane.xlu0 %592
      %v594 = vsel %vm559, %v584, 0.0
      %595 = vadd.xlane.f32.xlu0 %v594
      %v596 = vpop.xlane.xlu0 %595
      %v597 = vmul.f32 %v587, %v572
      %v598 = vmul.f32 %v590, %v572
      %v599 = vmul.f32 %v593, %v572
      %v600 = vmul.f32 %v596, %v572
      %v601 = vadd.f32 %v597, 1e-05
      %v602 = vadd.f32 %v598, 1e-05
      %v603 = vadd.f32 %v599, 1e-05
      %v604 = vadd.f32 %v600, 1e-05
      %v605 = vrsqrt.pop %v601
      %v606 = vrsqrt.pop %v602
      %v607 = vrsqrt.pop %v603
      %v608 = vrsqrt.pop %v604
      %v609 = vmul.f32 %v577, %v605
      %v610 = vmul.f32 %v578, %v606
      %v611 = vmul.f32 %v579, %v607
      %v612 = vmul.f32 %v580, %v608
      %v614 = vlaneseq
      %v615 = vshrl.u32 %v614, 7
      %v616 = vsub.s32 0, %v615
      %v617 = vrot.slane %v557, %v616
      %v619 = vmul.f32 %v609, %v617
      %v620 = vmul.f32 %v610, %v617
      %v621 = vmul.f32 %v611, %v617
      %v622 = vmul.f32 %v612, %v617
      %v624 = vlaneseq
      %v625 = vshrl.u32 %v624, 7
      %v626 = vsub.s32 0, %v625
      %v627 = vrot.slane %v558, %v626
      %v629 = vadd.f32 %v619, %v627
      %v630 = vadd.f32 %v620, %v627
      %v631 = vadd.f32 %v621, %v627
      %v632 = vadd.f32 %v622, %v627
      %v633 = vpack.c.bf16 %v630, %v629
      %v634 = vpack.c.bf16 %v632, %v631
      %v635 = vld [vmem:[%s3] sm:$0xf]
      %v636 = vld [vmem:[%s3 + $0x4] sm:$0xf]
      %v637 = vld [vmem:[%s3 + $0x8] sm:$0xf]
      %v638 = vld [vmem:[%s3 + $0xc] sm:$0xf]
      %v639 = vld [vmem:[%s4] sm:$0x1]
      %v641 = vlaneseq
      %v642 = vshrl.u32 %v641, 7
      %v643 = vsub.s32 0, %v642
      %v644 = vrot.slane %v639, %v643
      %v650 = vunpack.c.l.b16 %v635
      %v651 = vunpack.c.l.b16 %v636
      %v652 = vunpack.c.l.b16 %v637
      %v653 = vunpack.c.l.b16 %v638
      %v654 = vpack.c.b16 %v651, %v650
      %v655 = vpack.c.b16 %v653, %v652
      %v659 = vsel %vm559, %v633, 0
      %v662 = vsel %vm559, %v634, 0
      %664 = vmatprep.subr.bf16.mxu0 0
      %665 = vmatpush1.bf16.msra.mxu0 %v654
      %666 = vmatprep.subr.bf16.mxu0 0
      %667 = vmatpush1.bf16.msra.mxu0 %v655
      %668 = vmatprep.subr.bf16.mxu0 0
      %669 = vmatpush1.bf16.msra.mxu0 0
      %670 = vmatprep.subr.bf16.mxu0 0
      %671 = vmatpush1.bf16.msra.mxu0 0
      %672 = vmatprep.subr.bf16.mxu0 0
      %673 = vmatpush1.bf16.msra.mxu0 0
      %674 = vmatprep.subr.bf16.mxu0 0
      %675 = vmatpush1.bf16.msra.mxu0 0
      %676 = vmatprep.subr.bf16.mxu0 0
      %677 = vmatpush1.bf16.msra.mxu0 0
      %678 = vmatprep.subr.bf16.mxu0 0
      %679 = vmatpush1.bf16.msra.mxu0 0
      %680 = vmatprep.subr.bf16.mxu0 0
      %681 = vmatpush1.bf16.msra.mxu0 0
      %682 = vmatprep.subr.bf16.mxu0 0
      %683 = vmatpush1.bf16.msra.mxu0 0
      %684 = vmatprep.subr.bf16.mxu0 0
      %685 = vmatpush1.bf16.msra.mxu0 0
      %686 = vmatprep.subr.bf16.mxu0 0
      %687 = vmatpush1.bf16.msra.mxu0 0
      %688 = vmatprep.subr.bf16.mxu0 0
      %689 = vmatpush1.bf16.msra.mxu0 0
      %690 = vmatprep.subr.bf16.mxu0 0
      %691 = vmatpush1.bf16.msra.mxu0 0
      %692 = vmatprep.subr.bf16.mxu0 0
      %693 = vmatpush1.bf16.msra.mxu0 0
      %694 = vmatprep.subr.bf16.mxu0 0
      %695 = vmatpush1.bf16.msra.mxu0 0
      %696 = vmatprep.mubr.bf16.mxu0 0
      %697 = vmatmul.mubr.bf16.gmra.mrb[0].mxu0 %v659
      %v698 = vpop.f32.mrb[0].mxu0
      %v699 = vadd.f32 %v644, %v698
      %v700 = vpop.f32.mrb[0].mxu0
      %v701 = vpop.f32.mrb[0].mxu0
      %v702 = vadd.f32 %v644, %v701
      %v703 = vpop.f32.mrb[0].mxu0
      %704 = vmatprep.mubr.bf16.mxu0 0
      %705 = vmatmul.mubr.bf16.gmra.mrb[0].mxu0 %v662
      %v706 = vpop.f32.mrb[0].mxu0
      %v707 = vadd.f32 %v644, %v706
      %v708 = vpop.f32.mrb[0].mxu0
      %v709 = vpop.f32.mrb[0].mxu0
      %v710 = vadd.f32 %v644, %v709
      %v711 = vpop.f32.mrb[0].mxu0
      %712 = vdwg.mxu0
      %v713 = vmul.f32 %v699, 0.5
      %v714 = vmul.f32 %v702, 0.5
      %v715 = vmul.f32 %v707, 0.5
      %v716 = vmul.f32 %v710, 0.5
      %v717 = vmul.f32 %v699, 0.70710677
      %v718 = vmul.f32 %v702, 0.70710677
      %v719 = vmul.f32 %v707, 0.70710677
      %v720 = vmul.f32 %v710, 0.70710677
      %v721 = vand.u32 2147483647, %v717
      %v722 = vand.u32 2147483647, %v718
      %v723 = vand.u32 2147483647, %v719
      %v724 = vand.u32 2147483647, %v720
      %v725 = vmul.f32 %v721, 0.3275911
      %v726 = vmul.f32 %v722, 0.3275911
      %v727 = vmul.f32 %v723, 0.3275911
      %v728 = vmul.f32 %v724, 0.3275911
      %v729 = vadd.f32 %v725, 1.0
      %v730 = vadd.f32 %v726, 1.0
      %v731 = vadd.f32 %v727, 1.0
      %v732 = vadd.f32 %v728, 1.0
      %v733 = vrcp.pop %v729
      %v734 = vmul.f32 1.0, %v733
      %v735 = vrcp.pop %v730
      %v736 = vmul.f32 1.0, %v735
      %v737 = vrcp.pop %v731
      %v738 = vmul.f32 1.0, %v737
      %v739 = vrcp.pop %v732
      %v740 = vmul.f32 1.0, %v739
      %v741 = vmul.f32 %v734, 1.0614054
      %v742 = vmul.f32 %v736, 1.0614054
      %v743 = vmul.f32 %v738, 1.0614054
      %v744 = vmul.f32 %v740, 1.0614054
      %v745 = vadd.f32 %v741, -1.4531521
      %v746 = vadd.f32 %v742, -1.4531521
      %v747 = vadd.f32 %v743, -1.4531521
      %v748 = vadd.f32 %v744, -1.4531521
      %v749 = vmul.f32 %v745, %v734
      %v750 = vmul.f32 %v746, %v736
      %v751 = vmul.f32 %v747, %v738
      %v752 = vmul.f32 %v748, %v740
      %v753 = vadd.f32 %v749, 1.4214138
      %v754 = vadd.f32 %v750, 1.4214138
      %v755 = vadd.f32 %v751, 1.4214138
      %v756 = vadd.f32 %v752, 1.4214138
      %v757 = vmul.f32 %v753, %v734
      %v758 = vmul.f32 %v754, %v736
      %v759 = vmul.f32 %v755, %v738
      %v760 = vmul.f32 %v756, %v740
      %v761 = vadd.f32 %v757, -0.28449672
      %v762 = vadd.f32 %v758, -0.28449672
      %v763 = vadd.f32 %v759, -0.28449672
      %v764 = vadd.f32 %v760, -0.28449672
      %v765 = vmul.f32 %v761, %v734
      %v766 = vmul.f32 %v762, %v736
      %v767 = vmul.f32 %v763, %v738
      %v768 = vmul.f32 %v764, %v740
      %v769 = vadd.f32 %v765, 0.2548296
      %v770 = vadd.f32 %v766, 0.2548296
      %v771 = vadd.f32 %v767, 0.2548296
      %v772 = vadd.f32 %v768, 0.2548296
      %v773 = vmul.f32 %v769, %v734
      %v774 = vmul.f32 %v770, %v736
      %v775 = vmul.f32 %v771, %v738
      %v776 = vmul.f32 %v772, %v740
      %v777 = vsub.f32 0.0, %v721
      %v778 = vsub.f32 0.0, %v722
      %v779 = vsub.f32 0.0, %v723
      %v780 = vsub.f32 0.0, %v724
      %v781 = vmul.f32 %v777, %v721
      %v782 = vmul.f32 %v778, %v722
      %v783 = vmul.f32 %v779, %v723
      %v784 = vmul.f32 %v780, %v724
      %v785 = vmul.f32 %v781, 1.442695
      %v786 = vpow.pop %v785
      %v787 = vmul.f32 %v782, 1.442695
      %v788 = vpow.pop %v787
      %v789 = vmul.f32 %v783, 1.442695
      %v790 = vpow.pop %v789
      %v791 = vmul.f32 %v784, 1.442695
      %v792 = vpow.pop %v791
      %v793 = vmul.f32 %v773, %v786
      %v794 = vmul.f32 %v774, %v788
      %v795 = vmul.f32 %v775, %v790
      %v796 = vmul.f32 %v776, %v792
      %v797 = vsub.f32 1.0, %v793
      %v798 = vsub.f32 1.0, %v794
      %v799 = vsub.f32 1.0, %v795
      %v800 = vsub.f32 1.0, %v796
      %vm801 = vcmp.ge.f32.partialorder %v717, 0.0
      %vm802 = vcmp.ge.f32.partialorder %v718, 0.0
      %vm803 = vcmp.ge.f32.partialorder %v719, 0.0
      %vm804 = vcmp.ge.f32.partialorder %v720, 0.0
      %v805 = vsub.f32 0.0, %v797
      %v806 = vsub.f32 0.0, %v798
      %v807 = vsub.f32 0.0, %v799
      %v808 = vsub.f32 0.0, %v800
      %v809 = vsel %vm801, %v797, %v805
      %v810 = vsel %vm802, %v798, %v806
      %v811 = vsel %vm803, %v799, %v807
      %v812 = vsel %vm804, %v800, %v808
      %v813 = vadd.f32 %v809, 1.0
      %v814 = vadd.f32 %v810, 1.0
      %v815 = vadd.f32 %v811, 1.0
      %v816 = vadd.f32 %v812, 1.0
      %v817 = vmul.f32 %v713, %v813
      %v818 = vmul.f32 %v714, %v814
      %v819 = vmul.f32 %v715, %v815
      %v820 = vmul.f32 %v716, %v816
      %v821 = vld [vmem:[%s5] sm:$0xff]
      %v822 = vld [vmem:[%s5 + $0x8] sm:$0xff]
      %v823 = vld [vmem:[%s5 + $0x10] sm:$0xff]
      %v824 = vld [vmem:[%s5 + $0x18] sm:$0xff]
      %v825 = vmul.f32 %v821, %v817
      %v826 = vmul.f32 %v822, %v818
      %v827 = vmul.f32 %v823, %v819
      %v828 = vmul.f32 %v824, %v820
      %s829 = scalar_lea.vmem %s5, 32
      %v830 = vld [vmem:[%s829] sm:$0xff]
      %v831 = vld [vmem:[%s829 + $0x8] sm:$0xff]
      %v832 = vld [vmem:[%s829 + $0x10] sm:$0xff]
      %v833 = vld [vmem:[%s829 + $0x18] sm:$0xff]
      %v834 = vmul.f32 %v830, %v819
      %v835 = vmul.f32 %v831, %v820
      %v836 = vmul.f32 %v832, %v817
      %v837 = vmul.f32 %v833, %v818
      %v838 = vadd.f32 %v825, %v834
      %v839 = vadd.f32 %v826, %v835
      %v840 = vadd.f32 %v827, %v836
      %v841 = vadd.f32 %v828, %v837
      %v842 = vld [vmem:[%s6] sm:$0xff]
      %v843 = vld [vmem:[%s6 + $0x8] sm:$0xff]
      %v844 = vld [vmem:[%s6 + $0x10] sm:$0xff]
      %v845 = vld [vmem:[%s6 + $0x18] sm:$0xff]
      %v846 = vadd.f32 %v838, %v842
      %v847 = vadd.f32 %v839, %v843
      %v848 = vadd.f32 %v840, %v844
      %v849 = vadd.f32 %v841, %v845
      %854 = vrot.lane.b32.xlu0 %v817, 96
      %v855 = vpop.permute.xlu0 %854
      %856 = vrot.lane.b32.xlu0 %v818, 96
      %v857 = vpop.permute.xlu0 %856
      %858 = vrot.lane.b32.xlu0 %v819, 96
      %v859 = vpop.permute.xlu0 %858
      %860 = vrot.lane.b32.xlu0 %v820, 96
      %v861 = vpop.permute.xlu0 %860
      %v866 = vmul.f32 %v846, %v855
      %v867 = vmul.f32 %v847, %v857
      %v868 = vmul.f32 %v848, %v859
      %v869 = vmul.f32 %v849, %v861
      %v870 = vpack.c.bf16 %v867, %v866
      %v871 = vpack.c.bf16 %v869, %v868
      %v872 = vld [vmem:[%s7] sm:$0xf]
      %v873 = vld [vmem:[%s7 + $0x4] sm:$0xf]
      %v874 = vld [vmem:[%s7 + $0x8] sm:$0xf]
      %v875 = vld [vmem:[%s7 + $0xc] sm:$0xf]
      %v876 = vld [vmem:[%s8] sm:$0x1]
      %v878 = vlaneseq
      %v879 = vshrl.u32 %v878, 7
      %v880 = vsub.s32 0, %v879
      %v881 = vrot.slane %v876, %v880
      %v887 = vunpack.c.l.b16 %v872
      %v888 = vunpack.c.l.b16 %v873
      %v889 = vunpack.c.l.b16 %v874
      %v890 = vunpack.c.l.b16 %v875
      %v891 = vpack.c.b16 %v888, %v887
      %v892 = vpack.c.b16 %v890, %v889
      %v896 = vsel %vm559, %v870, 0
      %v899 = vsel %vm559, %v871, 0
      %901 = vmatprep.subr.bf16.mxu0 0
      %902 = vmatpush1.bf16.msra.mxu0 %v891
      %903 = vmatprep.subr.bf16.mxu0 0
      %904 = vmatpush1.bf16.msra.mxu0 %v892
      %905 = vmatprep.subr.bf16.mxu0 0
      %906 = vmatpush1.bf16.msra.mxu0 0
      %907 = vmatprep.subr.bf16.mxu0 0
      %908 = vmatpush1.bf16.msra.mxu0 0
      %909 = vmatprep.subr.bf16.mxu0 0
      %910 = vmatpush1.bf16.msra.mxu0 0
      %911 = vmatprep.subr.bf16.mxu0 0
      %912 = vmatpush1.bf16.msra.mxu0 0
      %913 = vmatprep.subr.bf16.mxu0 0
      %914 = vmatpush1.bf16.msra.mxu0 0
      %915 = vmatprep.subr.bf16.mxu0 0
      %916 = vmatpush1.bf16.msra.mxu0 0
      %917 = vmatprep.subr.bf16.mxu0 0
      %918 = vmatpush1.bf16.msra.mxu0 0
      %919 = vmatprep.subr.bf16.mxu0 0
      %920 = vmatpush1.bf16.msra.mxu0 0
      %921 = vmatprep.subr.bf16.mxu0 0
      %922 = vmatpush1.bf16.msra.mxu0 0
      %923 = vmatprep.subr.bf16.mxu0 0
      %924 = vmatpush1.bf16.msra.mxu0 0
      %925 = vmatprep.subr.bf16.mxu0 0
      %926 = vmatpush1.bf16.msra.mxu0 0
      %927 = vmatprep.subr.bf16.mxu0 0
      %928 = vmatpush1.bf16.msra.mxu0 0
      %929 = vmatprep.subr.bf16.mxu0 0
      %930 = vmatpush1.bf16.msra.mxu0 0
      %931 = vmatprep.subr.bf16.mxu0 0
      %932 = vmatpush1.bf16.msra.mxu0 0
      %933 = vmatprep.mubr.bf16.mxu0 0
      %934 = vmatmul.mubr.bf16.gmra.mrb[0].mxu0 %v896
      %v935 = vpop.f32.mrb[0].mxu0
      %v936 = vadd.f32 %v881, %v935
      %v937 = vpop.f32.mrb[0].mxu0
      %v938 = vpop.f32.mrb[0].mxu0
      %v939 = vadd.f32 %v881, %v938
      %v940 = vpop.f32.mrb[0].mxu0
      %941 = vmatprep.mubr.bf16.mxu0 0
      %942 = vmatmul.mubr.bf16.gmra.mrb[0].mxu0 %v899
      %v943 = vpop.f32.mrb[0].mxu0
      %v944 = vadd.f32 %v881, %v943
      %v945 = vpop.f32.mrb[0].mxu0
      %v946 = vpop.f32.mrb[0].mxu0
      %v947 = vadd.f32 %v881, %v946
      %v948 = vpop.f32.mrb[0].mxu0
      %949 = vdwg.mxu0
      %v950 = vld [vmem:[%s9] sm:$0x1]
      %v951 = vld [vmem:[%s10] sm:$0x1]
      %v953 = vlaneseq
      %v954 = vshrl.u32 %v953, 7
      %v955 = vsub.s32 0, %v954
      %v956 = vrot.slane %v950, %v955
      %v958 = vmul.f32 %v609, %v956
      %v959 = vmul.f32 %v610, %v956
      %v960 = vmul.f32 %v611, %v956
      %v961 = vmul.f32 %v612, %v956
      %v963 = vlaneseq
      %v964 = vshrl.u32 %v963, 7
      %v965 = vsub.s32 0, %v964
      %v966 = vrot.slane %v951, %v965
      %v968 = vadd.f32 %v958, %v966
      %v969 = vadd.f32 %v959, %v966
      %v970 = vadd.f32 %v960, %v966
      %v971 = vadd.f32 %v961, %v966
      %v972 = vpack.c.bf16 %v969, %v968
      %v973 = vpack.c.bf16 %v971, %v970
      %v974 = vld [vmem:[%s11] sm:$0xf]
      %v975 = vld [vmem:[%s11 + $0x4] sm:$0xf]
      %v976 = vld [vmem:[%s11 + $0x8] sm:$0xf]
      %v977 = vld [vmem:[%s11 + $0xc] sm:$0xf]
      %v978 = vld [vmem:[%s12] sm:$0x1]
      %v980 = vlaneseq
      %v981 = vshrl.u32 %v980, 7
      %v982 = vsub.s32 0, %v981
      %v983 = vrot.slane %v978, %v982
      %v989 = vunpack.c.l.b16 %v974
      %v990 = vunpack.c.l.b16 %v975
      %v991 = vunpack.c.l.b16 %v976
      %v992 = vunpack.c.l.b16 %v977
      %v993 = vpack.c.b16 %v990, %v989
      %v994 = vpack.c.b16 %v992, %v991
      %v998 = vsel %vm559, %v972, 0
      %v1001 = vsel %vm559, %v973, 0
      %1003 = vmatprep.subr.bf16.mxu0 0
      %1004 = vmatpush1.bf16.msra.mxu0 %v993
      %1005 = vmatprep.subr.bf16.mxu0 0
      %1006 = vmatpush1.bf16.msra.mxu0 %v994
      %1007 = vmatprep.subr.bf16.mxu0 0
      %1008 = vmatpush1.bf16.msra.mxu0 0
      %1009 = vmatprep.subr.bf16.mxu0 0
      %1010 = vmatpush1.bf16.msra.mxu0 0
      %1011 = vmatprep.subr.bf16.mxu0 0
      %1012 = vmatpush1.bf16.msra.mxu0 0
      %1013 = vmatprep.subr.bf16.mxu0 0
      %1014 = vmatpush1.bf16.msra.mxu0 0
      %1015 = vmatprep.subr.bf16.mxu0 0
      %1016 = vmatpush1.bf16.msra.mxu0 0
      %1017 = vmatprep.subr.bf16.mxu0 0
      %1018 = vmatpush1.bf16.msra.mxu0 0
      %1019 = vmatprep.subr.bf16.mxu0 0
      %1020 = vmatpush1.bf16.msra.mxu0 0
      %1021 = vmatprep.subr.bf16.mxu0 0
      %1022 = vmatpush1.bf16.msra.mxu0 0
      %1023 = vmatprep.subr.bf16.mxu0 0
      %1024 = vmatpush1.bf16.msra.mxu0 0
      %1025 = vmatprep.subr.bf16.mxu0 0
      %1026 = vmatpush1.bf16.msra.mxu0 0
      %1027 = vmatprep.subr.bf16.mxu0 0
      %1028 = vmatpush1.bf16.msra.mxu0 0
      %1029 = vmatprep.subr.bf16.mxu0 0
      %1030 = vmatpush1.bf16.msra.mxu0 0
      %1031 = vmatprep.subr.bf16.mxu0 0
      %1032 = vmatpush1.bf16.msra.mxu0 0
      %1033 = vmatprep.subr.bf16.mxu0 0
      %1034 = vmatpush1.bf16.msra.mxu0 0
      %1035 = vmatprep.mubr.bf16.mxu0 0
      %1036 = vmatmul.mubr.bf16.gmra.mrb[0].mxu0 %v998
      %v1037 = vpop.f32.mrb[0].mxu0
      %v1038 = vadd.f32 %v983, %v1037
      %v1039 = vpop.f32.mrb[0].mxu0
      %v1040 = vpop.f32.mrb[0].mxu0
      %v1041 = vadd.f32 %v983, %v1040
      %v1042 = vpop.f32.mrb[0].mxu0
      %1043 = vmatprep.mubr.bf16.mxu0 0
      %1044 = vmatmul.mubr.bf16.gmra.mrb[0].mxu0 %v1001
      %v1045 = vpop.f32.mrb[0].mxu0
      %v1046 = vadd.f32 %v983, %v1045
      %v1047 = vpop.f32.mrb[0].mxu0
      %v1048 = vpop.f32.mrb[0].mxu0
      %v1049 = vadd.f32 %v983, %v1048
      %v1050 = vpop.f32.mrb[0].mxu0
      %1051 = vdwg.mxu0
      %v1052 = vmul.f32 %v1038, 0.5
      %v1053 = vmul.f32 %v1041, 0.5
      %v1054 = vmul.f32 %v1046, 0.5
      %v1055 = vmul.f32 %v1049, 0.5
      %v1056 = vmul.f32 %v1038, 0.70710677
      %v1057 = vmul.f32 %v1041, 0.70710677
      %v1058 = vmul.f32 %v1046, 0.70710677
      %v1059 = vmul.f32 %v1049, 0.70710677
      %v1060 = vand.u32 2147483647, %v1056
      %v1061 = vand.u32 2147483647, %v1057
      %v1062 = vand.u32 2147483647, %v1058
      %v1063 = vand.u32 2147483647, %v1059
      %v1064 = vmul.f32 %v1060, 0.3275911
      %v1065 = vmul.f32 %v1061, 0.3275911
      %v1066 = vmul.f32 %v1062, 0.3275911
      %v1067 = vmul.f32 %v1063, 0.3275911
      %v1068 = vadd.f32 %v1064, 1.0
      %v1069 = vadd.f32 %v1065, 1.0
      %v1070 = vadd.f32 %v1066, 1.0
      %v1071 = vadd.f32 %v1067, 1.0
      %v1072 = vrcp.pop %v1068
      %v1073 = vmul.f32 1.0, %v1072
      %v1074 = vrcp.pop %v1069
      %v1075 = vmul.f32 1.0, %v1074
      %v1076 = vrcp.pop %v1070
      %v1077 = vmul.f32 1.0, %v1076
      %v1078 = vrcp.pop %v1071
      %v1079 = vmul.f32 1.0, %v1078
      %v1080 = vmul.f32 %v1073, 1.0614054
      %v1081 = vmul.f32 %v1075, 1.0614054
      %v1082 = vmul.f32 %v1077, 1.0614054
      %v1083 = vmul.f32 %v1079, 1.0614054
      %v1084 = vadd.f32 %v1080, -1.4531521
      %v1085 = vadd.f32 %v1081, -1.4531521
      %v1086 = vadd.f32 %v1082, -1.4531521
      %v1087 = vadd.f32 %v1083, -1.4531521
      %v1088 = vmul.f32 %v1084, %v1073
      %v1089 = vmul.f32 %v1085, %v1075
      %v1090 = vmul.f32 %v1086, %v1077
      %v1091 = vmul.f32 %v1087, %v1079
      %v1092 = vadd.f32 %v1088, 1.4214138
      %v1093 = vadd.f32 %v1089, 1.4214138
      %v1094 = vadd.f32 %v1090, 1.4214138
      %v1095 = vadd.f32 %v1091, 1.4214138
      %v1096 = vmul.f32 %v1092, %v1073
      %v1097 = vmul.f32 %v1093, %v1075
      %v1098 = vmul.f32 %v1094, %v1077
      %v1099 = vmul.f32 %v1095, %v1079
      %v1100 = vadd.f32 %v1096, -0.28449672
      %v1101 = vadd.f32 %v1097, -0.28449672
      %v1102 = vadd.f32 %v1098, -0.28449672
      %v1103 = vadd.f32 %v1099, -0.28449672
      %v1104 = vmul.f32 %v1100, %v1073
      %v1105 = vmul.f32 %v1101, %v1075
      %v1106 = vmul.f32 %v1102, %v1077
      %v1107 = vmul.f32 %v1103, %v1079
      %v1108 = vadd.f32 %v1104, 0.2548296
      %v1109 = vadd.f32 %v1105, 0.2548296
      %v1110 = vadd.f32 %v1106, 0.2548296
      %v1111 = vadd.f32 %v1107, 0.2548296
      %v1112 = vmul.f32 %v1108, %v1073
      %v1113 = vmul.f32 %v1109, %v1075
      %v1114 = vmul.f32 %v1110, %v1077
      %v1115 = vmul.f32 %v1111, %v1079
      %v1116 = vsub.f32 0.0, %v1060
      %v1117 = vsub.f32 0.0, %v1061
      %v1118 = vsub.f32 0.0, %v1062
      %v1119 = vsub.f32 0.0, %v1063
      %v1120 = vmul.f32 %v1116, %v1060
      %v1121 = vmul.f32 %v1117, %v1061
      %v1122 = vmul.f32 %v1118, %v1062
      %v1123 = vmul.f32 %v1119, %v1063
      %v1124 = vmul.f32 %v1120, 1.442695
      %v1125 = vpow.pop %v1124
      %v1126 = vmul.f32 %v1121, 1.442695
      %v1127 = vpow.pop %v1126
      %v1128 = vmul.f32 %v1122, 1.442695
      %v1129 = vpow.pop %v1128
      %v1130 = vmul.f32 %v1123, 1.442695
      %v1131 = vpow.pop %v1130
      %v1132 = vmul.f32 %v1112, %v1125
      %v1133 = vmul.f32 %v1113, %v1127
      %v1134 = vmul.f32 %v1114, %v1129
      %v1135 = vmul.f32 %v1115, %v1131
      %v1136 = vsub.f32 1.0, %v1132
      %v1137 = vsub.f32 1.0, %v1133
      %v1138 = vsub.f32 1.0, %v1134
      %v1139 = vsub.f32 1.0, %v1135
      %vm1140 = vcmp.ge.f32.partialorder %v1056, 0.0
      %vm1141 = vcmp.ge.f32.partialorder %v1057, 0.0
      %vm1142 = vcmp.ge.f32.partialorder %v1058, 0.0
      %vm1143 = vcmp.ge.f32.partialorder %v1059, 0.0
      %v1144 = vsub.f32 0.0, %v1136
      %v1145 = vsub.f32 0.0, %v1137
      %v1146 = vsub.f32 0.0, %v1138
      %v1147 = vsub.f32 0.0, %v1139
      %v1148 = vsel %vm1140, %v1136, %v1144
      %v1149 = vsel %vm1141, %v1137, %v1145
      %v1150 = vsel %vm1142, %v1138, %v1146
      %v1151 = vsel %vm1143, %v1139, %v1147
      %v1152 = vadd.f32 %v1148, 1.0
      %v1153 = vadd.f32 %v1149, 1.0
      %v1154 = vadd.f32 %v1150, 1.0
      %v1155 = vadd.f32 %v1151, 1.0
      %v1156 = vmul.f32 %v1052, %v1152
      %v1157 = vmul.f32 %v1053, %v1153
      %v1158 = vmul.f32 %v1054, %v1154
      %v1159 = vmul.f32 %v1055, %v1155
      %v1160 = vld [vmem:[%s13] sm:$0xf]
      %v1161 = vld [vmem:[%s13 + $0x4] sm:$0xf]
      %v1162 = vld [vmem:[%s13 + $0x8] sm:$0xf]
      %v1163 = vld [vmem:[%s13 + $0xc] sm:$0xf]
      %v1164 = vpack.c.bf16 %v1157, %v1156
      %v1165 = vpack.c.bf16 %v1159, %v1158
      %v1170 = vunpack.c.l.b16 %v1160
      %v1171 = vunpack.c.l.b16 %v1161
      %v1172 = vunpack.c.l.b16 %v1162
      %v1173 = vunpack.c.l.b16 %v1163
      %v1174 = vpack.c.b16 %v1171, %v1170
      %v1175 = vpack.c.b16 %v1173, %v1172
      %v1177 = vsel %vm559, %v1174, 0
      %v1180 = vsel %vm559, %v1175, 0
      %1182 = vmatprep.subr.bf16.mxu0 0
      %1183 = vmatpush1.bf16.msra.mxu0 %v1164
      %1184 = vmatprep.subr.bf16.mxu0 0
      %1185 = vmatpush1.bf16.msra.mxu0 %v1165
      %1186 = vmatprep.subr.bf16.mxu0 0
      %1187 = vmatpush1.bf16.msra.mxu0 0
      %1188 = vmatprep.subr.bf16.mxu0 0
      %1189 = vmatpush1.bf16.msra.mxu0 0
      %1190 = vmatprep.subr.bf16.mxu0 0
      %1191 = vmatpush1.bf16.msra.mxu0 0
      %1192 = vmatprep.subr.bf16.mxu0 0
      %1193 = vmatpush1.bf16.msra.mxu0 0
      %1194 = vmatprep.subr.bf16.mxu0 0
      %1195 = vmatpush1.bf16.msra.mxu0 0
      %1196 = vmatprep.subr.bf16.mxu0 0
      %1197 = vmatpush1.bf16.msra.mxu0 0
      %1198 = vmatprep.subr.bf16.mxu0 0
      %1199 = vmatpush1.bf16.msra.mxu0 0
      %1200 = vmatprep.subr.bf16.mxu0 0
      %1201 = vmatpush1.bf16.msra.mxu0 0
      %1202 = vmatprep.subr.bf16.mxu0 0
      %1203 = vmatpush1.bf16.msra.mxu0 0
      %1204 = vmatprep.subr.bf16.mxu0 0
      %1205 = vmatpush1.bf16.msra.mxu0 0
      %1206 = vmatprep.subr.bf16.mxu0 0
      %1207 = vmatpush1.bf16.msra.mxu0 0
      %1208 = vmatprep.subr.bf16.mxu0 0
      %1209 = vmatpush1.bf16.msra.mxu0 0
      %1210 = vmatprep.subr.bf16.mxu0 0
      %1211 = vmatpush1.bf16.msra.mxu0 0
      %1212 = vmatprep.subr.bf16.mxu0 0
      %1213 = vmatpush1.bf16.msra.mxu0 0
      %1214 = vmatprep.mubr.bf16.mxu0 0
      %1215 = vmatmul.mubr.bf16.gmra.mrb[0].mxu0 %v1177
      %v1216 = vpop.f32.mrb[0].mxu0
      %v1217 = vadd.f32 0.0, %v1216
      %v1218 = vpop.f32.mrb[0].mxu0
      %v1219 = vpop.f32.mrb[0].mxu0
      %v1220 = vadd.f32 0.0, %v1219
      %v1221 = vpop.f32.mrb[0].mxu0
      %1222 = vmatprep.mubr.bf16.mxu0 0
      %1223 = vmatmul.mubr.bf16.gmra.mrb[0].mxu0 %v1180
      %v1224 = vpop.f32.mrb[0].mxu0
      %v1225 = vadd.f32 0.0, %v1224
      %v1226 = vpop.f32.mrb[0].mxu0
      %v1227 = vpop.f32.mrb[0].mxu0
      %v1228 = vadd.f32 0.0, %v1227
      %v1229 = vpop.f32.mrb[0].mxu0
      %1230 = vdwg.mxu0
      %vm1231 = vcmask 64512
      %1232 = vst.msk [vmem:[#allocation2] sm:$0xff] %vm1231, %v1217
      %1233 = vst.msk [vmem:[#allocation2 + $0x8] sm:$0xff] %vm1231, %v1220
      %1234 = vst.msk [vmem:[#allocation2 + $0x10] sm:$0xff] %vm1231, %v1225
      %1235 = vst.msk [vmem:[#allocation2 + $0x18] sm:$0xff] %vm1231, %v1228
      %s1236 = scalar_lea.vmem %s13, 16
      %v1237 = vld [vmem:[%s1236] sm:$0xf]
      %v1238 = vld [vmem:[%s1236 + $0x4] sm:$0xf]
      %v1239 = vld [vmem:[%s1236 + $0x8] sm:$0xf]
      %v1240 = vld [vmem:[%s1236 + $0xc] sm:$0xf]
      %v1245 = vunpack.c.l.b16 %v1237
      %v1246 = vunpack.c.l.b16 %v1238
      %v1247 = vunpack.c.l.b16 %v1239
      %v1248 = vunpack.c.l.b16 %v1240
      %v1249 = vpack.c.b16 %v1246, %v1245
      %v1250 = vpack.c.b16 %v1248, %v1247
      %1253 = vrot.lane.b32.xlu0 %v1164, 120
      %v1254 = vpop.permute.xlu0 %1253
      %1255 = vrot.lane.b32.xlu0 %v1165, 120
      %v1256 = vpop.permute.xlu0 %1255
      %v1260 = vsel %vm559, %v1249, 0
      %v1263 = vsel %vm559, %v1250, 0
      %1265 = vmatprep.subr.bf16.mxu0 0
      %1266 = vmatpush1.bf16.msra.mxu0 %v1254
      %1267 = vmatprep.subr.bf16.mxu0 0
      %1268 = vmatpush1.bf16.msra.mxu0 %v1256
      %1269 = vmatprep.subr.bf16.mxu0 0
      %1270 = vmatpush1.bf16.msra.mxu0 0
      %1271 = vmatprep.subr.bf16.mxu0 0
      %1272 = vmatpush1.bf16.msra.mxu0 0
      %1273 = vmatprep.subr.bf16.mxu0 0
      %1274 = vmatpush1.bf16.msra.mxu0 0
      %1275 = vmatprep.subr.bf16.mxu0 0
      %1276 = vmatpush1.bf16.msra.mxu0 0
      %1277 = vmatprep.subr.bf16.mxu0 0
      %1278 = vmatpush1.bf16.msra.mxu0 0
      %1279 = vmatprep.subr.bf16.mxu0 0
      %1280 = vmatpush1.bf16.msra.mxu0 0
      %1281 = vmatprep.subr.bf16.mxu0 0
      %1282 = vmatpush1.bf16.msra.mxu0 0
      %1283 = vmatprep.subr.bf16.mxu0 0
      %1284 = vmatpush1.bf16.msra.mxu0 0
      %1285 = vmatprep.subr.bf16.mxu0 0
      %1286 = vmatpush1.bf16.msra.mxu0 0
      %1287 = vmatprep.subr.bf16.mxu0 0
      %1288 = vmatpush1.bf16.msra.mxu0 0
      %1289 = vmatprep.subr.bf16.mxu0 0
      %1290 = vmatpush1.bf16.msra.mxu0 0
      %1291 = vmatprep.subr.bf16.mxu0 0
      %1292 = vmatpush1.bf16.msra.mxu0 0
      %1293 = vmatprep.subr.bf16.mxu0 0
      %1294 = vmatpush1.bf16.msra.mxu0 0
      %1295 = vmatprep.subr.bf16.mxu0 0
      %1296 = vmatpush1.bf16.msra.mxu0 0
      %1297 = vmatprep.mubr.bf16.mxu0 0
      %1298 = vmatmul.mubr.bf16.gmra.mrb[0].mxu0 %v1260
      %v1299 = vpop.f32.mrb[0].mxu0
      %v1300 = vadd.f32 0.0, %v1299
      %v1301 = vpop.f32.mrb[0].mxu0
      %v1302 = vpop.f32.mrb[0].mxu0
      %v1303 = vadd.f32 0.0, %v1302
      %v1304 = vpop.f32.mrb[0].mxu0
      %1305 = vmatprep.mubr.bf16.mxu0 0
      %1306 = vmatmul.mubr.bf16.gmra.mrb[0].mxu0 %v1263
      %v1307 = vpop.f32.mrb[0].mxu0
      %v1308 = vadd.f32 0.0, %v1307
      %v1309 = vpop.f32.mrb[0].mxu0
      %v1310 = vpop.f32.mrb[0].mxu0
      %v1311 = vadd.f32 0.0, %v1310
      %v1312 = vpop.f32.mrb[0].mxu0
      %1313 = vdwg.mxu0
      %1318 = vrot.lane.b32.xlu0 %v1300, 8
      %v1319 = vpop.permute.xlu0 %1318
      %1320 = vrot.lane.b32.xlu0 %v1303, 8
      %v1321 = vpop.permute.xlu0 %1320
      %1322 = vrot.lane.b32.xlu0 %v1308, 8
      %v1323 = vpop.permute.xlu0 %1322
      %1324 = vrot.lane.b32.xlu0 %v1311, 8
      %v1325 = vpop.permute.xlu0 %1324
      %vm1330 = vcmask 130112
      %1331 = vst.msk [vmem:[#allocation2] sm:$0xff] %vm1330, %v1319
      %1332 = vst.msk [vmem:[#allocation2 + $0x8] sm:$0xff] %vm1330, %v1321
      %1333 = vst.msk [vmem:[#allocation2 + $0x10] sm:$0xff] %vm1330, %v1323
      %1334 = vst.msk [vmem:[#allocation2 + $0x18] sm:$0xff] %vm1330, %v1325
      %s1335 = scalar_lea.vmem %s13, 32
      %v1336 = vld [vmem:[%s1335] sm:$0xf]
      %v1337 = vld [vmem:[%s1335 + $0x4] sm:$0xf]
      %v1338 = vld [vmem:[%s1335 + $0x8] sm:$0xf]
      %v1339 = vld [vmem:[%s1335 + $0xc] sm:$0xf]
      %v1344 = vunpack.c.l.b16 %v1336
      %v1345 = vunpack.c.l.b16 %v1337
      %v1346 = vunpack.c.l.b16 %v1338
      %v1347 = vunpack.c.l.b16 %v1339
      %v1348 = vpack.c.b16 %v1345, %v1344
      %v1349 = vpack.c.b16 %v1347, %v1346
      %1350 = vrot.lane.b32.xlu0 %v1164, 112
      %v1351 = vpop.permute.xlu0 %1350
      %1352 = vrot.lane.b32.xlu0 %v1165, 112
      %v1353 = vpop.permute.xlu0 %1352
      %v1357 = vsel %vm559, %v1348, 0
      %v1360 = vsel %vm559, %v1349, 0
      %1362 = vmatprep.subr.bf16.mxu0 0
      %1363 = vmatpush1.bf16.msra.mxu0 %v1351
      %1364 = vmatprep.subr.bf16.mxu0 0
      %1365 = vmatpush1.bf16.msra.mxu0 %v1353
      %1366 = vmatprep.subr.bf16.mxu0 0
      %1367 = vmatpush1.bf16.msra.mxu0 0
      %1368 = vmatprep.subr.bf16.mxu0 0
      %1369 = vmatpush1.bf16.msra.mxu0 0
      %1370 = vmatprep.subr.bf16.mxu0 0
      %1371 = vmatpush1.bf16.msra.mxu0 0
      %1372 = vmatprep.subr.bf16.mxu0 0
      %1373 = vmatpush1.bf16.msra.mxu0 0
      %1374 = vmatprep.subr.bf16.mxu0 0
      %1375 = vmatpush1.bf16.msra.mxu0 0
      %1376 = vmatprep.subr.bf16.mxu0 0
      %1377 = vmatpush1.bf16.msra.mxu0 0
      %1378 = vmatprep.subr.bf16.mxu0 0
      %1379 = vmatpush1.bf16.msra.mxu0 0
      %1380 = vmatprep.subr.bf16.mxu0 0
      %1381 = vmatpush1.bf16.msra.mxu0 0
      %1382 = vmatprep.subr.bf16.mxu0 0
      %1383 = vmatpush1.bf16.msra.mxu0 0
      %1384 = vmatprep.subr.bf16.mxu0 0
      %1385 = vmatpush1.bf16.msra.mxu0 0
      %1386 = vmatprep.subr.bf16.mxu0 0
      %1387 = vmatpush1.bf16.msra.mxu0 0
      %1388 = vmatprep.subr.bf16.mxu0 0
      %1389 = vmatpush1.bf16.msra.mxu0 0
      %1390 = vmatprep.subr.bf16.mxu0 0
      %1391 = vmatpush1.bf16.msra.mxu0 0
      %1392 = vmatprep.subr.bf16.mxu0 0
      %1393 = vmatpush1.bf16.msra.mxu0 0
      %1394 = vmatprep.mubr.bf16.mxu0 0
      %1395 = vmatmul.mubr.bf16.gmra.mrb[0].mxu0 %v1357
      %v1396 = vpop.f32.mrb[0].mxu0
      %v1397 = vadd.f32 0.0, %v1396
      %v1398 = vpop.f32.mrb[0].mxu0
      %v1399 = vpop.f32.mrb[0].mxu0
      %v1400 = vadd.f32 0.0, %v1399
      %v1401 = vpop.f32.mrb[0].mxu0
      %1402 = vmatprep.mubr.bf16.mxu0 0
      %1403 = vmatmul.mubr.bf16.gmra.mrb[0].mxu0 %v1360
      %v1404 = vpop.f32.mrb[0].mxu0
      %v1405 = vadd.f32 0.0, %v1404
      %v1406 = vpop.f32.mrb[0].mxu0
      %v1407 = vpop.f32.mrb[0].mxu0
      %v1408 = vadd.f32 0.0, %v1407
      %v1409 = vpop.f32.mrb[0].mxu0
      %1410 = vdwg.mxu0
      %1415 = vrot.lane.b32.xlu0 %v1397, 16
      %v1416 = vpop.permute.xlu0 %1415
      %1417 = vrot.lane.b32.xlu0 %v1400, 16
      %v1418 = vpop.permute.xlu0 %1417
      %1419 = vrot.lane.b32.xlu0 %v1405, 16
      %v1420 = vpop.permute.xlu0 %1419
      %1421 = vrot.lane.b32.xlu0 %v1408, 16
      %v1422 = vpop.permute.xlu0 %1421
      %vm1427 = vcmask 195712
      %1428 = vst.msk [vmem:[#allocation2] sm:$0xff] %vm1427, %v1416
      %1429 = vst.msk [vmem:[#allocation2 + $0x8] sm:$0xff] %vm1427, %v1418
      %1430 = vst.msk [vmem:[#allocation2 + $0x10] sm:$0xff] %vm1427, %v1420
      %1431 = vst.msk [vmem:[#allocation2 + $0x18] sm:$0xff] %vm1427, %v1422
      %s1432 = scalar_lea.vmem %s13, 48
      %v1433 = vld [vmem:[%s1432] sm:$0xf]
      %v1434 = vld [vmem:[%s1432 + $0x4] sm:$0xf]
      %v1435 = vld [vmem:[%s1432 + $0x8] sm:$0xf]
      %v1436 = vld [vmem:[%s1432 + $0xc] sm:$0xf]
      %v1441 = vunpack.c.l.b16 %v1433
      %v1442 = vunpack.c.l.b16 %v1434
      %v1443 = vunpack.c.l.b16 %v1435
      %v1444 = vunpack.c.l.b16 %v1436
      %v1445 = vpack.c.b16 %v1442, %v1441
      %v1446 = vpack.c.b16 %v1444, %v1443
      %1447 = vrot.lane.b32.xlu0 %v1164, 104
      %v1448 = vpop.permute.xlu0 %1447
      %1449 = vrot.lane.b32.xlu0 %v1165, 104
      %v1450 = vpop.permute.xlu0 %1449
      %v1454 = vsel %vm559, %v1445, 0
      %v1457 = vsel %vm559, %v1446, 0
      %1459 = vmatprep.subr.bf16.mxu0 0
      %1460 = vmatpush1.bf16.msra.mxu0 %v1448
      %1461 = vmatprep.subr.bf16.mxu0 0
      %1462 = vmatpush1.bf16.msra.mxu0 %v1450
      %1463 = vmatprep.subr.bf16.mxu0 0
      %1464 = vmatpush1.bf16.msra.mxu0 0
      %1465 = vmatprep.subr.bf16.mxu0 0
      %1466 = vmatpush1.bf16.msra.mxu0 0
      %1467 = vmatprep.subr.bf16.mxu0 0
      %1468 = vmatpush1.bf16.msra.mxu0 0
      %1469 = vmatprep.subr.bf16.mxu0 0
      %1470 = vmatpush1.bf16.msra.mxu0 0
      %1471 = vmatprep.subr.bf16.mxu0 0
      %1472 = vmatpush1.bf16.msra.mxu0 0
      %1473 = vmatprep.subr.bf16.mxu0 0
      %1474 = vmatpush1.bf16.msra.mxu0 0
      %1475 = vmatprep.subr.bf16.mxu0 0
      %1476 = vmatpush1.bf16.msra.mxu0 0
      %1477 = vmatprep.subr.bf16.mxu0 0
      %1478 = vmatpush1.bf16.msra.mxu0 0
      %1479 = vmatprep.subr.bf16.mxu0 0
      %1480 = vmatpush1.bf16.msra.mxu0 0
      %1481 = vmatprep.subr.bf16.mxu0 0
      %1482 = vmatpush1.bf16.msra.mxu0 0
      %1483 = vmatprep.subr.bf16.mxu0 0
      %1484 = vmatpush1.bf16.msra.mxu0 0
      %1485 = vmatprep.subr.bf16.mxu0 0
      %1486 = vmatpush1.bf16.msra.mxu0 0
      %1487 = vmatprep.subr.bf16.mxu0 0
      %1488 = vmatpush1.bf16.msra.mxu0 0
      %1489 = vmatprep.subr.bf16.mxu0 0
      %1490 = vmatpush1.bf16.msra.mxu0 0
      %1491 = vmatprep.mubr.bf16.mxu0 0
      %1492 = vmatmul.mubr.bf16.gmra.mrb[0].mxu0 %v1454
      %v1493 = vpop.f32.mrb[0].mxu0
      %v1494 = vadd.f32 0.0, %v1493
      %v1495 = vpop.f32.mrb[0].mxu0
      %v1496 = vpop.f32.mrb[0].mxu0
      %v1497 = vadd.f32 0.0, %v1496
      %v1498 = vpop.f32.mrb[0].mxu0
      %1499 = vmatprep.mubr.bf16.mxu0 0
      %1500 = vmatmul.mubr.bf16.gmra.mrb[0].mxu0 %v1457
      %v1501 = vpop.f32.mrb[0].mxu0
      %v1502 = vadd.f32 0.0, %v1501
      %v1503 = vpop.f32.mrb[0].mxu0
      %v1504 = vpop.f32.mrb[0].mxu0
      %v1505 = vadd.f32 0.0, %v1504
      %v1506 = vpop.f32.mrb[0].mxu0
      %1507 = vdwg.mxu0
      %1512 = vrot.lane.b32.xlu0 %v1494, 24
      %v1513 = vpop.permute.xlu0 %1512
      %1514 = vrot.lane.b32.xlu0 %v1497, 24
      %v1515 = vpop.permute.xlu0 %1514
      %1516 = vrot.lane.b32.xlu0 %v1502, 24
      %v1517 = vpop.permute.xlu0 %1516
      %1518 = vrot.lane.b32.xlu0 %v1505, 24
      %v1519 = vpop.permute.xlu0 %1518
      %vm1524 = vcmask 261312
      %1525 = vst.msk [vmem:[#allocation2] sm:$0xff] %vm1524, %v1513
      %1526 = vst.msk [vmem:[#allocation2 + $0x8] sm:$0xff] %vm1524, %v1515
      %1527 = vst.msk [vmem:[#allocation2 + $0x10] sm:$0xff] %vm1524, %v1517
      %1528 = vst.msk [vmem:[#allocation2 + $0x18] sm:$0xff] %vm1524, %v1519
      %v1529 = vld [vmem:[#allocation2] sm:$0xff]
      %v1530 = vld [vmem:[#allocation2 + $0x8] sm:$0xff]
      %v1531 = vld [vmem:[#allocation2 + $0x10] sm:$0xff]
      %v1532 = vld [vmem:[#allocation2 + $0x18] sm:$0xff]
      %v1533 = vld [vmem:[%s14] sm:$0xff]
      %v1534 = vld [vmem:[%s14 + $0x8] sm:$0xff]
      %v1535 = vld [vmem:[%s14 + $0x10] sm:$0xff]
      %v1536 = vld [vmem:[%s14 + $0x18] sm:$0xff]
      %v1537 = vadd.f32 %v1529, %v1533
      %v1538 = vadd.f32 %v1530, %v1534
      %v1539 = vadd.f32 %v1531, %v1535
      %v1540 = vadd.f32 %v1532, %v1536
      %1545 = vrot.lane.b32.xlu0 %v1156, 96
      %v1546 = vpop.permute.xlu0 %1545
      %1547 = vrot.lane.b32.xlu0 %v1157, 96
      %v1548 = vpop.permute.xlu0 %1547
      %1549 = vrot.lane.b32.xlu0 %v1158, 96
      %v1550 = vpop.permute.xlu0 %1549
      %1551 = vrot.lane.b32.xlu0 %v1159, 96
      %v1552 = vpop.permute.xlu0 %1551
      %v1557 = vmul.f32 %v1537, %v1546
      %v1558 = vmul.f32 %v1538, %v1548
      %v1559 = vmul.f32 %v1539, %v1550
      %v1560 = vmul.f32 %v1540, %v1552
      %v1561 = vpack.c.bf16 %v1558, %v1557
      %v1562 = vpack.c.bf16 %v1560, %v1559
      %v1563 = vld [vmem:[%s15] sm:$0xf]
      %v1564 = vld [vmem:[%s15 + $0x4] sm:$0xf]
      %v1565 = vld [vmem:[%s15 + $0x8] sm:$0xf]
      %v1566 = vld [vmem:[%s15 + $0xc] sm:$0xf]
      %v1567 = vld [vmem:[%s16] sm:$0x1]
      %v1569 = vlaneseq
      %v1570 = vshrl.u32 %v1569, 7
      %v1571 = vsub.s32 0, %v1570
      %v1572 = vrot.slane %v1567, %v1571
      %v1578 = vunpack.c.l.b16 %v1563
      %v1579 = vunpack.c.l.b16 %v1564
      %v1580 = vunpack.c.l.b16 %v1565
      %v1581 = vunpack.c.l.b16 %v1566
      %v1582 = vpack.c.b16 %v1579, %v1578
      %v1583 = vpack.c.b16 %v1581, %v1580
      %v1587 = vsel %vm559, %v1561, 0
      %v1590 = vsel %vm559, %v1562, 0
      %1592 = vmatprep.subr.bf16.mxu0 0
      %1593 = vmatpush1.bf16.msra.mxu0 %v1582
      %1594 = vmatprep.subr.bf16.mxu0 0
      %1595 = vmatpush1.bf16.msra.mxu0 %v1583
      %1596 = vmatprep.subr.bf16.mxu0 0
      %1597 = vmatpush1.bf16.msra.mxu0 0
      %1598 = vmatprep.subr.bf16.mxu0 0
      %1599 = vmatpush1.bf16.msra.mxu0 0
      %1600 = vmatprep.subr.bf16.mxu0 0
      %1601 = vmatpush1.bf16.msra.mxu0 0
      %1602 = vmatprep.subr.bf16.mxu0 0
      %1603 = vmatpush1.bf16.msra.mxu0 0
      %1604 = vmatprep.subr.bf16.mxu0 0
      %1605 = vmatpush1.bf16.msra.mxu0 0
      %1606 = vmatprep.subr.bf16.mxu0 0
      %1607 = vmatpush1.bf16.msra.mxu0 0
      %1608 = vmatprep.subr.bf16.mxu0 0
      %1609 = vmatpush1.bf16.msra.mxu0 0
      %1610 = vmatprep.subr.bf16.mxu0 0
      %1611 = vmatpush1.bf16.msra.mxu0 0
      %1612 = vmatprep.subr.bf16.mxu0 0
      %1613 = vmatpush1.bf16.msra.mxu0 0
      %1614 = vmatprep.subr.bf16.mxu0 0
      %1615 = vmatpush1.bf16.msra.mxu0 0
      %1616 = vmatprep.subr.bf16.mxu0 0
      %1617 = vmatpush1.bf16.msra.mxu0 0
      %1618 = vmatprep.subr.bf16.mxu0 0
      %1619 = vmatpush1.bf16.msra.mxu0 0
      %1620 = vmatprep.subr.bf16.mxu0 0
      %1621 = vmatpush1.bf16.msra.mxu0 0
      %1622 = vmatprep.subr.bf16.mxu0 0
      %1623 = vmatpush1.bf16.msra.mxu0 0
      %1624 = vmatprep.mubr.bf16.mxu0 0
      %1625 = vmatmul.mubr.bf16.gmra.mrb[0].mxu0 %v1587
      %v1626 = vpop.f32.mrb[0].mxu0
      %v1627 = vadd.f32 %v1572, %v1626
      %v1628 = vpop.f32.mrb[0].mxu0
      %v1629 = vpop.f32.mrb[0].mxu0
      %v1630 = vadd.f32 %v1572, %v1629
      %v1631 = vpop.f32.mrb[0].mxu0
      %1632 = vmatprep.mubr.bf16.mxu0 0
      %1633 = vmatmul.mubr.bf16.gmra.mrb[0].mxu0 %v1590
      %v1634 = vpop.f32.mrb[0].mxu0
      %v1635 = vadd.f32 %v1572, %v1634
      %v1636 = vpop.f32.mrb[0].mxu0
      %v1637 = vpop.f32.mrb[0].mxu0
      %v1638 = vadd.f32 %v1572, %v1637
      %v1639 = vpop.f32.mrb[0].mxu0
      %1640 = vdwg.mxu0
      %v1641 = vadd.f32 %v553, %v936
      %v1642 = vadd.f32 %v554, %v939
      %v1643 = vadd.f32 %v555, %v944
      %v1644 = vadd.f32 %v556, %v947
      %v1645 = vadd.f32 %v1641, %v1627
      %v1646 = vadd.f32 %v1642, %v1630
      %v1647 = vadd.f32 %v1643, %v1635
      %v1648 = vadd.f32 %v1644, %v1638
      %1649 = vst.msk [vmem:[%s550] sm:$0xff] %vm559, %v1645
      %1650 = vst.msk [vmem:[%s550 + $0x8] sm:$0xff] %vm559, %v1646
      %1651 = vst.msk [vmem:[%s550 + $0x10] sm:$0xff] %vm559, %v1647
      %1652 = vst.msk [vmem:[%s550 + $0x18] sm:$0xff] %vm559, %v1648
      %s1653 = smul.u32 4, %s28
      %p1654 = scmp.lt.s32.totalorder %s1653, 7
      %s1655 = scalar_select %p1654, %s1653, 7
      %s1656 = smul.addr %s1655, 8
      %s1657 = scalar_lea.vmem %s17, %s1656
      // Predicated region
      $region89: #{forward.13} parent=87 // pred_check
        %p1658 = pneg %p408
      $region90: #{forward.13} parent=87 // pred_check_branch
        %1660 = sbr.rel (%p1658) target = $region92
      $region91: #{forward.13} parent=87 // pred_region
        %s1661 = smul.u32 4, %s28
      $region92: #{forward.13} parent=87 // pred_fallthru
        _
    $region88: #{forward.13} parent=5 // pred_fallthru
      _
    %p1662 = scmp.le.s32.totalorder 2, %s23
    // Predicated region
    $region93: #{forward.13} parent=5 // pred_check
      %p1663 = pneg %p1662
    $region94: #{forward.13} parent=5 // pred_check_branch
      %1665 = sbr.rel (%p1663) target = $region96
    $region95: #{forward.13} parent=5 // pred_region
      %s1666 = ssub.s32 %s23, 2
      // Predicated region
      $region97: #{forward.13} parent=95 // pred_check
        %p1667 = pneg %p414
      $region98: #{forward.13} parent=95 // pred_check_branch
        %1669 = sbr.rel (%p1667) target = $region100
      $region99: #{forward.13} parent=95 // pred_region
        %s1670 = smul.u32 4, %s29
        %p1671 = scmp.lt.s32.totalorder %s1670, 7
        %s1672 = scalar_select %p1671, %s1670, 7
        %s1673 = smul.addr %s1672, 8
        %s1674 = scalar_lea.vmem %s17, %s1673
      $region100: #{forward.13} parent=95 // pred_fallthru
        _
    $region96: #{forward.13} parent=5 // pred_fallthru
      _
  $region6: #{forward.13} parent=0 // loop_footer
    %s27 = sadd.s32 1, %s23
  $region7: #{forward.13} parent=0 // loop_footer_branch
    %22 = sbr.rel target = $region3
  $region8: #{forward.13} parent=0 // loop_exit
    _

// kernel: forward.15
$region0: #{forward.15}
  #allocation0 [shape = 'u32[]', space=smem, size = 0x4, offset = 0x4, fixed_abs, tag = 'smem constant byte address 0x4 - core index']
  #allocation1 [shape = 'u32[144,128]{1,0:T(1,128)}', space=vmem, size = 0x12000, scoped, tag = 'internal scratch']
  %s0 = inlined_call_operand.vmem [shape: f32[2,32,32], index: 0, kind: input, shape index: {}]
  %s1 = inlined_call_operand.vmem [shape: f32[1,32], index: 1, kind: input, shape index: {}]
  %s2 = inlined_call_operand.vmem [shape: f32[1,32], index: 2, kind: input, shape index: {}]
  %s3 = inlined_call_operand.vmem [shape: bf16[32,10], index: 3, kind: input, shape index: {}]
  %s4 = inlined_call_operand.vmem [shape: f32[1,10], index: 4, kind: input, shape index: {}]
  %s5 = inlined_call_operand.hbm [shape: f32[2,10], index: 5, kind: output, shape index: {}]
  %s6 = sld [smem:[#allocation0]]
  $region30: #{forward.15} parent=0
    _
  %s8 = ssub.s32 1, %s6
  %s9 = scalar_select 0, %s8, %s6
  $region1: #{forward.15} parent=0
    #allocation2 [shape = 'u8[1024]{0}', space=vmem, size = 0x400, scoped, tag = 'output window, operand 0, single buffered']
    #allocation3 [shape = 's32[1]{0}', space=sflag, size = 0x4, scoped, tag = 'scoped memory for forward.15']
    %10 = vsyncpa [#allocation3], 0
    // Predicated region
    $region2: #{forward.15} parent=1 // pred_check
      _
    $region3: #{forward.15} parent=1 // pred_check_branch
      %12 = sbr.rel (0) target = $region5
    $region4: #{forward.15} parent=1 // pred_region
      _
    $region5: #{forward.15} parent=1 // pred_fallthru
      _
    // Predicated region
    $region6: #{forward.15} parent=1 // pred_check
      _
    $region7: #{forward.15} parent=1 // pred_check_branch
      %14 = sbr.rel (0) target = $region9
    $region8: #{forward.15} parent=1 // pred_region
      _
    $region9: #{forward.15} parent=1 // pred_fallthru
      _
    // Predicated region
    $region10: #{forward.15} parent=1 // pred_check
      _
    $region11: #{forward.15} parent=1 // pred_check_branch
      %16 = sbr.rel (0) target = $region13
    $region12: #{forward.15} parent=1 // pred_region
      _
    $region13: #{forward.15} parent=1 // pred_fallthru
      _
    // Predicated region
    $region14: #{forward.15} parent=1 // pred_check
      _
    $region15: #{forward.15} parent=1 // pred_check_branch
      %18 = sbr.rel (0) target = $region17
    $region16: #{forward.15} parent=1 // pred_region
      _
    $region17: #{forward.15} parent=1 // pred_fallthru
      _
    // Predicated region
    $region18: #{forward.15} parent=1 // pred_check
      _
    $region19: #{forward.15} parent=1 // pred_check_branch
      %20 = sbr.rel (0) target = $region21
    $region20: #{forward.15} parent=1 // pred_region
      _
    $region21: #{forward.15} parent=1 // pred_fallthru
      _
    %v22 = vld [vmem:[%s0] sm:$0xff]
    %v23 = vld [vmem:[%s0 + $0x8] sm:$0xff]
    %v24 = vld [vmem:[%s0 + $0x10] sm:$0xff]
    %v25 = vld [vmem:[%s0 + $0x18] sm:$0xff]
    %v26 = vld [vmem:[%s0 + $0x20] sm:$0xff]
    %v27 = vld [vmem:[%s0 + $0x28] sm:$0xff]
    %v28 = vld [vmem:[%s0 + $0x30] sm:$0xff]
    %v29 = vld [vmem:[%s0 + $0x38] sm:$0xff]
    %v30 = vld [vmem:[%s1] sm:$0x1]
    %v31 = vld [vmem:[%s2] sm:$0x1]
    %vm32 = vcmask 261120
    %v33 = vsel %vm32, %v22, 0.0
    %34 = vadd.xlane.f32.xlu0 %v33
    %v35 = vpop.xlane.xlu0 %34
    %v36 = vsel %vm32, %v23, 0.0
    %37 = vadd.xlane.f32.xlu0 %v36
    %v38 = vpop.xlane.xlu0 %37
    %v39 = vsel %vm32, %v24, 0.0
    %40 = vadd.xlane.f32.xlu0 %v39
    %v41 = vpop.xlane.xlu0 %40
    %v42 = vsel %vm32, %v25, 0.0
    %43 = vadd.xlane.f32.xlu0 %v42
    %v44 = vpop.xlane.xlu0 %43
    %v45 = vsel %vm32, %v26, 0.0
    %46 = vadd.xlane.f32.xlu0 %v45
    %v47 = vpop.xlane.xlu0 %46
    %v48 = vsel %vm32, %v27, 0.0
    %49 = vadd.xlane.f32.xlu0 %v48
    %v50 = vpop.xlane.xlu0 %49
    %v51 = vsel %vm32, %v28, 0.0
    %52 = vadd.xlane.f32.xlu0 %v51
    %v53 = vpop.xlane.xlu0 %52
    %v54 = vsel %vm32, %v29, 0.0
    %55 = vadd.xlane.f32.xlu0 %v54
    %v56 = vpop.xlane.xlu0 %55
    %v57 = vrcp.pop 32.0
    %v58 = vmul.f32 %v35, %v57
    %v59 = vmul.f32 %v38, %v57
    %v60 = vmul.f32 %v41, %v57
    %v61 = vmul.f32 %v44, %v57
    %v62 = vmul.f32 %v47, %v57
    %v63 = vmul.f32 %v50, %v57
    %v64 = vmul.f32 %v53, %v57
    %v65 = vmul.f32 %v56, %v57
    %v66 = vsub.f32 %v22, %v58
    %v67 = vsub.f32 %v23, %v59
    %v68 = vsub.f32 %v24, %v60
    %v69 = vsub.f32 %v25, %v61
    %v70 = vsub.f32 %v26, %v62
    %v71 = vsub.f32 %v27, %v63
    %v72 = vsub.f32 %v28, %v64
    %v73 = vsub.f32 %v29, %v65
    %v74 = vmul.f32 %v66, %v66
    %v75 = vmul.f32 %v67, %v67
    %v76 = vmul.f32 %v68, %v68
    %v77 = vmul.f32 %v69, %v69
    %v78 = vmul.f32 %v70, %v70
    %v79 = vmul.f32 %v71, %v71
    %v80 = vmul.f32 %v72, %v72
    %v81 = vmul.f32 %v73, %v73
    %v82 = vsel %vm32, %v74, 0.0
    %83 = vadd.xlane.f32.xlu0 %v82
    %v84 = vpop.xlane.xlu0 %83
    %v85 = vsel %vm32, %v75, 0.0
    %86 = vadd.xlane.f32.xlu0 %v85
    %v87 = vpop.xlane.xlu0 %86
    %v88 = vsel %vm32, %v76, 0.0
    %89 = vadd.xlane.f32.xlu0 %v88
    %v90 = vpop.xlane.xlu0 %89
    %v91 = vsel %vm32, %v77, 0.0
    %92 = vadd.xlane.f32.xlu0 %v91
    %v93 = vpop.xlane.xlu0 %92
    %v94 = vsel %vm32, %v78, 0.0
    %95 = vadd.xlane.f32.xlu0 %v94
    %v96 = vpop.xlane.xlu0 %95
    %v97 = vsel %vm32, %v79, 0.0
    %98 = vadd.xlane.f32.xlu0 %v97
    %v99 = vpop.xlane.xlu0 %98
    %v100 = vsel %vm32, %v80, 0.0
    %101 = vadd.xlane.f32.xlu0 %v100
    %v102 = vpop.xlane.xlu0 %101
    %v103 = vsel %vm32, %v81, 0.0
    %104 = vadd.xlane.f32.xlu0 %v103
    %v105 = vpop.xlane.xlu0 %104
    %v106 = vmul.f32 %v84, %v57
    %v107 = vmul.f32 %v87, %v57
    %v108 = vmul.f32 %v90, %v57
    %v109 = vmul.f32 %v93, %v57
    %v110 = vmul.f32 %v96, %v57
    %v111 = vmul.f32 %v99, %v57
    %v112 = vmul.f32 %v102, %v57
    %v113 = vmul.f32 %v105, %v57
    %v114 = vadd.f32 %v106, 1e-05
    %v115 = vadd.f32 %v107, 1e-05
    %v116 = vadd.f32 %v108, 1e-05
    %v117 = vadd.f32 %v109, 1e-05
    %v118 = vadd.f32 %v110, 1e-05
    %v119 = vadd.f32 %v111, 1e-05
    %v120 = vadd.f32 %v112, 1e-05
    %v121 = vadd.f32 %v113, 1e-05
    %v122 = vrsqrt.pop %v114
    %v123 = vrsqrt.pop %v115
    %v124 = vrsqrt.pop %v116
    %v125 = vrsqrt.pop %v117
    %v126 = vrsqrt.pop %v118
    %v127 = vrsqrt.pop %v119
    %v128 = vrsqrt.pop %v120
    %v129 = vrsqrt.pop %v121
    %v130 = vmul.f32 %v66, %v122
    %v131 = vmul.f32 %v67, %v123
    %v132 = vmul.f32 %v68, %v124
    %v133 = vmul.f32 %v69, %v125
    %v134 = vmul.f32 %v70, %v126
    %v135 = vmul.f32 %v71, %v127
    %v136 = vmul.f32 %v72, %v128
    %v137 = vmul.f32 %v73, %v129
    %v139 = vlaneseq
    %v140 = vshrl.u32 %v139, 7
    %v141 = vsub.s32 0, %v140
    %v142 = vrot.slane %v30, %v141
    %v144 = vmul.f32 %v130, %v142
    %v145 = vmul.f32 %v131, %v142
    %v146 = vmul.f32 %v132, %v142
    %v147 = vmul.f32 %v133, %v142
    %v148 = vmul.f32 %v134, %v142
    %v149 = vmul.f32 %v135, %v142
    %v150 = vmul.f32 %v136, %v142
    %v151 = vmul.f32 %v137, %v142
    %v153 = vlaneseq
    %v154 = vshrl.u32 %v153, 7
    %v155 = vsub.s32 0, %v154
    %v156 = vrot.slane %v31, %v155
    %v158 = vadd.f32 %v144, %v156
    %v159 = vadd.f32 %v145, %v156
    %v160 = vadd.f32 %v146, %v156
    %v161 = vadd.f32 %v147, %v156
    %v162 = vadd.f32 %v148, %v156
    %v163 = vadd.f32 %v149, %v156
    %v164 = vadd.f32 %v150, %v156
    %v165 = vadd.f32 %v151, %v156
    %v166 = vsel %vm32, %v158, 0.0
    %v167 = vsel %vm32, %v159, 0.0
    %v168 = vadd.f32 %v166, %v167
    %v169 = vsel %vm32, %v160, 0.0
    %v170 = vadd.f32 %v168, %v169
    %v171 = vsel %vm32, %v161, 0.0
    %v172 = vadd.f32 %v170, %v171
    %v173 = vrot.slane %v172, 4
    %v174 = vadd.f32 %v172, %v173
    %v175 = vrot.slane %v174, 2
    %v176 = vadd.f32 %v174, %v175
    %v177 = vrot.slane %v176, 1
    %v178 = vadd.f32 %v176, %v177
    %v179 = vsel %vm32, %v162, 0.0
    %v180 = vsel %vm32, %v163, 0.0
    %v181 = vadd.f32 %v179, %v180
    %v182 = vsel %vm32, %v164, 0.0
    %v183 = vadd.f32 %v181, %v182
    %v184 = vsel %vm32, %v165, 0.0
    %v185 = vadd.f32 %v183, %v184
    %v186 = vrot.slane %v185, 4
    %v187 = vadd.f32 %v185, %v186
    %v188 = vrot.slane %v187, 2
    %v189 = vadd.f32 %v187, %v188
    %v190 = vrot.slane %v189, 1
    %v191 = vadd.f32 %v189, %v190
    %v192 = vmul.f32 %v178, %v57
    %v193 = vmul.f32 %v191, %v57
    %v194 = vpack.c.bf16 %v192, %v192
    %v195 = vpack.c.bf16 %v193, %v193
    %v196 = vld [vmem:[%s3] sm:$0xf]
    %v197 = vld [vmem:[%s3 + $0x4] sm:$0xf]
    %v198 = vld [vmem:[%s3 + $0x8] sm:$0xf]
    %v199 = vld [vmem:[%s3 + $0xc] sm:$0xf]
    %v200 = vld [vmem:[%s4] sm:$0x1]
    %v202 = vlaneseq
    %v203 = vshrl.u32 %v202, 7
    %v204 = vsub.s32 0, %v203
    %v205 = vrot.slane %v200, %v204
    %v209 = vunpack.c.l.b16 %v194
    %v210 = vunpack.c.l.b16 %v195
    %vm211 = vcmask 1041409
    %v212 = vsel %vm211, %v210, %v209
    %v213 = vpack.c.b16 %v212, %v212
    %v218 = vunpack.c.l.b16 %v196
    %v219 = vunpack.c.l.b16 %v197
    %v220 = vunpack.c.l.b16 %v198
    %v221 = vunpack.c.l.b16 %v199
    %v222 = vpack.c.b16 %v219, %v218
    %v223 = vpack.c.b16 %v221, %v220
    %v227 = vsel %vm32, %v213, 0
    %229 = vmatprep.subr.bf16.mxu0 0
    %230 = vmatpush1.bf16.msra.mxu0 %v222
    %231 = vmatprep.subr.bf16.mxu0 0
    %232 = vmatpush1.bf16.msra.mxu0 %v223
    %233 = vmatprep.subr.bf16.mxu0 0
    %234 = vmatpush1.bf16.msra.mxu0 0
    %235 = vmatprep.subr.bf16.mxu0 0
    %236 = vmatpush1.bf16.msra.mxu0 0
    %237 = vmatprep.subr.bf16.mxu0 0
    %238 = vmatpush1.bf16.msra.mxu0 0
    %239 = vmatprep.subr.bf16.mxu0 0
    %240 = vmatpush1.bf16.msra.mxu0 0
    %241 = vmatprep.subr.bf16.mxu0 0
    %242 = vmatpush1.bf16.msra.mxu0 0
    %243 = vmatprep.subr.bf16.mxu0 0
    %244 = vmatpush1.bf16.msra.mxu0 0
    %245 = vmatprep.subr.bf16.mxu0 0
    %246 = vmatpush1.bf16.msra.mxu0 0
    %247 = vmatprep.subr.bf16.mxu0 0
    %248 = vmatpush1.bf16.msra.mxu0 0
    %249 = vmatprep.subr.bf16.mxu0 0
    %250 = vmatpush1.bf16.msra.mxu0 0
    %251 = vmatprep.subr.bf16.mxu0 0
    %252 = vmatpush1.bf16.msra.mxu0 0
    %253 = vmatprep.subr.bf16.mxu0 0
    %254 = vmatpush1.bf16.msra.mxu0 0
    %255 = vmatprep.subr.bf16.mxu0 0
    %256 = vmatpush1.bf16.msra.mxu0 0
    %257 = vmatprep.subr.bf16.mxu0 0
    %258 = vmatpush1.bf16.msra.mxu0 0
    %259 = vmatprep.subr.bf16.mxu0 0
    %260 = vmatpush1.bf16.msra.mxu0 0
    %261 = vmatprep.mubr.bf16.mxu0 0
    %262 = vmatmul.mubr.bf16.gmra.mrb[0].mxu0 %v227
    %v263 = vpop.f32.mrb[0].mxu0
    %v264 = vadd.f32 %v205, %v263
    %v265 = vpop.f32.mrb[0].mxu0
    %v266 = vpop.f32.mrb[0].mxu0
    %v267 = vpop.f32.mrb[0].mxu0
    %268 = vdwg.mxu0
    %vm269 = vcmask 74752
    %270 = vst.msk [vmem:[#allocation2] sm:$0x3] %vm269, %v264
    // Predicated region
    $region22: #{forward.15} parent=1 // pred_check
      _
    $region23: #{forward.15} parent=1 // pred_check_branch
      %272 = sbr.rel (0) target = $region25
    $region24: #{forward.15} parent=1 // pred_region
      %s274 = ssub.s32 32, 32
      %275 = vsyncadd [#allocation3], %s274
      %s277 = sshll.u32 [#allocation2], 4
      %s278 = int_to_ptr.vmem [resolvable:$true] %s277
      %280 = dma.vmem_to_hbm [thread:$0]  %s278, 32, %s5, [#allocation3]
    $region25: #{forward.15} parent=1 // pred_fallthru
      _
    // Predicated region
    $region26: #{forward.15} parent=1 // pred_check
      _
    $region27: #{forward.15} parent=1 // pred_check_branch
      %282 = sbr.rel (0) target = $region29
    $region28: #{forward.15} parent=1 // pred_region
      %283 = dma.done [#allocation3], 32
    $region29: #{forward.15} parent=1 // pred_fallthru
      _
    %284 = vsyncpa [#allocation3], 1

</llo_original>
